<compile_context>
chip_gen: v6e
topology: v6e:2x2x1
jax: 0.10.0
libtpu: 0.0.40
codegen_flags: <defaults>
</compile_context>

<pallas_src>
import functools
import math

import jax
import jax.numpy as jnp
from jax import lax
from jax.experimental import pallas as pl
from jax.experimental.pallas import tpu as pltpu

LN_EPS = 1e-5
CHUNK = 128        # sequence tile; L is padded up to a multiple of this
CONV_PAD = 8       # sublane-aligned offset of the current chunk inside the conv slab


def _sigmoid(x):
    return 1.0 / (1.0 + jnp.exp(-x))


def _softplus(x):
    # numerically stable softplus: max(x, 0) + log1p(exp(-|x|))
    return jnp.maximum(x, 0.0) + jnp.log1p(jnp.exp(-jnp.abs(x)))


# --------------------------------------------------------------------------------------
# Pallas kernel: one Mamba layer + LayerNorm + ReLU, one (batch, chunk) tile per grid step.
# --------------------------------------------------------------------------------------
def _mamba_ln_relu_kernel(
    x_ref,
    w_in_x_ref, w_in_z_ref, conv_w_ref, conv_b_ref,
    w_dt_ref, b_dt_ref, w_B_ref, w_C_ref,
    A_log_T_ref, D_ref, w_out_t_ref, gamma_ref, beta_ref,
    o_ref,
    dA_s, dBu_s, cexp_s, ys_s, state_s, xpad_s,
    *, chunk, d_inner, d_conv, unroll):

    tail = d_conv - 1

    # ---- reset the carried scan state / conv tail at the start of every sequence ----
    @pl.when(pl.program_id(1) == 0)
    def _():
        state_s[...] = jnp.zeros_like(state_s)
        xpad_s[pl.ds(0, CONV_PAD), :] = jnp.zeros((CONV_PAD, d_inner), jnp.float32)

    x = x_ref[0]                                                            # (chunk, d_model)

    # ---- in_proj (two small matmuls: avoids sub-128-lane slices of a fused output) ----
    xc = jnp.dot(x, w_in_x_ref[...], preferred_element_type=jnp.float32)    # (chunk, d_inner)
    res = jnp.dot(x, w_in_z_ref[...], preferred_element_type=jnp.float32)   # (chunk, d_inner)

    # ---- depthwise causal conv1d: shifted adds from a sublane-aligned slab; the previous
    #      chunk's last (d_conv - 1) rows live at slab rows [CONV_PAD - tail, CONV_PAD) ----
    xpad_s[pl.ds(CONV_PAD, chunk), :] = xc
    cw = conv_w_ref[...]                                                    # (d_conv, d_inner)
    base = CONV_PAD - tail
    conv = xpad_s[pl.ds(base, chunk), :] * cw[0:1, :]
    for j in range(1, d_conv):
        conv = conv + xpad_s[pl.ds(base + j, chunk), :] * cw[j:j + 1, :]
    if tail > 0:                      # carry this chunk's tail for the next grid step
        xpad_s[pl.ds(base, tail), :] = xc[chunk - tail:, :]
    conv = conv + conv_b_ref[...]
    u = conv * _sigmoid(conv)                                               # SiLU

    # ---- data-dependent SSM parameters (dt_proj folded into w_dt_ref host-side) ----
    delta = _softplus(
        jnp.dot(u, w_dt_ref[...], preferred_element_type=jnp.float32) + b_dt_ref[...])
    Bm = jnp.dot(u, w_B_ref[...], preferred_element_type=jnp.float32)       # (chunk, d_state)
    Cm = jnp.dot(u, w_C_ref[...], preferred_element_type=jnp.float32)       # (chunk, d_state)

    A_T = -jnp.exp(A_log_T_ref[...])                                        # (d_state, d_inner)
    du = delta * u

    # ---- bulk precompute (vectorized, outside the serial loop); d_inner on the lane axis ----
    dA_s[...] = jnp.exp(delta[:, None, :] * A_T[None, :, :])                # (chunk, d_state, d_inner)
    dBu_s[...] = du[:, None, :] * Bm[:, :, None]                            # (chunk, d_state, d_inner)
    cexp_s[...] = jnp.broadcast_to(Cm[:, :, None], cexp_s.shape)            # C bcast along d_inner

    # ---- serial selective scan with the C-contraction fused (no per-step state write-back) ----
    def scan_body(i, st):
        l0 = pl.multiple_of(i * unroll, unroll)
        for k in range(unroll):
            l = l0 + k
            st = dA_s[l] * st + dBu_s[l]
            ys_s[pl.ds(l, 1), :] = jnp.sum(st * cexp_s[l], axis=0, keepdims=True)
        return st

    state_s[...] = lax.fori_loop(0, chunk // unroll, scan_body, state_s[...])

    # ---- epilogue: skip, gate, transposed out_proj (lane-dense), LayerNorm, ReLU ----
    ys = ys_s[...] + u * D_ref[...]
    y = ys * (res * _sigmoid(res))                                          # (chunk, d_inner)
    out_t = lax.dot_general(w_out_t_ref[...], y, (((1,), (1,)), ((), ())),
                            preferred_element_type=jnp.float32)             # (out_c, chunk)
    mu = jnp.mean(out_t, axis=0, keepdims=True)
    var = jnp.mean((out_t - mu) ** 2, axis=0, keepdims=True)
    normed = (out_t - mu) * lax.rsqrt(var + LN_EPS) * gamma_ref[...] + beta_ref[...]
    o_ref[0] = jnp.maximum(normed, 0.0)


def mamba_ln_relu(x_seq, p):
    """x_seq: (B, L, d_model) f32 -> (B, L, out_c) f32  (one Mamba block + LayerNorm + ReLU)."""
    B, L, d_model = x_seq.shape
    d_inner, d_state = p["d_inner"], p["d_state"]
    d_conv, out_c = p["d_conv"], p["out_c"]

    chunk = CHUNK
    Lp = int(pl.cdiv(L, chunk)) * chunk
    if Lp != L:
        # zero-pad the tail; conv + scan are causal so padded rows never affect real rows
        x_seq = jnp.pad(x_seq, ((0, 0), (0, Lp - L), (0, 0)))
    n_chunks = Lp // chunk
    unroll = 8

    # Host-side weight prep (cheap, once per call): fold dt_proj into the delta projection,
    # pre-transpose A and out_proj, and shape LayerNorm params as per-sublane columns.
    w_dt_fold = p["w_delta"] @ p["w_dt"]                    # (d_inner, d_inner)
    A_log_T = jnp.transpose(p["A_log"])                     # (d_state, d_inner)
    w_out_t = jnp.transpose(p["w_out"])                     # (out_c, d_inner)
    gamma_col = jnp.reshape(p["gamma"], (out_c, 1))
    beta_col = jnp.reshape(p["beta"], (out_c, 1))

    weights = [p["w_in_x"], p["w_in_z"], p["conv_w"], p["conv_b"],
               w_dt_fold, p["b_dt"], p["w_B"], p["w_C"],
               A_log_T, p["D"], w_out_t, gamma_col, beta_col]

    kernel = functools.partial(
        _mamba_ln_relu_kernel, chunk=chunk, d_inner=d_inner,
        d_conv=d_conv, unroll=unroll)

    def full_spec(arr):
        nd = arr.ndim
        return pl.BlockSpec(arr.shape, lambda b, c, _nd=nd: (0,) * _nd)

    grid_spec = pltpu.PrefetchScalarGridSpec(
        num_scalar_prefetch=0,
        grid=(B, n_chunks),
        in_specs=[pl.BlockSpec((1, chunk, d_model), lambda b, c: (b, c, 0))]
        + [full_spec(w) for w in weights],
        out_specs=pl.BlockSpec((1, out_c, chunk), lambda b, c: (b, 0, c)),
        scratch_shapes=[
            pltpu.VMEM((chunk, d_state, d_inner), jnp.float32),    # exp(delta ⊗ A)
            pltpu.VMEM((chunk, d_state, d_inner), jnp.float32),    # delta * B * u
            pltpu.VMEM((chunk, d_state, d_inner), jnp.float32),    # C broadcast along d_inner
            pltpu.VMEM((chunk, d_inner), jnp.float32),             # fused per-step C-contraction
            pltpu.VMEM((d_state, d_inner), jnp.float32),           # carried scan state
            pltpu.VMEM((CONV_PAD + chunk, d_inner), jnp.float32),  # conv slab (+ carried tail)
        ],
    )
    out_t = pl.pallas_call(
        kernel,
        out_shape=jax.ShapeDtypeStruct((B, out_c, Lp), jnp.float32),
        grid_spec=grid_spec,
        compiler_params=pltpu.CompilerParams(
            dimension_semantics=("parallel", "arbitrary"),  # batch across cores, chunks sequential
            vmem_limit_bytes=32 * 1024 * 1024,              # ~4 MiB actual footprint; safe on v7x
        ),
    )(x_seq, *weights)

    # The kernel emits (B, out_c, Lp) so its stores are lane-dense; transpose back wrapper-side.
    out = jnp.transpose(out_t, (0, 2, 1))
    return out[:, :L, :] if Lp != L else out


# --------------------------------------------------------------------------------------
# Parameter init (deterministic, synthetic).
# --------------------------------------------------------------------------------------
def init_mamba_params(key, d_model, out_c, d_state=16, d_conv=4, expand=2):
    d_inner = expand * d_model
    dt_rank = max(1, math.ceil(d_model / 16))
    ks = jax.random.split(key, 9)
    scale = 0.5

    def rnd(k, shape):
        return (scale * jax.random.normal(k, shape)).astype(jnp.float32)

    A_log = jnp.log(
        jnp.tile(jnp.arange(1, d_state + 1, dtype=jnp.float32)[None, :], (d_inner, 1)))
    return dict(
        d_inner=d_inner, d_state=d_state, dt_rank=dt_rank, d_conv=d_conv, out_c=out_c,
        w_in_x=rnd(ks[0], (d_model, d_inner)),
        w_in_z=rnd(ks[1], (d_model, d_inner)),
        conv_w=rnd(ks[2], (d_conv, d_inner)),
        conv_b=0.1 * rnd(ks[3], (1, d_inner)),
        w_delta=rnd(ks[4], (d_inner, dt_rank)),
        w_B=rnd(ks[5], (d_inner, d_state)),
        w_C=rnd(ks[6], (d_inner, d_state)),
        w_dt=rnd(ks[7], (dt_rank, d_inner)),
        b_dt=jnp.full((1, d_inner), 0.5, jnp.float32),
        A_log=A_log.astype(jnp.float32),
        D=jnp.ones((1, d_inner), jnp.float32),
        w_out=rnd(ks[8], (d_inner, out_c)),
        gamma=jnp.ones((1, out_c), jnp.float32),
        beta=jnp.zeros((1, out_c), jnp.float32),
    )


# --------------------------------------------------------------------------------------
# Full module forward (glue reshapes in plain JAX, compute in the Pallas kernel).
# --------------------------------------------------------------------------------------
def double_ssm_block(x, params, layer_fn=mamba_ln_relu):
    # input x is NCHW (b, c, h, w); output is (b, out_c, w, h) like the reference
    # module's permute(0, 3, 2, 1).
    b, c, h, w = x.shape
    seq = jnp.transpose(x, (0, 2, 3, 1)).reshape(b, h * w, c)
    seq = layer_fn(seq, params["ssm1"])
    seq = layer_fn(seq, params["ssm2"])
    out_c = params["ssm2"]["out_c"]
    y = seq.reshape(b, h, w, out_c)
    return jnp.transpose(y, (0, 3, 2, 1))


# --------------------------------------------------------------------------------------
# Pure-JAX reference (same math, unfused weights) for a correctness check.
# --------------------------------------------------------------------------------------
def _mamba_ln_relu_ref(x_seq, p):
    L = x_seq.shape[1]
    d_conv = p["d_conv"]
    xc = x_seq @ p["w_in_x"]
    res = x_seq @ p["w_in_z"]
    conv = jnp.zeros_like(xc)
    for j in range(d_conv):
        s = d_conv - 1 - j
        if s == 0:
            x_sh = xc
        else:
            x_sh = jnp.concatenate(
                [jnp.zeros_like(xc[:, :s, :]), xc[:, :L - s, :]], axis=1)
        conv = conv + x_sh * p["conv_w"][j][None, None, :]
    conv = conv + p["conv_b"][0][None, None, :]
    u = conv * _sigmoid(conv)
    delta = _softplus(u @ p["w_delta"] @ p["w_dt"] + p["b_dt"][0][None, None, :])
    Bm = u @ p["w_B"]
    Cm = u @ p["w_C"]
    A = -jnp.exp(p["A_log"])
    dA = jnp.exp(delta[..., None] * A[None, None, :, :])
    dBu = (delta * u)[..., None] * Bm[:, :, None, :]

    def step(state, inp):
        dA_l, dBu_l, C_l = inp
        state = dA_l * state + dBu_l
        y = jnp.sum(state * C_l[:, None, :], axis=-1)
        return state, y

    init = jnp.zeros((x_seq.shape[0], p["d_inner"], p["d_state"]), jnp.float32)
    _, ys = lax.scan(
        step, init,
        (jnp.moveaxis(dA, 1, 0), jnp.moveaxis(dBu, 1, 0), jnp.moveaxis(Cm, 1, 0)))
    ys = jnp.moveaxis(ys, 0, 1) + u * p["D"][0][None, None, :]
    y = ys * (res * _sigmoid(res))
    out = y @ p["w_out"]
    mu = jnp.mean(out, axis=-1, keepdims=True)
    var = jnp.mean((out - mu) ** 2, axis=-1, keepdims=True)
    normed = (out - mu) * lax.rsqrt(var + LN_EPS)
    normed = normed * p["gamma"][0][None, None, :] + p["beta"][0][None, None, :]
    return jnp.maximum(normed, 0.0)


if __name__ == "__main__":
    key = jax.random.PRNGKey(0)
    k_x, k1, k2 = jax.random.split(key, 3)
    batch, n_channels, out_channels, H, W = 2, 4, 8, 16, 16

    x = jax.random.normal(k_x, (batch, n_channels, H, W), jnp.float32)
    params = dict(
        ssm1=init_mamba_params(k1, d_model=n_channels, out_c=out_channels),
        ssm2=init_mamba_params(k2, d_model=out_channels, out_c=out_channels),
    )

    out = jax.block_until_ready(double_ssm_block(x, params))
    ref = jax.block_until_ready(double_ssm_block(x, params, layer_fn=_mamba_ln_relu_ref))

    assert out.shape == (batch, out_channels, W, H), out.shape
    err = float(jnp.max(jnp.abs(out - ref)))
    assert bool(jnp.all(jnp.isfinite(out))) and err < 1e-2, f"mismatch: {err}"
    print("KERNEL_OK")
</pallas_src>

<mosaic_0001>
module attributes {stable_mosaic.version = 11 : i64} {
  func.func @_mamba_ln_relu_kernel(%arg0: i32, %arg1: i32, %arg2: memref<1x128x4xf32, #tpu.memory_space<vmem>>, %arg3: memref<4x8xf32, #tpu.memory_space<vmem>>, %arg4: memref<4x8xf32, #tpu.memory_space<vmem>>, %arg5: memref<4x8xf32, #tpu.memory_space<vmem>>, %arg6: memref<1x8xf32, #tpu.memory_space<vmem>>, %arg7: memref<8x8xf32, #tpu.memory_space<vmem>>, %arg8: memref<1x8xf32, #tpu.memory_space<vmem>>, %arg9: memref<8x16xf32, #tpu.memory_space<vmem>>, %arg10: memref<8x16xf32, #tpu.memory_space<vmem>>, %arg11: memref<16x8xf32, #tpu.memory_space<vmem>>, %arg12: memref<1x8xf32, #tpu.memory_space<vmem>>, %arg13: memref<8x8xf32, #tpu.memory_space<vmem>>, %arg14: memref<8x1xf32, #tpu.memory_space<vmem>>, %arg15: memref<8x1xf32, #tpu.memory_space<vmem>>, %arg16: memref<1x8x128xf32, #tpu.memory_space<vmem>>, %arg17: memref<128x16x8xf32, #tpu.memory_space<vmem>>, %arg18: memref<128x16x8xf32, #tpu.memory_space<vmem>>, %arg19: memref<128x16x8xf32, #tpu.memory_space<vmem>>, %arg20: memref<128x8xf32, #tpu.memory_space<vmem>>, %arg21: memref<16x8xf32, #tpu.memory_space<vmem>>, %arg22: memref<136x8xf32, #tpu.memory_space<vmem>>) attributes {dimension_semantics = [#tpu.dimension_semantics<parallel>, #tpu.dimension_semantics<arbitrary>], iteration_bounds = array<i64: 2, 2>, scalar_prefetch = 0 : i64, scratch_operands = 6 : i64, tpu.core_type = #tpu.core_type<tc>, window_params = [{transform_indices = @transform_0, window_bounds = array<i64: 1, 128, 4>}, {pipeline_mode = #tpu.pipeline_mode<synchronous>, transform_indices = @transform_1, window_bounds = array<i64: 4, 8>}, {pipeline_mode = #tpu.pipeline_mode<synchronous>, transform_indices = @transform_2, window_bounds = array<i64: 4, 8>}, {pipeline_mode = #tpu.pipeline_mode<synchronous>, transform_indices = @transform_3, window_bounds = array<i64: 4, 8>}, {pipeline_mode = #tpu.pipeline_mode<synchronous>, transform_indices = @transform_4, window_bounds = array<i64: 1, 8>}, {pipeline_mode = #tpu.pipeline_mode<synchronous>, transform_indices = @transform_5, window_bounds = array<i64: 8, 8>}, {pipeline_mode = #tpu.pipeline_mode<synchronous>, transform_indices = @transform_6, window_bounds = array<i64: 1, 8>}, {pipeline_mode = #tpu.pipeline_mode<synchronous>, transform_indices = @transform_7, window_bounds = array<i64: 8, 16>}, {pipeline_mode = #tpu.pipeline_mode<synchronous>, transform_indices = @transform_8, window_bounds = array<i64: 8, 16>}, {pipeline_mode = #tpu.pipeline_mode<synchronous>, transform_indices = @transform_9, window_bounds = array<i64: 16, 8>}, {pipeline_mode = #tpu.pipeline_mode<synchronous>, transform_indices = @transform_10, window_bounds = array<i64: 1, 8>}, {pipeline_mode = #tpu.pipeline_mode<synchronous>, transform_indices = @transform_11, window_bounds = array<i64: 8, 8>}, {pipeline_mode = #tpu.pipeline_mode<synchronous>, transform_indices = @transform_12, window_bounds = array<i64: 8, 1>}, {pipeline_mode = #tpu.pipeline_mode<synchronous>, transform_indices = @transform_13, window_bounds = array<i64: 8, 1>}, {transform_indices = @transform_14, window_bounds = array<i64: 1, 8, 128>}]} {
    %c0_i32 = arith.constant 0 : i32
    %0 = arith.cmpi eq, %arg1, %c0_i32 : i32
    %1 = arith.extui %0 : i1 to i32
    %c0_i32_0 = arith.constant 0 : i32
    %2 = arith.cmpi ne, %1, %c0_i32_0 : i32
    scf.if %2 {
      %cst_77 = arith.constant 0.000000e+00 : f32
      %131 = vector.broadcast %cst_77 : f32 to vector<16x8xf32>
      %c0_78 = arith.constant 0 : index
      %c0_79 = arith.constant 0 : index
      %132 = vector.load %arg21[%c0_78, %c0_79] : memref<16x8xf32, #tpu.memory_space<vmem>>, vector<16x8xf32>
      tpu.vector_store %arg21[%c0_78, %c0_79], %131 {strides = array<i32>} : memref<16x8xf32, #tpu.memory_space<vmem>>, vector<16x8xf32>,
      %cst_80 = arith.constant 0.000000e+00 : f32
      %133 = vector.broadcast %cst_80 : f32 to vector<8x8xf32>
      %c0_81 = arith.constant 0 : index
      %c0_82 = arith.constant 0 : index
      %134 = vector.load %arg22[%c0_81, %c0_82] : memref<136x8xf32, #tpu.memory_space<vmem>>, vector<8x8xf32>
      tpu.vector_store %arg22[%c0_81, %c0_82], %133 {strides = array<i32>} : memref<136x8xf32, #tpu.memory_space<vmem>>, vector<8x8xf32>,
    } else {
    }
    %c0 = arith.constant 0 : index
    %c0_1 = arith.constant 0 : index
    %c0_2 = arith.constant 0 : index
    %3 = vector.load %arg2[%c0, %c0_1, %c0_2] : memref<1x128x4xf32, #tpu.memory_space<vmem>>, vector<1x128x4xf32>
    %4 = vector.shape_cast %3 : vector<1x128x4xf32> to vector<128x4xf32>
    %c0_3 = arith.constant 0 : index
    %c0_4 = arith.constant 0 : index
    %5 = vector.load %arg3[%c0_3, %c0_4] : memref<4x8xf32, #tpu.memory_space<vmem>>, vector<4x8xf32>
    %cst = arith.constant dense<0.000000e+00> : vector<128x8xf32>
    %6 = tpu.matmul %4, %5, %cst {dimension_numbers = #tpu.dot_dimension_numbers<[1], [0], [0], [1], [0, 0, 1, 1], [], []>} : vector<128x4xf32>, vector<4x8xf32>, vector<128x8xf32> -> vector<128x8xf32>
    %c0_5 = arith.constant 0 : index
    %c0_6 = arith.constant 0 : index
    %7 = vector.load %arg4[%c0_5, %c0_6] : memref<4x8xf32, #tpu.memory_space<vmem>>, vector<4x8xf32>
    %cst_7 = arith.constant dense<0.000000e+00> : vector<128x8xf32>
    %8 = tpu.matmul %4, %7, %cst_7 {dimension_numbers = #tpu.dot_dimension_numbers<[1], [0], [0], [1], [0, 0, 1, 1], [], []>} : vector<128x4xf32>, vector<4x8xf32>, vector<128x8xf32> -> vector<128x8xf32>
    %c8 = arith.constant 8 : index
    %c0_8 = arith.constant 0 : index
    %9 = vector.load %arg22[%c8, %c0_8] : memref<136x8xf32, #tpu.memory_space<vmem>>, vector<128x8xf32>
    tpu.vector_store %arg22[%c8, %c0_8], %6 {strides = array<i32>} : memref<136x8xf32, #tpu.memory_space<vmem>>, vector<128x8xf32>,
    %c0_9 = arith.constant 0 : index
    %c0_10 = arith.constant 0 : index
    %10 = vector.load %arg5[%c0_9, %c0_10] : memref<4x8xf32, #tpu.memory_space<vmem>>, vector<4x8xf32>
    %c5 = arith.constant 5 : index
    %c0_11 = arith.constant 0 : index
    %11 = vector.load %arg22[%c5, %c0_11] : memref<136x8xf32, #tpu.memory_space<vmem>>, vector<128x8xf32>
    %12 = vector.extract_strided_slice %10 {offsets = [0, 0], sizes = [1, 8], strides = [1, 1]} : vector<4x8xf32> to vector<1x8xf32>
    %13 = vector.broadcast %12 : vector<1x8xf32> to vector<128x8xf32>
    %14 = arith.mulf %11, %13 : vector<128x8xf32>
    %c6 = arith.constant 6 : index
    %c0_12 = arith.constant 0 : index
    %15 = vector.load %arg22[%c6, %c0_12] : memref<136x8xf32, #tpu.memory_space<vmem>>, vector<128x8xf32>
    %16 = vector.extract_strided_slice %10 {offsets = [1, 0], sizes = [1, 8], strides = [1, 1]} : vector<4x8xf32> to vector<1x8xf32>
    %17 = vector.broadcast %16 : vector<1x8xf32> to vector<128x8xf32>
    %18 = arith.mulf %15, %17 : vector<128x8xf32>
    %19 = arith.addf %14, %18 : vector<128x8xf32>
    %c7 = arith.constant 7 : index
    %c0_13 = arith.constant 0 : index
    %20 = vector.load %arg22[%c7, %c0_13] : memref<136x8xf32, #tpu.memory_space<vmem>>, vector<128x8xf32>
    %21 = vector.extract_strided_slice %10 {offsets = [2, 0], sizes = [1, 8], strides = [1, 1]} : vector<4x8xf32> to vector<1x8xf32>
    %22 = vector.broadcast %21 : vector<1x8xf32> to vector<128x8xf32>
    %23 = arith.mulf %20, %22 : vector<128x8xf32>
    %24 = arith.addf %19, %23 : vector<128x8xf32>
    %c8_14 = arith.constant 8 : index
    %c0_15 = arith.constant 0 : index
    %25 = vector.load %arg22[%c8_14, %c0_15] : memref<136x8xf32, #tpu.memory_space<vmem>>, vector<128x8xf32>
    %26 = vector.extract_strided_slice %10 {offsets = [3, 0], sizes = [1, 8], strides = [1, 1]} : vector<4x8xf32> to vector<1x8xf32>
    %27 = vector.broadcast %26 : vector<1x8xf32> to vector<128x8xf32>
    %28 = arith.mulf %25, %27 : vector<128x8xf32>
    %29 = arith.addf %24, %28 : vector<128x8xf32>
    %30 = vector.extract_strided_slice %6 {offsets = [125, 0], sizes = [3, 8], strides = [1, 1]} : vector<128x8xf32> to vector<3x8xf32>
    %c5_16 = arith.constant 5 : index
    %c0_17 = arith.constant 0 : index
    %31 = vector.load %arg22[%c5_16, %c0_17] : memref<136x8xf32, #tpu.memory_space<vmem>>, vector<3x8xf32>
    tpu.vector_store %arg22[%c5_16, %c0_17], %30 {strides = array<i32>} : memref<136x8xf32, #tpu.memory_space<vmem>>, vector<3x8xf32>,
    %c0_18 = arith.constant 0 : index
    %c0_19 = arith.constant 0 : index
    %32 = vector.load %arg6[%c0_18, %c0_19] : memref<1x8xf32, #tpu.memory_space<vmem>>, vector<1x8xf32>
    %33 = vector.broadcast %32 : vector<1x8xf32> to vector<128x8xf32>
    %34 = arith.addf %29, %33 : vector<128x8xf32>
    %cst_20 = arith.constant 0.000000e+00 : f32
    %35 = vector.broadcast %cst_20 : f32 to vector<128x8xf32>
    %36 = arith.subf %35, %34 : vector<128x8xf32>
    %37 = math.exp %36 : vector<128x8xf32>
    %cst_21 = arith.constant 1.000000e+00 : f32
    %38 = vector.broadcast %cst_21 : f32 to vector<128x8xf32>
    %39 = arith.addf %38, %37 : vector<128x8xf32>
    %cst_22 = arith.constant 1.000000e+00 : f32
    %40 = vector.broadcast %cst_22 : f32 to vector<128x8xf32>
    %41 = arith.divf %40, %39 : vector<128x8xf32>
    %42 = arith.mulf %34, %41 : vector<128x8xf32>
    %c0_23 = arith.constant 0 : index
    %c0_24 = arith.constant 0 : index
    %43 = vector.load %arg7[%c0_23, %c0_24] : memref<8x8xf32, #tpu.memory_space<vmem>>, vector<8x8xf32>
    %cst_25 = arith.constant dense<0.000000e+00> : vector<128x8xf32>
    %44 = tpu.matmul %42, %43, %cst_25 {dimension_numbers = #tpu.dot_dimension_numbers<[1], [0], [0], [1], [0, 0, 1, 1], [], []>} : vector<128x8xf32>, vector<8x8xf32>, vector<128x8xf32> -> vector<128x8xf32>
    %c0_26 = arith.constant 0 : index
    %c0_27 = arith.constant 0 : index
    %45 = vector.load %arg8[%c0_26, %c0_27] : memref<1x8xf32, #tpu.memory_space<vmem>>, vector<1x8xf32>
    %46 = vector.broadcast %45 : vector<1x8xf32> to vector<128x8xf32>
    %47 = arith.addf %44, %46 : vector<128x8xf32>
    %cst_28 = arith.constant 0.000000e+00 : f32
    %48 = vector.broadcast %cst_28 : f32 to vector<128x8xf32>
    %49 = arith.maximumf %47, %48 : vector<128x8xf32>
    %50 = math.absf %47 : vector<128x8xf32>
    %cst_29 = arith.constant 0.000000e+00 : f32
    %51 = vector.broadcast %cst_29 : f32 to vector<128x8xf32>
    %52 = arith.subf %51, %50 : vector<128x8xf32>
    %53 = math.exp %52 : vector<128x8xf32>
    %54 = math.log1p %53 : vector<128x8xf32>
    %55 = arith.addf %49, %54 : vector<128x8xf32>
    %c0_30 = arith.constant 0 : index
    %c0_31 = arith.constant 0 : index
    %56 = vector.load %arg9[%c0_30, %c0_31] : memref<8x16xf32, #tpu.memory_space<vmem>>, vector<8x16xf32>
    %cst_32 = arith.constant dense<0.000000e+00> : vector<128x16xf32>
    %57 = tpu.matmul %42, %56, %cst_32 {dimension_numbers = #tpu.dot_dimension_numbers<[1], [0], [0], [1], [0, 0, 1, 1], [], []>} : vector<128x8xf32>, vector<8x16xf32>, vector<128x16xf32> -> vector<128x16xf32>
    %c0_33 = arith.constant 0 : index
    %c0_34 = arith.constant 0 : index
    %58 = vector.load %arg10[%c0_33, %c0_34] : memref<8x16xf32, #tpu.memory_space<vmem>>, vector<8x16xf32>
    %cst_35 = arith.constant dense<0.000000e+00> : vector<128x16xf32>
    %59 = tpu.matmul %42, %58, %cst_35 {dimension_numbers = #tpu.dot_dimension_numbers<[1], [0], [0], [1], [0, 0, 1, 1], [], []>} : vector<128x8xf32>, vector<8x16xf32>, vector<128x16xf32> -> vector<128x16xf32>
    %c0_36 = arith.constant 0 : index
    %c0_37 = arith.constant 0 : index
    %60 = vector.load %arg11[%c0_36, %c0_37] : memref<16x8xf32, #tpu.memory_space<vmem>>, vector<16x8xf32>
    %61 = math.exp %60 : vector<16x8xf32>
    %cst_38 = arith.constant 0.000000e+00 : f32
    %62 = vector.broadcast %cst_38 : f32 to vector<16x8xf32>
    %63 = arith.subf %62, %61 : vector<16x8xf32>
    %64 = arith.mulf %55, %42 : vector<128x8xf32>
    %65 = vector.shape_cast %55 : vector<128x8xf32> to vector<128x1x8xf32>
    %66 = vector.shape_cast %63 : vector<16x8xf32> to vector<1x16x8xf32>
    %67 = vector.broadcast %65 : vector<128x1x8xf32> to vector<128x16x8xf32>
    %68 = vector.broadcast %66 : vector<1x16x8xf32> to vector<128x16x8xf32>
    %69 = arith.mulf %67, %68 : vector<128x16x8xf32>
    %70 = math.exp %69 : vector<128x16x8xf32>
    %c0_39 = arith.constant 0 : index
    %c0_40 = arith.constant 0 : index
    %c0_41 = arith.constant 0 : index
    %71 = vector.load %arg17[%c0_39, %c0_40, %c0_41] : memref<128x16x8xf32, #tpu.memory_space<vmem>>, vector<128x16x8xf32>
    tpu.vector_store %arg17[%c0_39, %c0_40, %c0_41], %70 {strides = array<i32>} : memref<128x16x8xf32, #tpu.memory_space<vmem>>, vector<128x16x8xf32>,
    %72 = vector.shape_cast %64 : vector<128x8xf32> to vector<128x1x8xf32>
    %73 = vector.shape_cast %57 : vector<128x16xf32> to vector<128x16x1xf32>
    %74 = vector.broadcast %72 : vector<128x1x8xf32> to vector<128x16x8xf32>
    %75 = vector.broadcast %73 : vector<128x16x1xf32> to vector<128x16x8xf32>
    %76 = arith.mulf %74, %75 : vector<128x16x8xf32>
    %c0_42 = arith.constant 0 : index
    %c0_43 = arith.constant 0 : index
    %c0_44 = arith.constant 0 : index
    %77 = vector.load %arg18[%c0_42, %c0_43, %c0_44] : memref<128x16x8xf32, #tpu.memory_space<vmem>>, vector<128x16x8xf32>
    tpu.vector_store %arg18[%c0_42, %c0_43, %c0_44], %76 {strides = array<i32>} : memref<128x16x8xf32, #tpu.memory_space<vmem>>, vector<128x16x8xf32>,
    %78 = vector.shape_cast %59 : vector<128x16xf32> to vector<128x16x1xf32>
    %79 = vector.shape_cast %78 : vector<128x16x1xf32> to vector<128x16x1xf32>
    %80 = vector.broadcast %79 : vector<128x16x1xf32> to vector<128x16x8xf32>
    %c0_45 = arith.constant 0 : index
    %c0_46 = arith.constant 0 : index
    %c0_47 = arith.constant 0 : index
    %81 = vector.load %arg19[%c0_45, %c0_46, %c0_47] : memref<128x16x8xf32, #tpu.memory_space<vmem>>, vector<128x16x8xf32>
    tpu.vector_store %arg19[%c0_45, %c0_46, %c0_47], %80 {strides = array<i32>} : memref<128x16x8xf32, #tpu.memory_space<vmem>>, vector<128x16x8xf32>,
    %c0_48 = arith.constant 0 : index
    %c0_49 = arith.constant 0 : index
    %82 = vector.load %arg21[%c0_48, %c0_49] : memref<16x8xf32, #tpu.memory_space<vmem>>, vector<16x8xf32>
    %c0_i32_50 = arith.constant 0 : i32
    %c16_i32 = arith.constant 16 : i32
    %83 = arith.addi %c0_i32_50, %c16_i32 : i32
    %c1_i32 = arith.constant 1 : i32
    %84 = scf.for %arg23 = %c0_i32_50 to %83 step %c1_i32 iter_args(%arg24 = %82) -> (vector<16x8xf32>)  : i32 {
      %c8_i32 = arith.constant 8 : i32
      %131 = arith.muli %arg23, %c8_i32 : i32
      %132 = tpu.assume_multiple %131, 8 : i32
      %c0_i32_77 = arith.constant 0 : i32
      %133 = arith.addi %132, %c0_i32_77 : i32
      %134 = arith.index_cast %133 : i32 to index
      %c0_78 = arith.constant 0 : index
      %c0_79 = arith.constant 0 : index
      %135 = vector.load %arg17[%134, %c0_78, %c0_79] : memref<128x16x8xf32, #tpu.memory_space<vmem>>, vector<1x16x8xf32>
      %136 = vector.shape_cast %135 : vector<1x16x8xf32> to vector<16x8xf32>
      %137 = arith.mulf %136, %arg24 : vector<16x8xf32>
      %138 = arith.index_cast %133 : i32 to index
      %c0_80 = arith.constant 0 : index
      %c0_81 = arith.constant 0 : index
      %139 = vector.load %arg18[%138, %c0_80, %c0_81] : memref<128x16x8xf32, #tpu.memory_space<vmem>>, vector<1x16x8xf32>
      %140 = vector.shape_cast %139 : vector<1x16x8xf32> to vector<16x8xf32>
      %141 = arith.addf %137, %140 : vector<16x8xf32>
      %142 = arith.index_cast %133 : i32 to index
      %c0_82 = arith.constant 0 : index
      %c0_83 = arith.constant 0 : index
      %143 = vector.load %arg19[%142, %c0_82, %c0_83] : memref<128x16x8xf32, #tpu.memory_space<vmem>>, vector<1x16x8xf32>
      %144 = vector.shape_cast %143 : vector<1x16x8xf32> to vector<16x8xf32>
      %145 = arith.mulf %141, %144 : vector<16x8xf32>
      %cst_84 = arith.constant dense<0.000000e+00> : vector<8xf32>
      %146 = vector.multi_reduction <add>, %145, %cst_84 [0] : vector<16x8xf32> to vector<8xf32>
      %147 = vector.shape_cast %146 : vector<8xf32> to vector<1x8xf32>
      %148 = arith.index_cast %133 : i32 to index
      %c0_85 = arith.constant 0 : index
      %149 = vector.load %arg20[%148, %c0_85] : memref<128x8xf32, #tpu.memory_space<vmem>>, vector<1x8xf32>
      tpu.vector_store %arg20[%148, %c0_85], %147 {strides = array<i32>} : memref<128x8xf32, #tpu.memory_space<vmem>>, vector<1x8xf32>,
      %c1_i32_86 = arith.constant 1 : i32
      %150 = arith.addi %132, %c1_i32_86 : i32
      %151 = arith.index_cast %150 : i32 to index
      %c0_87 = arith.constant 0 : index
      %c0_88 = arith.constant 0 : index
      %152 = vector.load %arg17[%151, %c0_87, %c0_88] : memref<128x16x8xf32, #tpu.memory_space<vmem>>, vector<1x16x8xf32>
      %153 = vector.shape_cast %152 : vector<1x16x8xf32> to vector<16x8xf32>
      %154 = arith.mulf %153, %141 : vector<16x8xf32>
      %155 = arith.index_cast %150 : i32 to index
      %c0_89 = arith.constant 0 : index
      %c0_90 = arith.constant 0 : index
      %156 = vector.load %arg18[%155, %c0_89, %c0_90] : memref<128x16x8xf32, #tpu.memory_space<vmem>>, vector<1x16x8xf32>
      %157 = vector.shape_cast %156 : vector<1x16x8xf32> to vector<16x8xf32>
      %158 = arith.addf %154, %157 : vector<16x8xf32>
      %159 = arith.index_cast %150 : i32 to index
      %c0_91 = arith.constant 0 : index
      %c0_92 = arith.constant 0 : index
      %160 = vector.load %arg19[%159, %c0_91, %c0_92] : memref<128x16x8xf32, #tpu.memory_space<vmem>>, vector<1x16x8xf32>
      %161 = vector.shape_cast %160 : vector<1x16x8xf32> to vector<16x8xf32>
      %162 = arith.mulf %158, %161 : vector<16x8xf32>
      %cst_93 = arith.constant dense<0.000000e+00> : vector<8xf32>
      %163 = vector.multi_reduction <add>, %162, %cst_93 [0] : vector<16x8xf32> to vector<8xf32>
      %164 = vector.shape_cast %163 : vector<8xf32> to vector<1x8xf32>
      %165 = arith.index_cast %150 : i32 to index
      %c0_94 = arith.constant 0 : index
      %166 = vector.load %arg20[%165, %c0_94] : memref<128x8xf32, #tpu.memory_space<vmem>>, vector<1x8xf32>
      tpu.vector_store %arg20[%165, %c0_94], %164 {strides = array<i32>} : memref<128x8xf32, #tpu.memory_space<vmem>>, vector<1x8xf32>,
      %c2_i32 = arith.constant 2 : i32
      %167 = arith.addi %132, %c2_i32 : i32
      %168 = arith.index_cast %167 : i32 to index
      %c0_95 = arith.constant 0 : index
      %c0_96 = arith.constant 0 : index
      %169 = vector.load %arg17[%168, %c0_95, %c0_96] : memref<128x16x8xf32, #tpu.memory_space<vmem>>, vector<1x16x8xf32>
      %170 = vector.shape_cast %169 : vector<1x16x8xf32> to vector<16x8xf32>
      %171 = arith.mulf %170, %158 : vector<16x8xf32>
      %172 = arith.index_cast %167 : i32 to index
      %c0_97 = arith.constant 0 : index
      %c0_98 = arith.constant 0 : index
      %173 = vector.load %arg18[%172, %c0_97, %c0_98] : memref<128x16x8xf32, #tpu.memory_space<vmem>>, vector<1x16x8xf32>
      %174 = vector.shape_cast %173 : vector<1x16x8xf32> to vector<16x8xf32>
      %175 = arith.addf %171, %174 : vector<16x8xf32>
      %176 = arith.index_cast %167 : i32 to index
      %c0_99 = arith.constant 0 : index
      %c0_100 = arith.constant 0 : index
      %177 = vector.load %arg19[%176, %c0_99, %c0_100] : memref<128x16x8xf32, #tpu.memory_space<vmem>>, vector<1x16x8xf32>
      %178 = vector.shape_cast %177 : vector<1x16x8xf32> to vector<16x8xf32>
      %179 = arith.mulf %175, %178 : vector<16x8xf32>
      %cst_101 = arith.constant dense<0.000000e+00> : vector<8xf32>
      %180 = vector.multi_reduction <add>, %179, %cst_101 [0] : vector<16x8xf32> to vector<8xf32>
      %181 = vector.shape_cast %180 : vector<8xf32> to vector<1x8xf32>
      %182 = arith.index_cast %167 : i32 to index
      %c0_102 = arith.constant 0 : index
      %183 = vector.load %arg20[%182, %c0_102] : memref<128x8xf32, #tpu.memory_space<vmem>>, vector<1x8xf32>
      tpu.vector_store %arg20[%182, %c0_102], %181 {strides = array<i32>} : memref<128x8xf32, #tpu.memory_space<vmem>>, vector<1x8xf32>,
      %c3_i32 = arith.constant 3 : i32
      %184 = arith.addi %132, %c3_i32 : i32
      %185 = arith.index_cast %184 : i32 to index
      %c0_103 = arith.constant 0 : index
      %c0_104 = arith.constant 0 : index
      %186 = vector.load %arg17[%185, %c0_103, %c0_104] : memref<128x16x8xf32, #tpu.memory_space<vmem>>, vector<1x16x8xf32>
      %187 = vector.shape_cast %186 : vector<1x16x8xf32> to vector<16x8xf32>
      %188 = arith.mulf %187, %175 : vector<16x8xf32>
      %189 = arith.index_cast %184 : i32 to index
      %c0_105 = arith.constant 0 : index
      %c0_106 = arith.constant 0 : index
      %190 = vector.load %arg18[%189, %c0_105, %c0_106] : memref<128x16x8xf32, #tpu.memory_space<vmem>>, vector<1x16x8xf32>
      %191 = vector.shape_cast %190 : vector<1x16x8xf32> to vector<16x8xf32>
      %192 = arith.addf %188, %191 : vector<16x8xf32>
      %193 = arith.index_cast %184 : i32 to index
      %c0_107 = arith.constant 0 : index
      %c0_108 = arith.constant 0 : index
      %194 = vector.load %arg19[%193, %c0_107, %c0_108] : memref<128x16x8xf32, #tpu.memory_space<vmem>>, vector<1x16x8xf32>
      %195 = vector.shape_cast %194 : vector<1x16x8xf32> to vector<16x8xf32>
      %196 = arith.mulf %192, %195 : vector<16x8xf32>
      %cst_109 = arith.constant dense<0.000000e+00> : vector<8xf32>
      %197 = vector.multi_reduction <add>, %196, %cst_109 [0] : vector<16x8xf32> to vector<8xf32>
      %198 = vector.shape_cast %197 : vector<8xf32> to vector<1x8xf32>
      %199 = arith.index_cast %184 : i32 to index
      %c0_110 = arith.constant 0 : index
      %200 = vector.load %arg20[%199, %c0_110] : memref<128x8xf32, #tpu.memory_space<vmem>>, vector<1x8xf32>
      tpu.vector_store %arg20[%199, %c0_110], %198 {strides = array<i32>} : memref<128x8xf32, #tpu.memory_space<vmem>>, vector<1x8xf32>,
      %c4_i32 = arith.constant 4 : i32
      %201 = arith.addi %132, %c4_i32 : i32
      %202 = arith.index_cast %201 : i32 to index
      %c0_111 = arith.constant 0 : index
      %c0_112 = arith.constant 0 : index
      %203 = vector.load %arg17[%202, %c0_111, %c0_112] : memref<128x16x8xf32, #tpu.memory_space<vmem>>, vector<1x16x8xf32>
      %204 = vector.shape_cast %203 : vector<1x16x8xf32> to vector<16x8xf32>
      %205 = arith.mulf %204, %192 : vector<16x8xf32>
      %206 = arith.index_cast %201 : i32 to index
      %c0_113 = arith.constant 0 : index
      %c0_114 = arith.constant 0 : index
      %207 = vector.load %arg18[%206, %c0_113, %c0_114] : memref<128x16x8xf32, #tpu.memory_space<vmem>>, vector<1x16x8xf32>
      %208 = vector.shape_cast %207 : vector<1x16x8xf32> to vector<16x8xf32>
      %209 = arith.addf %205, %208 : vector<16x8xf32>
      %210 = arith.index_cast %201 : i32 to index
      %c0_115 = arith.constant 0 : index
      %c0_116 = arith.constant 0 : index
      %211 = vector.load %arg19[%210, %c0_115, %c0_116] : memref<128x16x8xf32, #tpu.memory_space<vmem>>, vector<1x16x8xf32>
      %212 = vector.shape_cast %211 : vector<1x16x8xf32> to vector<16x8xf32>
      %213 = arith.mulf %209, %212 : vector<16x8xf32>
      %cst_117 = arith.constant dense<0.000000e+00> : vector<8xf32>
      %214 = vector.multi_reduction <add>, %213, %cst_117 [0] : vector<16x8xf32> to vector<8xf32>
      %215 = vector.shape_cast %214 : vector<8xf32> to vector<1x8xf32>
      %216 = arith.index_cast %201 : i32 to index
      %c0_118 = arith.constant 0 : index
      %217 = vector.load %arg20[%216, %c0_118] : memref<128x8xf32, #tpu.memory_space<vmem>>, vector<1x8xf32>
      tpu.vector_store %arg20[%216, %c0_118], %215 {strides = array<i32>} : memref<128x8xf32, #tpu.memory_space<vmem>>, vector<1x8xf32>,
      %c5_i32 = arith.constant 5 : i32
      %218 = arith.addi %132, %c5_i32 : i32
      %219 = arith.index_cast %218 : i32 to index
      %c0_119 = arith.constant 0 : index
      %c0_120 = arith.constant 0 : index
      %220 = vector.load %arg17[%219, %c0_119, %c0_120] : memref<128x16x8xf32, #tpu.memory_space<vmem>>, vector<1x16x8xf32>
      %221 = vector.shape_cast %220 : vector<1x16x8xf32> to vector<16x8xf32>
      %222 = arith.mulf %221, %209 : vector<16x8xf32>
      %223 = arith.index_cast %218 : i32 to index
      %c0_121 = arith.constant 0 : index
      %c0_122 = arith.constant 0 : index
      %224 = vector.load %arg18[%223, %c0_121, %c0_122] : memref<128x16x8xf32, #tpu.memory_space<vmem>>, vector<1x16x8xf32>
      %225 = vector.shape_cast %224 : vector<1x16x8xf32> to vector<16x8xf32>
      %226 = arith.addf %222, %225 : vector<16x8xf32>
      %227 = arith.index_cast %218 : i32 to index
      %c0_123 = arith.constant 0 : index
      %c0_124 = arith.constant 0 : index
      %228 = vector.load %arg19[%227, %c0_123, %c0_124] : memref<128x16x8xf32, #tpu.memory_space<vmem>>, vector<1x16x8xf32>
      %229 = vector.shape_cast %228 : vector<1x16x8xf32> to vector<16x8xf32>
      %230 = arith.mulf %226, %229 : vector<16x8xf32>
      %cst_125 = arith.constant dense<0.000000e+00> : vector<8xf32>
      %231 = vector.multi_reduction <add>, %230, %cst_125 [0] : vector<16x8xf32> to vector<8xf32>
      %232 = vector.shape_cast %231 : vector<8xf32> to vector<1x8xf32>
      %233 = arith.index_cast %218 : i32 to index
      %c0_126 = arith.constant 0 : index
      %234 = vector.load %arg20[%233, %c0_126] : memref<128x8xf32, #tpu.memory_space<vmem>>, vector<1x8xf32>
      tpu.vector_store %arg20[%233, %c0_126], %232 {strides = array<i32>} : memref<128x8xf32, #tpu.memory_space<vmem>>, vector<1x8xf32>,
      %c6_i32 = arith.constant 6 : i32
      %235 = arith.addi %132, %c6_i32 : i32
      %236 = arith.index_cast %235 : i32 to index
      %c0_127 = arith.constant 0 : index
      %c0_128 = arith.constant 0 : index
      %237 = vector.load %arg17[%236, %c0_127, %c0_128] : memref<128x16x8xf32, #tpu.memory_space<vmem>>, vector<1x16x8xf32>
      %238 = vector.shape_cast %237 : vector<1x16x8xf32> to vector<16x8xf32>
      %239 = arith.mulf %238, %226 : vector<16x8xf32>
      %240 = arith.index_cast %235 : i32 to index
      %c0_129 = arith.constant 0 : index
      %c0_130 = arith.constant 0 : index
      %241 = vector.load %arg18[%240, %c0_129, %c0_130] : memref<128x16x8xf32, #tpu.memory_space<vmem>>, vector<1x16x8xf32>
      %242 = vector.shape_cast %241 : vector<1x16x8xf32> to vector<16x8xf32>
      %243 = arith.addf %239, %242 : vector<16x8xf32>
      %244 = arith.index_cast %235 : i32 to index
      %c0_131 = arith.constant 0 : index
      %c0_132 = arith.constant 0 : index
      %245 = vector.load %arg19[%244, %c0_131, %c0_132] : memref<128x16x8xf32, #tpu.memory_space<vmem>>, vector<1x16x8xf32>
      %246 = vector.shape_cast %245 : vector<1x16x8xf32> to vector<16x8xf32>
      %247 = arith.mulf %243, %246 : vector<16x8xf32>
      %cst_133 = arith.constant dense<0.000000e+00> : vector<8xf32>
      %248 = vector.multi_reduction <add>, %247, %cst_133 [0] : vector<16x8xf32> to vector<8xf32>
      %249 = vector.shape_cast %248 : vector<8xf32> to vector<1x8xf32>
      %250 = arith.index_cast %235 : i32 to index
      %c0_134 = arith.constant 0 : index
      %251 = vector.load %arg20[%250, %c0_134] : memref<128x8xf32, #tpu.memory_space<vmem>>, vector<1x8xf32>
      tpu.vector_store %arg20[%250, %c0_134], %249 {strides = array<i32>} : memref<128x8xf32, #tpu.memory_space<vmem>>, vector<1x8xf32>,
      %c7_i32 = arith.constant 7 : i32
      %252 = arith.addi %132, %c7_i32 : i32
      %253 = arith.index_cast %252 : i32 to index
      %c0_135 = arith.constant 0 : index
      %c0_136 = arith.constant 0 : index
      %254 = vector.load %arg17[%253, %c0_135, %c0_136] : memref<128x16x8xf32, #tpu.memory_space<vmem>>, vector<1x16x8xf32>
      %255 = vector.shape_cast %254 : vector<1x16x8xf32> to vector<16x8xf32>
      %256 = arith.mulf %255, %243 : vector<16x8xf32>
      %257 = arith.index_cast %252 : i32 to index
      %c0_137 = arith.constant 0 : index
      %c0_138 = arith.constant 0 : index
      %258 = vector.load %arg18[%257, %c0_137, %c0_138] : memref<128x16x8xf32, #tpu.memory_space<vmem>>, vector<1x16x8xf32>
      %259 = vector.shape_cast %258 : vector<1x16x8xf32> to vector<16x8xf32>
      %260 = arith.addf %256, %259 : vector<16x8xf32>
      %261 = arith.index_cast %252 : i32 to index
      %c0_139 = arith.constant 0 : index
      %c0_140 = arith.constant 0 : index
      %262 = vector.load %arg19[%261, %c0_139, %c0_140] : memref<128x16x8xf32, #tpu.memory_space<vmem>>, vector<1x16x8xf32>
      %263 = vector.shape_cast %262 : vector<1x16x8xf32> to vector<16x8xf32>
      %264 = arith.mulf %260, %263 : vector<16x8xf32>
      %cst_141 = arith.constant dense<0.000000e+00> : vector<8xf32>
      %265 = vector.multi_reduction <add>, %264, %cst_141 [0] : vector<16x8xf32> to vector<8xf32>
      %266 = vector.shape_cast %265 : vector<8xf32> to vector<1x8xf32>
      %267 = arith.index_cast %252 : i32 to index
      %c0_142 = arith.constant 0 : index
      %268 = vector.load %arg20[%267, %c0_142] : memref<128x8xf32, #tpu.memory_space<vmem>>, vector<1x8xf32>
      tpu.vector_store %arg20[%267, %c0_142], %266 {strides = array<i32>} : memref<128x8xf32, #tpu.memory_space<vmem>>, vector<1x8xf32>,
      scf.yield %260 : vector<16x8xf32>
    }
    %c16_i32_51 = arith.constant 16 : i32
    %c0_52 = arith.constant 0 : index
    %c0_53 = arith.constant 0 : index
    %85 = vector.load %arg21[%c0_52, %c0_53] : memref<16x8xf32, #tpu.memory_space<vmem>>, vector<16x8xf32>
    tpu.vector_store %arg21[%c0_52, %c0_53], %84 {strides = array<i32>} : memref<16x8xf32, #tpu.memory_space<vmem>>, vector<16x8xf32>,
    %c0_54 = arith.constant 0 : index
    %c0_55 = arith.constant 0 : index
    %86 = vector.load %arg20[%c0_54, %c0_55] : memref<128x8xf32, #tpu.memory_space<vmem>>, vector<128x8xf32>
    %c0_56 = arith.constant 0 : index
    %c0_57 = arith.constant 0 : index
    %87 = vector.load %arg12[%c0_56, %c0_57] : memref<1x8xf32, #tpu.memory_space<vmem>>, vector<1x8xf32>
    %88 = vector.broadcast %87 : vector<1x8xf32> to vector<128x8xf32>
    %89 = arith.mulf %42, %88 : vector<128x8xf32>
    %90 = arith.addf %86, %89 : vector<128x8xf32>
    %cst_58 = arith.constant 0.000000e+00 : f32
    %91 = vector.broadcast %cst_58 : f32 to vector<128x8xf32>
    %92 = arith.subf %91, %8 : vector<128x8xf32>
    %93 = math.exp %92 : vector<128x8xf32>
    %cst_59 = arith.constant 1.000000e+00 : f32
    %94 = vector.broadcast %cst_59 : f32 to vector<128x8xf32>
    %95 = arith.addf %94, %93 : vector<128x8xf32>
    %cst_60 = arith.constant 1.000000e+00 : f32
    %96 = vector.broadcast %cst_60 : f32 to vector<128x8xf32>
    %97 = arith.divf %96, %95 : vector<128x8xf32>
    %98 = arith.mulf %8, %97 : vector<128x8xf32>
    %99 = arith.mulf %90, %98 : vector<128x8xf32>
    %c0_61 = arith.constant 0 : index
    %c0_62 = arith.constant 0 : index
    %100 = vector.load %arg13[%c0_61, %c0_62] : memref<8x8xf32, #tpu.memory_space<vmem>>, vector<8x8xf32>
    %cst_63 = arith.constant dense<0.000000e+00> : vector<8x128xf32>
    %101 = tpu.matmul %100, %99, %cst_63 {dimension_numbers = #tpu.dot_dimension_numbers<[1], [1], [0], [0], [0, 0, 1, 0], [], []>} : vector<8x8xf32>, vector<128x8xf32>, vector<8x128xf32> -> vector<8x128xf32>
    %cst_64 = arith.constant dense<0.000000e+00> : vector<128xf32>
    %102 = vector.multi_reduction <add>, %101, %cst_64 [0] : vector<8x128xf32> to vector<128xf32>
    %103 = vector.shape_cast %102 : vector<128xf32> to vector<1x128xf32>
    %cst_65 = arith.constant 8.000000e+00 : f32
    %104 = vector.broadcast %cst_65 : f32 to vector<1x128xf32>
    %105 = arith.divf %103, %104 : vector<1x128xf32>
    %106 = vector.broadcast %105 : vector<1x128xf32> to vector<8x128xf32>
    %107 = arith.subf %101, %106 : vector<8x128xf32>
    %108 = arith.mulf %107, %107 : vector<8x128xf32>
    %cst_66 = arith.constant dense<0.000000e+00> : vector<128xf32>
    %109 = vector.multi_reduction <add>, %108, %cst_66 [0] : vector<8x128xf32> to vector<128xf32>
    %110 = vector.shape_cast %109 : vector<128xf32> to vector<1x128xf32>
    %cst_67 = arith.constant 8.000000e+00 : f32
    %111 = vector.broadcast %cst_67 : f32 to vector<1x128xf32>
    %112 = arith.divf %110, %111 : vector<1x128xf32>
    %113 = vector.broadcast %105 : vector<1x128xf32> to vector<8x128xf32>
    %114 = arith.subf %101, %113 : vector<8x128xf32>
    %cst_68 = arith.constant 9.99999974E-6 : f32
    %115 = vector.broadcast %cst_68 : f32 to vector<1x128xf32>
    %116 = arith.addf %112, %115 : vector<1x128xf32>
    %117 = math.rsqrt %116 : vector<1x128xf32>
    %118 = vector.broadcast %117 : vector<1x128xf32> to vector<8x128xf32>
    %119 = arith.mulf %114, %118 : vector<8x128xf32>
    %c0_69 = arith.constant 0 : index
    %c0_70 = arith.constant 0 : index
    %120 = vector.load %arg14[%c0_69, %c0_70] : memref<8x1xf32, #tpu.memory_space<vmem>>, vector<8x1xf32>
    %121 = vector.broadcast %120 : vector<8x1xf32> to vector<8x128xf32>
    %122 = arith.mulf %119, %121 : vector<8x128xf32>
    %c0_71 = arith.constant 0 : index
    %c0_72 = arith.constant 0 : index
    %123 = vector.load %arg15[%c0_71, %c0_72] : memref<8x1xf32, #tpu.memory_space<vmem>>, vector<8x1xf32>
    %124 = vector.broadcast %123 : vector<8x1xf32> to vector<8x128xf32>
    %125 = arith.addf %122, %124 : vector<8x128xf32>
    %cst_73 = arith.constant 0.000000e+00 : f32
    %126 = vector.broadcast %cst_73 : f32 to vector<8x128xf32>
    %127 = arith.maximumf %125, %126 : vector<8x128xf32>
    %c0_74 = arith.constant 0 : index
    %c0_75 = arith.constant 0 : index
    %c0_76 = arith.constant 0 : index
    %128 = vector.load %arg16[%c0_74, %c0_75, %c0_76] : memref<1x8x128xf32, #tpu.memory_space<vmem>>, vector<1x8x128xf32>
    %129 = vector.shape_cast %128 : vector<1x8x128xf32> to vector<8x128xf32>
    %130 = vector.shape_cast %127 : vector<8x128xf32> to vector<1x8x128xf32>
    tpu.vector_store %arg16[%c0_74, %c0_75, %c0_76], %130 {strides = array<i32>} : memref<1x8x128xf32, #tpu.memory_space<vmem>>, vector<1x8x128xf32>,
    return
  }
  func.func @transform_0(%arg0: i32, %arg1: i32) -> (i32, i32, i32) {
    %c0_i32 = arith.constant 0 : i32
    %c0_i32_0 = arith.constant 0 : i32
    return %arg0, %arg1, %c0_i32 : i32, i32, i32
  }
  func.func @transform_1(%arg0: i32, %arg1: i32) -> (i32, i32) {
    %c0_i32 = arith.constant 0 : i32
    %c0_i32_0 = arith.constant 0 : i32
    %c0_i32_1 = arith.constant 0 : i32
    return %c0_i32, %c0_i32_0 : i32, i32
  }
  func.func @transform_2(%arg0: i32, %arg1: i32) -> (i32, i32) {
    %c0_i32 = arith.constant 0 : i32
    %c0_i32_0 = arith.constant 0 : i32
    %c0_i32_1 = arith.constant 0 : i32
    return %c0_i32, %c0_i32_0 : i32, i32
  }
  func.func @transform_3(%arg0: i32, %arg1: i32) -> (i32, i32) {
    %c0_i32 = arith.constant 0 : i32
    %c0_i32_0 = arith.constant 0 : i32
    %c0_i32_1 = arith.constant 0 : i32
    return %c0_i32, %c0_i32_0 : i32, i32
  }
  func.func @transform_4(%arg0: i32, %arg1: i32) -> (i32, i32) {
    %c0_i32 = arith.constant 0 : i32
    %c0_i32_0 = arith.constant 0 : i32
    %c0_i32_1 = arith.constant 0 : i32
    return %c0_i32, %c0_i32_0 : i32, i32
  }
  func.func @transform_5(%arg0: i32, %arg1: i32) -> (i32, i32) {
    %c0_i32 = arith.constant 0 : i32
    %c0_i32_0 = arith.constant 0 : i32
    %c0_i32_1 = arith.constant 0 : i32
    return %c0_i32, %c0_i32_0 : i32, i32
  }
  func.func @transform_6(%arg0: i32, %arg1: i32) -> (i32, i32) {
    %c0_i32 = arith.constant 0 : i32
    %c0_i32_0 = arith.constant 0 : i32
    %c0_i32_1 = arith.constant 0 : i32
    return %c0_i32, %c0_i32_0 : i32, i32
  }
  func.func @transform_7(%arg0: i32, %arg1: i32) -> (i32, i32) {
    %c0_i32 = arith.constant 0 : i32
    %c0_i32_0 = arith.constant 0 : i32
    %c0_i32_1 = arith.constant 0 : i32
    return %c0_i32, %c0_i32_0 : i32, i32
  }
  func.func @transform_8(%arg0: i32, %arg1: i32) -> (i32, i32) {
    %c0_i32 = arith.constant 0 : i32
    %c0_i32_0 = arith.constant 0 : i32
    %c0_i32_1 = arith.constant 0 : i32
    return %c0_i32, %c0_i32_0 : i32, i32
  }
  func.func @transform_9(%arg0: i32, %arg1: i32) -> (i32, i32) {
    %c0_i32 = arith.constant 0 : i32
    %c0_i32_0 = arith.constant 0 : i32
    %c0_i32_1 = arith.constant 0 : i32
    return %c0_i32, %c0_i32_0 : i32, i32
  }
  func.func @transform_10(%arg0: i32, %arg1: i32) -> (i32, i32) {
    %c0_i32 = arith.constant 0 : i32
    %c0_i32_0 = arith.constant 0 : i32
    %c0_i32_1 = arith.constant 0 : i32
    return %c0_i32, %c0_i32_0 : i32, i32
  }
  func.func @transform_11(%arg0: i32, %arg1: i32) -> (i32, i32) {
    %c0_i32 = arith.constant 0 : i32
    %c0_i32_0 = arith.constant 0 : i32
    %c0_i32_1 = arith.constant 0 : i32
    return %c0_i32, %c0_i32_0 : i32, i32
  }
  func.func @transform_12(%arg0: i32, %arg1: i32) -> (i32, i32) {
    %c0_i32 = arith.constant 0 : i32
    %c0_i32_0 = arith.constant 0 : i32
    %c0_i32_1 = arith.constant 0 : i32
    return %c0_i32, %c0_i32_0 : i32, i32
  }
  func.func @transform_13(%arg0: i32, %arg1: i32) -> (i32, i32) {
    %c0_i32 = arith.constant 0 : i32
    %c0_i32_0 = arith.constant 0 : i32
    %c0_i32_1 = arith.constant 0 : i32
    return %c0_i32, %c0_i32_0 : i32, i32
  }
  func.func @transform_14(%arg0: i32, %arg1: i32) -> (i32, i32, i32) {
    %c0_i32 = arith.constant 0 : i32
    %c0_i32_0 = arith.constant 0 : i32
    return %arg0, %c0_i32, %arg1 : i32, i32, i32
  }
}

</mosaic_0001>

<llo_original>
// kernel: tpu_custom_call.1
$region0: #{tpu_custom_call.1}
  #allocation0 [shape = 'u32[]', space=smem, size = 0x4, offset = 0x4, fixed_abs, tag = 'smem constant byte address 0x4 - core index']
  #allocation1 [shape = 'u32[144,128]{1,0:T(1,128)}', space=vmem, size = 0x12000, scoped, tag = 'internal scratch']
  #allocation2 [shape = 'f32[128,16,8]{2,1,0:T(8,128)}', space=vmem, size = 0x100000, scoped, tag = 'scratch operand']
  #allocation3 [shape = 'f32[128,16,8]{2,1,0:T(8,128)}', space=vmem, size = 0x100000, scoped, tag = 'scratch operand']
  #allocation4 [shape = 'f32[128,16,8]{2,1,0:T(8,128)}', space=vmem, size = 0x100000, scoped, tag = 'scratch operand']
  #allocation5 [shape = 'f32[128,8]{1,0:T(8,128)}', space=vmem, size = 0x10000, scoped, tag = 'scratch operand']
  #allocation6 [shape = 'f32[16,8]{1,0:T(8,128)}', space=vmem, size = 0x2000, scoped, tag = 'scratch operand']
  #allocation7 [shape = 'f32[136,8]{1,0:T(8,128)}', space=vmem, size = 0x11000, scoped, tag = 'scratch operand']
  %s0 = inlined_call_operand.vmem [shape: f32[2,256,4], index: 0, kind: input, shape index: {}]
  %s1 = inlined_call_operand.vmem [shape: f32[4,8], index: 1, kind: input, shape index: {}]
  %s2 = inlined_call_operand.vmem [shape: f32[4,8], index: 2, kind: input, shape index: {}]
  %s3 = inlined_call_operand.vmem [shape: f32[4,8], index: 3, kind: input, shape index: {}]
  %s4 = inlined_call_operand.vmem [shape: f32[1,8], index: 4, kind: input, shape index: {}]
  %s5 = inlined_call_operand.vmem [shape: f32[8,8], index: 5, kind: input, shape index: {}]
  %s6 = inlined_call_operand.vmem [shape: f32[1,8], index: 6, kind: input, shape index: {}]
  %s7 = inlined_call_operand.vmem [shape: f32[8,16], index: 7, kind: input, shape index: {}]
  %s8 = inlined_call_operand.vmem [shape: f32[8,16], index: 8, kind: input, shape index: {}]
  %s9 = inlined_call_operand.vmem [shape: f32[16,8], index: 9, kind: input, shape index: {}]
  %s10 = inlined_call_operand.vmem [shape: f32[1,8], index: 10, kind: input, shape index: {}]
  %s11 = inlined_call_operand.vmem [shape: f32[8,8], index: 11, kind: input, shape index: {}]
  %s12 = inlined_call_operand.vmem [shape: f32[8,1], index: 12, kind: input, shape index: {}]
  %s13 = inlined_call_operand.vmem [shape: f32[8,1], index: 13, kind: input, shape index: {}]
  %s14 = inlined_call_operand.hbm [shape: f32[2,8,256], index: 14, kind: output, shape index: {}]
  %s15 = sld [smem:[#allocation0]]
  $region100: #{tpu_custom_call.1} parent=0
    _
  %s17 = ssub.s32 1, %s15
  %s18 = scalar_select 0, %s17, %s15
  $region1: #{tpu_custom_call.1} parent=0
    #allocation8 [shape = 'u8[8192]{0}', space=vmem, size = 0x2000, scoped, tag = 'output window, operand 0']
    #allocation9 [shape = 's32[2]{0}', space=sflag, size = 0x8, scoped, tag = 'scoped memory for tpu_custom_call.1']
    %19 = vsyncpa [#allocation9], 0
    %s20 = scalar_lea.sflag [#allocation9], 1
    %21 = vsyncpa %s20, 0
    loop: start=0, step=1, limit=6
    $region2: #{tpu_custom_call.1} parent=1 // loop_pre_header
      _
    $region3: #{tpu_custom_call.1} parent=1 // loop_header
      %s23 = sphi 0, %s27
      %p24 = scmp.ge.s32.totalorder %s23, 6
      %s30 = sphi 0, %s42
      %s31 = sphi 0, %s38
      %s32 = sphi 0, %s30
      %s33 = sphi 0, %s31
      %s34 = sphi 0, %s32
      %s35 = sphi 0, %s33
      %s47 = sphi 0, %s49
      %s50 = sphi 0, %s47
      %s51 = sphi 0, %s50
      %s67 = sphi 0, %s51
      %s71 = sphi 0, %s71
      %s73 = sphi 0, %s71
      %s74 = sphi 0, %s73
      %s88 = sphi 0, %s74
      %s92 = sphi 0, %s92
      %s94 = sphi 0, %s92
      %s95 = sphi 0, %s94
      %s109 = sphi 0, %s95
      %s113 = sphi 0, %s113
      %s115 = sphi 0, %s113
      %s116 = sphi 0, %s115
      %s130 = sphi 0, %s116
      %s134 = sphi 0, %s134
      %s136 = sphi 0, %s134
      %s137 = sphi 0, %s136
      %s151 = sphi 0, %s137
      %s155 = sphi 0, %s155
      %s157 = sphi 0, %s155
      %s158 = sphi 0, %s157
      %s172 = sphi 0, %s158
      %s176 = sphi 0, %s176
      %s178 = sphi 0, %s176
      %s179 = sphi 0, %s178
      %s193 = sphi 0, %s179
      %s197 = sphi 0, %s197
      %s199 = sphi 0, %s197
      %s200 = sphi 0, %s199
      %s214 = sphi 0, %s200
      %s218 = sphi 0, %s218
      %s220 = sphi 0, %s218
      %s221 = sphi 0, %s220
      %s235 = sphi 0, %s221
      %s239 = sphi 0, %s239
      %s241 = sphi 0, %s239
      %s242 = sphi 0, %s241
      %s256 = sphi 0, %s242
      %s260 = sphi 0, %s260
      %s262 = sphi 0, %s260
      %s263 = sphi 0, %s262
      %s277 = sphi 0, %s263
      %s281 = sphi 0, %s281
      %s283 = sphi 0, %s281
      %s284 = sphi 0, %s283
      %s298 = sphi 0, %s284
      %s302 = sphi 0, %s302
      %s304 = sphi 0, %s302
      %s305 = sphi 0, %s304
      %s319 = sphi 0, %s305
      %s323 = sphi 0, %s323
      %s325 = sphi 0, %s323
      %s326 = sphi 0, %s325
      %s340 = sphi 0, %s326
      %s348 = sphi 0, %s350
      %s351 = sphi 0, %s348
      %s352 = sphi 0, %s351
      %s368 = sphi 0, %s352
    $region4: #{tpu_custom_call.1} parent=1 // loop_header_branch
      %26 = sbr.rel (%p24) target = $region8
    $region5: #{tpu_custom_call.1} parent=1 // loop_body
      %s28 = ssub.s32 %s23, 1
      %s29 = ssub.s32 %s23, 2
      %s36 = sadd.s32 1, %s31
      %p37 = scmp.ge.s32.totalorder %s36, 2
      %s38 = scalar_select %p37, 0, %s36
      %s39 = sadd.s32 1, %s30
      %s40 = scalar_select %p37, %s39, %s30
      %p41 = scmp.ge.s32.totalorder %s40, 2
      %s42 = scalar_select %p41, 0, %s40
      %s43 = ssub.s32 %s30, %s42
      %s44 = ssub.s32 %s31, %s38
      %s45 = sor.u32 %s43, %s44
      %p46 = scmp.eq.s32.totalorder %s45, 0
      %s48 = sadd.s32 %s47, 1
      %s49 = scalar_select %p46, %s47, %s48
      %p52 = pneg %p46
      %p53 = scmp.eq.s32.totalorder %s23, 3
      %p54 = por %p52, %p53
      %p55 = scmp.ne.s32.totalorder %s47, %s50
      %p56 = scmp.eq.s32.totalorder %s23, 0
      %p57 = por %p55, %p56
      %p58 = scmp.ne.s32.totalorder %s47, %s50
      %p59 = scmp.eq.s32.totalorder %s28, 3
      %p60 = por %p58, %p59
      %p61 = scmp.ne.s32.totalorder %s50, %s51
      %p62 = scmp.eq.s32.totalorder %s28, 0
      %p63 = por %p61, %p62
      %p64 = scmp.ne.s32.totalorder %s50, %s51
      %p65 = scmp.eq.s32.totalorder %s29, 3
      %p66 = por %p64, %p65
      %p68 = scmp.ne.s32.totalorder %s51, %s67
      %p69 = scmp.eq.s32.totalorder %s29, 0
      %p70 = por %p68, %p69
      %s72 = sadd.s32 %s71, 1
      %p75 = scmp.eq.s32.totalorder %s23, 3
      %p76 = scmp.ne.s32.totalorder %s71, %s73
      %p77 = scmp.eq.s32.totalorder %s23, 0
      %p78 = por %p76, %p77
      %p79 = scmp.ne.s32.totalorder %s71, %s73
      %p80 = scmp.eq.s32.totalorder %s28, 3
      %p81 = por %p79, %p80
      %p82 = scmp.ne.s32.totalorder %s73, %s74
      %p83 = scmp.eq.s32.totalorder %s28, 0
      %p84 = por %p82, %p83
      %p85 = scmp.ne.s32.totalorder %s73, %s74
      %p86 = scmp.eq.s32.totalorder %s29, 3
      %p87 = por %p85, %p86
      %p89 = scmp.ne.s32.totalorder %s74, %s88
      %p90 = scmp.eq.s32.totalorder %s29, 0
      %p91 = por %p89, %p90
      %s93 = sadd.s32 %s92, 1
      %p96 = scmp.eq.s32.totalorder %s23, 3
      %p97 = scmp.ne.s32.totalorder %s92, %s94
      %p98 = scmp.eq.s32.totalorder %s23, 0
      %p99 = por %p97, %p98
      %p100 = scmp.ne.s32.totalorder %s92, %s94
      %p101 = scmp.eq.s32.totalorder %s28, 3
      %p102 = por %p100, %p101
      %p103 = scmp.ne.s32.totalorder %s94, %s95
      %p104 = scmp.eq.s32.totalorder %s28, 0
      %p105 = por %p103, %p104
      %p106 = scmp.ne.s32.totalorder %s94, %s95
      %p107 = scmp.eq.s32.totalorder %s29, 3
      %p108 = por %p106, %p107
      %p110 = scmp.ne.s32.totalorder %s95, %s109
      %p111 = scmp.eq.s32.totalorder %s29, 0
      %p112 = por %p110, %p111
      %s114 = sadd.s32 %s113, 1
      %p117 = scmp.eq.s32.totalorder %s23, 3
      %p118 = scmp.ne.s32.totalorder %s113, %s115
      %p119 = scmp.eq.s32.totalorder %s23, 0
      %p120 = por %p118, %p119
      %p121 = scmp.ne.s32.totalorder %s113, %s115
      %p122 = scmp.eq.s32.totalorder %s28, 3
      %p123 = por %p121, %p122
      %p124 = scmp.ne.s32.totalorder %s115, %s116
      %p125 = scmp.eq.s32.totalorder %s28, 0
      %p126 = por %p124, %p125
      %p127 = scmp.ne.s32.totalorder %s115, %s116
      %p128 = scmp.eq.s32.totalorder %s29, 3
      %p129 = por %p127, %p128
      %p131 = scmp.ne.s32.totalorder %s116, %s130
      %p132 = scmp.eq.s32.totalorder %s29, 0
      %p133 = por %p131, %p132
      %s135 = sadd.s32 %s134, 1
      %p138 = scmp.eq.s32.totalorder %s23, 3
      %p139 = scmp.ne.s32.totalorder %s134, %s136
      %p140 = scmp.eq.s32.totalorder %s23, 0
      %p141 = por %p139, %p140
      %p142 = scmp.ne.s32.totalorder %s134, %s136
      %p143 = scmp.eq.s32.totalorder %s28, 3
      %p144 = por %p142, %p143
      %p145 = scmp.ne.s32.totalorder %s136, %s137
      %p146 = scmp.eq.s32.totalorder %s28, 0
      %p147 = por %p145, %p146
      %p148 = scmp.ne.s32.totalorder %s136, %s137
      %p149 = scmp.eq.s32.totalorder %s29, 3
      %p150 = por %p148, %p149
      %p152 = scmp.ne.s32.totalorder %s137, %s151
      %p153 = scmp.eq.s32.totalorder %s29, 0
      %p154 = por %p152, %p153
      %s156 = sadd.s32 %s155, 1
      %p159 = scmp.eq.s32.totalorder %s23, 3
      %p160 = scmp.ne.s32.totalorder %s155, %s157
      %p161 = scmp.eq.s32.totalorder %s23, 0
      %p162 = por %p160, %p161
      %p163 = scmp.ne.s32.totalorder %s155, %s157
      %p164 = scmp.eq.s32.totalorder %s28, 3
      %p165 = por %p163, %p164
      %p166 = scmp.ne.s32.totalorder %s157, %s158
      %p167 = scmp.eq.s32.totalorder %s28, 0
      %p168 = por %p166, %p167
      %p169 = scmp.ne.s32.totalorder %s157, %s158
      %p170 = scmp.eq.s32.totalorder %s29, 3
      %p171 = por %p169, %p170
      %p173 = scmp.ne.s32.totalorder %s158, %s172
      %p174 = scmp.eq.s32.totalorder %s29, 0
      %p175 = por %p173, %p174
      %s177 = sadd.s32 %s176, 1
      %p180 = scmp.eq.s32.totalorder %s23, 3
      %p181 = scmp.ne.s32.totalorder %s176, %s178
      %p182 = scmp.eq.s32.totalorder %s23, 0
      %p183 = por %p181, %p182
      %p184 = scmp.ne.s32.totalorder %s176, %s178
      %p185 = scmp.eq.s32.totalorder %s28, 3
      %p186 = por %p184, %p185
      %p187 = scmp.ne.s32.totalorder %s178, %s179
      %p188 = scmp.eq.s32.totalorder %s28, 0
      %p189 = por %p187, %p188
      %p190 = scmp.ne.s32.totalorder %s178, %s179
      %p191 = scmp.eq.s32.totalorder %s29, 3
      %p192 = por %p190, %p191
      %p194 = scmp.ne.s32.totalorder %s179, %s193
      %p195 = scmp.eq.s32.totalorder %s29, 0
      %p196 = por %p194, %p195
      %s198 = sadd.s32 %s197, 1
      %p201 = scmp.eq.s32.totalorder %s23, 3
      %p202 = scmp.ne.s32.totalorder %s197, %s199
      %p203 = scmp.eq.s32.totalorder %s23, 0
      %p204 = por %p202, %p203
      %p205 = scmp.ne.s32.totalorder %s197, %s199
      %p206 = scmp.eq.s32.totalorder %s28, 3
      %p207 = por %p205, %p206
      %p208 = scmp.ne.s32.totalorder %s199, %s200
      %p209 = scmp.eq.s32.totalorder %s28, 0
      %p210 = por %p208, %p209
      %p211 = scmp.ne.s32.totalorder %s199, %s200
      %p212 = scmp.eq.s32.totalorder %s29, 3
      %p213 = por %p211, %p212
      %p215 = scmp.ne.s32.totalorder %s200, %s214
      %p216 = scmp.eq.s32.totalorder %s29, 0
      %p217 = por %p215, %p216
      %s219 = sadd.s32 %s218, 1
      %p222 = scmp.eq.s32.totalorder %s23, 3
      %p223 = scmp.ne.s32.totalorder %s218, %s220
      %p224 = scmp.eq.s32.totalorder %s23, 0
      %p225 = por %p223, %p224
      %p226 = scmp.ne.s32.totalorder %s218, %s220
      %p227 = scmp.eq.s32.totalorder %s28, 3
      %p228 = por %p226, %p227
      %p229 = scmp.ne.s32.totalorder %s220, %s221
      %p230 = scmp.eq.s32.totalorder %s28, 0
      %p231 = por %p229, %p230
      %p232 = scmp.ne.s32.totalorder %s220, %s221
      %p233 = scmp.eq.s32.totalorder %s29, 3
      %p234 = por %p232, %p233
      %p236 = scmp.ne.s32.totalorder %s221, %s235
      %p237 = scmp.eq.s32.totalorder %s29, 0
      %p238 = por %p236, %p237
      %s240 = sadd.s32 %s239, 1
      %p243 = scmp.eq.s32.totalorder %s23, 3
      %p244 = scmp.ne.s32.totalorder %s239, %s241
      %p245 = scmp.eq.s32.totalorder %s23, 0
      %p246 = por %p244, %p245
      %p247 = scmp.ne.s32.totalorder %s239, %s241
      %p248 = scmp.eq.s32.totalorder %s28, 3
      %p249 = por %p247, %p248
      %p250 = scmp.ne.s32.totalorder %s241, %s242
      %p251 = scmp.eq.s32.totalorder %s28, 0
      %p252 = por %p250, %p251
      %p253 = scmp.ne.s32.totalorder %s241, %s242
      %p254 = scmp.eq.s32.totalorder %s29, 3
      %p255 = por %p253, %p254
      %p257 = scmp.ne.s32.totalorder %s242, %s256
      %p258 = scmp.eq.s32.totalorder %s29, 0
      %p259 = por %p257, %p258
      %s261 = sadd.s32 %s260, 1
      %p264 = scmp.eq.s32.totalorder %s23, 3
      %p265 = scmp.ne.s32.totalorder %s260, %s262
      %p266 = scmp.eq.s32.totalorder %s23, 0
      %p267 = por %p265, %p266
      %p268 = scmp.ne.s32.totalorder %s260, %s262
      %p269 = scmp.eq.s32.totalorder %s28, 3
      %p270 = por %p268, %p269
      %p271 = scmp.ne.s32.totalorder %s262, %s263
      %p272 = scmp.eq.s32.totalorder %s28, 0
      %p273 = por %p271, %p272
      %p274 = scmp.ne.s32.totalorder %s262, %s263
      %p275 = scmp.eq.s32.totalorder %s29, 3
      %p276 = por %p274, %p275
      %p278 = scmp.ne.s32.totalorder %s263, %s277
      %p279 = scmp.eq.s32.totalorder %s29, 0
      %p280 = por %p278, %p279
      %s282 = sadd.s32 %s281, 1
      %p285 = scmp.eq.s32.totalorder %s23, 3
      %p286 = scmp.ne.s32.totalorder %s281, %s283
      %p287 = scmp.eq.s32.totalorder %s23, 0
      %p288 = por %p286, %p287
      %p289 = scmp.ne.s32.totalorder %s281, %s283
      %p290 = scmp.eq.s32.totalorder %s28, 3
      %p291 = por %p289, %p290
      %p292 = scmp.ne.s32.totalorder %s283, %s284
      %p293 = scmp.eq.s32.totalorder %s28, 0
      %p294 = por %p292, %p293
      %p295 = scmp.ne.s32.totalorder %s283, %s284
      %p296 = scmp.eq.s32.totalorder %s29, 3
      %p297 = por %p295, %p296
      %p299 = scmp.ne.s32.totalorder %s284, %s298
      %p300 = scmp.eq.s32.totalorder %s29, 0
      %p301 = por %p299, %p300
      %s303 = sadd.s32 %s302, 1
      %p306 = scmp.eq.s32.totalorder %s23, 3
      %p307 = scmp.ne.s32.totalorder %s302, %s304
      %p308 = scmp.eq.s32.totalorder %s23, 0
      %p309 = por %p307, %p308
      %p310 = scmp.ne.s32.totalorder %s302, %s304
      %p311 = scmp.eq.s32.totalorder %s28, 3
      %p312 = por %p310, %p311
      %p313 = scmp.ne.s32.totalorder %s304, %s305
      %p314 = scmp.eq.s32.totalorder %s28, 0
      %p315 = por %p313, %p314
      %p316 = scmp.ne.s32.totalorder %s304, %s305
      %p317 = scmp.eq.s32.totalorder %s29, 3
      %p318 = por %p316, %p317
      %p320 = scmp.ne.s32.totalorder %s305, %s319
      %p321 = scmp.eq.s32.totalorder %s29, 0
      %p322 = por %p320, %p321
      %s324 = sadd.s32 %s323, 1
      %p327 = scmp.eq.s32.totalorder %s23, 3
      %p328 = scmp.ne.s32.totalorder %s323, %s325
      %p329 = scmp.eq.s32.totalorder %s23, 0
      %p330 = por %p328, %p329
      %p331 = scmp.ne.s32.totalorder %s323, %s325
      %p332 = scmp.eq.s32.totalorder %s28, 3
      %p333 = por %p331, %p332
      %p334 = scmp.ne.s32.totalorder %s325, %s326
      %p335 = scmp.eq.s32.totalorder %s28, 0
      %p336 = por %p334, %p335
      %p337 = scmp.ne.s32.totalorder %s325, %s326
      %p338 = scmp.eq.s32.totalorder %s29, 3
      %p339 = por %p337, %p338
      %p341 = scmp.ne.s32.totalorder %s326, %s340
      %p342 = scmp.eq.s32.totalorder %s29, 0
      %p343 = por %p341, %p342
      %s344 = ssub.s32 %s30, %s42
      %s345 = ssub.s32 %s31, %s38
      %s346 = sor.u32 %s344, %s345
      %p347 = scmp.eq.s32.totalorder %s346, 0
      %s349 = sadd.s32 %s348, 1
      %s350 = scalar_select %p347, %s348, %s349
      %p353 = pneg %p347
      %p354 = scmp.eq.s32.totalorder %s23, 3
      %p355 = por %p353, %p354
      %p356 = scmp.ne.s32.totalorder %s348, %s351
      %p357 = scmp.eq.s32.totalorder %s23, 0
      %p358 = por %p356, %p357
      %p359 = scmp.ne.s32.totalorder %s348, %s351
      %p360 = scmp.eq.s32.totalorder %s28, 3
      %p361 = por %p359, %p360
      %p362 = scmp.ne.s32.totalorder %s351, %s352
      %p363 = scmp.eq.s32.totalorder %s28, 0
      %p364 = por %p362, %p363
      %p365 = scmp.ne.s32.totalorder %s351, %s352
      %p366 = scmp.eq.s32.totalorder %s29, 3
      %p367 = por %p365, %p366
      %p369 = scmp.ne.s32.totalorder %s352, %s368
      %p370 = scmp.eq.s32.totalorder %s29, 0
      %p371 = por %p369, %p370
      %p372 = scmp.le.s32.totalorder 1, %s23
      %p373 = scmp.lt.s32.totalorder %s23, 5
      %p374 = pnand %p372, %p373
      %p375 = pneg %p374
      // Predicated region
      $region9: #{tpu_custom_call.1} parent=5 // pred_check
        _
      $region10: #{tpu_custom_call.1} parent=5 // pred_check_branch
        %377 = sbr.rel (%p374) target = $region12
      $region11: #{tpu_custom_call.1} parent=5 // pred_region
        %s378 = ssub.s32 %s23, 1
        // Predicated region
        $region13: #{tpu_custom_call.1} parent=11 // pred_check
          %p379 = pneg %p84
        $region14: #{tpu_custom_call.1} parent=11 // pred_check_branch
          %381 = sbr.rel (%p379) target = $region16
        $region15: #{tpu_custom_call.1} parent=11 // pred_region
          _
        $region16: #{tpu_custom_call.1} parent=11 // pred_fallthru
          _
        // Predicated region
        $region17: #{tpu_custom_call.1} parent=11 // pred_check
          %p382 = pneg %p105
        $region18: #{tpu_custom_call.1} parent=11 // pred_check_branch
          %384 = sbr.rel (%p382) target = $region20
        $region19: #{tpu_custom_call.1} parent=11 // pred_region
          _
        $region20: #{tpu_custom_call.1} parent=11 // pred_fallthru
          _
        // Predicated region
        $region21: #{tpu_custom_call.1} parent=11 // pred_check
          %p385 = pneg %p126
        $region22: #{tpu_custom_call.1} parent=11 // pred_check_branch
          %387 = sbr.rel (%p385) target = $region24
        $region23: #{tpu_custom_call.1} parent=11 // pred_region
          _
        $region24: #{tpu_custom_call.1} parent=11 // pred_fallthru
          _
        // Predicated region
        $region25: #{tpu_custom_call.1} parent=11 // pred_check
          %p388 = pneg %p147
        $region26: #{tpu_custom_call.1} parent=11 // pred_check_branch
          %390 = sbr.rel (%p388) target = $region28
        $region27: #{tpu_custom_call.1} parent=11 // pred_region
          _
        $region28: #{tpu_custom_call.1} parent=11 // pred_fallthru
          _
        // Predicated region
        $region29: #{tpu_custom_call.1} parent=11 // pred_check
          %p391 = pneg %p168
        $region30: #{tpu_custom_call.1} parent=11 // pred_check_branch
          %393 = sbr.rel (%p391) target = $region32
        $region31: #{tpu_custom_call.1} parent=11 // pred_region
          _
        $region32: #{tpu_custom_call.1} parent=11 // pred_fallthru
          _
        // Predicated region
        $region33: #{tpu_custom_call.1} parent=11 // pred_check
          %p394 = pneg %p189
        $region34: #{tpu_custom_call.1} parent=11 // pred_check_branch
          %396 = sbr.rel (%p394) target = $region36
        $region35: #{tpu_custom_call.1} parent=11 // pred_region
          _
        $region36: #{tpu_custom_call.1} parent=11 // pred_fallthru
          _
        // Predicated region
        $region37: #{tpu_custom_call.1} parent=11 // pred_check
          %p397 = pneg %p210
        $region38: #{tpu_custom_call.1} parent=11 // pred_check_branch
          %399 = sbr.rel (%p397) target = $region40
        $region39: #{tpu_custom_call.1} parent=11 // pred_region
          _
        $region40: #{tpu_custom_call.1} parent=11 // pred_fallthru
          _
        // Predicated region
        $region41: #{tpu_custom_call.1} parent=11 // pred_check
          %p400 = pneg %p231
        $region42: #{tpu_custom_call.1} parent=11 // pred_check_branch
          %402 = sbr.rel (%p400) target = $region44
        $region43: #{tpu_custom_call.1} parent=11 // pred_region
          _
        $region44: #{tpu_custom_call.1} parent=11 // pred_fallthru
          _
        // Predicated region
        $region45: #{tpu_custom_call.1} parent=11 // pred_check
          %p403 = pneg %p252
        $region46: #{tpu_custom_call.1} parent=11 // pred_check_branch
          %405 = sbr.rel (%p403) target = $region48
        $region47: #{tpu_custom_call.1} parent=11 // pred_region
          _
        $region48: #{tpu_custom_call.1} parent=11 // pred_fallthru
          _
        // Predicated region
        $region49: #{tpu_custom_call.1} parent=11 // pred_check
          %p406 = pneg %p273
        $region50: #{tpu_custom_call.1} parent=11 // pred_check_branch
          %408 = sbr.rel (%p406) target = $region52
        $region51: #{tpu_custom_call.1} parent=11 // pred_region
          _
        $region52: #{tpu_custom_call.1} parent=11 // pred_fallthru
          _
        // Predicated region
        $region53: #{tpu_custom_call.1} parent=11 // pred_check
          %p409 = pneg %p294
        $region54: #{tpu_custom_call.1} parent=11 // pred_check_branch
          %411 = sbr.rel (%p409) target = $region56
        $region55: #{tpu_custom_call.1} parent=11 // pred_region
          _
        $region56: #{tpu_custom_call.1} parent=11 // pred_fallthru
          _
        // Predicated region
        $region57: #{tpu_custom_call.1} parent=11 // pred_check
          %p412 = pneg %p315
        $region58: #{tpu_custom_call.1} parent=11 // pred_check_branch
          %414 = sbr.rel (%p412) target = $region60
        $region59: #{tpu_custom_call.1} parent=11 // pred_region
          _
        $region60: #{tpu_custom_call.1} parent=11 // pred_fallthru
          _
        // Predicated region
        $region61: #{tpu_custom_call.1} parent=11 // pred_check
          %p415 = pneg %p336
        $region62: #{tpu_custom_call.1} parent=11 // pred_check_branch
          %417 = sbr.rel (%p415) target = $region64
        $region63: #{tpu_custom_call.1} parent=11 // pred_region
          _
        $region64: #{tpu_custom_call.1} parent=11 // pred_fallthru
          _
      $region12: #{tpu_custom_call.1} parent=5 // pred_fallthru
        _
      %p418 = scmp.lt.s32.totalorder %s23, 4
      // Predicated region
      $region65: #{tpu_custom_call.1} parent=5 // pred_check
        %p419 = pneg %p418
      $region66: #{tpu_custom_call.1} parent=5 // pred_check_branch
        %421 = sbr.rel (%p419) target = $region68
      $region67: #{tpu_custom_call.1} parent=5 // pred_region
        // Predicated region
        $region69: #{tpu_custom_call.1} parent=67 // pred_check
          %p422 = pneg %p57
        $region70: #{tpu_custom_call.1} parent=67 // pred_check_branch
          %424 = sbr.rel (%p422) target = $region72
        $region71: #{tpu_custom_call.1} parent=67 // pred_region
          %s425 = smul.u32 16, %s31
          %p426 = scmp.lt.s32.totalorder %s30, 1
          %s427 = scalar_select %p426, %s30, 1
          %p428 = scmp.lt.s32.totalorder %s425, 31
          %s429 = scalar_select %p428, %s425, 31
          %s430 = smul.addr %s427, 32
          %s431 = sadd.s32 %s429, %s430
          %s432 = smul.addr %s431, 8
          %s433 = scalar_lea.vmem %s0, %s432
          %s434 = smul.u32 16, %s31
        $region72: #{tpu_custom_call.1} parent=67 // pred_fallthru
          _
      $region68: #{tpu_custom_call.1} parent=5 // pred_fallthru
        _
      %p435 = scmp.le.s32.totalorder 1, %s23
      %p436 = scmp.lt.s32.totalorder %s23, 5
      %p437 = pnand %p435, %p436
      %p438 = pneg %p437
      // Predicated region
      $region73: #{tpu_custom_call.1} parent=5 // pred_check
        _
      $region74: #{tpu_custom_call.1} parent=5 // pred_check_branch
        %440 = sbr.rel (%p437) target = $region76
      $region75: #{tpu_custom_call.1} parent=5 // pred_region
        %s441 = ssub.s32 %s23, 1
        %s442 = smul.u32 16, %s33
        %p443 = scmp.lt.s32.totalorder %s32, 1
        %s444 = scalar_select %p443, %s32, 1
        %p445 = scmp.lt.s32.totalorder %s442, 31
        %s446 = scalar_select %p445, %s442, 31
        %s447 = smul.addr %s444, 32
        %s448 = sadd.s32 %s446, %s447
        %s449 = smul.addr %s448, 8
        %s450 = scalar_lea.vmem %s0, %s449
        %p451 = pneg %p63
        %p452 = pneg %p60
        %p453 = pneg %p84
        %p454 = pneg %p81
        %p455 = pneg %p105
        %p456 = pneg %p102
        %p457 = pneg %p126
        %p458 = pneg %p123
        %p459 = pneg %p147
        %p460 = pneg %p144
        %p461 = pneg %p168
        %p462 = pneg %p165
        %p463 = pneg %p189
        %p464 = pneg %p186
        %p465 = pneg %p210
        %p466 = pneg %p207
        %p467 = pneg %p231
        %p468 = pneg %p228
        %p469 = pneg %p252
        %p470 = pneg %p249
        %p471 = pneg %p273
        %p472 = pneg %p270
        %p473 = pneg %p294
        %p474 = pneg %p291
        %p475 = pneg %p315
        %p476 = pneg %p312
        %p477 = pneg %p336
        %p478 = pneg %p333
        %p479 = pneg %p364
        %p480 = pneg %p361
        %s481 = sand.u32 %s351, 1
        %s482 = scalar_lea.sflag [#allocation9], %s481
        %s483 = sand.u32 %s351, 1
        %s484 = smul.addr %s483, 8
        %s485 = scalar_lea.vmem [#allocation8], %s484
        %s486 = smul.u32 16, %s33
        %p487 = scmp.lt.s32.totalorder %s32, 1
        %s488 = scalar_select %p487, %s32, 1
        %p489 = scmp.lt.s32.totalorder %s486, 31
        %s490 = scalar_select %p489, %s486, 31
        %s491 = smul.addr %s488, 32
        %s492 = sadd.s32 %s490, %s491
        %s493 = smul.addr %s492, 8
        %s494 = scalar_lea.vmem %s0, %s493
        %s495 = smul.u32 16, %s33
        %p496 = scmp.eq.s32.totalorder %s33, 0
        // Predicated region
        $region77: #{tpu_custom_call.1} parent=75 // pred_check
          %p497 = pneg %p496
        $region78: #{tpu_custom_call.1} parent=75 // pred_check_branch
          %499 = sbr.rel (%p497) target = $region80
        $region79: #{tpu_custom_call.1} parent=75 // pred_region
          %vm500 = vcmask 64512
          %501 = vst.msk [vmem:[#allocation6] sm:$0xff] %vm500, 0.0
          %502 = vst.msk [vmem:[#allocation6 + $0x8] sm:$0xff] %vm500, 0.0
          %503 = vst.msk [vmem:[#allocation7] sm:$0xff] %vm500, 0.0
        $region80: #{tpu_custom_call.1} parent=75 // pred_fallthru
          _
        %v504 = vld [vmem:[%s494] sm:$0xff]
        %v505 = vld [vmem:[%s494 + $0x8] sm:$0xff]
        %v506 = vld [vmem:[%s494 + $0x10] sm:$0xff]
        %v507 = vld [vmem:[%s494 + $0x18] sm:$0xff]
        %v508 = vld [vmem:[%s494 + $0x20] sm:$0xff]
        %v509 = vld [vmem:[%s494 + $0x28] sm:$0xff]
        %v510 = vld [vmem:[%s494 + $0x30] sm:$0xff]
        %v511 = vld [vmem:[%s494 + $0x38] sm:$0xff]
        %v512 = vld [vmem:[%s494 + $0x40] sm:$0xff]
        %v513 = vld [vmem:[%s494 + $0x48] sm:$0xff]
        %v514 = vld [vmem:[%s494 + $0x50] sm:$0xff]
        %v515 = vld [vmem:[%s494 + $0x58] sm:$0xff]
        %v516 = vld [vmem:[%s494 + $0x60] sm:$0xff]
        %v517 = vld [vmem:[%s494 + $0x68] sm:$0xff]
        %v518 = vld [vmem:[%s494 + $0x70] sm:$0xff]
        %v519 = vld [vmem:[%s494 + $0x78] sm:$0xff]
        %v520 = vld [vmem:[%s1] sm:$0xf]
        %vm521 = vcmask 31744
        %v523 = vsel %vm521, %v504, 0
        %v526 = vsel %vm521, %v505, 0
        %v529 = vsel %vm521, %v506, 0
        %v532 = vsel %vm521, %v507, 0
        %v535 = vsel %vm521, %v508, 0
        %v538 = vsel %vm521, %v509, 0
        %v541 = vsel %vm521, %v510, 0
        %v544 = vsel %vm521, %v511, 0
        %v547 = vsel %vm521, %v512, 0
        %v550 = vsel %vm521, %v513, 0
        %v553 = vsel %vm521, %v514, 0
        %v556 = vsel %vm521, %v515, 0
        %v559 = vsel %vm521, %v516, 0
        %v562 = vsel %vm521, %v517, 0
        %v565 = vsel %vm521, %v518, 0
        %v568 = vsel %vm521, %v519, 0
        %vm570 = vcmask 1043456
        %v572 = vsel %vm570, %v520, 0
        %574 = vmatprep.subr.mxu0 0.0
        %575 = vmatpush1.msra.mxu0 0.0
        %576 = vmatprep.subr.mxu0 0.0
        %577 = vmatpush1.msra.mxu0 0.0
        %578 = vmatprep.subr.mxu0 0.0
        %579 = vmatpush1.msra.mxu0 0.0
        %580 = vmatprep.subr.mxu0 0.0
        %581 = vmatpush1.msra.mxu0 0.0
        %582 = vmatprep.subr.mxu0 0.0
        %583 = vmatpush1.msra.mxu0 0.0
        %584 = vmatprep.subr.mxu0 0.0
        %585 = vmatpush1.msra.mxu0 0.0
        %586 = vmatprep.subr.mxu0 0.0
        %587 = vmatpush1.msra.mxu0 0.0
        %588 = vmatprep.subr.mxu0 0.0
        %589 = vmatpush1.msra.mxu0 0.0
        %590 = vmatprep.subr.mxu0 0.0
        %591 = vmatpush1.msra.mxu0 0.0
        %592 = vmatprep.subr.mxu0 0.0
        %593 = vmatpush1.msra.mxu0 0.0
        %594 = vmatprep.subr.mxu0 0.0
        %595 = vmatpush1.msra.mxu0 0.0
        %596 = vmatprep.subr.mxu0 0.0
        %597 = vmatpush1.msra.mxu0 0.0
        %598 = vmatprep.subr.mxu0 0.0
        %599 = vmatpush1.msra.mxu0 0.0
        %600 = vmatprep.subr.mxu0 0.0
        %601 = vmatpush1.msra.mxu0 0.0
        %602 = vmatprep.subr.mxu0 0.0
        %603 = vmatpush1.msra.mxu0 0.0
        %604 = vmatprep.subr.mxu0 0.0
        %605 = vmatpush1.msra.mxu0 %v572
        %606 = vmatprep.subr.mxu0 0.0
        %607 = vmatpush2.msra.mxu0 0.0
        %608 = vmatprep.subr.mxu0 0.0
        %609 = vmatpush2.msra.mxu0 0.0
        %610 = vmatprep.subr.mxu0 0.0
        %611 = vmatpush2.msra.mxu0 0.0
        %612 = vmatprep.subr.mxu0 0.0
        %613 = vmatpush2.msra.mxu0 0.0
        %614 = vmatprep.subr.mxu0 0.0
        %615 = vmatpush2.msra.mxu0 0.0
        %616 = vmatprep.subr.mxu0 0.0
        %617 = vmatpush2.msra.mxu0 0.0
        %618 = vmatprep.subr.mxu0 0.0
        %619 = vmatpush2.msra.mxu0 0.0
        %620 = vmatprep.subr.mxu0 0.0
        %621 = vmatpush2.msra.mxu0 0.0
        %622 = vmatprep.subr.mxu0 0.0
        %623 = vmatpush2.msra.mxu0 0.0
        %624 = vmatprep.subr.mxu0 0.0
        %625 = vmatpush2.msra.mxu0 0.0
        %626 = vmatprep.subr.mxu0 0.0
        %627 = vmatpush2.msra.mxu0 0.0
        %628 = vmatprep.subr.mxu0 0.0
        %629 = vmatpush2.msra.mxu0 0.0
        %630 = vmatprep.subr.mxu0 0.0
        %631 = vmatpush2.msra.mxu0 0.0
        %632 = vmatprep.subr.mxu0 0.0
        %633 = vmatpush2.msra.mxu0 0.0
        %634 = vmatprep.subr.mxu0 0.0
        %635 = vmatpush2.msra.mxu0 0.0
        %636 = vmatprep.subr.mxu0 0.0
        %637 = vmatpush2.msra.mxu0 0.0
        %638 = vmatprep.mubr.f32.mxu0 0.0
        %639 = vmatmul.mubr.f32.gmra.mxu0 %v523
        %v640 = vpop.f32.mrf.mxu0
        %v641 = vadd.f32 0.0, %v640
        %v642 = vpop.f32.mrf.mxu0
        %643 = vmatprep.mubr.f32.mxu0 0.0
        %644 = vmatmul.mubr.f32.gmra.mxu0 %v526
        %v645 = vpop.f32.mrf.mxu0
        %v646 = vadd.f32 0.0, %v645
        %v647 = vpop.f32.mrf.mxu0
        %648 = vmatprep.mubr.f32.mxu0 0.0
        %649 = vmatmul.mubr.f32.gmra.mxu0 %v529
        %v650 = vpop.f32.mrf.mxu0
        %v651 = vadd.f32 0.0, %v650
        %v652 = vpop.f32.mrf.mxu0
        %653 = vmatprep.mubr.f32.mxu0 0.0
        %654 = vmatmul.mubr.f32.gmra.mxu0 %v532
        %v655 = vpop.f32.mrf.mxu0
        %v656 = vadd.f32 0.0, %v655
        %v657 = vpop.f32.mrf.mxu0
        %658 = vmatprep.mubr.f32.mxu0 0.0
        %659 = vmatmul.mubr.f32.gmra.mxu0 %v535
        %v660 = vpop.f32.mrf.mxu0
        %v661 = vadd.f32 0.0, %v660
        %v662 = vpop.f32.mrf.mxu0
        %663 = vmatprep.mubr.f32.mxu0 0.0
        %664 = vmatmul.mubr.f32.gmra.mxu0 %v538
        %v665 = vpop.f32.mrf.mxu0
        %v666 = vadd.f32 0.0, %v665
        %v667 = vpop.f32.mrf.mxu0
        %668 = vmatprep.mubr.f32.mxu0 0.0
        %669 = vmatmul.mubr.f32.gmra.mxu0 %v541
        %v670 = vpop.f32.mrf.mxu0
        %v671 = vadd.f32 0.0, %v670
        %v672 = vpop.f32.mrf.mxu0
        %673 = vmatprep.mubr.f32.mxu0 0.0
        %674 = vmatmul.mubr.f32.gmra.mxu0 %v544
        %v675 = vpop.f32.mrf.mxu0
        %v676 = vadd.f32 0.0, %v675
        %v677 = vpop.f32.mrf.mxu0
        %678 = vmatprep.mubr.f32.mxu0 0.0
        %679 = vmatmul.mubr.f32.gmra.mxu0 %v547
        %v680 = vpop.f32.mrf.mxu0
        %v681 = vadd.f32 0.0, %v680
        %v682 = vpop.f32.mrf.mxu0
        %683 = vmatprep.mubr.f32.mxu0 0.0
        %684 = vmatmul.mubr.f32.gmra.mxu0 %v550
        %v685 = vpop.f32.mrf.mxu0
        %v686 = vadd.f32 0.0, %v685
        %v687 = vpop.f32.mrf.mxu0
        %688 = vmatprep.mubr.f32.mxu0 0.0
        %689 = vmatmul.mubr.f32.gmra.mxu0 %v553
        %v690 = vpop.f32.mrf.mxu0
        %v691 = vadd.f32 0.0, %v690
        %v692 = vpop.f32.mrf.mxu0
        %693 = vmatprep.mubr.f32.mxu0 0.0
        %694 = vmatmul.mubr.f32.gmra.mxu0 %v556
        %v695 = vpop.f32.mrf.mxu0
        %v696 = vadd.f32 0.0, %v695
        %v697 = vpop.f32.mrf.mxu0
        %698 = vmatprep.mubr.f32.mxu0 0.0
        %699 = vmatmul.mubr.f32.gmra.mxu0 %v559
        %v700 = vpop.f32.mrf.mxu0
        %v701 = vadd.f32 0.0, %v700
        %v702 = vpop.f32.mrf.mxu0
        %703 = vmatprep.mubr.f32.mxu0 0.0
        %704 = vmatmul.mubr.f32.gmra.mxu0 %v562
        %v705 = vpop.f32.mrf.mxu0
        %v706 = vadd.f32 0.0, %v705
        %v707 = vpop.f32.mrf.mxu0
        %708 = vmatprep.mubr.f32.mxu0 0.0
        %709 = vmatmul.mubr.f32.gmra.mxu0 %v565
        %v710 = vpop.f32.mrf.mxu0
        %v711 = vadd.f32 0.0, %v710
        %v712 = vpop.f32.mrf.mxu0
        %713 = vmatprep.mubr.f32.mxu0 0.0
        %714 = vmatmul.mubr.f32.gmra.mxu0 %v568
        %v715 = vpop.f32.mrf.mxu0
        %v716 = vadd.f32 0.0, %v715
        %v717 = vpop.f32.mrf.mxu0
        %718 = vdwg.mxu0
        %v719 = vld [vmem:[%s2] sm:$0xf]
        %v721 = vsel %vm570, %v719, 0
        %723 = vmatprep.subr.mxu0 0.0
        %724 = vmatpush1.msra.mxu0 0.0
        %725 = vmatprep.subr.mxu0 0.0
        %726 = vmatpush1.msra.mxu0 0.0
        %727 = vmatprep.subr.mxu0 0.0
        %728 = vmatpush1.msra.mxu0 0.0
        %729 = vmatprep.subr.mxu0 0.0
        %730 = vmatpush1.msra.mxu0 0.0
        %731 = vmatprep.subr.mxu0 0.0
        %732 = vmatpush1.msra.mxu0 0.0
        %733 = vmatprep.subr.mxu0 0.0
        %734 = vmatpush1.msra.mxu0 0.0
        %735 = vmatprep.subr.mxu0 0.0
        %736 = vmatpush1.msra.mxu0 0.0
        %737 = vmatprep.subr.mxu0 0.0
        %738 = vmatpush1.msra.mxu0 0.0
        %739 = vmatprep.subr.mxu0 0.0
        %740 = vmatpush1.msra.mxu0 0.0
        %741 = vmatprep.subr.mxu0 0.0
        %742 = vmatpush1.msra.mxu0 0.0
        %743 = vmatprep.subr.mxu0 0.0
        %744 = vmatpush1.msra.mxu0 0.0
        %745 = vmatprep.subr.mxu0 0.0
        %746 = vmatpush1.msra.mxu0 0.0
        %747 = vmatprep.subr.mxu0 0.0
        %748 = vmatpush1.msra.mxu0 0.0
        %749 = vmatprep.subr.mxu0 0.0
        %750 = vmatpush1.msra.mxu0 0.0
        %751 = vmatprep.subr.mxu0 0.0
        %752 = vmatpush1.msra.mxu0 0.0
        %753 = vmatprep.subr.mxu0 0.0
        %754 = vmatpush1.msra.mxu0 %v721
        %755 = vmatprep.subr.mxu0 0.0
        %756 = vmatpush2.msra.mxu0 0.0
        %757 = vmatprep.subr.mxu0 0.0
        %758 = vmatpush2.msra.mxu0 0.0
        %759 = vmatprep.subr.mxu0 0.0
        %760 = vmatpush2.msra.mxu0 0.0
        %761 = vmatprep.subr.mxu0 0.0
        %762 = vmatpush2.msra.mxu0 0.0
        %763 = vmatprep.subr.mxu0 0.0
        %764 = vmatpush2.msra.mxu0 0.0
        %765 = vmatprep.subr.mxu0 0.0
        %766 = vmatpush2.msra.mxu0 0.0
        %767 = vmatprep.subr.mxu0 0.0
        %768 = vmatpush2.msra.mxu0 0.0
        %769 = vmatprep.subr.mxu0 0.0
        %770 = vmatpush2.msra.mxu0 0.0
        %771 = vmatprep.subr.mxu0 0.0
        %772 = vmatpush2.msra.mxu0 0.0
        %773 = vmatprep.subr.mxu0 0.0
        %774 = vmatpush2.msra.mxu0 0.0
        %775 = vmatprep.subr.mxu0 0.0
        %776 = vmatpush2.msra.mxu0 0.0
        %777 = vmatprep.subr.mxu0 0.0
        %778 = vmatpush2.msra.mxu0 0.0
        %779 = vmatprep.subr.mxu0 0.0
        %780 = vmatpush2.msra.mxu0 0.0
        %781 = vmatprep.subr.mxu0 0.0
        %782 = vmatpush2.msra.mxu0 0.0
        %783 = vmatprep.subr.mxu0 0.0
        %784 = vmatpush2.msra.mxu0 0.0
        %785 = vmatprep.subr.mxu0 0.0
        %786 = vmatpush2.msra.mxu0 0.0
        %787 = vmatprep.mubr.f32.mxu0 0.0
        %788 = vmatmul.mubr.f32.gmra.mxu0 %v523
        %v789 = vpop.f32.mrf.mxu0
        %v790 = vadd.f32 0.0, %v789
        %v791 = vpop.f32.mrf.mxu0
        %792 = vmatprep.mubr.f32.mxu0 0.0
        %793 = vmatmul.mubr.f32.gmra.mxu0 %v526
        %v794 = vpop.f32.mrf.mxu0
        %v795 = vadd.f32 0.0, %v794
        %v796 = vpop.f32.mrf.mxu0
        %797 = vmatprep.mubr.f32.mxu0 0.0
        %798 = vmatmul.mubr.f32.gmra.mxu0 %v529
        %v799 = vpop.f32.mrf.mxu0
        %v800 = vadd.f32 0.0, %v799
        %v801 = vpop.f32.mrf.mxu0
        %802 = vmatprep.mubr.f32.mxu0 0.0
        %803 = vmatmul.mubr.f32.gmra.mxu0 %v532
        %v804 = vpop.f32.mrf.mxu0
        %v805 = vadd.f32 0.0, %v804
        %v806 = vpop.f32.mrf.mxu0
        %807 = vmatprep.mubr.f32.mxu0 0.0
        %808 = vmatmul.mubr.f32.gmra.mxu0 %v535
        %v809 = vpop.f32.mrf.mxu0
        %v810 = vadd.f32 0.0, %v809
        %v811 = vpop.f32.mrf.mxu0
        %812 = vmatprep.mubr.f32.mxu0 0.0
        %813 = vmatmul.mubr.f32.gmra.mxu0 %v538
        %v814 = vpop.f32.mrf.mxu0
        %v815 = vadd.f32 0.0, %v814
        %v816 = vpop.f32.mrf.mxu0
        %817 = vmatprep.mubr.f32.mxu0 0.0
        %818 = vmatmul.mubr.f32.gmra.mxu0 %v541
        %v819 = vpop.f32.mrf.mxu0
        %v820 = vadd.f32 0.0, %v819
        %v821 = vpop.f32.mrf.mxu0
        %822 = vmatprep.mubr.f32.mxu0 0.0
        %823 = vmatmul.mubr.f32.gmra.mxu0 %v544
        %v824 = vpop.f32.mrf.mxu0
        %v825 = vadd.f32 0.0, %v824
        %v826 = vpop.f32.mrf.mxu0
        %827 = vmatprep.mubr.f32.mxu0 0.0
        %828 = vmatmul.mubr.f32.gmra.mxu0 %v547
        %v829 = vpop.f32.mrf.mxu0
        %v830 = vadd.f32 0.0, %v829
        %v831 = vpop.f32.mrf.mxu0
        %832 = vmatprep.mubr.f32.mxu0 0.0
        %833 = vmatmul.mubr.f32.gmra.mxu0 %v550
        %v834 = vpop.f32.mrf.mxu0
        %v835 = vadd.f32 0.0, %v834
        %v836 = vpop.f32.mrf.mxu0
        %837 = vmatprep.mubr.f32.mxu0 0.0
        %838 = vmatmul.mubr.f32.gmra.mxu0 %v553
        %v839 = vpop.f32.mrf.mxu0
        %v840 = vadd.f32 0.0, %v839
        %v841 = vpop.f32.mrf.mxu0
        %842 = vmatprep.mubr.f32.mxu0 0.0
        %843 = vmatmul.mubr.f32.gmra.mxu0 %v556
        %v844 = vpop.f32.mrf.mxu0
        %v845 = vadd.f32 0.0, %v844
        %v846 = vpop.f32.mrf.mxu0
        %847 = vmatprep.mubr.f32.mxu0 0.0
        %848 = vmatmul.mubr.f32.gmra.mxu0 %v559
        %v849 = vpop.f32.mrf.mxu0
        %v850 = vadd.f32 0.0, %v849
        %v851 = vpop.f32.mrf.mxu0
        %852 = vmatprep.mubr.f32.mxu0 0.0
        %853 = vmatmul.mubr.f32.gmra.mxu0 %v562
        %v854 = vpop.f32.mrf.mxu0
        %v855 = vadd.f32 0.0, %v854
        %v856 = vpop.f32.mrf.mxu0
        %857 = vmatprep.mubr.f32.mxu0 0.0
        %858 = vmatmul.mubr.f32.gmra.mxu0 %v565
        %v859 = vpop.f32.mrf.mxu0
        %v860 = vadd.f32 0.0, %v859
        %v861 = vpop.f32.mrf.mxu0
        %862 = vmatprep.mubr.f32.mxu0 0.0
        %863 = vmatmul.mubr.f32.gmra.mxu0 %v568
        %v864 = vpop.f32.mrf.mxu0
        %v865 = vadd.f32 0.0, %v864
        %v866 = vpop.f32.mrf.mxu0
        %867 = vdwg.mxu0
        %vm868 = vcmask 64512
        %869 = vst.msk [vmem:[#allocation7 + $0x8] sm:$0xff] %vm868, %v641
        %870 = vst.msk [vmem:[#allocation7 + $0x10] sm:$0xff] %vm868, %v646
        %871 = vst.msk [vmem:[#allocation7 + $0x18] sm:$0xff] %vm868, %v651
        %872 = vst.msk [vmem:[#allocation7 + $0x20] sm:$0xff] %vm868, %v656
        %873 = vst.msk [vmem:[#allocation7 + $0x28] sm:$0xff] %vm868, %v661
        %874 = vst.msk [vmem:[#allocation7 + $0x30] sm:$0xff] %vm868, %v666
        %875 = vst.msk [vmem:[#allocation7 + $0x38] sm:$0xff] %vm868, %v671
        %876 = vst.msk [vmem:[#allocation7 + $0x40] sm:$0xff] %vm868, %v676
        %877 = vst.msk [vmem:[#allocation7 + $0x48] sm:$0xff] %vm868, %v681
        %878 = vst.msk [vmem:[#allocation7 + $0x50] sm:$0xff] %vm868, %v686
        %879 = vst.msk [vmem:[#allocation7 + $0x58] sm:$0xff] %vm868, %v691
        %880 = vst.msk [vmem:[#allocation7 + $0x60] sm:$0xff] %vm868, %v696
        %881 = vst.msk [vmem:[#allocation7 + $0x68] sm:$0xff] %vm868, %v701
        %882 = vst.msk [vmem:[#allocation7 + $0x70] sm:$0xff] %vm868, %v706
        %883 = vst.msk [vmem:[#allocation7 + $0x78] sm:$0xff] %vm868, %v711
        %884 = vst.msk [vmem:[#allocation7 + $0x80] sm:$0xff] %vm868, %v716
        %v885 = vld [vmem:[%s3] sm:$0xf]
        %v886 = vld [vmem:[#allocation7 + $0x5] sm:$0xff]
        %v887 = vld [vmem:[#allocation7 + $0xd] sm:$0xff]
        %v888 = vld [vmem:[#allocation7 + $0x15] sm:$0xff]
        %v889 = vld [vmem:[#allocation7 + $0x1d] sm:$0xff]
        %v890 = vld [vmem:[#allocation7 + $0x25] sm:$0xff]
        %v891 = vld [vmem:[#allocation7 + $0x2d] sm:$0xff]
        %v892 = vld [vmem:[#allocation7 + $0x35] sm:$0xff]
        %v893 = vld [vmem:[#allocation7 + $0x3d] sm:$0xff]
        %v894 = vld [vmem:[#allocation7 + $0x45] sm:$0xff]
        %v895 = vld [vmem:[#allocation7 + $0x4d] sm:$0xff]
        %v896 = vld [vmem:[#allocation7 + $0x55] sm:$0xff]
        %v897 = vld [vmem:[#allocation7 + $0x5d] sm:$0xff]
        %v898 = vld [vmem:[#allocation7 + $0x65] sm:$0xff]
        %v899 = vld [vmem:[#allocation7 + $0x6d] sm:$0xff]
        %v900 = vld [vmem:[#allocation7 + $0x75] sm:$0xff]
        %v901 = vld [vmem:[#allocation7 + $0x7d] sm:$0xff]
        %v902 = vlaneseq
        %v903 = vshrl.u32 %v902, 7
        %v904 = vsub.s32 0, %v903
        %v905 = vrot.slane %v885, %v904
        %v906 = vmul.f32 %v886, %v905
        %v907 = vmul.f32 %v887, %v905
        %v908 = vmul.f32 %v888, %v905
        %v909 = vmul.f32 %v889, %v905
        %v910 = vmul.f32 %v890, %v905
        %v911 = vmul.f32 %v891, %v905
        %v912 = vmul.f32 %v892, %v905
        %v913 = vmul.f32 %v893, %v905
        %v914 = vmul.f32 %v894, %v905
        %v915 = vmul.f32 %v895, %v905
        %v916 = vmul.f32 %v896, %v905
        %v917 = vmul.f32 %v897, %v905
        %v918 = vmul.f32 %v898, %v905
        %v919 = vmul.f32 %v899, %v905
        %v920 = vmul.f32 %v900, %v905
        %v921 = vmul.f32 %v901, %v905
        %v922 = vld [vmem:[#allocation7 + $0x6] sm:$0xff]
        %v923 = vld [vmem:[#allocation7 + $0xe] sm:$0xff]
        %v924 = vld [vmem:[#allocation7 + $0x16] sm:$0xff]
        %v925 = vld [vmem:[#allocation7 + $0x1e] sm:$0xff]
        %v926 = vld [vmem:[#allocation7 + $0x26] sm:$0xff]
        %v927 = vld [vmem:[#allocation7 + $0x2e] sm:$0xff]
        %v928 = vld [vmem:[#allocation7 + $0x36] sm:$0xff]
        %v929 = vld [vmem:[#allocation7 + $0x3e] sm:$0xff]
        %v930 = vld [vmem:[#allocation7 + $0x46] sm:$0xff]
        %v931 = vld [vmem:[#allocation7 + $0x4e] sm:$0xff]
        %v932 = vld [vmem:[#allocation7 + $0x56] sm:$0xff]
        %v933 = vld [vmem:[#allocation7 + $0x5e] sm:$0xff]
        %v934 = vld [vmem:[#allocation7 + $0x66] sm:$0xff]
        %v935 = vld [vmem:[#allocation7 + $0x6e] sm:$0xff]
        %v936 = vld [vmem:[#allocation7 + $0x76] sm:$0xff]
        %v937 = vld [vmem:[#allocation7 + $0x7e] sm:$0xff]
        %v938 = vlaneseq
        %v939 = vshrl.u32 %v938, 7
        %v940 = vsub.s32 1, %v939
        %v941 = vrot.slane %v885, %v940
        %v942 = vmul.f32 %v922, %v941
        %v943 = vmul.f32 %v923, %v941
        %v944 = vmul.f32 %v924, %v941
        %v945 = vmul.f32 %v925, %v941
        %v946 = vmul.f32 %v926, %v941
        %v947 = vmul.f32 %v927, %v941
        %v948 = vmul.f32 %v928, %v941
        %v949 = vmul.f32 %v929, %v941
        %v950 = vmul.f32 %v930, %v941
        %v951 = vmul.f32 %v931, %v941
        %v952 = vmul.f32 %v932, %v941
        %v953 = vmul.f32 %v933, %v941
        %v954 = vmul.f32 %v934, %v941
        %v955 = vmul.f32 %v935, %v941
        %v956 = vmul.f32 %v936, %v941
        %v957 = vmul.f32 %v937, %v941
        %v958 = vadd.f32 %v906, %v942
        %v959 = vadd.f32 %v907, %v943
        %v960 = vadd.f32 %v908, %v944
        %v961 = vadd.f32 %v909, %v945
        %v962 = vadd.f32 %v910, %v946
        %v963 = vadd.f32 %v911, %v947
        %v964 = vadd.f32 %v912, %v948
        %v965 = vadd.f32 %v913, %v949
        %v966 = vadd.f32 %v914, %v950
        %v967 = vadd.f32 %v915, %v951
        %v968 = vadd.f32 %v916, %v952
        %v969 = vadd.f32 %v917, %v953
        %v970 = vadd.f32 %v918, %v954
        %v971 = vadd.f32 %v919, %v955
        %v972 = vadd.f32 %v920, %v956
        %v973 = vadd.f32 %v921, %v957
        %v974 = vld [vmem:[#allocation7 + $0x7] sm:$0xff]
        %v975 = vld [vmem:[#allocation7 + $0xf] sm:$0xff]
        %v976 = vld [vmem:[#allocation7 + $0x17] sm:$0xff]
        %v977 = vld [vmem:[#allocation7 + $0x1f] sm:$0xff]
        %v978 = vld [vmem:[#allocation7 + $0x27] sm:$0xff]
        %v979 = vld [vmem:[#allocation7 + $0x2f] sm:$0xff]
        %v980 = vld [vmem:[#allocation7 + $0x37] sm:$0xff]
        %v981 = vld [vmem:[#allocation7 + $0x3f] sm:$0xff]
        %v982 = vld [vmem:[#allocation7 + $0x47] sm:$0xff]
        %v983 = vld [vmem:[#allocation7 + $0x4f] sm:$0xff]
        %v984 = vld [vmem:[#allocation7 + $0x57] sm:$0xff]
        %v985 = vld [vmem:[#allocation7 + $0x5f] sm:$0xff]
        %v986 = vld [vmem:[#allocation7 + $0x67] sm:$0xff]
        %v987 = vld [vmem:[#allocation7 + $0x6f] sm:$0xff]
        %v988 = vld [vmem:[#allocation7 + $0x77] sm:$0xff]
        %v989 = vld [vmem:[#allocation7 + $0x7f] sm:$0xff]
        %v990 = vlaneseq
        %v991 = vshrl.u32 %v990, 7
        %v992 = vsub.s32 2, %v991
        %v993 = vrot.slane %v885, %v992
        %v994 = vmul.f32 %v974, %v993
        %v995 = vmul.f32 %v975, %v993
        %v996 = vmul.f32 %v976, %v993
        %v997 = vmul.f32 %v977, %v993
        %v998 = vmul.f32 %v978, %v993
        %v999 = vmul.f32 %v979, %v993
        %v1000 = vmul.f32 %v980, %v993
        %v1001 = vmul.f32 %v981, %v993
        %v1002 = vmul.f32 %v982, %v993
        %v1003 = vmul.f32 %v983, %v993
        %v1004 = vmul.f32 %v984, %v993
        %v1005 = vmul.f32 %v985, %v993
        %v1006 = vmul.f32 %v986, %v993
        %v1007 = vmul.f32 %v987, %v993
        %v1008 = vmul.f32 %v988, %v993
        %v1009 = vmul.f32 %v989, %v993
        %v1010 = vadd.f32 %v958, %v994
        %v1011 = vadd.f32 %v959, %v995
        %v1012 = vadd.f32 %v960, %v996
        %v1013 = vadd.f32 %v961, %v997
        %v1014 = vadd.f32 %v962, %v998
        %v1015 = vadd.f32 %v963, %v999
        %v1016 = vadd.f32 %v964, %v1000
        %v1017 = vadd.f32 %v965, %v1001
        %v1018 = vadd.f32 %v966, %v1002
        %v1019 = vadd.f32 %v967, %v1003
        %v1020 = vadd.f32 %v968, %v1004
        %v1021 = vadd.f32 %v969, %v1005
        %v1022 = vadd.f32 %v970, %v1006
        %v1023 = vadd.f32 %v971, %v1007
        %v1024 = vadd.f32 %v972, %v1008
        %v1025 = vadd.f32 %v973, %v1009
        %v1026 = vld [vmem:[#allocation7 + $0x8] sm:$0xff]
        %v1027 = vld [vmem:[#allocation7 + $0x10] sm:$0xff]
        %v1028 = vld [vmem:[#allocation7 + $0x18] sm:$0xff]
        %v1029 = vld [vmem:[#allocation7 + $0x20] sm:$0xff]
        %v1030 = vld [vmem:[#allocation7 + $0x28] sm:$0xff]
        %v1031 = vld [vmem:[#allocation7 + $0x30] sm:$0xff]
        %v1032 = vld [vmem:[#allocation7 + $0x38] sm:$0xff]
        %v1033 = vld [vmem:[#allocation7 + $0x40] sm:$0xff]
        %v1034 = vld [vmem:[#allocation7 + $0x48] sm:$0xff]
        %v1035 = vld [vmem:[#allocation7 + $0x50] sm:$0xff]
        %v1036 = vld [vmem:[#allocation7 + $0x58] sm:$0xff]
        %v1037 = vld [vmem:[#allocation7 + $0x60] sm:$0xff]
        %v1038 = vld [vmem:[#allocation7 + $0x68] sm:$0xff]
        %v1039 = vld [vmem:[#allocation7 + $0x70] sm:$0xff]
        %v1040 = vld [vmem:[#allocation7 + $0x78] sm:$0xff]
        %v1041 = vld [vmem:[#allocation7 + $0x80] sm:$0xff]
        %v1042 = vlaneseq
        %v1043 = vshrl.u32 %v1042, 7
        %v1044 = vsub.s32 3, %v1043
        %v1045 = vrot.slane %v885, %v1044
        %v1046 = vmul.f32 %v1026, %v1045
        %v1047 = vmul.f32 %v1027, %v1045
        %v1048 = vmul.f32 %v1028, %v1045
        %v1049 = vmul.f32 %v1029, %v1045
        %v1050 = vmul.f32 %v1030, %v1045
        %v1051 = vmul.f32 %v1031, %v1045
        %v1052 = vmul.f32 %v1032, %v1045
        %v1053 = vmul.f32 %v1033, %v1045
        %v1054 = vmul.f32 %v1034, %v1045
        %v1055 = vmul.f32 %v1035, %v1045
        %v1056 = vmul.f32 %v1036, %v1045
        %v1057 = vmul.f32 %v1037, %v1045
        %v1058 = vmul.f32 %v1038, %v1045
        %v1059 = vmul.f32 %v1039, %v1045
        %v1060 = vmul.f32 %v1040, %v1045
        %v1061 = vmul.f32 %v1041, %v1045
        %v1062 = vadd.f32 %v1010, %v1046
        %v1063 = vadd.f32 %v1011, %v1047
        %v1064 = vadd.f32 %v1012, %v1048
        %v1065 = vadd.f32 %v1013, %v1049
        %v1066 = vadd.f32 %v1014, %v1050
        %v1067 = vadd.f32 %v1015, %v1051
        %v1068 = vadd.f32 %v1016, %v1052
        %v1069 = vadd.f32 %v1017, %v1053
        %v1070 = vadd.f32 %v1018, %v1054
        %v1071 = vadd.f32 %v1019, %v1055
        %v1072 = vadd.f32 %v1020, %v1056
        %v1073 = vadd.f32 %v1021, %v1057
        %v1074 = vadd.f32 %v1022, %v1058
        %v1075 = vadd.f32 %v1023, %v1059
        %v1076 = vadd.f32 %v1024, %v1060
        %v1077 = vadd.f32 %v1025, %v1061
        %vm1078 = vcmask 64517
        %1079 = vst.msk [vmem:[#allocation7] sm:$0xe0] %vm1078, %v716
        %v1080 = vld [vmem:[%s4] sm:$0x1]
        %v1082 = vlaneseq
        %v1083 = vshrl.u32 %v1082, 7
        %v1084 = vsub.s32 0, %v1083
        %v1085 = vrot.slane %v1080, %v1084
        %v1087 = vadd.f32 %v1062, %v1085
        %v1088 = vadd.f32 %v1063, %v1085
        %v1089 = vadd.f32 %v1064, %v1085
        %v1090 = vadd.f32 %v1065, %v1085
        %v1091 = vadd.f32 %v1066, %v1085
        %v1092 = vadd.f32 %v1067, %v1085
        %v1093 = vadd.f32 %v1068, %v1085
        %v1094 = vadd.f32 %v1069, %v1085
        %v1095 = vadd.f32 %v1070, %v1085
        %v1096 = vadd.f32 %v1071, %v1085
        %v1097 = vadd.f32 %v1072, %v1085
        %v1098 = vadd.f32 %v1073, %v1085
        %v1099 = vadd.f32 %v1074, %v1085
        %v1100 = vadd.f32 %v1075, %v1085
        %v1101 = vadd.f32 %v1076, %v1085
        %v1102 = vadd.f32 %v1077, %v1085
        %v1103 = vsub.f32 0.0, %v1087
        %v1104 = vsub.f32 0.0, %v1088
        %v1105 = vsub.f32 0.0, %v1089
        %v1106 = vsub.f32 0.0, %v1090
        %v1107 = vsub.f32 0.0, %v1091
        %v1108 = vsub.f32 0.0, %v1092
        %v1109 = vsub.f32 0.0, %v1093
        %v1110 = vsub.f32 0.0, %v1094
        %v1111 = vsub.f32 0.0, %v1095
        %v1112 = vsub.f32 0.0, %v1096
        %v1113 = vsub.f32 0.0, %v1097
        %v1114 = vsub.f32 0.0, %v1098
        %v1115 = vsub.f32 0.0, %v1099
        %v1116 = vsub.f32 0.0, %v1100
        %v1117 = vsub.f32 0.0, %v1101
        %v1118 = vsub.f32 0.0, %v1102
        %v1119 = vmul.f32 %v1103, 1.442695
        %v1120 = vpow.pop %v1119
        %v1121 = vmul.f32 %v1104, 1.442695
        %v1122 = vpow.pop %v1121
        %v1123 = vmul.f32 %v1105, 1.442695
        %v1124 = vpow.pop %v1123
        %v1125 = vmul.f32 %v1106, 1.442695
        %v1126 = vpow.pop %v1125
        %v1127 = vmul.f32 %v1107, 1.442695
        %v1128 = vpow.pop %v1127
        %v1129 = vmul.f32 %v1108, 1.442695
        %v1130 = vpow.pop %v1129
        %v1131 = vmul.f32 %v1109, 1.442695
        %v1132 = vpow.pop %v1131
        %v1133 = vmul.f32 %v1110, 1.442695
        %v1134 = vpow.pop %v1133
        %v1135 = vmul.f32 %v1111, 1.442695
        %v1136 = vpow.pop %v1135
        %v1137 = vmul.f32 %v1112, 1.442695
        %v1138 = vpow.pop %v1137
        %v1139 = vmul.f32 %v1113, 1.442695
        %v1140 = vpow.pop %v1139
        %v1141 = vmul.f32 %v1114, 1.442695
        %v1142 = vpow.pop %v1141
        %v1143 = vmul.f32 %v1115, 1.442695
        %v1144 = vpow.pop %v1143
        %v1145 = vmul.f32 %v1116, 1.442695
        %v1146 = vpow.pop %v1145
        %v1147 = vmul.f32 %v1117, 1.442695
        %v1148 = vpow.pop %v1147
        %v1149 = vmul.f32 %v1118, 1.442695
        %v1150 = vpow.pop %v1149
        %v1151 = vadd.f32 %v1120, 1.0
        %v1152 = vadd.f32 %v1122, 1.0
        %v1153 = vadd.f32 %v1124, 1.0
        %v1154 = vadd.f32 %v1126, 1.0
        %v1155 = vadd.f32 %v1128, 1.0
        %v1156 = vadd.f32 %v1130, 1.0
        %v1157 = vadd.f32 %v1132, 1.0
        %v1158 = vadd.f32 %v1134, 1.0
        %v1159 = vadd.f32 %v1136, 1.0
        %v1160 = vadd.f32 %v1138, 1.0
        %v1161 = vadd.f32 %v1140, 1.0
        %v1162 = vadd.f32 %v1142, 1.0
        %v1163 = vadd.f32 %v1144, 1.0
        %v1164 = vadd.f32 %v1146, 1.0
        %v1165 = vadd.f32 %v1148, 1.0
        %v1166 = vadd.f32 %v1150, 1.0
        %v1167 = vrcp.pop %v1151
        %v1168 = vmul.f32 1.0, %v1167
        %v1169 = vrcp.pop %v1152
        %v1170 = vmul.f32 1.0, %v1169
        %v1171 = vrcp.pop %v1153
        %v1172 = vmul.f32 1.0, %v1171
        %v1173 = vrcp.pop %v1154
        %v1174 = vmul.f32 1.0, %v1173
        %v1175 = vrcp.pop %v1155
        %v1176 = vmul.f32 1.0, %v1175
        %v1177 = vrcp.pop %v1156
        %v1178 = vmul.f32 1.0, %v1177
        %v1179 = vrcp.pop %v1157
        %v1180 = vmul.f32 1.0, %v1179
        %v1181 = vrcp.pop %v1158
        %v1182 = vmul.f32 1.0, %v1181
        %v1183 = vrcp.pop %v1159
        %v1184 = vmul.f32 1.0, %v1183
        %v1185 = vrcp.pop %v1160
        %v1186 = vmul.f32 1.0, %v1185
        %v1187 = vrcp.pop %v1161
        %v1188 = vmul.f32 1.0, %v1187
        %v1189 = vrcp.pop %v1162
        %v1190 = vmul.f32 1.0, %v1189
        %v1191 = vrcp.pop %v1163
        %v1192 = vmul.f32 1.0, %v1191
        %v1193 = vrcp.pop %v1164
        %v1194 = vmul.f32 1.0, %v1193
        %v1195 = vrcp.pop %v1165
        %v1196 = vmul.f32 1.0, %v1195
        %v1197 = vrcp.pop %v1166
        %v1198 = vmul.f32 1.0, %v1197
        %v1199 = vmul.f32 %v1087, %v1168
        %v1200 = vmul.f32 %v1088, %v1170
        %v1201 = vmul.f32 %v1089, %v1172
        %v1202 = vmul.f32 %v1090, %v1174
        %v1203 = vmul.f32 %v1091, %v1176
        %v1204 = vmul.f32 %v1092, %v1178
        %v1205 = vmul.f32 %v1093, %v1180
        %v1206 = vmul.f32 %v1094, %v1182
        %v1207 = vmul.f32 %v1095, %v1184
        %v1208 = vmul.f32 %v1096, %v1186
        %v1209 = vmul.f32 %v1097, %v1188
        %v1210 = vmul.f32 %v1098, %v1190
        %v1211 = vmul.f32 %v1099, %v1192
        %v1212 = vmul.f32 %v1100, %v1194
        %v1213 = vmul.f32 %v1101, %v1196
        %v1214 = vmul.f32 %v1102, %v1198
        %v1215 = vld [vmem:[%s5] sm:$0xff]
        %v1216 = vld [vmem:[%s6] sm:$0x1]
        %v1218 = vlaneseq
        %v1219 = vshrl.u32 %v1218, 7
        %v1220 = vsub.s32 0, %v1219
        %v1221 = vrot.slane %v1216, %v1220
        %v1224 = vsel %vm868, %v1199, 0
        %v1227 = vsel %vm868, %v1200, 0
        %v1230 = vsel %vm868, %v1201, 0
        %v1233 = vsel %vm868, %v1202, 0
        %v1236 = vsel %vm868, %v1203, 0
        %v1239 = vsel %vm868, %v1204, 0
        %v1242 = vsel %vm868, %v1205, 0
        %v1245 = vsel %vm868, %v1206, 0
        %v1248 = vsel %vm868, %v1207, 0
        %v1251 = vsel %vm868, %v1208, 0
        %v1254 = vsel %vm868, %v1209, 0
        %v1257 = vsel %vm868, %v1210, 0
        %v1260 = vsel %vm868, %v1211, 0
        %v1263 = vsel %vm868, %v1212, 0
        %v1266 = vsel %vm868, %v1213, 0
        %v1269 = vsel %vm868, %v1214, 0
        %1271 = vmatprep.subr.mxu0 0.0
        %1272 = vmatpush1.msra.mxu0 0.0
        %1273 = vmatprep.subr.mxu0 0.0
        %1274 = vmatpush1.msra.mxu0 0.0
        %1275 = vmatprep.subr.mxu0 0.0
        %1276 = vmatpush1.msra.mxu0 0.0
        %1277 = vmatprep.subr.mxu0 0.0
        %1278 = vmatpush1.msra.mxu0 0.0
        %1279 = vmatprep.subr.mxu0 0.0
        %1280 = vmatpush1.msra.mxu0 0.0
        %1281 = vmatprep.subr.mxu0 0.0
        %1282 = vmatpush1.msra.mxu0 0.0
        %1283 = vmatprep.subr.mxu0 0.0
        %1284 = vmatpush1.msra.mxu0 0.0
        %1285 = vmatprep.subr.mxu0 0.0
        %1286 = vmatpush1.msra.mxu0 0.0
        %1287 = vmatprep.subr.mxu0 0.0
        %1288 = vmatpush1.msra.mxu0 0.0
        %1289 = vmatprep.subr.mxu0 0.0
        %1290 = vmatpush1.msra.mxu0 0.0
        %1291 = vmatprep.subr.mxu0 0.0
        %1292 = vmatpush1.msra.mxu0 0.0
        %1293 = vmatprep.subr.mxu0 0.0
        %1294 = vmatpush1.msra.mxu0 0.0
        %1295 = vmatprep.subr.mxu0 0.0
        %1296 = vmatpush1.msra.mxu0 0.0
        %1297 = vmatprep.subr.mxu0 0.0
        %1298 = vmatpush1.msra.mxu0 0.0
        %1299 = vmatprep.subr.mxu0 0.0
        %1300 = vmatpush1.msra.mxu0 0.0
        %1301 = vmatprep.subr.mxu0 0.0
        %1302 = vmatpush1.msra.mxu0 %v1215
        %1303 = vmatprep.subr.mxu0 0.0
        %1304 = vmatpush2.msra.mxu0 0.0
        %1305 = vmatprep.subr.mxu0 0.0
        %1306 = vmatpush2.msra.mxu0 0.0
        %1307 = vmatprep.subr.mxu0 0.0
        %1308 = vmatpush2.msra.mxu0 0.0
        %1309 = vmatprep.subr.mxu0 0.0
        %1310 = vmatpush2.msra.mxu0 0.0
        %1311 = vmatprep.subr.mxu0 0.0
        %1312 = vmatpush2.msra.mxu0 0.0
        %1313 = vmatprep.subr.mxu0 0.0
        %1314 = vmatpush2.msra.mxu0 0.0
        %1315 = vmatprep.subr.mxu0 0.0
        %1316 = vmatpush2.msra.mxu0 0.0
        %1317 = vmatprep.subr.mxu0 0.0
        %1318 = vmatpush2.msra.mxu0 0.0
        %1319 = vmatprep.subr.mxu0 0.0
        %1320 = vmatpush2.msra.mxu0 0.0
        %1321 = vmatprep.subr.mxu0 0.0
        %1322 = vmatpush2.msra.mxu0 0.0
        %1323 = vmatprep.subr.mxu0 0.0
        %1324 = vmatpush2.msra.mxu0 0.0
        %1325 = vmatprep.subr.mxu0 0.0
        %1326 = vmatpush2.msra.mxu0 0.0
        %1327 = vmatprep.subr.mxu0 0.0
        %1328 = vmatpush2.msra.mxu0 0.0
        %1329 = vmatprep.subr.mxu0 0.0
        %1330 = vmatpush2.msra.mxu0 0.0
        %1331 = vmatprep.subr.mxu0 0.0
        %1332 = vmatpush2.msra.mxu0 0.0
        %1333 = vmatprep.subr.mxu0 0.0
        %1334 = vmatpush2.msra.mxu0 0.0
        %1335 = vmatprep.mubr.f32.mxu0 0.0
        %1336 = vmatmul.mubr.f32.gmra.mxu0 %v1224
        %v1337 = vpop.f32.mrf.mxu0
        %v1338 = vadd.f32 %v1221, %v1337
        %v1339 = vpop.f32.mrf.mxu0
        %1340 = vmatprep.mubr.f32.mxu0 0.0
        %1341 = vmatmul.mubr.f32.gmra.mxu0 %v1227
        %v1342 = vpop.f32.mrf.mxu0
        %v1343 = vadd.f32 %v1221, %v1342
        %v1344 = vpop.f32.mrf.mxu0
        %1345 = vmatprep.mubr.f32.mxu0 0.0
        %1346 = vmatmul.mubr.f32.gmra.mxu0 %v1230
        %v1347 = vpop.f32.mrf.mxu0
        %v1348 = vadd.f32 %v1221, %v1347
        %v1349 = vpop.f32.mrf.mxu0
        %1350 = vmatprep.mubr.f32.mxu0 0.0
        %1351 = vmatmul.mubr.f32.gmra.mxu0 %v1233
        %v1352 = vpop.f32.mrf.mxu0
        %v1353 = vadd.f32 %v1221, %v1352
        %v1354 = vpop.f32.mrf.mxu0
        %1355 = vmatprep.mubr.f32.mxu0 0.0
        %1356 = vmatmul.mubr.f32.gmra.mxu0 %v1236
        %v1357 = vpop.f32.mrf.mxu0
        %v1358 = vadd.f32 %v1221, %v1357
        %v1359 = vpop.f32.mrf.mxu0
        %1360 = vmatprep.mubr.f32.mxu0 0.0
        %1361 = vmatmul.mubr.f32.gmra.mxu0 %v1239
        %v1362 = vpop.f32.mrf.mxu0
        %v1363 = vadd.f32 %v1221, %v1362
        %v1364 = vpop.f32.mrf.mxu0
        %1365 = vmatprep.mubr.f32.mxu0 0.0
        %1366 = vmatmul.mubr.f32.gmra.mxu0 %v1242
        %v1367 = vpop.f32.mrf.mxu0
        %v1368 = vadd.f32 %v1221, %v1367
        %v1369 = vpop.f32.mrf.mxu0
        %1370 = vmatprep.mubr.f32.mxu0 0.0
        %1371 = vmatmul.mubr.f32.gmra.mxu0 %v1245
        %v1372 = vpop.f32.mrf.mxu0
        %v1373 = vadd.f32 %v1221, %v1372
        %v1374 = vpop.f32.mrf.mxu0
        %1375 = vmatprep.mubr.f32.mxu0 0.0
        %1376 = vmatmul.mubr.f32.gmra.mxu0 %v1248
        %v1377 = vpop.f32.mrf.mxu0
        %v1378 = vadd.f32 %v1221, %v1377
        %v1379 = vpop.f32.mrf.mxu0
        %1380 = vmatprep.mubr.f32.mxu0 0.0
        %1381 = vmatmul.mubr.f32.gmra.mxu0 %v1251
        %v1382 = vpop.f32.mrf.mxu0
        %v1383 = vadd.f32 %v1221, %v1382
        %v1384 = vpop.f32.mrf.mxu0
        %1385 = vmatprep.mubr.f32.mxu0 0.0
        %1386 = vmatmul.mubr.f32.gmra.mxu0 %v1254
        %v1387 = vpop.f32.mrf.mxu0
        %v1388 = vadd.f32 %v1221, %v1387
        %v1389 = vpop.f32.mrf.mxu0
        %1390 = vmatprep.mubr.f32.mxu0 0.0
        %1391 = vmatmul.mubr.f32.gmra.mxu0 %v1257
        %v1392 = vpop.f32.mrf.mxu0
        %v1393 = vadd.f32 %v1221, %v1392
        %v1394 = vpop.f32.mrf.mxu0
        %1395 = vmatprep.mubr.f32.mxu0 0.0
        %1396 = vmatmul.mubr.f32.gmra.mxu0 %v1260
        %v1397 = vpop.f32.mrf.mxu0
        %v1398 = vadd.f32 %v1221, %v1397
        %v1399 = vpop.f32.mrf.mxu0
        %1400 = vmatprep.mubr.f32.mxu0 0.0
        %1401 = vmatmul.mubr.f32.gmra.mxu0 %v1263
        %v1402 = vpop.f32.mrf.mxu0
        %v1403 = vadd.f32 %v1221, %v1402
        %v1404 = vpop.f32.mrf.mxu0
        %1405 = vmatprep.mubr.f32.mxu0 0.0
        %1406 = vmatmul.mubr.f32.gmra.mxu0 %v1266
        %v1407 = vpop.f32.mrf.mxu0
        %v1408 = vadd.f32 %v1221, %v1407
        %v1409 = vpop.f32.mrf.mxu0
        %1410 = vmatprep.mubr.f32.mxu0 0.0
        %1411 = vmatmul.mubr.f32.gmra.mxu0 %v1269
        %v1412 = vpop.f32.mrf.mxu0
        %v1413 = vadd.f32 %v1221, %v1412
        %v1414 = vpop.f32.mrf.mxu0
        %1415 = vdwg.mxu0
        %v1416 = vmax.f32 %v1338, 0.0
        %v1417 = vmax.f32 %v1343, 0.0
        %v1418 = vmax.f32 %v1348, 0.0
        %v1419 = vmax.f32 %v1353, 0.0
        %v1420 = vmax.f32 %v1358, 0.0
        %v1421 = vmax.f32 %v1363, 0.0
        %v1422 = vmax.f32 %v1368, 0.0
        %v1423 = vmax.f32 %v1373, 0.0
        %v1424 = vmax.f32 %v1378, 0.0
        %v1425 = vmax.f32 %v1383, 0.0
        %v1426 = vmax.f32 %v1388, 0.0
        %v1427 = vmax.f32 %v1393, 0.0
        %v1428 = vmax.f32 %v1398, 0.0
        %v1429 = vmax.f32 %v1403, 0.0
        %v1430 = vmax.f32 %v1408, 0.0
        %v1431 = vmax.f32 %v1413, 0.0
        %v1432 = vand.u32 2147483647, %v1338
        %v1433 = vand.u32 2147483647, %v1343
        %v1434 = vand.u32 2147483647, %v1348
        %v1435 = vand.u32 2147483647, %v1353
        %v1436 = vand.u32 2147483647, %v1358
        %v1437 = vand.u32 2147483647, %v1363
        %v1438 = vand.u32 2147483647, %v1368
        %v1439 = vand.u32 2147483647, %v1373
        %v1440 = vand.u32 2147483647, %v1378
        %v1441 = vand.u32 2147483647, %v1383
        %v1442 = vand.u32 2147483647, %v1388
        %v1443 = vand.u32 2147483647, %v1393
        %v1444 = vand.u32 2147483647, %v1398
        %v1445 = vand.u32 2147483647, %v1403
        %v1446 = vand.u32 2147483647, %v1408
        %v1447 = vand.u32 2147483647, %v1413
        %v1448 = vsub.f32 0.0, %v1432
        %v1449 = vsub.f32 0.0, %v1433
        %v1450 = vsub.f32 0.0, %v1434
        %v1451 = vsub.f32 0.0, %v1435
        %v1452 = vsub.f32 0.0, %v1436
        %v1453 = vsub.f32 0.0, %v1437
        %v1454 = vsub.f32 0.0, %v1438
        %v1455 = vsub.f32 0.0, %v1439
        %v1456 = vsub.f32 0.0, %v1440
        %v1457 = vsub.f32 0.0, %v1441
        %v1458 = vsub.f32 0.0, %v1442
        %v1459 = vsub.f32 0.0, %v1443
        %v1460 = vsub.f32 0.0, %v1444
        %v1461 = vsub.f32 0.0, %v1445
        %v1462 = vsub.f32 0.0, %v1446
        %v1463 = vsub.f32 0.0, %v1447
        %v1464 = vmul.f32 %v1448, 1.442695
        %v1465 = vpow.pop %v1464
        %v1466 = vmul.f32 %v1449, 1.442695
        %v1467 = vpow.pop %v1466
        %v1468 = vmul.f32 %v1450, 1.442695
        %v1469 = vpow.pop %v1468
        %v1470 = vmul.f32 %v1451, 1.442695
        %v1471 = vpow.pop %v1470
        %v1472 = vmul.f32 %v1452, 1.442695
        %v1473 = vpow.pop %v1472
        %v1474 = vmul.f32 %v1453, 1.442695
        %v1475 = vpow.pop %v1474
        %v1476 = vmul.f32 %v1454, 1.442695
        %v1477 = vpow.pop %v1476
        %v1478 = vmul.f32 %v1455, 1.442695
        %v1479 = vpow.pop %v1478
        %v1480 = vmul.f32 %v1456, 1.442695
        %v1481 = vpow.pop %v1480
        %v1482 = vmul.f32 %v1457, 1.442695
        %v1483 = vpow.pop %v1482
        %v1484 = vmul.f32 %v1458, 1.442695
        %v1485 = vpow.pop %v1484
        %v1486 = vmul.f32 %v1459, 1.442695
        %v1487 = vpow.pop %v1486
        %v1488 = vmul.f32 %v1460, 1.442695
        %v1489 = vpow.pop %v1488
        %v1490 = vmul.f32 %v1461, 1.442695
        %v1491 = vpow.pop %v1490
        %v1492 = vmul.f32 %v1462, 1.442695
        %v1493 = vpow.pop %v1492
        %v1494 = vmul.f32 %v1463, 1.442695
        %v1495 = vpow.pop %v1494
        %v1496 = vadd.f32 %v1465, 1.0
        %v1497 = vlog2.pop %v1496
        %v1498 = vmul.f32 %v1497, 0.6931472
        %v1499 = vmul.f32 -0.5, %v1465
        %v1500 = vadd.f32 %v1499, 1.0
        %v1501 = vmul.f32 %v1500, %v1465
        %v1502 = vand.u32 2147483647, %v1465
        %vm1503 = vcmp.lt.f32.partialorder %v1502, 0.0004427343
        %v1504 = vsel %vm1503, %v1501, %v1498
        %v1505 = vadd.f32 %v1467, 1.0
        %v1506 = vlog2.pop %v1505
        %v1507 = vmul.f32 %v1506, 0.6931472
        %v1508 = vmul.f32 -0.5, %v1467
        %v1509 = vadd.f32 %v1508, 1.0
        %v1510 = vmul.f32 %v1509, %v1467
        %v1511 = vand.u32 2147483647, %v1467
        %vm1512 = vcmp.lt.f32.partialorder %v1511, 0.0004427343
        %v1513 = vsel %vm1512, %v1510, %v1507
        %v1514 = vadd.f32 %v1469, 1.0
        %v1515 = vlog2.pop %v1514
        %v1516 = vmul.f32 %v1515, 0.6931472
        %v1517 = vmul.f32 -0.5, %v1469
        %v1518 = vadd.f32 %v1517, 1.0
        %v1519 = vmul.f32 %v1518, %v1469
        %v1520 = vand.u32 2147483647, %v1469
        %vm1521 = vcmp.lt.f32.partialorder %v1520, 0.0004427343
        %v1522 = vsel %vm1521, %v1519, %v1516
        %v1523 = vadd.f32 %v1471, 1.0
        %v1524 = vlog2.pop %v1523
        %v1525 = vmul.f32 %v1524, 0.6931472
        %v1526 = vmul.f32 -0.5, %v1471
        %v1527 = vadd.f32 %v1526, 1.0
        %v1528 = vmul.f32 %v1527, %v1471
        %v1529 = vand.u32 2147483647, %v1471
        %vm1530 = vcmp.lt.f32.partialorder %v1529, 0.0004427343
        %v1531 = vsel %vm1530, %v1528, %v1525
        %v1532 = vadd.f32 %v1473, 1.0
        %v1533 = vlog2.pop %v1532
        %v1534 = vmul.f32 %v1533, 0.6931472
        %v1535 = vmul.f32 -0.5, %v1473
        %v1536 = vadd.f32 %v1535, 1.0
        %v1537 = vmul.f32 %v1536, %v1473
        %v1538 = vand.u32 2147483647, %v1473
        %vm1539 = vcmp.lt.f32.partialorder %v1538, 0.0004427343
        %v1540 = vsel %vm1539, %v1537, %v1534
        %v1541 = vadd.f32 %v1475, 1.0
        %v1542 = vlog2.pop %v1541
        %v1543 = vmul.f32 %v1542, 0.6931472
        %v1544 = vmul.f32 -0.5, %v1475
        %v1545 = vadd.f32 %v1544, 1.0
        %v1546 = vmul.f32 %v1545, %v1475
        %v1547 = vand.u32 2147483647, %v1475
        %vm1548 = vcmp.lt.f32.partialorder %v1547, 0.0004427343
        %v1549 = vsel %vm1548, %v1546, %v1543
        %v1550 = vadd.f32 %v1477, 1.0
        %v1551 = vlog2.pop %v1550
        %v1552 = vmul.f32 %v1551, 0.6931472
        %v1553 = vmul.f32 -0.5, %v1477
        %v1554 = vadd.f32 %v1553, 1.0
        %v1555 = vmul.f32 %v1554, %v1477
        %v1556 = vand.u32 2147483647, %v1477
        %vm1557 = vcmp.lt.f32.partialorder %v1556, 0.0004427343
        %v1558 = vsel %vm1557, %v1555, %v1552
        %v1559 = vadd.f32 %v1479, 1.0
        %v1560 = vlog2.pop %v1559
        %v1561 = vmul.f32 %v1560, 0.6931472
        %v1562 = vmul.f32 -0.5, %v1479
        %v1563 = vadd.f32 %v1562, 1.0
        %v1564 = vmul.f32 %v1563, %v1479
        %v1565 = vand.u32 2147483647, %v1479
        %vm1566 = vcmp.lt.f32.partialorder %v1565, 0.0004427343
        %v1567 = vsel %vm1566, %v1564, %v1561
        %v1568 = vadd.f32 %v1481, 1.0
        %v1569 = vlog2.pop %v1568
        %v1570 = vmul.f32 %v1569, 0.6931472
        %v1571 = vmul.f32 -0.5, %v1481
        %v1572 = vadd.f32 %v1571, 1.0
        %v1573 = vmul.f32 %v1572, %v1481
        %v1574 = vand.u32 2147483647, %v1481
        %vm1575 = vcmp.lt.f32.partialorder %v1574, 0.0004427343
        %v1576 = vsel %vm1575, %v1573, %v1570
        %v1577 = vadd.f32 %v1483, 1.0
        %v1578 = vlog2.pop %v1577
        %v1579 = vmul.f32 %v1578, 0.6931472
        %v1580 = vmul.f32 -0.5, %v1483
        %v1581 = vadd.f32 %v1580, 1.0
        %v1582 = vmul.f32 %v1581, %v1483
        %v1583 = vand.u32 2147483647, %v1483
        %vm1584 = vcmp.lt.f32.partialorder %v1583, 0.0004427343
        %v1585 = vsel %vm1584, %v1582, %v1579
        %v1586 = vadd.f32 %v1485, 1.0
        %v1587 = vlog2.pop %v1586
        %v1588 = vmul.f32 %v1587, 0.6931472
        %v1589 = vmul.f32 -0.5, %v1485
        %v1590 = vadd.f32 %v1589, 1.0
        %v1591 = vmul.f32 %v1590, %v1485
        %v1592 = vand.u32 2147483647, %v1485
        %vm1593 = vcmp.lt.f32.partialorder %v1592, 0.0004427343
        %v1594 = vsel %vm1593, %v1591, %v1588
        %v1595 = vadd.f32 %v1487, 1.0
        %v1596 = vlog2.pop %v1595
        %v1597 = vmul.f32 %v1596, 0.6931472
        %v1598 = vmul.f32 -0.5, %v1487
        %v1599 = vadd.f32 %v1598, 1.0
        %v1600 = vmul.f32 %v1599, %v1487
        %v1601 = vand.u32 2147483647, %v1487
        %vm1602 = vcmp.lt.f32.partialorder %v1601, 0.0004427343
        %v1603 = vsel %vm1602, %v1600, %v1597
        %v1604 = vadd.f32 %v1489, 1.0
        %v1605 = vlog2.pop %v1604
        %v1606 = vmul.f32 %v1605, 0.6931472
        %v1607 = vmul.f32 -0.5, %v1489
        %v1608 = vadd.f32 %v1607, 1.0
        %v1609 = vmul.f32 %v1608, %v1489
        %v1610 = vand.u32 2147483647, %v1489
        %vm1611 = vcmp.lt.f32.partialorder %v1610, 0.0004427343
        %v1612 = vsel %vm1611, %v1609, %v1606
        %v1613 = vadd.f32 %v1491, 1.0
        %v1614 = vlog2.pop %v1613
        %v1615 = vmul.f32 %v1614, 0.6931472
        %v1616 = vmul.f32 -0.5, %v1491
        %v1617 = vadd.f32 %v1616, 1.0
        %v1618 = vmul.f32 %v1617, %v1491
        %v1619 = vand.u32 2147483647, %v1491
        %vm1620 = vcmp.lt.f32.partialorder %v1619, 0.0004427343
        %v1621 = vsel %vm1620, %v1618, %v1615
        %v1622 = vadd.f32 %v1493, 1.0
        %v1623 = vlog2.pop %v1622
        %v1624 = vmul.f32 %v1623, 0.6931472
        %v1625 = vmul.f32 -0.5, %v1493
        %v1626 = vadd.f32 %v1625, 1.0
        %v1627 = vmul.f32 %v1626, %v1493
        %v1628 = vand.u32 2147483647, %v1493
        %vm1629 = vcmp.lt.f32.partialorder %v1628, 0.0004427343
        %v1630 = vsel %vm1629, %v1627, %v1624
        %v1631 = vadd.f32 %v1495, 1.0
        %v1632 = vlog2.pop %v1631
        %v1633 = vmul.f32 %v1632, 0.6931472
        %v1634 = vmul.f32 -0.5, %v1495
        %v1635 = vadd.f32 %v1634, 1.0
        %v1636 = vmul.f32 %v1635, %v1495
        %v1637 = vand.u32 2147483647, %v1495
        %vm1638 = vcmp.lt.f32.partialorder %v1637, 0.0004427343
        %v1639 = vsel %vm1638, %v1636, %v1633
        %v1640 = vadd.f32 %v1416, %v1504
        %v1641 = vadd.f32 %v1417, %v1513
        %v1642 = vadd.f32 %v1418, %v1522
        %v1643 = vadd.f32 %v1419, %v1531
        %v1644 = vadd.f32 %v1420, %v1540
        %v1645 = vadd.f32 %v1421, %v1549
        %v1646 = vadd.f32 %v1422, %v1558
        %v1647 = vadd.f32 %v1423, %v1567
        %v1648 = vadd.f32 %v1424, %v1576
        %v1649 = vadd.f32 %v1425, %v1585
        %v1650 = vadd.f32 %v1426, %v1594
        %v1651 = vadd.f32 %v1427, %v1603
        %v1652 = vadd.f32 %v1428, %v1612
        %v1653 = vadd.f32 %v1429, %v1621
        %v1654 = vadd.f32 %v1430, %v1630
        %v1655 = vadd.f32 %v1431, %v1639
        %v1656 = vld [vmem:[%s7] sm:$0xff]
        %1657 = vmatprep.subr.mxu0 0.0
        %1658 = vmatpush1.msra.mxu0 0.0
        %1659 = vmatprep.subr.mxu0 0.0
        %1660 = vmatpush1.msra.mxu0 0.0
        %1661 = vmatprep.subr.mxu0 0.0
        %1662 = vmatpush1.msra.mxu0 0.0
        %1663 = vmatprep.subr.mxu0 0.0
        %1664 = vmatpush1.msra.mxu0 0.0
        %1665 = vmatprep.subr.mxu0 0.0
        %1666 = vmatpush1.msra.mxu0 0.0
        %1667 = vmatprep.subr.mxu0 0.0
        %1668 = vmatpush1.msra.mxu0 0.0
        %1669 = vmatprep.subr.mxu0 0.0
        %1670 = vmatpush1.msra.mxu0 0.0
        %1671 = vmatprep.subr.mxu0 0.0
        %1672 = vmatpush1.msra.mxu0 0.0
        %1673 = vmatprep.subr.mxu0 0.0
        %1674 = vmatpush1.msra.mxu0 0.0
        %1675 = vmatprep.subr.mxu0 0.0
        %1676 = vmatpush1.msra.mxu0 0.0
        %1677 = vmatprep.subr.mxu0 0.0
        %1678 = vmatpush1.msra.mxu0 0.0
        %1679 = vmatprep.subr.mxu0 0.0
        %1680 = vmatpush1.msra.mxu0 0.0
        %1681 = vmatprep.subr.mxu0 0.0
        %1682 = vmatpush1.msra.mxu0 0.0
        %1683 = vmatprep.subr.mxu0 0.0
        %1684 = vmatpush1.msra.mxu0 0.0
        %1685 = vmatprep.subr.mxu0 0.0
        %1686 = vmatpush1.msra.mxu0 0.0
        %1687 = vmatprep.subr.mxu0 0.0
        %1688 = vmatpush1.msra.mxu0 %v1656
        %1689 = vmatprep.subr.mxu0 0.0
        %1690 = vmatpush2.msra.mxu0 0.0
        %1691 = vmatprep.subr.mxu0 0.0
        %1692 = vmatpush2.msra.mxu0 0.0
        %1693 = vmatprep.subr.mxu0 0.0
        %1694 = vmatpush2.msra.mxu0 0.0
        %1695 = vmatprep.subr.mxu0 0.0
        %1696 = vmatpush2.msra.mxu0 0.0
        %1697 = vmatprep.subr.mxu0 0.0
        %1698 = vmatpush2.msra.mxu0 0.0
        %1699 = vmatprep.subr.mxu0 0.0
        %1700 = vmatpush2.msra.mxu0 0.0
        %1701 = vmatprep.subr.mxu0 0.0
        %1702 = vmatpush2.msra.mxu0 0.0
        %1703 = vmatprep.subr.mxu0 0.0
        %1704 = vmatpush2.msra.mxu0 0.0
        %1705 = vmatprep.subr.mxu0 0.0
        %1706 = vmatpush2.msra.mxu0 0.0
        %1707 = vmatprep.subr.mxu0 0.0
        %1708 = vmatpush2.msra.mxu0 0.0
        %1709 = vmatprep.subr.mxu0 0.0
        %1710 = vmatpush2.msra.mxu0 0.0
        %1711 = vmatprep.subr.mxu0 0.0
        %1712 = vmatpush2.msra.mxu0 0.0
        %1713 = vmatprep.subr.mxu0 0.0
        %1714 = vmatpush2.msra.mxu0 0.0
        %1715 = vmatprep.subr.mxu0 0.0
        %1716 = vmatpush2.msra.mxu0 0.0
        %1717 = vmatprep.subr.mxu0 0.0
        %1718 = vmatpush2.msra.mxu0 0.0
        %1719 = vmatprep.subr.mxu0 0.0
        %1720 = vmatpush2.msra.mxu0 0.0
        %1721 = vmatprep.mubr.f32.mxu0 0.0
        %1722 = vmatmul.mubr.f32.gmra.mxu0 %v1224
        %v1723 = vpop.f32.mrf.mxu0
        %v1724 = vadd.f32 0.0, %v1723
        %v1725 = vpop.f32.mrf.mxu0
        %1726 = vmatprep.mubr.f32.mxu0 0.0
        %1727 = vmatmul.mubr.f32.gmra.mxu0 %v1227
        %v1728 = vpop.f32.mrf.mxu0
        %v1729 = vadd.f32 0.0, %v1728
        %v1730 = vpop.f32.mrf.mxu0
        %1731 = vmatprep.mubr.f32.mxu0 0.0
        %1732 = vmatmul.mubr.f32.gmra.mxu0 %v1230
        %v1733 = vpop.f32.mrf.mxu0
        %v1734 = vadd.f32 0.0, %v1733
        %v1735 = vpop.f32.mrf.mxu0
        %1736 = vmatprep.mubr.f32.mxu0 0.0
        %1737 = vmatmul.mubr.f32.gmra.mxu0 %v1233
        %v1738 = vpop.f32.mrf.mxu0
        %v1739 = vadd.f32 0.0, %v1738
        %v1740 = vpop.f32.mrf.mxu0
        %1741 = vmatprep.mubr.f32.mxu0 0.0
        %1742 = vmatmul.mubr.f32.gmra.mxu0 %v1236
        %v1743 = vpop.f32.mrf.mxu0
        %v1744 = vadd.f32 0.0, %v1743
        %v1745 = vpop.f32.mrf.mxu0
        %1746 = vmatprep.mubr.f32.mxu0 0.0
        %1747 = vmatmul.mubr.f32.gmra.mxu0 %v1239
        %v1748 = vpop.f32.mrf.mxu0
        %v1749 = vadd.f32 0.0, %v1748
        %v1750 = vpop.f32.mrf.mxu0
        %1751 = vmatprep.mubr.f32.mxu0 0.0
        %1752 = vmatmul.mubr.f32.gmra.mxu0 %v1242
        %v1753 = vpop.f32.mrf.mxu0
        %v1754 = vadd.f32 0.0, %v1753
        %v1755 = vpop.f32.mrf.mxu0
        %1756 = vmatprep.mubr.f32.mxu0 0.0
        %1757 = vmatmul.mubr.f32.gmra.mxu0 %v1245
        %v1758 = vpop.f32.mrf.mxu0
        %v1759 = vadd.f32 0.0, %v1758
        %v1760 = vpop.f32.mrf.mxu0
        %1761 = vmatprep.mubr.f32.mxu0 0.0
        %1762 = vmatmul.mubr.f32.gmra.mxu0 %v1248
        %v1763 = vpop.f32.mrf.mxu0
        %v1764 = vadd.f32 0.0, %v1763
        %v1765 = vpop.f32.mrf.mxu0
        %1766 = vmatprep.mubr.f32.mxu0 0.0
        %1767 = vmatmul.mubr.f32.gmra.mxu0 %v1251
        %v1768 = vpop.f32.mrf.mxu0
        %v1769 = vadd.f32 0.0, %v1768
        %v1770 = vpop.f32.mrf.mxu0
        %1771 = vmatprep.mubr.f32.mxu0 0.0
        %1772 = vmatmul.mubr.f32.gmra.mxu0 %v1254
        %v1773 = vpop.f32.mrf.mxu0
        %v1774 = vadd.f32 0.0, %v1773
        %v1775 = vpop.f32.mrf.mxu0
        %1776 = vmatprep.mubr.f32.mxu0 0.0
        %1777 = vmatmul.mubr.f32.gmra.mxu0 %v1257
        %v1778 = vpop.f32.mrf.mxu0
        %v1779 = vadd.f32 0.0, %v1778
        %v1780 = vpop.f32.mrf.mxu0
        %1781 = vmatprep.mubr.f32.mxu0 0.0
        %1782 = vmatmul.mubr.f32.gmra.mxu0 %v1260
        %v1783 = vpop.f32.mrf.mxu0
        %v1784 = vadd.f32 0.0, %v1783
        %v1785 = vpop.f32.mrf.mxu0
        %1786 = vmatprep.mubr.f32.mxu0 0.0
        %1787 = vmatmul.mubr.f32.gmra.mxu0 %v1263
        %v1788 = vpop.f32.mrf.mxu0
        %v1789 = vadd.f32 0.0, %v1788
        %v1790 = vpop.f32.mrf.mxu0
        %1791 = vmatprep.mubr.f32.mxu0 0.0
        %1792 = vmatmul.mubr.f32.gmra.mxu0 %v1266
        %v1793 = vpop.f32.mrf.mxu0
        %v1794 = vadd.f32 0.0, %v1793
        %v1795 = vpop.f32.mrf.mxu0
        %1796 = vmatprep.mubr.f32.mxu0 0.0
        %1797 = vmatmul.mubr.f32.gmra.mxu0 %v1269
        %v1798 = vpop.f32.mrf.mxu0
        %v1799 = vadd.f32 0.0, %v1798
        %v1800 = vpop.f32.mrf.mxu0
        %1801 = vdwg.mxu0
        %v1802 = vld [vmem:[%s8] sm:$0xff]
        %1803 = vmatprep.subr.mxu0 0.0
        %1804 = vmatpush1.msra.mxu0 0.0
        %1805 = vmatprep.subr.mxu0 0.0
        %1806 = vmatpush1.msra.mxu0 0.0
        %1807 = vmatprep.subr.mxu0 0.0
        %1808 = vmatpush1.msra.mxu0 0.0
        %1809 = vmatprep.subr.mxu0 0.0
        %1810 = vmatpush1.msra.mxu0 0.0
        %1811 = vmatprep.subr.mxu0 0.0
        %1812 = vmatpush1.msra.mxu0 0.0
        %1813 = vmatprep.subr.mxu0 0.0
        %1814 = vmatpush1.msra.mxu0 0.0
        %1815 = vmatprep.subr.mxu0 0.0
        %1816 = vmatpush1.msra.mxu0 0.0
        %1817 = vmatprep.subr.mxu0 0.0
        %1818 = vmatpush1.msra.mxu0 0.0
        %1819 = vmatprep.subr.mxu0 0.0
        %1820 = vmatpush1.msra.mxu0 0.0
        %1821 = vmatprep.subr.mxu0 0.0
        %1822 = vmatpush1.msra.mxu0 0.0
        %1823 = vmatprep.subr.mxu0 0.0
        %1824 = vmatpush1.msra.mxu0 0.0
        %1825 = vmatprep.subr.mxu0 0.0
        %1826 = vmatpush1.msra.mxu0 0.0
        %1827 = vmatprep.subr.mxu0 0.0
        %1828 = vmatpush1.msra.mxu0 0.0
        %1829 = vmatprep.subr.mxu0 0.0
        %1830 = vmatpush1.msra.mxu0 0.0
        %1831 = vmatprep.subr.mxu0 0.0
        %1832 = vmatpush1.msra.mxu0 0.0
        %1833 = vmatprep.subr.mxu0 0.0
        %1834 = vmatpush1.msra.mxu0 %v1802
        %1835 = vmatprep.subr.mxu0 0.0
        %1836 = vmatpush2.msra.mxu0 0.0
        %1837 = vmatprep.subr.mxu0 0.0
        %1838 = vmatpush2.msra.mxu0 0.0
        %1839 = vmatprep.subr.mxu0 0.0
        %1840 = vmatpush2.msra.mxu0 0.0
        %1841 = vmatprep.subr.mxu0 0.0
        %1842 = vmatpush2.msra.mxu0 0.0
        %1843 = vmatprep.subr.mxu0 0.0
        %1844 = vmatpush2.msra.mxu0 0.0
        %1845 = vmatprep.subr.mxu0 0.0
        %1846 = vmatpush2.msra.mxu0 0.0
        %1847 = vmatprep.subr.mxu0 0.0
        %1848 = vmatpush2.msra.mxu0 0.0
        %1849 = vmatprep.subr.mxu0 0.0
        %1850 = vmatpush2.msra.mxu0 0.0
        %1851 = vmatprep.subr.mxu0 0.0
        %1852 = vmatpush2.msra.mxu0 0.0
        %1853 = vmatprep.subr.mxu0 0.0
        %1854 = vmatpush2.msra.mxu0 0.0
        %1855 = vmatprep.subr.mxu0 0.0
        %1856 = vmatpush2.msra.mxu0 0.0
        %1857 = vmatprep.subr.mxu0 0.0
        %1858 = vmatpush2.msra.mxu0 0.0
        %1859 = vmatprep.subr.mxu0 0.0
        %1860 = vmatpush2.msra.mxu0 0.0
        %1861 = vmatprep.subr.mxu0 0.0
        %1862 = vmatpush2.msra.mxu0 0.0
        %1863 = vmatprep.subr.mxu0 0.0
        %1864 = vmatpush2.msra.mxu0 0.0
        %1865 = vmatprep.subr.mxu0 0.0
        %1866 = vmatpush2.msra.mxu0 0.0
        %1867 = vmatprep.mubr.f32.mxu0 0.0
        %1868 = vmatmul.mubr.f32.gmra.mxu0 %v1224
        %v1869 = vpop.f32.mrf.mxu0
        %v1870 = vadd.f32 0.0, %v1869
        %v1871 = vpop.f32.mrf.mxu0
        %1872 = vmatprep.mubr.f32.mxu0 0.0
        %1873 = vmatmul.mubr.f32.gmra.mxu0 %v1227
        %v1874 = vpop.f32.mrf.mxu0
        %v1875 = vadd.f32 0.0, %v1874
        %v1876 = vpop.f32.mrf.mxu0
        %1877 = vmatprep.mubr.f32.mxu0 0.0
        %1878 = vmatmul.mubr.f32.gmra.mxu0 %v1230
        %v1879 = vpop.f32.mrf.mxu0
        %v1880 = vadd.f32 0.0, %v1879
        %v1881 = vpop.f32.mrf.mxu0
        %1882 = vmatprep.mubr.f32.mxu0 0.0
        %1883 = vmatmul.mubr.f32.gmra.mxu0 %v1233
        %v1884 = vpop.f32.mrf.mxu0
        %v1885 = vadd.f32 0.0, %v1884
        %v1886 = vpop.f32.mrf.mxu0
        %1887 = vmatprep.mubr.f32.mxu0 0.0
        %1888 = vmatmul.mubr.f32.gmra.mxu0 %v1236
        %v1889 = vpop.f32.mrf.mxu0
        %v1890 = vadd.f32 0.0, %v1889
        %v1891 = vpop.f32.mrf.mxu0
        %1892 = vmatprep.mubr.f32.mxu0 0.0
        %1893 = vmatmul.mubr.f32.gmra.mxu0 %v1239
        %v1894 = vpop.f32.mrf.mxu0
        %v1895 = vadd.f32 0.0, %v1894
        %v1896 = vpop.f32.mrf.mxu0
        %1897 = vmatprep.mubr.f32.mxu0 0.0
        %1898 = vmatmul.mubr.f32.gmra.mxu0 %v1242
        %v1899 = vpop.f32.mrf.mxu0
        %v1900 = vadd.f32 0.0, %v1899
        %v1901 = vpop.f32.mrf.mxu0
        %1902 = vmatprep.mubr.f32.mxu0 0.0
        %1903 = vmatmul.mubr.f32.gmra.mxu0 %v1245
        %v1904 = vpop.f32.mrf.mxu0
        %v1905 = vadd.f32 0.0, %v1904
        %v1906 = vpop.f32.mrf.mxu0
        %1907 = vmatprep.mubr.f32.mxu0 0.0
        %1908 = vmatmul.mubr.f32.gmra.mxu0 %v1248
        %v1909 = vpop.f32.mrf.mxu0
        %v1910 = vadd.f32 0.0, %v1909
        %v1911 = vpop.f32.mrf.mxu0
        %1912 = vmatprep.mubr.f32.mxu0 0.0
        %1913 = vmatmul.mubr.f32.gmra.mxu0 %v1251
        %v1914 = vpop.f32.mrf.mxu0
        %v1915 = vadd.f32 0.0, %v1914
        %v1916 = vpop.f32.mrf.mxu0
        %1917 = vmatprep.mubr.f32.mxu0 0.0
        %1918 = vmatmul.mubr.f32.gmra.mxu0 %v1254
        %v1919 = vpop.f32.mrf.mxu0
        %v1920 = vadd.f32 0.0, %v1919
        %v1921 = vpop.f32.mrf.mxu0
        %1922 = vmatprep.mubr.f32.mxu0 0.0
        %1923 = vmatmul.mubr.f32.gmra.mxu0 %v1257
        %v1924 = vpop.f32.mrf.mxu0
        %v1925 = vadd.f32 0.0, %v1924
        %v1926 = vpop.f32.mrf.mxu0
        %1927 = vmatprep.mubr.f32.mxu0 0.0
        %1928 = vmatmul.mubr.f32.gmra.mxu0 %v1260
        %v1929 = vpop.f32.mrf.mxu0
        %v1930 = vadd.f32 0.0, %v1929
        %v1931 = vpop.f32.mrf.mxu0
        %1932 = vmatprep.mubr.f32.mxu0 0.0
        %1933 = vmatmul.mubr.f32.gmra.mxu0 %v1263
        %v1934 = vpop.f32.mrf.mxu0
        %v1935 = vadd.f32 0.0, %v1934
        %v1936 = vpop.f32.mrf.mxu0
        %1937 = vmatprep.mubr.f32.mxu0 0.0
        %1938 = vmatmul.mubr.f32.gmra.mxu0 %v1266
        %v1939 = vpop.f32.mrf.mxu0
        %v1940 = vadd.f32 0.0, %v1939
        %v1941 = vpop.f32.mrf.mxu0
        %1942 = vmatprep.mubr.f32.mxu0 0.0
        %1943 = vmatmul.mubr.f32.gmra.mxu0 %v1269
        %v1944 = vpop.f32.mrf.mxu0
        %v1945 = vadd.f32 0.0, %v1944
        %v1946 = vpop.f32.mrf.mxu0
        %1947 = vdwg.mxu0
        %v1948 = vld [vmem:[%s9] sm:$0xff]
        %v1949 = vld [vmem:[%s9 + $0x8] sm:$0xff]
        %v1950 = vmul.f32 %v1948, 1.442695
        %v1951 = vpow.pop %v1950
        %v1952 = vmul.f32 %v1949, 1.442695
        %v1953 = vpow.pop %v1952
        %v1954 = vsub.f32 0.0, %v1951
        %v1955 = vsub.f32 0.0, %v1953
        %v1956 = vmul.f32 %v1640, %v1199
        %v1957 = vmul.f32 %v1641, %v1200
        %v1958 = vmul.f32 %v1642, %v1201
        %v1959 = vmul.f32 %v1643, %v1202
        %v1960 = vmul.f32 %v1644, %v1203
        %v1961 = vmul.f32 %v1645, %v1204
        %v1962 = vmul.f32 %v1646, %v1205
        %v1963 = vmul.f32 %v1647, %v1206
        %v1964 = vmul.f32 %v1648, %v1207
        %v1965 = vmul.f32 %v1649, %v1208
        %v1966 = vmul.f32 %v1650, %v1209
        %v1967 = vmul.f32 %v1651, %v1210
        %v1968 = vmul.f32 %v1652, %v1211
        %v1969 = vmul.f32 %v1653, %v1212
        %v1970 = vmul.f32 %v1654, %v1213
        %v1971 = vmul.f32 %v1655, %v1214
        %v1988 = vcombine.high %v1640, %v1640
        %v1990 = vunpack.c.l.s4 1966171168
        %v1991 = vunpack.c.0.s8 %v1990
        %v1992 = vlaneseq
        %v1993 = vshrl.u32 %v1992, 7
        %v1994 = vsub.s32 %v1991, %v1993
        %v1995 = vrot.slane %v1640, %v1994
        %v1997 = vunpack.c.l.s4 1966171168
        %v1998 = vunpack.c.0.s8 %v1997
        %v1999 = vlaneseq
        %v2000 = vshrl.u32 %v1999, 7
        %v2001 = vsub.s32 %v1998, %v2000
        %v2002 = vrot.slane %v1988, %v2001
        %v2003 = vcombine.high %v1995, %v1995
        %v2004 = vcombine.high %v2002, %v2002
        %v2006 = vunpack.c.l.s4 1966171168
        %v2007 = vunpack.c.0.s8 %v2006
        %v2008 = vlaneseq
        %v2009 = vshrl.u32 %v2008, 7
        %v2010 = vsub.s32 %v2007, %v2009
        %v2011 = vrot.slane %v1995, %v2010
        %v2013 = vunpack.c.l.s4 1966171168
        %v2014 = vunpack.c.0.s8 %v2013
        %v2015 = vlaneseq
        %v2016 = vshrl.u32 %v2015, 7
        %v2017 = vsub.s32 %v2014, %v2016
        %v2018 = vrot.slane %v2002, %v2017
        %v2020 = vunpack.c.l.s4 1966171168
        %v2021 = vunpack.c.0.s8 %v2020
        %v2022 = vlaneseq
        %v2023 = vshrl.u32 %v2022, 7
        %v2024 = vsub.s32 %v2021, %v2023
        %v2025 = vrot.slane %v2003, %v2024
        %v2027 = vunpack.c.l.s4 1966171168
        %v2028 = vunpack.c.0.s8 %v2027
        %v2029 = vlaneseq
        %v2030 = vshrl.u32 %v2029, 7
        %v2031 = vsub.s32 %v2028, %v2030
        %v2032 = vrot.slane %v2004, %v2031
        %v2033 = vcombine.high %v2011, %v2011
        %v2034 = vcombine.high %v2018, %v2018
        %v2035 = vcombine.high %v2025, %v2025
        %v2036 = vcombine.high %v2032, %v2032
        %v2037 = vcombine.high %v1641, %v1641
        %v2039 = vunpack.c.l.s4 1966171168
        %v2040 = vunpack.c.0.s8 %v2039
        %v2041 = vlaneseq
        %v2042 = vshrl.u32 %v2041, 7
        %v2043 = vsub.s32 %v2040, %v2042
        %v2044 = vrot.slane %v1641, %v2043
        %v2046 = vunpack.c.l.s4 1966171168
        %v2047 = vunpack.c.0.s8 %v2046
        %v2048 = vlaneseq
        %v2049 = vshrl.u32 %v2048, 7
        %v2050 = vsub.s32 %v2047, %v2049
        %v2051 = vrot.slane %v2037, %v2050
        %v2052 = vcombine.high %v2044, %v2044
        %v2053 = vcombine.high %v2051, %v2051
        %v2055 = vunpack.c.l.s4 1966171168
        %v2056 = vunpack.c.0.s8 %v2055
        %v2057 = vlaneseq
        %v2058 = vshrl.u32 %v2057, 7
        %v2059 = vsub.s32 %v2056, %v2058
        %v2060 = vrot.slane %v2044, %v2059
        %v2062 = vunpack.c.l.s4 1966171168
        %v2063 = vunpack.c.0.s8 %v2062
        %v2064 = vlaneseq
        %v2065 = vshrl.u32 %v2064, 7
        %v2066 = vsub.s32 %v2063, %v2065
        %v2067 = vrot.slane %v2051, %v2066
        %v2069 = vunpack.c.l.s4 1966171168
        %v2070 = vunpack.c.0.s8 %v2069
        %v2071 = vlaneseq
        %v2072 = vshrl.u32 %v2071, 7
        %v2073 = vsub.s32 %v2070, %v2072
        %v2074 = vrot.slane %v2052, %v2073
        %v2076 = vunpack.c.l.s4 1966171168
        %v2077 = vunpack.c.0.s8 %v2076
        %v2078 = vlaneseq
        %v2079 = vshrl.u32 %v2078, 7
        %v2080 = vsub.s32 %v2077, %v2079
        %v2081 = vrot.slane %v2053, %v2080
        %v2082 = vcombine.high %v2060, %v2060
        %v2083 = vcombine.high %v2067, %v2067
        %v2084 = vcombine.high %v2074, %v2074
        %v2085 = vcombine.high %v2081, %v2081
        %v2086 = vcombine.high %v1642, %v1642
        %v2088 = vunpack.c.l.s4 1966171168
        %v2089 = vunpack.c.0.s8 %v2088
        %v2090 = vlaneseq
        %v2091 = vshrl.u32 %v2090, 7
        %v2092 = vsub.s32 %v2089, %v2091
        %v2093 = vrot.slane %v1642, %v2092
        %v2095 = vunpack.c.l.s4 1966171168
        %v2096 = vunpack.c.0.s8 %v2095
        %v2097 = vlaneseq
        %v2098 = vshrl.u32 %v2097, 7
        %v2099 = vsub.s32 %v2096, %v2098
        %v2100 = vrot.slane %v2086, %v2099
        %v2101 = vcombine.high %v2093, %v2093
        %v2102 = vcombine.high %v2100, %v2100
        %v2104 = vunpack.c.l.s4 1966171168
        %v2105 = vunpack.c.0.s8 %v2104
        %v2106 = vlaneseq
        %v2107 = vshrl.u32 %v2106, 7
        %v2108 = vsub.s32 %v2105, %v2107
        %v2109 = vrot.slane %v2093, %v2108
        %v2111 = vunpack.c.l.s4 1966171168
        %v2112 = vunpack.c.0.s8 %v2111
        %v2113 = vlaneseq
        %v2114 = vshrl.u32 %v2113, 7
        %v2115 = vsub.s32 %v2112, %v2114
        %v2116 = vrot.slane %v2100, %v2115
        %v2118 = vunpack.c.l.s4 1966171168
        %v2119 = vunpack.c.0.s8 %v2118
        %v2120 = vlaneseq
        %v2121 = vshrl.u32 %v2120, 7
        %v2122 = vsub.s32 %v2119, %v2121
        %v2123 = vrot.slane %v2101, %v2122
        %v2125 = vunpack.c.l.s4 1966171168
        %v2126 = vunpack.c.0.s8 %v2125
        %v2127 = vlaneseq
        %v2128 = vshrl.u32 %v2127, 7
        %v2129 = vsub.s32 %v2126, %v2128
        %v2130 = vrot.slane %v2102, %v2129
        %v2131 = vcombine.high %v2109, %v2109
        %v2132 = vcombine.high %v2116, %v2116
        %v2133 = vcombine.high %v2123, %v2123
        %v2134 = vcombine.high %v2130, %v2130
        %v2135 = vcombine.high %v1643, %v1643
        %v2137 = vunpack.c.l.s4 1966171168
        %v2138 = vunpack.c.0.s8 %v2137
        %v2139 = vlaneseq
        %v2140 = vshrl.u32 %v2139, 7
        %v2141 = vsub.s32 %v2138, %v2140
        %v2142 = vrot.slane %v1643, %v2141
        %v2144 = vunpack.c.l.s4 1966171168
        %v2145 = vunpack.c.0.s8 %v2144
        %v2146 = vlaneseq
        %v2147 = vshrl.u32 %v2146, 7
        %v2148 = vsub.s32 %v2145, %v2147
        %v2149 = vrot.slane %v2135, %v2148
        %v2150 = vcombine.high %v2142, %v2142
        %v2151 = vcombine.high %v2149, %v2149
        %v2153 = vunpack.c.l.s4 1966171168
        %v2154 = vunpack.c.0.s8 %v2153
        %v2155 = vlaneseq
        %v2156 = vshrl.u32 %v2155, 7
        %v2157 = vsub.s32 %v2154, %v2156
        %v2158 = vrot.slane %v2142, %v2157
        %v2160 = vunpack.c.l.s4 1966171168
        %v2161 = vunpack.c.0.s8 %v2160
        %v2162 = vlaneseq
        %v2163 = vshrl.u32 %v2162, 7
        %v2164 = vsub.s32 %v2161, %v2163
        %v2165 = vrot.slane %v2149, %v2164
        %v2167 = vunpack.c.l.s4 1966171168
        %v2168 = vunpack.c.0.s8 %v2167
        %v2169 = vlaneseq
        %v2170 = vshrl.u32 %v2169, 7
        %v2171 = vsub.s32 %v2168, %v2170
        %v2172 = vrot.slane %v2150, %v2171
        %v2174 = vunpack.c.l.s4 1966171168
        %v2175 = vunpack.c.0.s8 %v2174
        %v2176 = vlaneseq
        %v2177 = vshrl.u32 %v2176, 7
        %v2178 = vsub.s32 %v2175, %v2177
        %v2179 = vrot.slane %v2151, %v2178
        %v2180 = vcombine.high %v2158, %v2158
        %v2181 = vcombine.high %v2165, %v2165
        %v2182 = vcombine.high %v2172, %v2172
        %v2183 = vcombine.high %v2179, %v2179
        %v2184 = vcombine.high %v1644, %v1644
        %v2186 = vunpack.c.l.s4 1966171168
        %v2187 = vunpack.c.0.s8 %v2186
        %v2188 = vlaneseq
        %v2189 = vshrl.u32 %v2188, 7
        %v2190 = vsub.s32 %v2187, %v2189
        %v2191 = vrot.slane %v1644, %v2190
        %v2193 = vunpack.c.l.s4 1966171168
        %v2194 = vunpack.c.0.s8 %v2193
        %v2195 = vlaneseq
        %v2196 = vshrl.u32 %v2195, 7
        %v2197 = vsub.s32 %v2194, %v2196
        %v2198 = vrot.slane %v2184, %v2197
        %v2199 = vcombine.high %v2191, %v2191
        %v2200 = vcombine.high %v2198, %v2198
        %v2202 = vunpack.c.l.s4 1966171168
        %v2203 = vunpack.c.0.s8 %v2202
        %v2204 = vlaneseq
        %v2205 = vshrl.u32 %v2204, 7
        %v2206 = vsub.s32 %v2203, %v2205
        %v2207 = vrot.slane %v2191, %v2206
        %v2209 = vunpack.c.l.s4 1966171168
        %v2210 = vunpack.c.0.s8 %v2209
        %v2211 = vlaneseq
        %v2212 = vshrl.u32 %v2211, 7
        %v2213 = vsub.s32 %v2210, %v2212
        %v2214 = vrot.slane %v2198, %v2213
        %v2216 = vunpack.c.l.s4 1966171168
        %v2217 = vunpack.c.0.s8 %v2216
        %v2218 = vlaneseq
        %v2219 = vshrl.u32 %v2218, 7
        %v2220 = vsub.s32 %v2217, %v2219
        %v2221 = vrot.slane %v2199, %v2220
        %v2223 = vunpack.c.l.s4 1966171168
        %v2224 = vunpack.c.0.s8 %v2223
        %v2225 = vlaneseq
        %v2226 = vshrl.u32 %v2225, 7
        %v2227 = vsub.s32 %v2224, %v2226
        %v2228 = vrot.slane %v2200, %v2227
        %v2229 = vcombine.high %v2207, %v2207
        %v2230 = vcombine.high %v2214, %v2214
        %v2231 = vcombine.high %v2221, %v2221
        %v2232 = vcombine.high %v2228, %v2228
        %v2233 = vcombine.high %v1645, %v1645
        %v2235 = vunpack.c.l.s4 1966171168
        %v2236 = vunpack.c.0.s8 %v2235
        %v2237 = vlaneseq
        %v2238 = vshrl.u32 %v2237, 7
        %v2239 = vsub.s32 %v2236, %v2238
        %v2240 = vrot.slane %v1645, %v2239
        %v2242 = vunpack.c.l.s4 1966171168
        %v2243 = vunpack.c.0.s8 %v2242
        %v2244 = vlaneseq
        %v2245 = vshrl.u32 %v2244, 7
        %v2246 = vsub.s32 %v2243, %v2245
        %v2247 = vrot.slane %v2233, %v2246
        %v2248 = vcombine.high %v2240, %v2240
        %v2249 = vcombine.high %v2247, %v2247
        %v2251 = vunpack.c.l.s4 1966171168
        %v2252 = vunpack.c.0.s8 %v2251
        %v2253 = vlaneseq
        %v2254 = vshrl.u32 %v2253, 7
        %v2255 = vsub.s32 %v2252, %v2254
        %v2256 = vrot.slane %v2240, %v2255
        %v2258 = vunpack.c.l.s4 1966171168
        %v2259 = vunpack.c.0.s8 %v2258
        %v2260 = vlaneseq
        %v2261 = vshrl.u32 %v2260, 7
        %v2262 = vsub.s32 %v2259, %v2261
        %v2263 = vrot.slane %v2247, %v2262
        %v2265 = vunpack.c.l.s4 1966171168
        %v2266 = vunpack.c.0.s8 %v2265
        %v2267 = vlaneseq
        %v2268 = vshrl.u32 %v2267, 7
        %v2269 = vsub.s32 %v2266, %v2268
        %v2270 = vrot.slane %v2248, %v2269
        %v2272 = vunpack.c.l.s4 1966171168
        %v2273 = vunpack.c.0.s8 %v2272
        %v2274 = vlaneseq
        %v2275 = vshrl.u32 %v2274, 7
        %v2276 = vsub.s32 %v2273, %v2275
        %v2277 = vrot.slane %v2249, %v2276
        %v2278 = vcombine.high %v2256, %v2256
        %v2279 = vcombine.high %v2263, %v2263
        %v2280 = vcombine.high %v2270, %v2270
        %v2281 = vcombine.high %v2277, %v2277
        %v2282 = vcombine.high %v1646, %v1646
        %v2284 = vunpack.c.l.s4 1966171168
        %v2285 = vunpack.c.0.s8 %v2284
        %v2286 = vlaneseq
        %v2287 = vshrl.u32 %v2286, 7
        %v2288 = vsub.s32 %v2285, %v2287
        %v2289 = vrot.slane %v1646, %v2288
        %v2291 = vunpack.c.l.s4 1966171168
        %v2292 = vunpack.c.0.s8 %v2291
        %v2293 = vlaneseq
        %v2294 = vshrl.u32 %v2293, 7
        %v2295 = vsub.s32 %v2292, %v2294
        %v2296 = vrot.slane %v2282, %v2295
        %v2297 = vcombine.high %v2289, %v2289
        %v2298 = vcombine.high %v2296, %v2296
        %v2300 = vunpack.c.l.s4 1966171168
        %v2301 = vunpack.c.0.s8 %v2300
        %v2302 = vlaneseq
        %v2303 = vshrl.u32 %v2302, 7
        %v2304 = vsub.s32 %v2301, %v2303
        %v2305 = vrot.slane %v2289, %v2304
        %v2307 = vunpack.c.l.s4 1966171168
        %v2308 = vunpack.c.0.s8 %v2307
        %v2309 = vlaneseq
        %v2310 = vshrl.u32 %v2309, 7
        %v2311 = vsub.s32 %v2308, %v2310
        %v2312 = vrot.slane %v2296, %v2311
        %v2314 = vunpack.c.l.s4 1966171168
        %v2315 = vunpack.c.0.s8 %v2314
        %v2316 = vlaneseq
        %v2317 = vshrl.u32 %v2316, 7
        %v2318 = vsub.s32 %v2315, %v2317
        %v2319 = vrot.slane %v2297, %v2318
        %v2321 = vunpack.c.l.s4 1966171168
        %v2322 = vunpack.c.0.s8 %v2321
        %v2323 = vlaneseq
        %v2324 = vshrl.u32 %v2323, 7
        %v2325 = vsub.s32 %v2322, %v2324
        %v2326 = vrot.slane %v2298, %v2325
        %v2327 = vcombine.high %v2305, %v2305
        %v2328 = vcombine.high %v2312, %v2312
        %v2329 = vcombine.high %v2319, %v2319
        %v2330 = vcombine.high %v2326, %v2326
        %v2331 = vcombine.high %v1647, %v1647
        %v2333 = vunpack.c.l.s4 1966171168
        %v2334 = vunpack.c.0.s8 %v2333
        %v2335 = vlaneseq
        %v2336 = vshrl.u32 %v2335, 7
        %v2337 = vsub.s32 %v2334, %v2336
        %v2338 = vrot.slane %v1647, %v2337
        %v2340 = vunpack.c.l.s4 1966171168
        %v2341 = vunpack.c.0.s8 %v2340
        %v2342 = vlaneseq
        %v2343 = vshrl.u32 %v2342, 7
        %v2344 = vsub.s32 %v2341, %v2343
        %v2345 = vrot.slane %v2331, %v2344
        %v2346 = vcombine.high %v2338, %v2338
        %v2347 = vcombine.high %v2345, %v2345
        %v2349 = vunpack.c.l.s4 1966171168
        %v2350 = vunpack.c.0.s8 %v2349
        %v2351 = vlaneseq
        %v2352 = vshrl.u32 %v2351, 7
        %v2353 = vsub.s32 %v2350, %v2352
        %v2354 = vrot.slane %v2338, %v2353
        %v2356 = vunpack.c.l.s4 1966171168
        %v2357 = vunpack.c.0.s8 %v2356
        %v2358 = vlaneseq
        %v2359 = vshrl.u32 %v2358, 7
        %v2360 = vsub.s32 %v2357, %v2359
        %v2361 = vrot.slane %v2345, %v2360
        %v2363 = vunpack.c.l.s4 1966171168
        %v2364 = vunpack.c.0.s8 %v2363
        %v2365 = vlaneseq
        %v2366 = vshrl.u32 %v2365, 7
        %v2367 = vsub.s32 %v2364, %v2366
        %v2368 = vrot.slane %v2346, %v2367
        %v2370 = vunpack.c.l.s4 1966171168
        %v2371 = vunpack.c.0.s8 %v2370
        %v2372 = vlaneseq
        %v2373 = vshrl.u32 %v2372, 7
        %v2374 = vsub.s32 %v2371, %v2373
        %v2375 = vrot.slane %v2347, %v2374
        %v2376 = vcombine.high %v2354, %v2354
        %v2377 = vcombine.high %v2361, %v2361
        %v2378 = vcombine.high %v2368, %v2368
        %v2379 = vcombine.high %v2375, %v2375
        %v2380 = vcombine.high %v1648, %v1648
        %v2382 = vunpack.c.l.s4 1966171168
        %v2383 = vunpack.c.0.s8 %v2382
        %v2384 = vlaneseq
        %v2385 = vshrl.u32 %v2384, 7
        %v2386 = vsub.s32 %v2383, %v2385
        %v2387 = vrot.slane %v1648, %v2386
        %v2389 = vunpack.c.l.s4 1966171168
        %v2390 = vunpack.c.0.s8 %v2389
        %v2391 = vlaneseq
        %v2392 = vshrl.u32 %v2391, 7
        %v2393 = vsub.s32 %v2390, %v2392
        %v2394 = vrot.slane %v2380, %v2393
        %v2395 = vcombine.high %v2387, %v2387
        %v2396 = vcombine.high %v2394, %v2394
        %v2398 = vunpack.c.l.s4 1966171168
        %v2399 = vunpack.c.0.s8 %v2398
        %v2400 = vlaneseq
        %v2401 = vshrl.u32 %v2400, 7
        %v2402 = vsub.s32 %v2399, %v2401
        %v2403 = vrot.slane %v2387, %v2402
        %v2405 = vunpack.c.l.s4 1966171168
        %v2406 = vunpack.c.0.s8 %v2405
        %v2407 = vlaneseq
        %v2408 = vshrl.u32 %v2407, 7
        %v2409 = vsub.s32 %v2406, %v2408
        %v2410 = vrot.slane %v2394, %v2409
        %v2412 = vunpack.c.l.s4 1966171168
        %v2413 = vunpack.c.0.s8 %v2412
        %v2414 = vlaneseq
        %v2415 = vshrl.u32 %v2414, 7
        %v2416 = vsub.s32 %v2413, %v2415
        %v2417 = vrot.slane %v2395, %v2416
        %v2419 = vunpack.c.l.s4 1966171168
        %v2420 = vunpack.c.0.s8 %v2419
        %v2421 = vlaneseq
        %v2422 = vshrl.u32 %v2421, 7
        %v2423 = vsub.s32 %v2420, %v2422
        %v2424 = vrot.slane %v2396, %v2423
        %v2425 = vcombine.high %v2403, %v2403
        %v2426 = vcombine.high %v2410, %v2410
        %v2427 = vcombine.high %v2417, %v2417
        %v2428 = vcombine.high %v2424, %v2424
        %v2429 = vcombine.high %v1649, %v1649
        %v2431 = vunpack.c.l.s4 1966171168
        %v2432 = vunpack.c.0.s8 %v2431
        %v2433 = vlaneseq
        %v2434 = vshrl.u32 %v2433, 7
        %v2435 = vsub.s32 %v2432, %v2434
        %v2436 = vrot.slane %v1649, %v2435
        %v2438 = vunpack.c.l.s4 1966171168
        %v2439 = vunpack.c.0.s8 %v2438
        %v2440 = vlaneseq
        %v2441 = vshrl.u32 %v2440, 7
        %v2442 = vsub.s32 %v2439, %v2441
        %v2443 = vrot.slane %v2429, %v2442
        %v2444 = vcombine.high %v2436, %v2436
        %v2445 = vcombine.high %v2443, %v2443
        %v2447 = vunpack.c.l.s4 1966171168
        %v2448 = vunpack.c.0.s8 %v2447
        %v2449 = vlaneseq
        %v2450 = vshrl.u32 %v2449, 7
        %v2451 = vsub.s32 %v2448, %v2450
        %v2452 = vrot.slane %v2436, %v2451
        %v2454 = vunpack.c.l.s4 1966171168
        %v2455 = vunpack.c.0.s8 %v2454
        %v2456 = vlaneseq
        %v2457 = vshrl.u32 %v2456, 7
        %v2458 = vsub.s32 %v2455, %v2457
        %v2459 = vrot.slane %v2443, %v2458
        %v2461 = vunpack.c.l.s4 1966171168
        %v2462 = vunpack.c.0.s8 %v2461
        %v2463 = vlaneseq
        %v2464 = vshrl.u32 %v2463, 7
        %v2465 = vsub.s32 %v2462, %v2464
        %v2466 = vrot.slane %v2444, %v2465
        %v2468 = vunpack.c.l.s4 1966171168
        %v2469 = vunpack.c.0.s8 %v2468
        %v2470 = vlaneseq
        %v2471 = vshrl.u32 %v2470, 7
        %v2472 = vsub.s32 %v2469, %v2471
        %v2473 = vrot.slane %v2445, %v2472
        %v2474 = vcombine.high %v2452, %v2452
        %v2475 = vcombine.high %v2459, %v2459
        %v2476 = vcombine.high %v2466, %v2466
        %v2477 = vcombine.high %v2473, %v2473
        %v2478 = vcombine.high %v1650, %v1650
        %v2480 = vunpack.c.l.s4 1966171168
        %v2481 = vunpack.c.0.s8 %v2480
        %v2482 = vlaneseq
        %v2483 = vshrl.u32 %v2482, 7
        %v2484 = vsub.s32 %v2481, %v2483
        %v2485 = vrot.slane %v1650, %v2484
        %v2487 = vunpack.c.l.s4 1966171168
        %v2488 = vunpack.c.0.s8 %v2487
        %v2489 = vlaneseq
        %v2490 = vshrl.u32 %v2489, 7
        %v2491 = vsub.s32 %v2488, %v2490
        %v2492 = vrot.slane %v2478, %v2491
        %v2493 = vcombine.high %v2485, %v2485
        %v2494 = vcombine.high %v2492, %v2492
        %v2496 = vunpack.c.l.s4 1966171168
        %v2497 = vunpack.c.0.s8 %v2496
        %v2498 = vlaneseq
        %v2499 = vshrl.u32 %v2498, 7
        %v2500 = vsub.s32 %v2497, %v2499
        %v2501 = vrot.slane %v2485, %v2500
        %v2503 = vunpack.c.l.s4 1966171168
        %v2504 = vunpack.c.0.s8 %v2503
        %v2505 = vlaneseq
        %v2506 = vshrl.u32 %v2505, 7
        %v2507 = vsub.s32 %v2504, %v2506
        %v2508 = vrot.slane %v2492, %v2507
        %v2510 = vunpack.c.l.s4 1966171168
        %v2511 = vunpack.c.0.s8 %v2510
        %v2512 = vlaneseq
        %v2513 = vshrl.u32 %v2512, 7
        %v2514 = vsub.s32 %v2511, %v2513
        %v2515 = vrot.slane %v2493, %v2514
        %v2517 = vunpack.c.l.s4 1966171168
        %v2518 = vunpack.c.0.s8 %v2517
        %v2519 = vlaneseq
        %v2520 = vshrl.u32 %v2519, 7
        %v2521 = vsub.s32 %v2518, %v2520
        %v2522 = vrot.slane %v2494, %v2521
        %v2523 = vcombine.high %v2501, %v2501
        %v2524 = vcombine.high %v2508, %v2508
        %v2525 = vcombine.high %v2515, %v2515
        %v2526 = vcombine.high %v2522, %v2522
        %v2527 = vcombine.high %v1651, %v1651
        %v2529 = vunpack.c.l.s4 1966171168
        %v2530 = vunpack.c.0.s8 %v2529
        %v2531 = vlaneseq
        %v2532 = vshrl.u32 %v2531, 7
        %v2533 = vsub.s32 %v2530, %v2532
        %v2534 = vrot.slane %v1651, %v2533
        %v2536 = vunpack.c.l.s4 1966171168
        %v2537 = vunpack.c.0.s8 %v2536
        %v2538 = vlaneseq
        %v2539 = vshrl.u32 %v2538, 7
        %v2540 = vsub.s32 %v2537, %v2539
        %v2541 = vrot.slane %v2527, %v2540
        %v2542 = vcombine.high %v2534, %v2534
        %v2543 = vcombine.high %v2541, %v2541
        %v2545 = vunpack.c.l.s4 1966171168
        %v2546 = vunpack.c.0.s8 %v2545
        %v2547 = vlaneseq
        %v2548 = vshrl.u32 %v2547, 7
        %v2549 = vsub.s32 %v2546, %v2548
        %v2550 = vrot.slane %v2534, %v2549
        %v2552 = vunpack.c.l.s4 1966171168
        %v2553 = vunpack.c.0.s8 %v2552
        %v2554 = vlaneseq
        %v2555 = vshrl.u32 %v2554, 7
        %v2556 = vsub.s32 %v2553, %v2555
        %v2557 = vrot.slane %v2541, %v2556
        %v2559 = vunpack.c.l.s4 1966171168
        %v2560 = vunpack.c.0.s8 %v2559
        %v2561 = vlaneseq
        %v2562 = vshrl.u32 %v2561, 7
        %v2563 = vsub.s32 %v2560, %v2562
        %v2564 = vrot.slane %v2542, %v2563
        %v2566 = vunpack.c.l.s4 1966171168
        %v2567 = vunpack.c.0.s8 %v2566
        %v2568 = vlaneseq
        %v2569 = vshrl.u32 %v2568, 7
        %v2570 = vsub.s32 %v2567, %v2569
        %v2571 = vrot.slane %v2543, %v2570
        %v2572 = vcombine.high %v2550, %v2550
        %v2573 = vcombine.high %v2557, %v2557
        %v2574 = vcombine.high %v2564, %v2564
        %v2575 = vcombine.high %v2571, %v2571
        %v2576 = vcombine.high %v1652, %v1652
        %v2578 = vunpack.c.l.s4 1966171168
        %v2579 = vunpack.c.0.s8 %v2578
        %v2580 = vlaneseq
        %v2581 = vshrl.u32 %v2580, 7
        %v2582 = vsub.s32 %v2579, %v2581
        %v2583 = vrot.slane %v1652, %v2582
        %v2585 = vunpack.c.l.s4 1966171168
        %v2586 = vunpack.c.0.s8 %v2585
        %v2587 = vlaneseq
        %v2588 = vshrl.u32 %v2587, 7
        %v2589 = vsub.s32 %v2586, %v2588
        %v2590 = vrot.slane %v2576, %v2589
        %v2591 = vcombine.high %v2583, %v2583
        %v2592 = vcombine.high %v2590, %v2590
        %v2594 = vunpack.c.l.s4 1966171168
        %v2595 = vunpack.c.0.s8 %v2594
        %v2596 = vlaneseq
        %v2597 = vshrl.u32 %v2596, 7
        %v2598 = vsub.s32 %v2595, %v2597
        %v2599 = vrot.slane %v2583, %v2598
        %v2601 = vunpack.c.l.s4 1966171168
        %v2602 = vunpack.c.0.s8 %v2601
        %v2603 = vlaneseq
        %v2604 = vshrl.u32 %v2603, 7
        %v2605 = vsub.s32 %v2602, %v2604
        %v2606 = vrot.slane %v2590, %v2605
        %v2608 = vunpack.c.l.s4 1966171168
        %v2609 = vunpack.c.0.s8 %v2608
        %v2610 = vlaneseq
        %v2611 = vshrl.u32 %v2610, 7
        %v2612 = vsub.s32 %v2609, %v2611
        %v2613 = vrot.slane %v2591, %v2612
        %v2615 = vunpack.c.l.s4 1966171168
        %v2616 = vunpack.c.0.s8 %v2615
        %v2617 = vlaneseq
        %v2618 = vshrl.u32 %v2617, 7
        %v2619 = vsub.s32 %v2616, %v2618
        %v2620 = vrot.slane %v2592, %v2619
        %v2621 = vcombine.high %v2599, %v2599
        %v2622 = vcombine.high %v2606, %v2606
        %v2623 = vcombine.high %v2613, %v2613
        %v2624 = vcombine.high %v2620, %v2620
        %v2625 = vcombine.high %v1653, %v1653
        %v2627 = vunpack.c.l.s4 1966171168
        %v2628 = vunpack.c.0.s8 %v2627
        %v2629 = vlaneseq
        %v2630 = vshrl.u32 %v2629, 7
        %v2631 = vsub.s32 %v2628, %v2630
        %v2632 = vrot.slane %v1653, %v2631
        %v2634 = vunpack.c.l.s4 1966171168
        %v2635 = vunpack.c.0.s8 %v2634
        %v2636 = vlaneseq
        %v2637 = vshrl.u32 %v2636, 7
        %v2638 = vsub.s32 %v2635, %v2637
        %v2639 = vrot.slane %v2625, %v2638
        %v2640 = vcombine.high %v2632, %v2632
        %v2641 = vcombine.high %v2639, %v2639
        %v2643 = vunpack.c.l.s4 1966171168
        %v2644 = vunpack.c.0.s8 %v2643
        %v2645 = vlaneseq
        %v2646 = vshrl.u32 %v2645, 7
        %v2647 = vsub.s32 %v2644, %v2646
        %v2648 = vrot.slane %v2632, %v2647
        %v2650 = vunpack.c.l.s4 1966171168
        %v2651 = vunpack.c.0.s8 %v2650
        %v2652 = vlaneseq
        %v2653 = vshrl.u32 %v2652, 7
        %v2654 = vsub.s32 %v2651, %v2653
        %v2655 = vrot.slane %v2639, %v2654
        %v2657 = vunpack.c.l.s4 1966171168
        %v2658 = vunpack.c.0.s8 %v2657
        %v2659 = vlaneseq
        %v2660 = vshrl.u32 %v2659, 7
        %v2661 = vsub.s32 %v2658, %v2660
        %v2662 = vrot.slane %v2640, %v2661
        %v2664 = vunpack.c.l.s4 1966171168
        %v2665 = vunpack.c.0.s8 %v2664
        %v2666 = vlaneseq
        %v2667 = vshrl.u32 %v2666, 7
        %v2668 = vsub.s32 %v2665, %v2667
        %v2669 = vrot.slane %v2641, %v2668
        %v2670 = vcombine.high %v2648, %v2648
        %v2671 = vcombine.high %v2655, %v2655
        %v2672 = vcombine.high %v2662, %v2662
        %v2673 = vcombine.high %v2669, %v2669
        %v2674 = vcombine.high %v1654, %v1654
        %v2676 = vunpack.c.l.s4 1966171168
        %v2677 = vunpack.c.0.s8 %v2676
        %v2678 = vlaneseq
        %v2679 = vshrl.u32 %v2678, 7
        %v2680 = vsub.s32 %v2677, %v2679
        %v2681 = vrot.slane %v1654, %v2680
        %v2683 = vunpack.c.l.s4 1966171168
        %v2684 = vunpack.c.0.s8 %v2683
        %v2685 = vlaneseq
        %v2686 = vshrl.u32 %v2685, 7
        %v2687 = vsub.s32 %v2684, %v2686
        %v2688 = vrot.slane %v2674, %v2687
        %v2689 = vcombine.high %v2681, %v2681
        %v2690 = vcombine.high %v2688, %v2688
        %v2692 = vunpack.c.l.s4 1966171168
        %v2693 = vunpack.c.0.s8 %v2692
        %v2694 = vlaneseq
        %v2695 = vshrl.u32 %v2694, 7
        %v2696 = vsub.s32 %v2693, %v2695
        %v2697 = vrot.slane %v2681, %v2696
        %v2699 = vunpack.c.l.s4 1966171168
        %v2700 = vunpack.c.0.s8 %v2699
        %v2701 = vlaneseq
        %v2702 = vshrl.u32 %v2701, 7
        %v2703 = vsub.s32 %v2700, %v2702
        %v2704 = vrot.slane %v2688, %v2703
        %v2706 = vunpack.c.l.s4 1966171168
        %v2707 = vunpack.c.0.s8 %v2706
        %v2708 = vlaneseq
        %v2709 = vshrl.u32 %v2708, 7
        %v2710 = vsub.s32 %v2707, %v2709
        %v2711 = vrot.slane %v2689, %v2710
        %v2713 = vunpack.c.l.s4 1966171168
        %v2714 = vunpack.c.0.s8 %v2713
        %v2715 = vlaneseq
        %v2716 = vshrl.u32 %v2715, 7
        %v2717 = vsub.s32 %v2714, %v2716
        %v2718 = vrot.slane %v2690, %v2717
        %v2719 = vcombine.high %v2697, %v2697
        %v2720 = vcombine.high %v2704, %v2704
        %v2721 = vcombine.high %v2711, %v2711
        %v2722 = vcombine.high %v2718, %v2718
        %v2723 = vcombine.high %v1655, %v1655
        %v2725 = vunpack.c.l.s4 1966171168
        %v2726 = vunpack.c.0.s8 %v2725
        %v2727 = vlaneseq
        %v2728 = vshrl.u32 %v2727, 7
        %v2729 = vsub.s32 %v2726, %v2728
        %v2730 = vrot.slane %v1655, %v2729
        %v2732 = vunpack.c.l.s4 1966171168
        %v2733 = vunpack.c.0.s8 %v2732
        %v2734 = vlaneseq
        %v2735 = vshrl.u32 %v2734, 7
        %v2736 = vsub.s32 %v2733, %v2735
        %v2737 = vrot.slane %v2723, %v2736
        %v2738 = vcombine.high %v2730, %v2730
        %v2739 = vcombine.high %v2737, %v2737
        %v2741 = vunpack.c.l.s4 1966171168
        %v2742 = vunpack.c.0.s8 %v2741
        %v2743 = vlaneseq
        %v2744 = vshrl.u32 %v2743, 7
        %v2745 = vsub.s32 %v2742, %v2744
        %v2746 = vrot.slane %v2730, %v2745
        %v2748 = vunpack.c.l.s4 1966171168
        %v2749 = vunpack.c.0.s8 %v2748
        %v2750 = vlaneseq
        %v2751 = vshrl.u32 %v2750, 7
        %v2752 = vsub.s32 %v2749, %v2751
        %v2753 = vrot.slane %v2737, %v2752
        %v2755 = vunpack.c.l.s4 1966171168
        %v2756 = vunpack.c.0.s8 %v2755
        %v2757 = vlaneseq
        %v2758 = vshrl.u32 %v2757, 7
        %v2759 = vsub.s32 %v2756, %v2758
        %v2760 = vrot.slane %v2738, %v2759
        %v2762 = vunpack.c.l.s4 1966171168
        %v2763 = vunpack.c.0.s8 %v2762
        %v2764 = vlaneseq
        %v2765 = vshrl.u32 %v2764, 7
        %v2766 = vsub.s32 %v2763, %v2765
        %v2767 = vrot.slane %v2739, %v2766
        %v2768 = vcombine.high %v2746, %v2746
        %v2769 = vcombine.high %v2753, %v2753
        %v2770 = vcombine.high %v2760, %v2760
        %v2771 = vcombine.high %v2767, %v2767
        %v2772 = vlaneseq
        %v2773 = vshrl.u32 %v2772, 7
        %v2774 = vsub.s32 0, %v2773
        %v2775 = vrot.slane %v2011, %v2774
        %v2776 = vlaneseq
        %v2777 = vshrl.u32 %v2776, 7
        %v2778 = vsub.s32 0, %v2777
        %v2779 = vrot.slane %v2025, %v2778
        %v2780 = vlaneseq
        %v2781 = vshrl.u32 %v2780, 7
        %v2782 = vsub.s32 0, %v2781
        %v2783 = vrot.slane %v2033, %v2782
        %v2784 = vlaneseq
        %v2785 = vshrl.u32 %v2784, 7
        %v2786 = vsub.s32 0, %v2785
        %v2787 = vrot.slane %v2035, %v2786
        %v2788 = vlaneseq
        %v2789 = vshrl.u32 %v2788, 7
        %v2790 = vsub.s32 0, %v2789
        %v2791 = vrot.slane %v2018, %v2790
        %v2792 = vlaneseq
        %v2793 = vshrl.u32 %v2792, 7
        %v2794 = vsub.s32 0, %v2793
        %v2795 = vrot.slane %v2032, %v2794
        %v2796 = vlaneseq
        %v2797 = vshrl.u32 %v2796, 7
        %v2798 = vsub.s32 0, %v2797
        %v2799 = vrot.slane %v2034, %v2798
        %v2800 = vlaneseq
        %v2801 = vshrl.u32 %v2800, 7
        %v2802 = vsub.s32 0, %v2801
        %v2803 = vrot.slane %v2036, %v2802
        %v2804 = vlaneseq
        %v2805 = vshrl.u32 %v2804, 7
        %v2806 = vsub.s32 0, %v2805
        %v2807 = vrot.slane %v2060, %v2806
        %v2808 = vlaneseq
        %v2809 = vshrl.u32 %v2808, 7
        %v2810 = vsub.s32 0, %v2809
        %v2811 = vrot.slane %v2074, %v2810
        %v2812 = vlaneseq
        %v2813 = vshrl.u32 %v2812, 7
        %v2814 = vsub.s32 0, %v2813
        %v2815 = vrot.slane %v2082, %v2814
        %v2816 = vlaneseq
        %v2817 = vshrl.u32 %v2816, 7
        %v2818 = vsub.s32 0, %v2817
        %v2819 = vrot.slane %v2084, %v2818
        %v2820 = vlaneseq
        %v2821 = vshrl.u32 %v2820, 7
        %v2822 = vsub.s32 0, %v2821
        %v2823 = vrot.slane %v2067, %v2822
        %v2824 = vlaneseq
        %v2825 = vshrl.u32 %v2824, 7
        %v2826 = vsub.s32 0, %v2825
        %v2827 = vrot.slane %v2081, %v2826
        %v2828 = vlaneseq
        %v2829 = vshrl.u32 %v2828, 7
        %v2830 = vsub.s32 0, %v2829
        %v2831 = vrot.slane %v2083, %v2830
        %v2832 = vlaneseq
        %v2833 = vshrl.u32 %v2832, 7
        %v2834 = vsub.s32 0, %v2833
        %v2835 = vrot.slane %v2085, %v2834
        %v2836 = vlaneseq
        %v2837 = vshrl.u32 %v2836, 7
        %v2838 = vsub.s32 0, %v2837
        %v2839 = vrot.slane %v2109, %v2838
        %v2840 = vlaneseq
        %v2841 = vshrl.u32 %v2840, 7
        %v2842 = vsub.s32 0, %v2841
        %v2843 = vrot.slane %v2123, %v2842
        %v2844 = vlaneseq
        %v2845 = vshrl.u32 %v2844, 7
        %v2846 = vsub.s32 0, %v2845
        %v2847 = vrot.slane %v2131, %v2846
        %v2848 = vlaneseq
        %v2849 = vshrl.u32 %v2848, 7
        %v2850 = vsub.s32 0, %v2849
        %v2851 = vrot.slane %v2133, %v2850
        %v2852 = vlaneseq
        %v2853 = vshrl.u32 %v2852, 7
        %v2854 = vsub.s32 0, %v2853
        %v2855 = vrot.slane %v2116, %v2854
        %v2856 = vlaneseq
        %v2857 = vshrl.u32 %v2856, 7
        %v2858 = vsub.s32 0, %v2857
        %v2859 = vrot.slane %v2130, %v2858
        %v2860 = vlaneseq
        %v2861 = vshrl.u32 %v2860, 7
        %v2862 = vsub.s32 0, %v2861
        %v2863 = vrot.slane %v2132, %v2862
        %v2864 = vlaneseq
        %v2865 = vshrl.u32 %v2864, 7
        %v2866 = vsub.s32 0, %v2865
        %v2867 = vrot.slane %v2134, %v2866
        %v2868 = vlaneseq
        %v2869 = vshrl.u32 %v2868, 7
        %v2870 = vsub.s32 0, %v2869
        %v2871 = vrot.slane %v2158, %v2870
        %v2872 = vlaneseq
        %v2873 = vshrl.u32 %v2872, 7
        %v2874 = vsub.s32 0, %v2873
        %v2875 = vrot.slane %v2172, %v2874
        %v2876 = vlaneseq
        %v2877 = vshrl.u32 %v2876, 7
        %v2878 = vsub.s32 0, %v2877
        %v2879 = vrot.slane %v2180, %v2878
        %v2880 = vlaneseq
        %v2881 = vshrl.u32 %v2880, 7
        %v2882 = vsub.s32 0, %v2881
        %v2883 = vrot.slane %v2182, %v2882
        %v2884 = vlaneseq
        %v2885 = vshrl.u32 %v2884, 7
        %v2886 = vsub.s32 0, %v2885
        %v2887 = vrot.slane %v2165, %v2886
        %v2888 = vlaneseq
        %v2889 = vshrl.u32 %v2888, 7
        %v2890 = vsub.s32 0, %v2889
        %v2891 = vrot.slane %v2179, %v2890
        %v2892 = vlaneseq
        %v2893 = vshrl.u32 %v2892, 7
        %v2894 = vsub.s32 0, %v2893
        %v2895 = vrot.slane %v2181, %v2894
        %v2896 = vlaneseq
        %v2897 = vshrl.u32 %v2896, 7
        %v2898 = vsub.s32 0, %v2897
        %v2899 = vrot.slane %v2183, %v2898
        %v2900 = vlaneseq
        %v2901 = vshrl.u32 %v2900, 7
        %v2902 = vsub.s32 0, %v2901
        %v2903 = vrot.slane %v2207, %v2902
        %v2904 = vlaneseq
        %v2905 = vshrl.u32 %v2904, 7
        %v2906 = vsub.s32 0, %v2905
        %v2907 = vrot.slane %v2221, %v2906
        %v2908 = vlaneseq
        %v2909 = vshrl.u32 %v2908, 7
        %v2910 = vsub.s32 0, %v2909
        %v2911 = vrot.slane %v2229, %v2910
        %v2912 = vlaneseq
        %v2913 = vshrl.u32 %v2912, 7
        %v2914 = vsub.s32 0, %v2913
        %v2915 = vrot.slane %v2231, %v2914
        %v2916 = vlaneseq
        %v2917 = vshrl.u32 %v2916, 7
        %v2918 = vsub.s32 0, %v2917
        %v2919 = vrot.slane %v2214, %v2918
        %v2920 = vlaneseq
        %v2921 = vshrl.u32 %v2920, 7
        %v2922 = vsub.s32 0, %v2921
        %v2923 = vrot.slane %v2228, %v2922
        %v2924 = vlaneseq
        %v2925 = vshrl.u32 %v2924, 7
        %v2926 = vsub.s32 0, %v2925
        %v2927 = vrot.slane %v2230, %v2926
        %v2928 = vlaneseq
        %v2929 = vshrl.u32 %v2928, 7
        %v2930 = vsub.s32 0, %v2929
        %v2931 = vrot.slane %v2232, %v2930
        %v2932 = vlaneseq
        %v2933 = vshrl.u32 %v2932, 7
        %v2934 = vsub.s32 0, %v2933
        %v2935 = vrot.slane %v2256, %v2934
        %v2936 = vlaneseq
        %v2937 = vshrl.u32 %v2936, 7
        %v2938 = vsub.s32 0, %v2937
        %v2939 = vrot.slane %v2270, %v2938
        %v2940 = vlaneseq
        %v2941 = vshrl.u32 %v2940, 7
        %v2942 = vsub.s32 0, %v2941
        %v2943 = vrot.slane %v2278, %v2942
        %v2944 = vlaneseq
        %v2945 = vshrl.u32 %v2944, 7
        %v2946 = vsub.s32 0, %v2945
        %v2947 = vrot.slane %v2280, %v2946
        %v2948 = vlaneseq
        %v2949 = vshrl.u32 %v2948, 7
        %v2950 = vsub.s32 0, %v2949
        %v2951 = vrot.slane %v2263, %v2950
        %v2952 = vlaneseq
        %v2953 = vshrl.u32 %v2952, 7
        %v2954 = vsub.s32 0, %v2953
        %v2955 = vrot.slane %v2277, %v2954
        %v2956 = vlaneseq
        %v2957 = vshrl.u32 %v2956, 7
        %v2958 = vsub.s32 0, %v2957
        %v2959 = vrot.slane %v2279, %v2958
        %v2960 = vlaneseq
        %v2961 = vshrl.u32 %v2960, 7
        %v2962 = vsub.s32 0, %v2961
        %v2963 = vrot.slane %v2281, %v2962
        %v2964 = vlaneseq
        %v2965 = vshrl.u32 %v2964, 7
        %v2966 = vsub.s32 0, %v2965
        %v2967 = vrot.slane %v2305, %v2966
        %v2968 = vlaneseq
        %v2969 = vshrl.u32 %v2968, 7
        %v2970 = vsub.s32 0, %v2969
        %v2971 = vrot.slane %v2319, %v2970
        %v2972 = vlaneseq
        %v2973 = vshrl.u32 %v2972, 7
        %v2974 = vsub.s32 0, %v2973
        %v2975 = vrot.slane %v2327, %v2974
        %v2976 = vlaneseq
        %v2977 = vshrl.u32 %v2976, 7
        %v2978 = vsub.s32 0, %v2977
        %v2979 = vrot.slane %v2329, %v2978
        %v2980 = vlaneseq
        %v2981 = vshrl.u32 %v2980, 7
        %v2982 = vsub.s32 0, %v2981
        %v2983 = vrot.slane %v2312, %v2982
        %v2984 = vlaneseq
        %v2985 = vshrl.u32 %v2984, 7
        %v2986 = vsub.s32 0, %v2985
        %v2987 = vrot.slane %v2326, %v2986
        %v2988 = vlaneseq
        %v2989 = vshrl.u32 %v2988, 7
        %v2990 = vsub.s32 0, %v2989
        %v2991 = vrot.slane %v2328, %v2990
        %v2992 = vlaneseq
        %v2993 = vshrl.u32 %v2992, 7
        %v2994 = vsub.s32 0, %v2993
        %v2995 = vrot.slane %v2330, %v2994
        %v2996 = vlaneseq
        %v2997 = vshrl.u32 %v2996, 7
        %v2998 = vsub.s32 0, %v2997
        %v2999 = vrot.slane %v2354, %v2998
        %v3000 = vlaneseq
        %v3001 = vshrl.u32 %v3000, 7
        %v3002 = vsub.s32 0, %v3001
        %v3003 = vrot.slane %v2368, %v3002
        %v3004 = vlaneseq
        %v3005 = vshrl.u32 %v3004, 7
        %v3006 = vsub.s32 0, %v3005
        %v3007 = vrot.slane %v2376, %v3006
        %v3008 = vlaneseq
        %v3009 = vshrl.u32 %v3008, 7
        %v3010 = vsub.s32 0, %v3009
        %v3011 = vrot.slane %v2378, %v3010
        %v3012 = vlaneseq
        %v3013 = vshrl.u32 %v3012, 7
        %v3014 = vsub.s32 0, %v3013
        %v3015 = vrot.slane %v2361, %v3014
        %v3016 = vlaneseq
        %v3017 = vshrl.u32 %v3016, 7
        %v3018 = vsub.s32 0, %v3017
        %v3019 = vrot.slane %v2375, %v3018
        %v3020 = vlaneseq
        %v3021 = vshrl.u32 %v3020, 7
        %v3022 = vsub.s32 0, %v3021
        %v3023 = vrot.slane %v2377, %v3022
        %v3024 = vlaneseq
        %v3025 = vshrl.u32 %v3024, 7
        %v3026 = vsub.s32 0, %v3025
        %v3027 = vrot.slane %v2379, %v3026
        %v3028 = vlaneseq
        %v3029 = vshrl.u32 %v3028, 7
        %v3030 = vsub.s32 0, %v3029
        %v3031 = vrot.slane %v2403, %v3030
        %v3032 = vlaneseq
        %v3033 = vshrl.u32 %v3032, 7
        %v3034 = vsub.s32 0, %v3033
        %v3035 = vrot.slane %v2417, %v3034
        %v3036 = vlaneseq
        %v3037 = vshrl.u32 %v3036, 7
        %v3038 = vsub.s32 0, %v3037
        %v3039 = vrot.slane %v2425, %v3038
        %v3040 = vlaneseq
        %v3041 = vshrl.u32 %v3040, 7
        %v3042 = vsub.s32 0, %v3041
        %v3043 = vrot.slane %v2427, %v3042
        %v3044 = vlaneseq
        %v3045 = vshrl.u32 %v3044, 7
        %v3046 = vsub.s32 0, %v3045
        %v3047 = vrot.slane %v2410, %v3046
        %v3048 = vlaneseq
        %v3049 = vshrl.u32 %v3048, 7
        %v3050 = vsub.s32 0, %v3049
        %v3051 = vrot.slane %v2424, %v3050
        %v3052 = vlaneseq
        %v3053 = vshrl.u32 %v3052, 7
        %v3054 = vsub.s32 0, %v3053
        %v3055 = vrot.slane %v2426, %v3054
        %v3056 = vlaneseq
        %v3057 = vshrl.u32 %v3056, 7
        %v3058 = vsub.s32 0, %v3057
        %v3059 = vrot.slane %v2428, %v3058
        %v3060 = vlaneseq
        %v3061 = vshrl.u32 %v3060, 7
        %v3062 = vsub.s32 0, %v3061
        %v3063 = vrot.slane %v2452, %v3062
        %v3064 = vlaneseq
        %v3065 = vshrl.u32 %v3064, 7
        %v3066 = vsub.s32 0, %v3065
        %v3067 = vrot.slane %v2466, %v3066
        %v3068 = vlaneseq
        %v3069 = vshrl.u32 %v3068, 7
        %v3070 = vsub.s32 0, %v3069
        %v3071 = vrot.slane %v2474, %v3070
        %v3072 = vlaneseq
        %v3073 = vshrl.u32 %v3072, 7
        %v3074 = vsub.s32 0, %v3073
        %v3075 = vrot.slane %v2476, %v3074
        %v3076 = vlaneseq
        %v3077 = vshrl.u32 %v3076, 7
        %v3078 = vsub.s32 0, %v3077
        %v3079 = vrot.slane %v2459, %v3078
        %v3080 = vlaneseq
        %v3081 = vshrl.u32 %v3080, 7
        %v3082 = vsub.s32 0, %v3081
        %v3083 = vrot.slane %v2473, %v3082
        %v3084 = vlaneseq
        %v3085 = vshrl.u32 %v3084, 7
        %v3086 = vsub.s32 0, %v3085
        %v3087 = vrot.slane %v2475, %v3086
        %v3088 = vlaneseq
        %v3089 = vshrl.u32 %v3088, 7
        %v3090 = vsub.s32 0, %v3089
        %v3091 = vrot.slane %v2477, %v3090
        %v3092 = vlaneseq
        %v3093 = vshrl.u32 %v3092, 7
        %v3094 = vsub.s32 0, %v3093
        %v3095 = vrot.slane %v2501, %v3094
        %v3096 = vlaneseq
        %v3097 = vshrl.u32 %v3096, 7
        %v3098 = vsub.s32 0, %v3097
        %v3099 = vrot.slane %v2515, %v3098
        %v3100 = vlaneseq
        %v3101 = vshrl.u32 %v3100, 7
        %v3102 = vsub.s32 0, %v3101
        %v3103 = vrot.slane %v2523, %v3102
        %v3104 = vlaneseq
        %v3105 = vshrl.u32 %v3104, 7
        %v3106 = vsub.s32 0, %v3105
        %v3107 = vrot.slane %v2525, %v3106
        %v3108 = vlaneseq
        %v3109 = vshrl.u32 %v3108, 7
        %v3110 = vsub.s32 0, %v3109
        %v3111 = vrot.slane %v2508, %v3110
        %v3112 = vlaneseq
        %v3113 = vshrl.u32 %v3112, 7
        %v3114 = vsub.s32 0, %v3113
        %v3115 = vrot.slane %v2522, %v3114
        %v3116 = vlaneseq
        %v3117 = vshrl.u32 %v3116, 7
        %v3118 = vsub.s32 0, %v3117
        %v3119 = vrot.slane %v2524, %v3118
        %v3120 = vlaneseq
        %v3121 = vshrl.u32 %v3120, 7
        %v3122 = vsub.s32 0, %v3121
        %v3123 = vrot.slane %v2526, %v3122
        %v3124 = vlaneseq
        %v3125 = vshrl.u32 %v3124, 7
        %v3126 = vsub.s32 0, %v3125
        %v3127 = vrot.slane %v2550, %v3126
        %v3128 = vlaneseq
        %v3129 = vshrl.u32 %v3128, 7
        %v3130 = vsub.s32 0, %v3129
        %v3131 = vrot.slane %v2564, %v3130
        %v3132 = vlaneseq
        %v3133 = vshrl.u32 %v3132, 7
        %v3134 = vsub.s32 0, %v3133
        %v3135 = vrot.slane %v2572, %v3134
        %v3136 = vlaneseq
        %v3137 = vshrl.u32 %v3136, 7
        %v3138 = vsub.s32 0, %v3137
        %v3139 = vrot.slane %v2574, %v3138
        %v3140 = vlaneseq
        %v3141 = vshrl.u32 %v3140, 7
        %v3142 = vsub.s32 0, %v3141
        %v3143 = vrot.slane %v2557, %v3142
        %v3144 = vlaneseq
        %v3145 = vshrl.u32 %v3144, 7
        %v3146 = vsub.s32 0, %v3145
        %v3147 = vrot.slane %v2571, %v3146
        %v3148 = vlaneseq
        %v3149 = vshrl.u32 %v3148, 7
        %v3150 = vsub.s32 0, %v3149
        %v3151 = vrot.slane %v2573, %v3150
        %v3152 = vlaneseq
        %v3153 = vshrl.u32 %v3152, 7
        %v3154 = vsub.s32 0, %v3153
        %v3155 = vrot.slane %v2575, %v3154
        %v3156 = vlaneseq
        %v3157 = vshrl.u32 %v3156, 7
        %v3158 = vsub.s32 0, %v3157
        %v3159 = vrot.slane %v2599, %v3158
        %v3160 = vlaneseq
        %v3161 = vshrl.u32 %v3160, 7
        %v3162 = vsub.s32 0, %v3161
        %v3163 = vrot.slane %v2613, %v3162
        %v3164 = vlaneseq
        %v3165 = vshrl.u32 %v3164, 7
        %v3166 = vsub.s32 0, %v3165
        %v3167 = vrot.slane %v2621, %v3166
        %v3168 = vlaneseq
        %v3169 = vshrl.u32 %v3168, 7
        %v3170 = vsub.s32 0, %v3169
        %v3171 = vrot.slane %v2623, %v3170
        %v3172 = vlaneseq
        %v3173 = vshrl.u32 %v3172, 7
        %v3174 = vsub.s32 0, %v3173
        %v3175 = vrot.slane %v2606, %v3174
        %v3176 = vlaneseq
        %v3177 = vshrl.u32 %v3176, 7
        %v3178 = vsub.s32 0, %v3177
        %v3179 = vrot.slane %v2620, %v3178
        %v3180 = vlaneseq
        %v3181 = vshrl.u32 %v3180, 7
        %v3182 = vsub.s32 0, %v3181
        %v3183 = vrot.slane %v2622, %v3182
        %v3184 = vlaneseq
        %v3185 = vshrl.u32 %v3184, 7
        %v3186 = vsub.s32 0, %v3185
        %v3187 = vrot.slane %v2624, %v3186
        %v3188 = vlaneseq
        %v3189 = vshrl.u32 %v3188, 7
        %v3190 = vsub.s32 0, %v3189
        %v3191 = vrot.slane %v2648, %v3190
        %v3192 = vlaneseq
        %v3193 = vshrl.u32 %v3192, 7
        %v3194 = vsub.s32 0, %v3193
        %v3195 = vrot.slane %v2662, %v3194
        %v3196 = vlaneseq
        %v3197 = vshrl.u32 %v3196, 7
        %v3198 = vsub.s32 0, %v3197
        %v3199 = vrot.slane %v2670, %v3198
        %v3200 = vlaneseq
        %v3201 = vshrl.u32 %v3200, 7
        %v3202 = vsub.s32 0, %v3201
        %v3203 = vrot.slane %v2672, %v3202
        %v3204 = vlaneseq
        %v3205 = vshrl.u32 %v3204, 7
        %v3206 = vsub.s32 0, %v3205
        %v3207 = vrot.slane %v2655, %v3206
        %v3208 = vlaneseq
        %v3209 = vshrl.u32 %v3208, 7
        %v3210 = vsub.s32 0, %v3209
        %v3211 = vrot.slane %v2669, %v3210
        %v3212 = vlaneseq
        %v3213 = vshrl.u32 %v3212, 7
        %v3214 = vsub.s32 0, %v3213
        %v3215 = vrot.slane %v2671, %v3214
        %v3216 = vlaneseq
        %v3217 = vshrl.u32 %v3216, 7
        %v3218 = vsub.s32 0, %v3217
        %v3219 = vrot.slane %v2673, %v3218
        %v3220 = vlaneseq
        %v3221 = vshrl.u32 %v3220, 7
        %v3222 = vsub.s32 0, %v3221
        %v3223 = vrot.slane %v2697, %v3222
        %v3224 = vlaneseq
        %v3225 = vshrl.u32 %v3224, 7
        %v3226 = vsub.s32 0, %v3225
        %v3227 = vrot.slane %v2711, %v3226
        %v3228 = vlaneseq
        %v3229 = vshrl.u32 %v3228, 7
        %v3230 = vsub.s32 0, %v3229
        %v3231 = vrot.slane %v2719, %v3230
        %v3232 = vlaneseq
        %v3233 = vshrl.u32 %v3232, 7
        %v3234 = vsub.s32 0, %v3233
        %v3235 = vrot.slane %v2721, %v3234
        %v3236 = vlaneseq
        %v3237 = vshrl.u32 %v3236, 7
        %v3238 = vsub.s32 0, %v3237
        %v3239 = vrot.slane %v2704, %v3238
        %v3240 = vlaneseq
        %v3241 = vshrl.u32 %v3240, 7
        %v3242 = vsub.s32 0, %v3241
        %v3243 = vrot.slane %v2718, %v3242
        %v3244 = vlaneseq
        %v3245 = vshrl.u32 %v3244, 7
        %v3246 = vsub.s32 0, %v3245
        %v3247 = vrot.slane %v2720, %v3246
        %v3248 = vlaneseq
        %v3249 = vshrl.u32 %v3248, 7
        %v3250 = vsub.s32 0, %v3249
        %v3251 = vrot.slane %v2722, %v3250
        %v3252 = vlaneseq
        %v3253 = vshrl.u32 %v3252, 7
        %v3254 = vsub.s32 0, %v3253
        %v3255 = vrot.slane %v2746, %v3254
        %v3256 = vlaneseq
        %v3257 = vshrl.u32 %v3256, 7
        %v3258 = vsub.s32 0, %v3257
        %v3259 = vrot.slane %v2760, %v3258
        %v3260 = vlaneseq
        %v3261 = vshrl.u32 %v3260, 7
        %v3262 = vsub.s32 0, %v3261
        %v3263 = vrot.slane %v2768, %v3262
        %v3264 = vlaneseq
        %v3265 = vshrl.u32 %v3264, 7
        %v3266 = vsub.s32 0, %v3265
        %v3267 = vrot.slane %v2770, %v3266
        %v3268 = vlaneseq
        %v3269 = vshrl.u32 %v3268, 7
        %v3270 = vsub.s32 0, %v3269
        %v3271 = vrot.slane %v2753, %v3270
        %v3272 = vlaneseq
        %v3273 = vshrl.u32 %v3272, 7
        %v3274 = vsub.s32 0, %v3273
        %v3275 = vrot.slane %v2767, %v3274
        %v3276 = vlaneseq
        %v3277 = vshrl.u32 %v3276, 7
        %v3278 = vsub.s32 0, %v3277
        %v3279 = vrot.slane %v2769, %v3278
        %v3280 = vlaneseq
        %v3281 = vshrl.u32 %v3280, 7
        %v3282 = vsub.s32 0, %v3281
        %v3283 = vrot.slane %v2771, %v3282
        %v3412 = vmul.f32 %v2775, %v1954
        %v3413 = vmul.f32 %v2775, %v1955
        %v3414 = vmul.f32 %v2779, %v1954
        %v3415 = vmul.f32 %v2779, %v1955
        %v3416 = vmul.f32 %v2783, %v1954
        %v3417 = vmul.f32 %v2783, %v1955
        %v3418 = vmul.f32 %v2787, %v1954
        %v3419 = vmul.f32 %v2787, %v1955
        %v3420 = vmul.f32 %v2791, %v1954
        %v3421 = vmul.f32 %v2791, %v1955
        %v3422 = vmul.f32 %v2795, %v1954
        %v3423 = vmul.f32 %v2795, %v1955
        %v3424 = vmul.f32 %v2799, %v1954
        %v3425 = vmul.f32 %v2799, %v1955
        %v3426 = vmul.f32 %v2803, %v1954
        %v3427 = vmul.f32 %v2803, %v1955
        %v3428 = vmul.f32 %v2807, %v1954
        %v3429 = vmul.f32 %v2807, %v1955
        %v3430 = vmul.f32 %v2811, %v1954
        %v3431 = vmul.f32 %v2811, %v1955
        %v3432 = vmul.f32 %v2815, %v1954
        %v3433 = vmul.f32 %v2815, %v1955
        %v3434 = vmul.f32 %v2819, %v1954
        %v3435 = vmul.f32 %v2819, %v1955
        %v3436 = vmul.f32 %v2823, %v1954
        %v3437 = vmul.f32 %v2823, %v1955
        %v3438 = vmul.f32 %v2827, %v1954
        %v3439 = vmul.f32 %v2827, %v1955
        %v3440 = vmul.f32 %v2831, %v1954
        %v3441 = vmul.f32 %v2831, %v1955
        %v3442 = vmul.f32 %v2835, %v1954
        %v3443 = vmul.f32 %v2835, %v1955
        %v3444 = vmul.f32 %v2839, %v1954
        %v3445 = vmul.f32 %v2839, %v1955
        %v3446 = vmul.f32 %v2843, %v1954
        %v3447 = vmul.f32 %v2843, %v1955
        %v3448 = vmul.f32 %v2847, %v1954
        %v3449 = vmul.f32 %v2847, %v1955
        %v3450 = vmul.f32 %v2851, %v1954
        %v3451 = vmul.f32 %v2851, %v1955
        %v3452 = vmul.f32 %v2855, %v1954
        %v3453 = vmul.f32 %v2855, %v1955
        %v3454 = vmul.f32 %v2859, %v1954
        %v3455 = vmul.f32 %v2859, %v1955
        %v3456 = vmul.f32 %v2863, %v1954
        %v3457 = vmul.f32 %v2863, %v1955
        %v3458 = vmul.f32 %v2867, %v1954
        %v3459 = vmul.f32 %v2867, %v1955
        %v3460 = vmul.f32 %v2871, %v1954
        %v3461 = vmul.f32 %v2871, %v1955
        %v3462 = vmul.f32 %v2875, %v1954
        %v3463 = vmul.f32 %v2875, %v1955
        %v3464 = vmul.f32 %v2879, %v1954
        %v3465 = vmul.f32 %v2879, %v1955
        %v3466 = vmul.f32 %v2883, %v1954
        %v3467 = vmul.f32 %v2883, %v1955
        %v3468 = vmul.f32 %v2887, %v1954
        %v3469 = vmul.f32 %v2887, %v1955
        %v3470 = vmul.f32 %v2891, %v1954
        %v3471 = vmul.f32 %v2891, %v1955
        %v3472 = vmul.f32 %v2895, %v1954
        %v3473 = vmul.f32 %v2895, %v1955
        %v3474 = vmul.f32 %v2899, %v1954
        %v3475 = vmul.f32 %v2899, %v1955
        %v3476 = vmul.f32 %v2903, %v1954
        %v3477 = vmul.f32 %v2903, %v1955
        %v3478 = vmul.f32 %v2907, %v1954
        %v3479 = vmul.f32 %v2907, %v1955
        %v3480 = vmul.f32 %v2911, %v1954
        %v3481 = vmul.f32 %v2911, %v1955
        %v3482 = vmul.f32 %v2915, %v1954
        %v3483 = vmul.f32 %v2915, %v1955
        %v3484 = vmul.f32 %v2919, %v1954
        %v3485 = vmul.f32 %v2919, %v1955
        %v3486 = vmul.f32 %v2923, %v1954
        %v3487 = vmul.f32 %v2923, %v1955
        %v3488 = vmul.f32 %v2927, %v1954
        %v3489 = vmul.f32 %v2927, %v1955
        %v3490 = vmul.f32 %v2931, %v1954
        %v3491 = vmul.f32 %v2931, %v1955
        %v3492 = vmul.f32 %v2935, %v1954
        %v3493 = vmul.f32 %v2935, %v1955
        %v3494 = vmul.f32 %v2939, %v1954
        %v3495 = vmul.f32 %v2939, %v1955
        %v3496 = vmul.f32 %v2943, %v1954
        %v3497 = vmul.f32 %v2943, %v1955
        %v3498 = vmul.f32 %v2947, %v1954
        %v3499 = vmul.f32 %v2947, %v1955
        %v3500 = vmul.f32 %v2951, %v1954
        %v3501 = vmul.f32 %v2951, %v1955
        %v3502 = vmul.f32 %v2955, %v1954
        %v3503 = vmul.f32 %v2955, %v1955
        %v3504 = vmul.f32 %v2959, %v1954
        %v3505 = vmul.f32 %v2959, %v1955
        %v3506 = vmul.f32 %v2963, %v1954
        %v3507 = vmul.f32 %v2963, %v1955
        %v3508 = vmul.f32 %v2967, %v1954
        %v3509 = vmul.f32 %v2967, %v1955
        %v3510 = vmul.f32 %v2971, %v1954
        %v3511 = vmul.f32 %v2971, %v1955
        %v3512 = vmul.f32 %v2975, %v1954
        %v3513 = vmul.f32 %v2975, %v1955
        %v3514 = vmul.f32 %v2979, %v1954
        %v3515 = vmul.f32 %v2979, %v1955
        %v3516 = vmul.f32 %v2983, %v1954
        %v3517 = vmul.f32 %v2983, %v1955
        %v3518 = vmul.f32 %v2987, %v1954
        %v3519 = vmul.f32 %v2987, %v1955
        %v3520 = vmul.f32 %v2991, %v1954
        %v3521 = vmul.f32 %v2991, %v1955
        %v3522 = vmul.f32 %v2995, %v1954
        %v3523 = vmul.f32 %v2995, %v1955
        %v3524 = vmul.f32 %v2999, %v1954
        %v3525 = vmul.f32 %v2999, %v1955
        %v3526 = vmul.f32 %v3003, %v1954
        %v3527 = vmul.f32 %v3003, %v1955
        %v3528 = vmul.f32 %v3007, %v1954
        %v3529 = vmul.f32 %v3007, %v1955
        %v3530 = vmul.f32 %v3011, %v1954
        %v3531 = vmul.f32 %v3011, %v1955
        %v3532 = vmul.f32 %v3015, %v1954
        %v3533 = vmul.f32 %v3015, %v1955
        %v3534 = vmul.f32 %v3019, %v1954
        %v3535 = vmul.f32 %v3019, %v1955
        %v3536 = vmul.f32 %v3023, %v1954
        %v3537 = vmul.f32 %v3023, %v1955
        %v3538 = vmul.f32 %v3027, %v1954
        %v3539 = vmul.f32 %v3027, %v1955
        %v3540 = vmul.f32 %v3031, %v1954
        %v3541 = vmul.f32 %v3031, %v1955
        %v3542 = vmul.f32 %v3035, %v1954
        %v3543 = vmul.f32 %v3035, %v1955
        %v3544 = vmul.f32 %v3039, %v1954
        %v3545 = vmul.f32 %v3039, %v1955
        %v3546 = vmul.f32 %v3043, %v1954
        %v3547 = vmul.f32 %v3043, %v1955
        %v3548 = vmul.f32 %v3047, %v1954
        %v3549 = vmul.f32 %v3047, %v1955
        %v3550 = vmul.f32 %v3051, %v1954
        %v3551 = vmul.f32 %v3051, %v1955
        %v3552 = vmul.f32 %v3055, %v1954
        %v3553 = vmul.f32 %v3055, %v1955
        %v3554 = vmul.f32 %v3059, %v1954
        %v3555 = vmul.f32 %v3059, %v1955
        %v3556 = vmul.f32 %v3063, %v1954
        %v3557 = vmul.f32 %v3063, %v1955
        %v3558 = vmul.f32 %v3067, %v1954
        %v3559 = vmul.f32 %v3067, %v1955
        %v3560 = vmul.f32 %v3071, %v1954
        %v3561 = vmul.f32 %v3071, %v1955
        %v3562 = vmul.f32 %v3075, %v1954
        %v3563 = vmul.f32 %v3075, %v1955
        %v3564 = vmul.f32 %v3079, %v1954
        %v3565 = vmul.f32 %v3079, %v1955
        %v3566 = vmul.f32 %v3083, %v1954
        %v3567 = vmul.f32 %v3083, %v1955
        %v3568 = vmul.f32 %v3087, %v1954
        %v3569 = vmul.f32 %v3087, %v1955
        %v3570 = vmul.f32 %v3091, %v1954
        %v3571 = vmul.f32 %v3091, %v1955
        %v3572 = vmul.f32 %v3095, %v1954
        %v3573 = vmul.f32 %v3095, %v1955
        %v3574 = vmul.f32 %v3099, %v1954
        %v3575 = vmul.f32 %v3099, %v1955
        %v3576 = vmul.f32 %v3103, %v1954
        %v3577 = vmul.f32 %v3103, %v1955
        %v3578 = vmul.f32 %v3107, %v1954
        %v3579 = vmul.f32 %v3107, %v1955
        %v3580 = vmul.f32 %v3111, %v1954
        %v3581 = vmul.f32 %v3111, %v1955
        %v3582 = vmul.f32 %v3115, %v1954
        %v3583 = vmul.f32 %v3115, %v1955
        %v3584 = vmul.f32 %v3119, %v1954
        %v3585 = vmul.f32 %v3119, %v1955
        %v3586 = vmul.f32 %v3123, %v1954
        %v3587 = vmul.f32 %v3123, %v1955
        %v3588 = vmul.f32 %v3127, %v1954
        %v3589 = vmul.f32 %v3127, %v1955
        %v3590 = vmul.f32 %v3131, %v1954
        %v3591 = vmul.f32 %v3131, %v1955
        %v3592 = vmul.f32 %v3135, %v1954
        %v3593 = vmul.f32 %v3135, %v1955
        %v3594 = vmul.f32 %v3139, %v1954
        %v3595 = vmul.f32 %v3139, %v1955
        %v3596 = vmul.f32 %v3143, %v1954
        %v3597 = vmul.f32 %v3143, %v1955
        %v3598 = vmul.f32 %v3147, %v1954
        %v3599 = vmul.f32 %v3147, %v1955
        %v3600 = vmul.f32 %v3151, %v1954
        %v3601 = vmul.f32 %v3151, %v1955
        %v3602 = vmul.f32 %v3155, %v1954
        %v3603 = vmul.f32 %v3155, %v1955
        %v3604 = vmul.f32 %v3159, %v1954
        %v3605 = vmul.f32 %v3159, %v1955
        %v3606 = vmul.f32 %v3163, %v1954
        %v3607 = vmul.f32 %v3163, %v1955
        %v3608 = vmul.f32 %v3167, %v1954
        %v3609 = vmul.f32 %v3167, %v1955
        %v3610 = vmul.f32 %v3171, %v1954
        %v3611 = vmul.f32 %v3171, %v1955
        %v3612 = vmul.f32 %v3175, %v1954
        %v3613 = vmul.f32 %v3175, %v1955
        %v3614 = vmul.f32 %v3179, %v1954
        %v3615 = vmul.f32 %v3179, %v1955
        %v3616 = vmul.f32 %v3183, %v1954
        %v3617 = vmul.f32 %v3183, %v1955
        %v3618 = vmul.f32 %v3187, %v1954
        %v3619 = vmul.f32 %v3187, %v1955
        %v3620 = vmul.f32 %v3191, %v1954
        %v3621 = vmul.f32 %v3191, %v1955
        %v3622 = vmul.f32 %v3195, %v1954
        %v3623 = vmul.f32 %v3195, %v1955
        %v3624 = vmul.f32 %v3199, %v1954
        %v3625 = vmul.f32 %v3199, %v1955
        %v3626 = vmul.f32 %v3203, %v1954
        %v3627 = vmul.f32 %v3203, %v1955
        %v3628 = vmul.f32 %v3207, %v1954
        %v3629 = vmul.f32 %v3207, %v1955
        %v3630 = vmul.f32 %v3211, %v1954
        %v3631 = vmul.f32 %v3211, %v1955
        %v3632 = vmul.f32 %v3215, %v1954
        %v3633 = vmul.f32 %v3215, %v1955
        %v3634 = vmul.f32 %v3219, %v1954
        %v3635 = vmul.f32 %v3219, %v1955
        %v3636 = vmul.f32 %v3223, %v1954
        %v3637 = vmul.f32 %v3223, %v1955
        %v3638 = vmul.f32 %v3227, %v1954
        %v3639 = vmul.f32 %v3227, %v1955
        %v3640 = vmul.f32 %v3231, %v1954
        %v3641 = vmul.f32 %v3231, %v1955
        %v3642 = vmul.f32 %v3235, %v1954
        %v3643 = vmul.f32 %v3235, %v1955
        %v3644 = vmul.f32 %v3239, %v1954
        %v3645 = vmul.f32 %v3239, %v1955
        %v3646 = vmul.f32 %v3243, %v1954
        %v3647 = vmul.f32 %v3243, %v1955
        %v3648 = vmul.f32 %v3247, %v1954
        %v3649 = vmul.f32 %v3247, %v1955
        %v3650 = vmul.f32 %v3251, %v1954
        %v3651 = vmul.f32 %v3251, %v1955
        %v3652 = vmul.f32 %v3255, %v1954
        %v3653 = vmul.f32 %v3255, %v1955
        %v3654 = vmul.f32 %v3259, %v1954
        %v3655 = vmul.f32 %v3259, %v1955
        %v3656 = vmul.f32 %v3263, %v1954
        %v3657 = vmul.f32 %v3263, %v1955
        %v3658 = vmul.f32 %v3267, %v1954
        %v3659 = vmul.f32 %v3267, %v1955
        %v3660 = vmul.f32 %v3271, %v1954
        %v3661 = vmul.f32 %v3271, %v1955
        %v3662 = vmul.f32 %v3275, %v1954
        %v3663 = vmul.f32 %v3275, %v1955
        %v3664 = vmul.f32 %v3279, %v1954
        %v3665 = vmul.f32 %v3279, %v1955
        %v3666 = vmul.f32 %v3283, %v1954
        %v3667 = vmul.f32 %v3283, %v1955
        %v3668 = vmul.f32 %v3412, 1.442695
        %v3669 = vpow.pop %v3668
        %v3670 = vmul.f32 %v3413, 1.442695
        %v3671 = vpow.pop %v3670
        %v3672 = vmul.f32 %v3414, 1.442695
        %v3673 = vpow.pop %v3672
        %v3674 = vmul.f32 %v3415, 1.442695
        %v3675 = vpow.pop %v3674
        %v3676 = vmul.f32 %v3416, 1.442695
        %v3677 = vpow.pop %v3676
        %v3678 = vmul.f32 %v3417, 1.442695
        %v3679 = vpow.pop %v3678
        %v3680 = vmul.f32 %v3418, 1.442695
        %v3681 = vpow.pop %v3680
        %v3682 = vmul.f32 %v3419, 1.442695
        %v3683 = vpow.pop %v3682
        %v3684 = vmul.f32 %v3420, 1.442695
        %v3685 = vpow.pop %v3684
        %v3686 = vmul.f32 %v3421, 1.442695
        %v3687 = vpow.pop %v3686
        %v3688 = vmul.f32 %v3422, 1.442695
        %v3689 = vpow.pop %v3688
        %v3690 = vmul.f32 %v3423, 1.442695
        %v3691 = vpow.pop %v3690
        %v3692 = vmul.f32 %v3424, 1.442695
        %v3693 = vpow.pop %v3692
        %v3694 = vmul.f32 %v3425, 1.442695
        %v3695 = vpow.pop %v3694
        %v3696 = vmul.f32 %v3426, 1.442695
        %v3697 = vpow.pop %v3696
        %v3698 = vmul.f32 %v3427, 1.442695
        %v3699 = vpow.pop %v3698
        %v3700 = vmul.f32 %v3428, 1.442695
        %v3701 = vpow.pop %v3700
        %v3702 = vmul.f32 %v3429, 1.442695
        %v3703 = vpow.pop %v3702
        %v3704 = vmul.f32 %v3430, 1.442695
        %v3705 = vpow.pop %v3704
        %v3706 = vmul.f32 %v3431, 1.442695
        %v3707 = vpow.pop %v3706
        %v3708 = vmul.f32 %v3432, 1.442695
        %v3709 = vpow.pop %v3708
        %v3710 = vmul.f32 %v3433, 1.442695
        %v3711 = vpow.pop %v3710
        %v3712 = vmul.f32 %v3434, 1.442695
        %v3713 = vpow.pop %v3712
        %v3714 = vmul.f32 %v3435, 1.442695
        %v3715 = vpow.pop %v3714
        %v3716 = vmul.f32 %v3436, 1.442695
        %v3717 = vpow.pop %v3716
        %v3718 = vmul.f32 %v3437, 1.442695
        %v3719 = vpow.pop %v3718
        %v3720 = vmul.f32 %v3438, 1.442695
        %v3721 = vpow.pop %v3720
        %v3722 = vmul.f32 %v3439, 1.442695
        %v3723 = vpow.pop %v3722
        %v3724 = vmul.f32 %v3440, 1.442695
        %v3725 = vpow.pop %v3724
        %v3726 = vmul.f32 %v3441, 1.442695
        %v3727 = vpow.pop %v3726
        %v3728 = vmul.f32 %v3442, 1.442695
        %v3729 = vpow.pop %v3728
        %v3730 = vmul.f32 %v3443, 1.442695
        %v3731 = vpow.pop %v3730
        %v3732 = vmul.f32 %v3444, 1.442695
        %v3733 = vpow.pop %v3732
        %v3734 = vmul.f32 %v3445, 1.442695
        %v3735 = vpow.pop %v3734
        %v3736 = vmul.f32 %v3446, 1.442695
        %v3737 = vpow.pop %v3736
        %v3738 = vmul.f32 %v3447, 1.442695
        %v3739 = vpow.pop %v3738
        %v3740 = vmul.f32 %v3448, 1.442695
        %v3741 = vpow.pop %v3740
        %v3742 = vmul.f32 %v3449, 1.442695
        %v3743 = vpow.pop %v3742
        %v3744 = vmul.f32 %v3450, 1.442695
        %v3745 = vpow.pop %v3744
        %v3746 = vmul.f32 %v3451, 1.442695
        %v3747 = vpow.pop %v3746
        %v3748 = vmul.f32 %v3452, 1.442695
        %v3749 = vpow.pop %v3748
        %v3750 = vmul.f32 %v3453, 1.442695
        %v3751 = vpow.pop %v3750
        %v3752 = vmul.f32 %v3454, 1.442695
        %v3753 = vpow.pop %v3752
        %v3754 = vmul.f32 %v3455, 1.442695
        %v3755 = vpow.pop %v3754
        %v3756 = vmul.f32 %v3456, 1.442695
        %v3757 = vpow.pop %v3756
        %v3758 = vmul.f32 %v3457, 1.442695
        %v3759 = vpow.pop %v3758
        %v3760 = vmul.f32 %v3458, 1.442695
        %v3761 = vpow.pop %v3760
        %v3762 = vmul.f32 %v3459, 1.442695
        %v3763 = vpow.pop %v3762
        %v3764 = vmul.f32 %v3460, 1.442695
        %v3765 = vpow.pop %v3764
        %v3766 = vmul.f32 %v3461, 1.442695
        %v3767 = vpow.pop %v3766
        %v3768 = vmul.f32 %v3462, 1.442695
        %v3769 = vpow.pop %v3768
        %v3770 = vmul.f32 %v3463, 1.442695
        %v3771 = vpow.pop %v3770
        %v3772 = vmul.f32 %v3464, 1.442695
        %v3773 = vpow.pop %v3772
        %v3774 = vmul.f32 %v3465, 1.442695
        %v3775 = vpow.pop %v3774
        %v3776 = vmul.f32 %v3466, 1.442695
        %v3777 = vpow.pop %v3776
        %v3778 = vmul.f32 %v3467, 1.442695
        %v3779 = vpow.pop %v3778
        %v3780 = vmul.f32 %v3468, 1.442695
        %v3781 = vpow.pop %v3780
        %v3782 = vmul.f32 %v3469, 1.442695
        %v3783 = vpow.pop %v3782
        %v3784 = vmul.f32 %v3470, 1.442695
        %v3785 = vpow.pop %v3784
        %v3786 = vmul.f32 %v3471, 1.442695
        %v3787 = vpow.pop %v3786
        %v3788 = vmul.f32 %v3472, 1.442695
        %v3789 = vpow.pop %v3788
        %v3790 = vmul.f32 %v3473, 1.442695
        %v3791 = vpow.pop %v3790
        %v3792 = vmul.f32 %v3474, 1.442695
        %v3793 = vpow.pop %v3792
        %v3794 = vmul.f32 %v3475, 1.442695
        %v3795 = vpow.pop %v3794
        %v3796 = vmul.f32 %v3476, 1.442695
        %v3797 = vpow.pop %v3796
        %v3798 = vmul.f32 %v3477, 1.442695
        %v3799 = vpow.pop %v3798
        %v3800 = vmul.f32 %v3478, 1.442695
        %v3801 = vpow.pop %v3800
        %v3802 = vmul.f32 %v3479, 1.442695
        %v3803 = vpow.pop %v3802
        %v3804 = vmul.f32 %v3480, 1.442695
        %v3805 = vpow.pop %v3804
        %v3806 = vmul.f32 %v3481, 1.442695
        %v3807 = vpow.pop %v3806
        %v3808 = vmul.f32 %v3482, 1.442695
        %v3809 = vpow.pop %v3808
        %v3810 = vmul.f32 %v3483, 1.442695
        %v3811 = vpow.pop %v3810
        %v3812 = vmul.f32 %v3484, 1.442695
        %v3813 = vpow.pop %v3812
        %v3814 = vmul.f32 %v3485, 1.442695
        %v3815 = vpow.pop %v3814
        %v3816 = vmul.f32 %v3486, 1.442695
        %v3817 = vpow.pop %v3816
        %v3818 = vmul.f32 %v3487, 1.442695
        %v3819 = vpow.pop %v3818
        %v3820 = vmul.f32 %v3488, 1.442695
        %v3821 = vpow.pop %v3820
        %v3822 = vmul.f32 %v3489, 1.442695
        %v3823 = vpow.pop %v3822
        %v3824 = vmul.f32 %v3490, 1.442695
        %v3825 = vpow.pop %v3824
        %v3826 = vmul.f32 %v3491, 1.442695
        %v3827 = vpow.pop %v3826
        %v3828 = vmul.f32 %v3492, 1.442695
        %v3829 = vpow.pop %v3828
        %v3830 = vmul.f32 %v3493, 1.442695
        %v3831 = vpow.pop %v3830
        %v3832 = vmul.f32 %v3494, 1.442695
        %v3833 = vpow.pop %v3832
        %v3834 = vmul.f32 %v3495, 1.442695
        %v3835 = vpow.pop %v3834
        %v3836 = vmul.f32 %v3496, 1.442695
        %v3837 = vpow.pop %v3836
        %v3838 = vmul.f32 %v3497, 1.442695
        %v3839 = vpow.pop %v3838
        %v3840 = vmul.f32 %v3498, 1.442695
        %v3841 = vpow.pop %v3840
        %v3842 = vmul.f32 %v3499, 1.442695
        %v3843 = vpow.pop %v3842
        %v3844 = vmul.f32 %v3500, 1.442695
        %v3845 = vpow.pop %v3844
        %v3846 = vmul.f32 %v3501, 1.442695
        %v3847 = vpow.pop %v3846
        %v3848 = vmul.f32 %v3502, 1.442695
        %v3849 = vpow.pop %v3848
        %v3850 = vmul.f32 %v3503, 1.442695
        %v3851 = vpow.pop %v3850
        %v3852 = vmul.f32 %v3504, 1.442695
        %v3853 = vpow.pop %v3852
        %v3854 = vmul.f32 %v3505, 1.442695
        %v3855 = vpow.pop %v3854
        %v3856 = vmul.f32 %v3506, 1.442695
        %v3857 = vpow.pop %v3856
        %v3858 = vmul.f32 %v3507, 1.442695
        %v3859 = vpow.pop %v3858
        %v3860 = vmul.f32 %v3508, 1.442695
        %v3861 = vpow.pop %v3860
        %v3862 = vmul.f32 %v3509, 1.442695
        %v3863 = vpow.pop %v3862
        %v3864 = vmul.f32 %v3510, 1.442695
        %v3865 = vpow.pop %v3864
        %v3866 = vmul.f32 %v3511, 1.442695
        %v3867 = vpow.pop %v3866
        %v3868 = vmul.f32 %v3512, 1.442695
        %v3869 = vpow.pop %v3868
        %v3870 = vmul.f32 %v3513, 1.442695
        %v3871 = vpow.pop %v3870
        %v3872 = vmul.f32 %v3514, 1.442695
        %v3873 = vpow.pop %v3872
        %v3874 = vmul.f32 %v3515, 1.442695
        %v3875 = vpow.pop %v3874
        %v3876 = vmul.f32 %v3516, 1.442695
        %v3877 = vpow.pop %v3876
        %v3878 = vmul.f32 %v3517, 1.442695
        %v3879 = vpow.pop %v3878
        %v3880 = vmul.f32 %v3518, 1.442695
        %v3881 = vpow.pop %v3880
        %v3882 = vmul.f32 %v3519, 1.442695
        %v3883 = vpow.pop %v3882
        %v3884 = vmul.f32 %v3520, 1.442695
        %v3885 = vpow.pop %v3884
        %v3886 = vmul.f32 %v3521, 1.442695
        %v3887 = vpow.pop %v3886
        %v3888 = vmul.f32 %v3522, 1.442695
        %v3889 = vpow.pop %v3888
        %v3890 = vmul.f32 %v3523, 1.442695
        %v3891 = vpow.pop %v3890
        %v3892 = vmul.f32 %v3524, 1.442695
        %v3893 = vpow.pop %v3892
        %v3894 = vmul.f32 %v3525, 1.442695
        %v3895 = vpow.pop %v3894
        %v3896 = vmul.f32 %v3526, 1.442695
        %v3897 = vpow.pop %v3896
        %v3898 = vmul.f32 %v3527, 1.442695
        %v3899 = vpow.pop %v3898
        %v3900 = vmul.f32 %v3528, 1.442695
        %v3901 = vpow.pop %v3900
        %v3902 = vmul.f32 %v3529, 1.442695
        %v3903 = vpow.pop %v3902
        %v3904 = vmul.f32 %v3530, 1.442695
        %v3905 = vpow.pop %v3904
        %v3906 = vmul.f32 %v3531, 1.442695
        %v3907 = vpow.pop %v3906
        %v3908 = vmul.f32 %v3532, 1.442695
        %v3909 = vpow.pop %v3908
        %v3910 = vmul.f32 %v3533, 1.442695
        %v3911 = vpow.pop %v3910
        %v3912 = vmul.f32 %v3534, 1.442695
        %v3913 = vpow.pop %v3912
        %v3914 = vmul.f32 %v3535, 1.442695
        %v3915 = vpow.pop %v3914
        %v3916 = vmul.f32 %v3536, 1.442695
        %v3917 = vpow.pop %v3916
        %v3918 = vmul.f32 %v3537, 1.442695
        %v3919 = vpow.pop %v3918
        %v3920 = vmul.f32 %v3538, 1.442695
        %v3921 = vpow.pop %v3920
        %v3922 = vmul.f32 %v3539, 1.442695
        %v3923 = vpow.pop %v3922
        %v3924 = vmul.f32 %v3540, 1.442695
        %v3925 = vpow.pop %v3924
        %v3926 = vmul.f32 %v3541, 1.442695
        %v3927 = vpow.pop %v3926
        %v3928 = vmul.f32 %v3542, 1.442695
        %v3929 = vpow.pop %v3928
        %v3930 = vmul.f32 %v3543, 1.442695
        %v3931 = vpow.pop %v3930
        %v3932 = vmul.f32 %v3544, 1.442695
        %v3933 = vpow.pop %v3932
        %v3934 = vmul.f32 %v3545, 1.442695
        %v3935 = vpow.pop %v3934
        %v3936 = vmul.f32 %v3546, 1.442695
        %v3937 = vpow.pop %v3936
        %v3938 = vmul.f32 %v3547, 1.442695
        %v3939 = vpow.pop %v3938
        %v3940 = vmul.f32 %v3548, 1.442695
        %v3941 = vpow.pop %v3940
        %v3942 = vmul.f32 %v3549, 1.442695
        %v3943 = vpow.pop %v3942
        %v3944 = vmul.f32 %v3550, 1.442695
        %v3945 = vpow.pop %v3944
        %v3946 = vmul.f32 %v3551, 1.442695
        %v3947 = vpow.pop %v3946
        %v3948 = vmul.f32 %v3552, 1.442695
        %v3949 = vpow.pop %v3948
        %v3950 = vmul.f32 %v3553, 1.442695
        %v3951 = vpow.pop %v3950
        %v3952 = vmul.f32 %v3554, 1.442695
        %v3953 = vpow.pop %v3952
        %v3954 = vmul.f32 %v3555, 1.442695
        %v3955 = vpow.pop %v3954
        %v3956 = vmul.f32 %v3556, 1.442695
        %v3957 = vpow.pop %v3956
        %v3958 = vmul.f32 %v3557, 1.442695
        %v3959 = vpow.pop %v3958
        %v3960 = vmul.f32 %v3558, 1.442695
        %v3961 = vpow.pop %v3960
        %v3962 = vmul.f32 %v3559, 1.442695
        %v3963 = vpow.pop %v3962
        %v3964 = vmul.f32 %v3560, 1.442695
        %v3965 = vpow.pop %v3964
        %v3966 = vmul.f32 %v3561, 1.442695
        %v3967 = vpow.pop %v3966
        %v3968 = vmul.f32 %v3562, 1.442695
        %v3969 = vpow.pop %v3968
        %v3970 = vmul.f32 %v3563, 1.442695
        %v3971 = vpow.pop %v3970
        %v3972 = vmul.f32 %v3564, 1.442695
        %v3973 = vpow.pop %v3972
        %v3974 = vmul.f32 %v3565, 1.442695
        %v3975 = vpow.pop %v3974
        %v3976 = vmul.f32 %v3566, 1.442695
        %v3977 = vpow.pop %v3976
        %v3978 = vmul.f32 %v3567, 1.442695
        %v3979 = vpow.pop %v3978
        %v3980 = vmul.f32 %v3568, 1.442695
        %v3981 = vpow.pop %v3980
        %v3982 = vmul.f32 %v3569, 1.442695
        %v3983 = vpow.pop %v3982
        %v3984 = vmul.f32 %v3570, 1.442695
        %v3985 = vpow.pop %v3984
        %v3986 = vmul.f32 %v3571, 1.442695
        %v3987 = vpow.pop %v3986
        %v3988 = vmul.f32 %v3572, 1.442695
        %v3989 = vpow.pop %v3988
        %v3990 = vmul.f32 %v3573, 1.442695
        %v3991 = vpow.pop %v3990
        %v3992 = vmul.f32 %v3574, 1.442695
        %v3993 = vpow.pop %v3992
        %v3994 = vmul.f32 %v3575, 1.442695
        %v3995 = vpow.pop %v3994
        %v3996 = vmul.f32 %v3576, 1.442695
        %v3997 = vpow.pop %v3996
        %v3998 = vmul.f32 %v3577, 1.442695
        %v3999 = vpow.pop %v3998
        %v4000 = vmul.f32 %v3578, 1.442695
        %v4001 = vpow.pop %v4000
        %v4002 = vmul.f32 %v3579, 1.442695
        %v4003 = vpow.pop %v4002
        %v4004 = vmul.f32 %v3580, 1.442695
        %v4005 = vpow.pop %v4004
        %v4006 = vmul.f32 %v3581, 1.442695
        %v4007 = vpow.pop %v4006
        %v4008 = vmul.f32 %v3582, 1.442695
        %v4009 = vpow.pop %v4008
        %v4010 = vmul.f32 %v3583, 1.442695
        %v4011 = vpow.pop %v4010
        %v4012 = vmul.f32 %v3584, 1.442695
        %v4013 = vpow.pop %v4012
        %v4014 = vmul.f32 %v3585, 1.442695
        %v4015 = vpow.pop %v4014
        %v4016 = vmul.f32 %v3586, 1.442695
        %v4017 = vpow.pop %v4016
        %v4018 = vmul.f32 %v3587, 1.442695
        %v4019 = vpow.pop %v4018
        %v4020 = vmul.f32 %v3588, 1.442695
        %v4021 = vpow.pop %v4020
        %v4022 = vmul.f32 %v3589, 1.442695
        %v4023 = vpow.pop %v4022
        %v4024 = vmul.f32 %v3590, 1.442695
        %v4025 = vpow.pop %v4024
        %v4026 = vmul.f32 %v3591, 1.442695
        %v4027 = vpow.pop %v4026
        %v4028 = vmul.f32 %v3592, 1.442695
        %v4029 = vpow.pop %v4028
        %v4030 = vmul.f32 %v3593, 1.442695
        %v4031 = vpow.pop %v4030
        %v4032 = vmul.f32 %v3594, 1.442695
        %v4033 = vpow.pop %v4032
        %v4034 = vmul.f32 %v3595, 1.442695
        %v4035 = vpow.pop %v4034
        %v4036 = vmul.f32 %v3596, 1.442695
        %v4037 = vpow.pop %v4036
        %v4038 = vmul.f32 %v3597, 1.442695
        %v4039 = vpow.pop %v4038
        %v4040 = vmul.f32 %v3598, 1.442695
        %v4041 = vpow.pop %v4040
        %v4042 = vmul.f32 %v3599, 1.442695
        %v4043 = vpow.pop %v4042
        %v4044 = vmul.f32 %v3600, 1.442695
        %v4045 = vpow.pop %v4044
        %v4046 = vmul.f32 %v3601, 1.442695
        %v4047 = vpow.pop %v4046
        %v4048 = vmul.f32 %v3602, 1.442695
        %v4049 = vpow.pop %v4048
        %v4050 = vmul.f32 %v3603, 1.442695
        %v4051 = vpow.pop %v4050
        %v4052 = vmul.f32 %v3604, 1.442695
        %v4053 = vpow.pop %v4052
        %v4054 = vmul.f32 %v3605, 1.442695
        %v4055 = vpow.pop %v4054
        %v4056 = vmul.f32 %v3606, 1.442695
        %v4057 = vpow.pop %v4056
        %v4058 = vmul.f32 %v3607, 1.442695
        %v4059 = vpow.pop %v4058
        %v4060 = vmul.f32 %v3608, 1.442695
        %v4061 = vpow.pop %v4060
        %v4062 = vmul.f32 %v3609, 1.442695
        %v4063 = vpow.pop %v4062
        %v4064 = vmul.f32 %v3610, 1.442695
        %v4065 = vpow.pop %v4064
        %v4066 = vmul.f32 %v3611, 1.442695
        %v4067 = vpow.pop %v4066
        %v4068 = vmul.f32 %v3612, 1.442695
        %v4069 = vpow.pop %v4068
        %v4070 = vmul.f32 %v3613, 1.442695
        %v4071 = vpow.pop %v4070
        %v4072 = vmul.f32 %v3614, 1.442695
        %v4073 = vpow.pop %v4072
        %v4074 = vmul.f32 %v3615, 1.442695
        %v4075 = vpow.pop %v4074
        %v4076 = vmul.f32 %v3616, 1.442695
        %v4077 = vpow.pop %v4076
        %v4078 = vmul.f32 %v3617, 1.442695
        %v4079 = vpow.pop %v4078
        %v4080 = vmul.f32 %v3618, 1.442695
        %v4081 = vpow.pop %v4080
        %v4082 = vmul.f32 %v3619, 1.442695
        %v4083 = vpow.pop %v4082
        %v4084 = vmul.f32 %v3620, 1.442695
        %v4085 = vpow.pop %v4084
        %v4086 = vmul.f32 %v3621, 1.442695
        %v4087 = vpow.pop %v4086
        %v4088 = vmul.f32 %v3622, 1.442695
        %v4089 = vpow.pop %v4088
        %v4090 = vmul.f32 %v3623, 1.442695
        %v4091 = vpow.pop %v4090
        %v4092 = vmul.f32 %v3624, 1.442695
        %v4093 = vpow.pop %v4092
        %v4094 = vmul.f32 %v3625, 1.442695
        %v4095 = vpow.pop %v4094
        %v4096 = vmul.f32 %v3626, 1.442695
        %v4097 = vpow.pop %v4096
        %v4098 = vmul.f32 %v3627, 1.442695
        %v4099 = vpow.pop %v4098
        %v4100 = vmul.f32 %v3628, 1.442695
        %v4101 = vpow.pop %v4100
        %v4102 = vmul.f32 %v3629, 1.442695
        %v4103 = vpow.pop %v4102
        %v4104 = vmul.f32 %v3630, 1.442695
        %v4105 = vpow.pop %v4104
        %v4106 = vmul.f32 %v3631, 1.442695
        %v4107 = vpow.pop %v4106
        %v4108 = vmul.f32 %v3632, 1.442695
        %v4109 = vpow.pop %v4108
        %v4110 = vmul.f32 %v3633, 1.442695
        %v4111 = vpow.pop %v4110
        %v4112 = vmul.f32 %v3634, 1.442695
        %v4113 = vpow.pop %v4112
        %v4114 = vmul.f32 %v3635, 1.442695
        %v4115 = vpow.pop %v4114
        %v4116 = vmul.f32 %v3636, 1.442695
        %v4117 = vpow.pop %v4116
        %v4118 = vmul.f32 %v3637, 1.442695
        %v4119 = vpow.pop %v4118
        %v4120 = vmul.f32 %v3638, 1.442695
        %v4121 = vpow.pop %v4120
        %v4122 = vmul.f32 %v3639, 1.442695
        %v4123 = vpow.pop %v4122
        %v4124 = vmul.f32 %v3640, 1.442695
        %v4125 = vpow.pop %v4124
        %v4126 = vmul.f32 %v3641, 1.442695
        %v4127 = vpow.pop %v4126
        %v4128 = vmul.f32 %v3642, 1.442695
        %v4129 = vpow.pop %v4128
        %v4130 = vmul.f32 %v3643, 1.442695
        %v4131 = vpow.pop %v4130
        %v4132 = vmul.f32 %v3644, 1.442695
        %v4133 = vpow.pop %v4132
        %v4134 = vmul.f32 %v3645, 1.442695
        %v4135 = vpow.pop %v4134
        %v4136 = vmul.f32 %v3646, 1.442695
        %v4137 = vpow.pop %v4136
        %v4138 = vmul.f32 %v3647, 1.442695
        %v4139 = vpow.pop %v4138
        %v4140 = vmul.f32 %v3648, 1.442695
        %v4141 = vpow.pop %v4140
        %v4142 = vmul.f32 %v3649, 1.442695
        %v4143 = vpow.pop %v4142
        %v4144 = vmul.f32 %v3650, 1.442695
        %v4145 = vpow.pop %v4144
        %v4146 = vmul.f32 %v3651, 1.442695
        %v4147 = vpow.pop %v4146
        %v4148 = vmul.f32 %v3652, 1.442695
        %v4149 = vpow.pop %v4148
        %v4150 = vmul.f32 %v3653, 1.442695
        %v4151 = vpow.pop %v4150
        %v4152 = vmul.f32 %v3654, 1.442695
        %v4153 = vpow.pop %v4152
        %v4154 = vmul.f32 %v3655, 1.442695
        %v4155 = vpow.pop %v4154
        %v4156 = vmul.f32 %v3656, 1.442695
        %v4157 = vpow.pop %v4156
        %v4158 = vmul.f32 %v3657, 1.442695
        %v4159 = vpow.pop %v4158
        %v4160 = vmul.f32 %v3658, 1.442695
        %v4161 = vpow.pop %v4160
        %v4162 = vmul.f32 %v3659, 1.442695
        %v4163 = vpow.pop %v4162
        %v4164 = vmul.f32 %v3660, 1.442695
        %v4165 = vpow.pop %v4164
        %v4166 = vmul.f32 %v3661, 1.442695
        %v4167 = vpow.pop %v4166
        %v4168 = vmul.f32 %v3662, 1.442695
        %v4169 = vpow.pop %v4168
        %v4170 = vmul.f32 %v3663, 1.442695
        %v4171 = vpow.pop %v4170
        %v4172 = vmul.f32 %v3664, 1.442695
        %v4173 = vpow.pop %v4172
        %v4174 = vmul.f32 %v3665, 1.442695
        %v4175 = vpow.pop %v4174
        %v4176 = vmul.f32 %v3666, 1.442695
        %v4177 = vpow.pop %v4176
        %v4178 = vmul.f32 %v3667, 1.442695
        %v4179 = vpow.pop %v4178
        %4180 = vst.msk [vmem:[#allocation2] sm:$0xff] %vm868, %v3669
        %4181 = vst.msk [vmem:[#allocation2 + $0x8] sm:$0xff] %vm868, %v3671
        %4182 = vst.msk [vmem:[#allocation2 + $0x10] sm:$0xff] %vm868, %v3673
        %4183 = vst.msk [vmem:[#allocation2 + $0x18] sm:$0xff] %vm868, %v3675
        %4184 = vst.msk [vmem:[#allocation2 + $0x20] sm:$0xff] %vm868, %v3677
        %4185 = vst.msk [vmem:[#allocation2 + $0x28] sm:$0xff] %vm868, %v3679
        %4186 = vst.msk [vmem:[#allocation2 + $0x30] sm:$0xff] %vm868, %v3681
        %4187 = vst.msk [vmem:[#allocation2 + $0x38] sm:$0xff] %vm868, %v3683
        %4188 = vst.msk [vmem:[#allocation2 + $0x40] sm:$0xff] %vm868, %v3685
        %4189 = vst.msk [vmem:[#allocation2 + $0x48] sm:$0xff] %vm868, %v3687
        %4190 = vst.msk [vmem:[#allocation2 + $0x50] sm:$0xff] %vm868, %v3689
        %4191 = vst.msk [vmem:[#allocation2 + $0x58] sm:$0xff] %vm868, %v3691
        %4192 = vst.msk [vmem:[#allocation2 + $0x60] sm:$0xff] %vm868, %v3693
        %4193 = vst.msk [vmem:[#allocation2 + $0x68] sm:$0xff] %vm868, %v3695
        %4194 = vst.msk [vmem:[#allocation2 + $0x70] sm:$0xff] %vm868, %v3697
        %4195 = vst.msk [vmem:[#allocation2 + $0x78] sm:$0xff] %vm868, %v3699
        %4196 = vst.msk [vmem:[#allocation2 + $0x80] sm:$0xff] %vm868, %v3701
        %4197 = vst.msk [vmem:[#allocation2 + $0x88] sm:$0xff] %vm868, %v3703
        %4198 = vst.msk [vmem:[#allocation2 + $0x90] sm:$0xff] %vm868, %v3705
        %4199 = vst.msk [vmem:[#allocation2 + $0x98] sm:$0xff] %vm868, %v3707
        %4200 = vst.msk [vmem:[#allocation2 + $0xa0] sm:$0xff] %vm868, %v3709
        %4201 = vst.msk [vmem:[#allocation2 + $0xa8] sm:$0xff] %vm868, %v3711
        %4202 = vst.msk [vmem:[#allocation2 + $0xb0] sm:$0xff] %vm868, %v3713
        %4203 = vst.msk [vmem:[#allocation2 + $0xb8] sm:$0xff] %vm868, %v3715
        %4204 = vst.msk [vmem:[#allocation2 + $0xc0] sm:$0xff] %vm868, %v3717
        %4205 = vst.msk [vmem:[#allocation2 + $0xc8] sm:$0xff] %vm868, %v3719
        %4206 = vst.msk [vmem:[#allocation2 + $0xd0] sm:$0xff] %vm868, %v3721
        %4207 = vst.msk [vmem:[#allocation2 + $0xd8] sm:$0xff] %vm868, %v3723
        %4208 = vst.msk [vmem:[#allocation2 + $0xe0] sm:$0xff] %vm868, %v3725
        %4209 = vst.msk [vmem:[#allocation2 + $0xe8] sm:$0xff] %vm868, %v3727
        %4210 = vst.msk [vmem:[#allocation2 + $0xf0] sm:$0xff] %vm868, %v3729
        %4211 = vst.msk [vmem:[#allocation2 + $0xf8] sm:$0xff] %vm868, %v3731
        %4212 = vst.msk [vmem:[#allocation2 + $0x100] sm:$0xff] %vm868, %v3733
        %4213 = vst.msk [vmem:[#allocation2 + $0x108] sm:$0xff] %vm868, %v3735
        %4214 = vst.msk [vmem:[#allocation2 + $0x110] sm:$0xff] %vm868, %v3737
        %4215 = vst.msk [vmem:[#allocation2 + $0x118] sm:$0xff] %vm868, %v3739
        %4216 = vst.msk [vmem:[#allocation2 + $0x120] sm:$0xff] %vm868, %v3741
        %4217 = vst.msk [vmem:[#allocation2 + $0x128] sm:$0xff] %vm868, %v3743
        %4218 = vst.msk [vmem:[#allocation2 + $0x130] sm:$0xff] %vm868, %v3745
        %4219 = vst.msk [vmem:[#allocation2 + $0x138] sm:$0xff] %vm868, %v3747
        %4220 = vst.msk [vmem:[#allocation2 + $0x140] sm:$0xff] %vm868, %v3749
        %4221 = vst.msk [vmem:[#allocation2 + $0x148] sm:$0xff] %vm868, %v3751
        %4222 = vst.msk [vmem:[#allocation2 + $0x150] sm:$0xff] %vm868, %v3753
        %4223 = vst.msk [vmem:[#allocation2 + $0x158] sm:$0xff] %vm868, %v3755
        %4224 = vst.msk [vmem:[#allocation2 + $0x160] sm:$0xff] %vm868, %v3757
        %4225 = vst.msk [vmem:[#allocation2 + $0x168] sm:$0xff] %vm868, %v3759
        %4226 = vst.msk [vmem:[#allocation2 + $0x170] sm:$0xff] %vm868, %v3761
        %4227 = vst.msk [vmem:[#allocation2 + $0x178] sm:$0xff] %vm868, %v3763
        %4228 = vst.msk [vmem:[#allocation2 + $0x180] sm:$0xff] %vm868, %v3765
        %4229 = vst.msk [vmem:[#allocation2 + $0x188] sm:$0xff] %vm868, %v3767
        %4230 = vst.msk [vmem:[#allocation2 + $0x190] sm:$0xff] %vm868, %v3769
        %4231 = vst.msk [vmem:[#allocation2 + $0x198] sm:$0xff] %vm868, %v3771
        %4232 = vst.msk [vmem:[#allocation2 + $0x1a0] sm:$0xff] %vm868, %v3773
        %4233 = vst.msk [vmem:[#allocation2 + $0x1a8] sm:$0xff] %vm868, %v3775
        %4234 = vst.msk [vmem:[#allocation2 + $0x1b0] sm:$0xff] %vm868, %v3777
        %4235 = vst.msk [vmem:[#allocation2 + $0x1b8] sm:$0xff] %vm868, %v3779
        %4236 = vst.msk [vmem:[#allocation2 + $0x1c0] sm:$0xff] %vm868, %v3781
        %4237 = vst.msk [vmem:[#allocation2 + $0x1c8] sm:$0xff] %vm868, %v3783
        %4238 = vst.msk [vmem:[#allocation2 + $0x1d0] sm:$0xff] %vm868, %v3785
        %4239 = vst.msk [vmem:[#allocation2 + $0x1d8] sm:$0xff] %vm868, %v3787
        %4240 = vst.msk [vmem:[#allocation2 + $0x1e0] sm:$0xff] %vm868, %v3789
        %4241 = vst.msk [vmem:[#allocation2 + $0x1e8] sm:$0xff] %vm868, %v3791
        %4242 = vst.msk [vmem:[#allocation2 + $0x1f0] sm:$0xff] %vm868, %v3793
        %4243 = vst.msk [vmem:[#allocation2 + $0x1f8] sm:$0xff] %vm868, %v3795
        %4244 = vst.msk [vmem:[#allocation2 + $0x200] sm:$0xff] %vm868, %v3797
        %4245 = vst.msk [vmem:[#allocation2 + $0x208] sm:$0xff] %vm868, %v3799
        %4246 = vst.msk [vmem:[#allocation2 + $0x210] sm:$0xff] %vm868, %v3801
        %4247 = vst.msk [vmem:[#allocation2 + $0x218] sm:$0xff] %vm868, %v3803
        %4248 = vst.msk [vmem:[#allocation2 + $0x220] sm:$0xff] %vm868, %v3805
        %4249 = vst.msk [vmem:[#allocation2 + $0x228] sm:$0xff] %vm868, %v3807
        %4250 = vst.msk [vmem:[#allocation2 + $0x230] sm:$0xff] %vm868, %v3809
        %4251 = vst.msk [vmem:[#allocation2 + $0x238] sm:$0xff] %vm868, %v3811
        %4252 = vst.msk [vmem:[#allocation2 + $0x240] sm:$0xff] %vm868, %v3813
        %4253 = vst.msk [vmem:[#allocation2 + $0x248] sm:$0xff] %vm868, %v3815
        %4254 = vst.msk [vmem:[#allocation2 + $0x250] sm:$0xff] %vm868, %v3817
        %4255 = vst.msk [vmem:[#allocation2 + $0x258] sm:$0xff] %vm868, %v3819
        %4256 = vst.msk [vmem:[#allocation2 + $0x260] sm:$0xff] %vm868, %v3821
        %4257 = vst.msk [vmem:[#allocation2 + $0x268] sm:$0xff] %vm868, %v3823
        %4258 = vst.msk [vmem:[#allocation2 + $0x270] sm:$0xff] %vm868, %v3825
        %4259 = vst.msk [vmem:[#allocation2 + $0x278] sm:$0xff] %vm868, %v3827
        %4260 = vst.msk [vmem:[#allocation2 + $0x280] sm:$0xff] %vm868, %v3829
        %4261 = vst.msk [vmem:[#allocation2 + $0x288] sm:$0xff] %vm868, %v3831
        %4262 = vst.msk [vmem:[#allocation2 + $0x290] sm:$0xff] %vm868, %v3833
        %4263 = vst.msk [vmem:[#allocation2 + $0x298] sm:$0xff] %vm868, %v3835
        %4264 = vst.msk [vmem:[#allocation2 + $0x2a0] sm:$0xff] %vm868, %v3837
        %4265 = vst.msk [vmem:[#allocation2 + $0x2a8] sm:$0xff] %vm868, %v3839
        %4266 = vst.msk [vmem:[#allocation2 + $0x2b0] sm:$0xff] %vm868, %v3841
        %4267 = vst.msk [vmem:[#allocation2 + $0x2b8] sm:$0xff] %vm868, %v3843
        %4268 = vst.msk [vmem:[#allocation2 + $0x2c0] sm:$0xff] %vm868, %v3845
        %4269 = vst.msk [vmem:[#allocation2 + $0x2c8] sm:$0xff] %vm868, %v3847
        %4270 = vst.msk [vmem:[#allocation2 + $0x2d0] sm:$0xff] %vm868, %v3849
        %4271 = vst.msk [vmem:[#allocation2 + $0x2d8] sm:$0xff] %vm868, %v3851
        %4272 = vst.msk [vmem:[#allocation2 + $0x2e0] sm:$0xff] %vm868, %v3853
        %4273 = vst.msk [vmem:[#allocation2 + $0x2e8] sm:$0xff] %vm868, %v3855
        %4274 = vst.msk [vmem:[#allocation2 + $0x2f0] sm:$0xff] %vm868, %v3857
        %4275 = vst.msk [vmem:[#allocation2 + $0x2f8] sm:$0xff] %vm868, %v3859
        %4276 = vst.msk [vmem:[#allocation2 + $0x300] sm:$0xff] %vm868, %v3861
        %4277 = vst.msk [vmem:[#allocation2 + $0x308] sm:$0xff] %vm868, %v3863
        %4278 = vst.msk [vmem:[#allocation2 + $0x310] sm:$0xff] %vm868, %v3865
        %4279 = vst.msk [vmem:[#allocation2 + $0x318] sm:$0xff] %vm868, %v3867
        %4280 = vst.msk [vmem:[#allocation2 + $0x320] sm:$0xff] %vm868, %v3869
        %4281 = vst.msk [vmem:[#allocation2 + $0x328] sm:$0xff] %vm868, %v3871
        %4282 = vst.msk [vmem:[#allocation2 + $0x330] sm:$0xff] %vm868, %v3873
        %4283 = vst.msk [vmem:[#allocation2 + $0x338] sm:$0xff] %vm868, %v3875
        %4284 = vst.msk [vmem:[#allocation2 + $0x340] sm:$0xff] %vm868, %v3877
        %4285 = vst.msk [vmem:[#allocation2 + $0x348] sm:$0xff] %vm868, %v3879
        %4286 = vst.msk [vmem:[#allocation2 + $0x350] sm:$0xff] %vm868, %v3881
        %4287 = vst.msk [vmem:[#allocation2 + $0x358] sm:$0xff] %vm868, %v3883
        %4288 = vst.msk [vmem:[#allocation2 + $0x360] sm:$0xff] %vm868, %v3885
        %4289 = vst.msk [vmem:[#allocation2 + $0x368] sm:$0xff] %vm868, %v3887
        %4290 = vst.msk [vmem:[#allocation2 + $0x370] sm:$0xff] %vm868, %v3889
        %4291 = vst.msk [vmem:[#allocation2 + $0x378] sm:$0xff] %vm868, %v3891
        %4292 = vst.msk [vmem:[#allocation2 + $0x380] sm:$0xff] %vm868, %v3893
        %4293 = vst.msk [vmem:[#allocation2 + $0x388] sm:$0xff] %vm868, %v3895
        %4294 = vst.msk [vmem:[#allocation2 + $0x390] sm:$0xff] %vm868, %v3897
        %4295 = vst.msk [vmem:[#allocation2 + $0x398] sm:$0xff] %vm868, %v3899
        %4296 = vst.msk [vmem:[#allocation2 + $0x3a0] sm:$0xff] %vm868, %v3901
        %4297 = vst.msk [vmem:[#allocation2 + $0x3a8] sm:$0xff] %vm868, %v3903
        %4298 = vst.msk [vmem:[#allocation2 + $0x3b0] sm:$0xff] %vm868, %v3905
        %4299 = vst.msk [vmem:[#allocation2 + $0x3b8] sm:$0xff] %vm868, %v3907
        %4300 = vst.msk [vmem:[#allocation2 + $0x3c0] sm:$0xff] %vm868, %v3909
        %4301 = vst.msk [vmem:[#allocation2 + $0x3c8] sm:$0xff] %vm868, %v3911
        %4302 = vst.msk [vmem:[#allocation2 + $0x3d0] sm:$0xff] %vm868, %v3913
        %4303 = vst.msk [vmem:[#allocation2 + $0x3d8] sm:$0xff] %vm868, %v3915
        %4304 = vst.msk [vmem:[#allocation2 + $0x3e0] sm:$0xff] %vm868, %v3917
        %4305 = vst.msk [vmem:[#allocation2 + $0x3e8] sm:$0xff] %vm868, %v3919
        %4306 = vst.msk [vmem:[#allocation2 + $0x3f0] sm:$0xff] %vm868, %v3921
        %4307 = vst.msk [vmem:[#allocation2 + $0x3f8] sm:$0xff] %vm868, %v3923
        %4308 = vst.msk [vmem:[#allocation2 + $0x400] sm:$0xff] %vm868, %v3925
        %4309 = vst.msk [vmem:[#allocation2 + $0x408] sm:$0xff] %vm868, %v3927
        %4310 = vst.msk [vmem:[#allocation2 + $0x410] sm:$0xff] %vm868, %v3929
        %4311 = vst.msk [vmem:[#allocation2 + $0x418] sm:$0xff] %vm868, %v3931
        %4312 = vst.msk [vmem:[#allocation2 + $0x420] sm:$0xff] %vm868, %v3933
        %4313 = vst.msk [vmem:[#allocation2 + $0x428] sm:$0xff] %vm868, %v3935
        %4314 = vst.msk [vmem:[#allocation2 + $0x430] sm:$0xff] %vm868, %v3937
        %4315 = vst.msk [vmem:[#allocation2 + $0x438] sm:$0xff] %vm868, %v3939
        %4316 = vst.msk [vmem:[#allocation2 + $0x440] sm:$0xff] %vm868, %v3941
        %4317 = vst.msk [vmem:[#allocation2 + $0x448] sm:$0xff] %vm868, %v3943
        %4318 = vst.msk [vmem:[#allocation2 + $0x450] sm:$0xff] %vm868, %v3945
        %4319 = vst.msk [vmem:[#allocation2 + $0x458] sm:$0xff] %vm868, %v3947
        %4320 = vst.msk [vmem:[#allocation2 + $0x460] sm:$0xff] %vm868, %v3949
        %4321 = vst.msk [vmem:[#allocation2 + $0x468] sm:$0xff] %vm868, %v3951
        %4322 = vst.msk [vmem:[#allocation2 + $0x470] sm:$0xff] %vm868, %v3953
        %4323 = vst.msk [vmem:[#allocation2 + $0x478] sm:$0xff] %vm868, %v3955
        %4324 = vst.msk [vmem:[#allocation2 + $0x480] sm:$0xff] %vm868, %v3957
        %4325 = vst.msk [vmem:[#allocation2 + $0x488] sm:$0xff] %vm868, %v3959
        %4326 = vst.msk [vmem:[#allocation2 + $0x490] sm:$0xff] %vm868, %v3961
        %4327 = vst.msk [vmem:[#allocation2 + $0x498] sm:$0xff] %vm868, %v3963
        %4328 = vst.msk [vmem:[#allocation2 + $0x4a0] sm:$0xff] %vm868, %v3965
        %4329 = vst.msk [vmem:[#allocation2 + $0x4a8] sm:$0xff] %vm868, %v3967
        %4330 = vst.msk [vmem:[#allocation2 + $0x4b0] sm:$0xff] %vm868, %v3969
        %4331 = vst.msk [vmem:[#allocation2 + $0x4b8] sm:$0xff] %vm868, %v3971
        %4332 = vst.msk [vmem:[#allocation2 + $0x4c0] sm:$0xff] %vm868, %v3973
        %4333 = vst.msk [vmem:[#allocation2 + $0x4c8] sm:$0xff] %vm868, %v3975
        %4334 = vst.msk [vmem:[#allocation2 + $0x4d0] sm:$0xff] %vm868, %v3977
        %4335 = vst.msk [vmem:[#allocation2 + $0x4d8] sm:$0xff] %vm868, %v3979
        %4336 = vst.msk [vmem:[#allocation2 + $0x4e0] sm:$0xff] %vm868, %v3981
        %4337 = vst.msk [vmem:[#allocation2 + $0x4e8] sm:$0xff] %vm868, %v3983
        %4338 = vst.msk [vmem:[#allocation2 + $0x4f0] sm:$0xff] %vm868, %v3985
        %4339 = vst.msk [vmem:[#allocation2 + $0x4f8] sm:$0xff] %vm868, %v3987
        %4340 = vst.msk [vmem:[#allocation2 + $0x500] sm:$0xff] %vm868, %v3989
        %4341 = vst.msk [vmem:[#allocation2 + $0x508] sm:$0xff] %vm868, %v3991
        %4342 = vst.msk [vmem:[#allocation2 + $0x510] sm:$0xff] %vm868, %v3993
        %4343 = vst.msk [vmem:[#allocation2 + $0x518] sm:$0xff] %vm868, %v3995
        %4344 = vst.msk [vmem:[#allocation2 + $0x520] sm:$0xff] %vm868, %v3997
        %4345 = vst.msk [vmem:[#allocation2 + $0x528] sm:$0xff] %vm868, %v3999
        %4346 = vst.msk [vmem:[#allocation2 + $0x530] sm:$0xff] %vm868, %v4001
        %4347 = vst.msk [vmem:[#allocation2 + $0x538] sm:$0xff] %vm868, %v4003
        %4348 = vst.msk [vmem:[#allocation2 + $0x540] sm:$0xff] %vm868, %v4005
        %4349 = vst.msk [vmem:[#allocation2 + $0x548] sm:$0xff] %vm868, %v4007
        %4350 = vst.msk [vmem:[#allocation2 + $0x550] sm:$0xff] %vm868, %v4009
        %4351 = vst.msk [vmem:[#allocation2 + $0x558] sm:$0xff] %vm868, %v4011
        %4352 = vst.msk [vmem:[#allocation2 + $0x560] sm:$0xff] %vm868, %v4013
        %4353 = vst.msk [vmem:[#allocation2 + $0x568] sm:$0xff] %vm868, %v4015
        %4354 = vst.msk [vmem:[#allocation2 + $0x570] sm:$0xff] %vm868, %v4017
        %4355 = vst.msk [vmem:[#allocation2 + $0x578] sm:$0xff] %vm868, %v4019
        %4356 = vst.msk [vmem:[#allocation2 + $0x580] sm:$0xff] %vm868, %v4021
        %4357 = vst.msk [vmem:[#allocation2 + $0x588] sm:$0xff] %vm868, %v4023
        %4358 = vst.msk [vmem:[#allocation2 + $0x590] sm:$0xff] %vm868, %v4025
        %4359 = vst.msk [vmem:[#allocation2 + $0x598] sm:$0xff] %vm868, %v4027
        %4360 = vst.msk [vmem:[#allocation2 + $0x5a0] sm:$0xff] %vm868, %v4029
        %4361 = vst.msk [vmem:[#allocation2 + $0x5a8] sm:$0xff] %vm868, %v4031
        %4362 = vst.msk [vmem:[#allocation2 + $0x5b0] sm:$0xff] %vm868, %v4033
        %4363 = vst.msk [vmem:[#allocation2 + $0x5b8] sm:$0xff] %vm868, %v4035
        %4364 = vst.msk [vmem:[#allocation2 + $0x5c0] sm:$0xff] %vm868, %v4037
        %4365 = vst.msk [vmem:[#allocation2 + $0x5c8] sm:$0xff] %vm868, %v4039
        %4366 = vst.msk [vmem:[#allocation2 + $0x5d0] sm:$0xff] %vm868, %v4041
        %4367 = vst.msk [vmem:[#allocation2 + $0x5d8] sm:$0xff] %vm868, %v4043
        %4368 = vst.msk [vmem:[#allocation2 + $0x5e0] sm:$0xff] %vm868, %v4045
        %4369 = vst.msk [vmem:[#allocation2 + $0x5e8] sm:$0xff] %vm868, %v4047
        %4370 = vst.msk [vmem:[#allocation2 + $0x5f0] sm:$0xff] %vm868, %v4049
        %4371 = vst.msk [vmem:[#allocation2 + $0x5f8] sm:$0xff] %vm868, %v4051
        %4372 = vst.msk [vmem:[#allocation2 + $0x600] sm:$0xff] %vm868, %v4053
        %4373 = vst.msk [vmem:[#allocation2 + $0x608] sm:$0xff] %vm868, %v4055
        %4374 = vst.msk [vmem:[#allocation2 + $0x610] sm:$0xff] %vm868, %v4057
        %4375 = vst.msk [vmem:[#allocation2 + $0x618] sm:$0xff] %vm868, %v4059
        %4376 = vst.msk [vmem:[#allocation2 + $0x620] sm:$0xff] %vm868, %v4061
        %4377 = vst.msk [vmem:[#allocation2 + $0x628] sm:$0xff] %vm868, %v4063
        %4378 = vst.msk [vmem:[#allocation2 + $0x630] sm:$0xff] %vm868, %v4065
        %4379 = vst.msk [vmem:[#allocation2 + $0x638] sm:$0xff] %vm868, %v4067
        %4380 = vst.msk [vmem:[#allocation2 + $0x640] sm:$0xff] %vm868, %v4069
        %4381 = vst.msk [vmem:[#allocation2 + $0x648] sm:$0xff] %vm868, %v4071
        %4382 = vst.msk [vmem:[#allocation2 + $0x650] sm:$0xff] %vm868, %v4073
        %4383 = vst.msk [vmem:[#allocation2 + $0x658] sm:$0xff] %vm868, %v4075
        %4384 = vst.msk [vmem:[#allocation2 + $0x660] sm:$0xff] %vm868, %v4077
        %4385 = vst.msk [vmem:[#allocation2 + $0x668] sm:$0xff] %vm868, %v4079
        %4386 = vst.msk [vmem:[#allocation2 + $0x670] sm:$0xff] %vm868, %v4081
        %4387 = vst.msk [vmem:[#allocation2 + $0x678] sm:$0xff] %vm868, %v4083
        %4388 = vst.msk [vmem:[#allocation2 + $0x680] sm:$0xff] %vm868, %v4085
        %4389 = vst.msk [vmem:[#allocation2 + $0x688] sm:$0xff] %vm868, %v4087
        %4390 = vst.msk [vmem:[#allocation2 + $0x690] sm:$0xff] %vm868, %v4089
        %4391 = vst.msk [vmem:[#allocation2 + $0x698] sm:$0xff] %vm868, %v4091
        %4392 = vst.msk [vmem:[#allocation2 + $0x6a0] sm:$0xff] %vm868, %v4093
        %4393 = vst.msk [vmem:[#allocation2 + $0x6a8] sm:$0xff] %vm868, %v4095
        %4394 = vst.msk [vmem:[#allocation2 + $0x6b0] sm:$0xff] %vm868, %v4097
        %4395 = vst.msk [vmem:[#allocation2 + $0x6b8] sm:$0xff] %vm868, %v4099
        %4396 = vst.msk [vmem:[#allocation2 + $0x6c0] sm:$0xff] %vm868, %v4101
        %4397 = vst.msk [vmem:[#allocation2 + $0x6c8] sm:$0xff] %vm868, %v4103
        %4398 = vst.msk [vmem:[#allocation2 + $0x6d0] sm:$0xff] %vm868, %v4105
        %4399 = vst.msk [vmem:[#allocation2 + $0x6d8] sm:$0xff] %vm868, %v4107
        %4400 = vst.msk [vmem:[#allocation2 + $0x6e0] sm:$0xff] %vm868, %v4109
        %4401 = vst.msk [vmem:[#allocation2 + $0x6e8] sm:$0xff] %vm868, %v4111
        %4402 = vst.msk [vmem:[#allocation2 + $0x6f0] sm:$0xff] %vm868, %v4113
        %4403 = vst.msk [vmem:[#allocation2 + $0x6f8] sm:$0xff] %vm868, %v4115
        %4404 = vst.msk [vmem:[#allocation2 + $0x700] sm:$0xff] %vm868, %v4117
        %4405 = vst.msk [vmem:[#allocation2 + $0x708] sm:$0xff] %vm868, %v4119
        %4406 = vst.msk [vmem:[#allocation2 + $0x710] sm:$0xff] %vm868, %v4121
        %4407 = vst.msk [vmem:[#allocation2 + $0x718] sm:$0xff] %vm868, %v4123
        %4408 = vst.msk [vmem:[#allocation2 + $0x720] sm:$0xff] %vm868, %v4125
        %4409 = vst.msk [vmem:[#allocation2 + $0x728] sm:$0xff] %vm868, %v4127
        %4410 = vst.msk [vmem:[#allocation2 + $0x730] sm:$0xff] %vm868, %v4129
        %4411 = vst.msk [vmem:[#allocation2 + $0x738] sm:$0xff] %vm868, %v4131
        %4412 = vst.msk [vmem:[#allocation2 + $0x740] sm:$0xff] %vm868, %v4133
        %4413 = vst.msk [vmem:[#allocation2 + $0x748] sm:$0xff] %vm868, %v4135
        %4414 = vst.msk [vmem:[#allocation2 + $0x750] sm:$0xff] %vm868, %v4137
        %4415 = vst.msk [vmem:[#allocation2 + $0x758] sm:$0xff] %vm868, %v4139
        %4416 = vst.msk [vmem:[#allocation2 + $0x760] sm:$0xff] %vm868, %v4141
        %4417 = vst.msk [vmem:[#allocation2 + $0x768] sm:$0xff] %vm868, %v4143
        %4418 = vst.msk [vmem:[#allocation2 + $0x770] sm:$0xff] %vm868, %v4145
        %4419 = vst.msk [vmem:[#allocation2 + $0x778] sm:$0xff] %vm868, %v4147
        %4420 = vst.msk [vmem:[#allocation2 + $0x780] sm:$0xff] %vm868, %v4149
        %4421 = vst.msk [vmem:[#allocation2 + $0x788] sm:$0xff] %vm868, %v4151
        %4422 = vst.msk [vmem:[#allocation2 + $0x790] sm:$0xff] %vm868, %v4153
        %4423 = vst.msk [vmem:[#allocation2 + $0x798] sm:$0xff] %vm868, %v4155
        %4424 = vst.msk [vmem:[#allocation2 + $0x7a0] sm:$0xff] %vm868, %v4157
        %4425 = vst.msk [vmem:[#allocation2 + $0x7a8] sm:$0xff] %vm868, %v4159
        %4426 = vst.msk [vmem:[#allocation2 + $0x7b0] sm:$0xff] %vm868, %v4161
        %4427 = vst.msk [vmem:[#allocation2 + $0x7b8] sm:$0xff] %vm868, %v4163
        %4428 = vst.msk [vmem:[#allocation2 + $0x7c0] sm:$0xff] %vm868, %v4165
        %4429 = vst.msk [vmem:[#allocation2 + $0x7c8] sm:$0xff] %vm868, %v4167
        %4430 = vst.msk [vmem:[#allocation2 + $0x7d0] sm:$0xff] %vm868, %v4169
        %4431 = vst.msk [vmem:[#allocation2 + $0x7d8] sm:$0xff] %vm868, %v4171
        %4432 = vst.msk [vmem:[#allocation2 + $0x7e0] sm:$0xff] %vm868, %v4173
        %4433 = vst.msk [vmem:[#allocation2 + $0x7e8] sm:$0xff] %vm868, %v4175
        %4434 = vst.msk [vmem:[#allocation2 + $0x7f0] sm:$0xff] %vm868, %v4177
        %4435 = vst.msk [vmem:[#allocation2 + $0x7f8] sm:$0xff] %vm868, %v4179
        %v4452 = vcombine.high %v1956, %v1956
        %v4454 = vunpack.c.l.s4 1966171168
        %v4455 = vunpack.c.0.s8 %v4454
        %v4456 = vlaneseq
        %v4457 = vshrl.u32 %v4456, 7
        %v4458 = vsub.s32 %v4455, %v4457
        %v4459 = vrot.slane %v1956, %v4458
        %v4461 = vunpack.c.l.s4 1966171168
        %v4462 = vunpack.c.0.s8 %v4461
        %v4463 = vlaneseq
        %v4464 = vshrl.u32 %v4463, 7
        %v4465 = vsub.s32 %v4462, %v4464
        %v4466 = vrot.slane %v4452, %v4465
        %v4467 = vcombine.high %v4459, %v4459
        %v4468 = vcombine.high %v4466, %v4466
        %v4470 = vunpack.c.l.s4 1966171168
        %v4471 = vunpack.c.0.s8 %v4470
        %v4472 = vlaneseq
        %v4473 = vshrl.u32 %v4472, 7
        %v4474 = vsub.s32 %v4471, %v4473
        %v4475 = vrot.slane %v4459, %v4474
        %v4477 = vunpack.c.l.s4 1966171168
        %v4478 = vunpack.c.0.s8 %v4477
        %v4479 = vlaneseq
        %v4480 = vshrl.u32 %v4479, 7
        %v4481 = vsub.s32 %v4478, %v4480
        %v4482 = vrot.slane %v4466, %v4481
        %v4484 = vunpack.c.l.s4 1966171168
        %v4485 = vunpack.c.0.s8 %v4484
        %v4486 = vlaneseq
        %v4487 = vshrl.u32 %v4486, 7
        %v4488 = vsub.s32 %v4485, %v4487
        %v4489 = vrot.slane %v4467, %v4488
        %v4491 = vunpack.c.l.s4 1966171168
        %v4492 = vunpack.c.0.s8 %v4491
        %v4493 = vlaneseq
        %v4494 = vshrl.u32 %v4493, 7
        %v4495 = vsub.s32 %v4492, %v4494
        %v4496 = vrot.slane %v4468, %v4495
        %v4497 = vcombine.high %v4475, %v4475
        %v4498 = vcombine.high %v4482, %v4482
        %v4499 = vcombine.high %v4489, %v4489
        %v4500 = vcombine.high %v4496, %v4496
        %v4501 = vcombine.high %v1957, %v1957
        %v4503 = vunpack.c.l.s4 1966171168
        %v4504 = vunpack.c.0.s8 %v4503
        %v4505 = vlaneseq
        %v4506 = vshrl.u32 %v4505, 7
        %v4507 = vsub.s32 %v4504, %v4506
        %v4508 = vrot.slane %v1957, %v4507
        %v4510 = vunpack.c.l.s4 1966171168
        %v4511 = vunpack.c.0.s8 %v4510
        %v4512 = vlaneseq
        %v4513 = vshrl.u32 %v4512, 7
        %v4514 = vsub.s32 %v4511, %v4513
        %v4515 = vrot.slane %v4501, %v4514
        %v4516 = vcombine.high %v4508, %v4508
        %v4517 = vcombine.high %v4515, %v4515
        %v4519 = vunpack.c.l.s4 1966171168
        %v4520 = vunpack.c.0.s8 %v4519
        %v4521 = vlaneseq
        %v4522 = vshrl.u32 %v4521, 7
        %v4523 = vsub.s32 %v4520, %v4522
        %v4524 = vrot.slane %v4508, %v4523
        %v4526 = vunpack.c.l.s4 1966171168
        %v4527 = vunpack.c.0.s8 %v4526
        %v4528 = vlaneseq
        %v4529 = vshrl.u32 %v4528, 7
        %v4530 = vsub.s32 %v4527, %v4529
        %v4531 = vrot.slane %v4515, %v4530
        %v4533 = vunpack.c.l.s4 1966171168
        %v4534 = vunpack.c.0.s8 %v4533
        %v4535 = vlaneseq
        %v4536 = vshrl.u32 %v4535, 7
        %v4537 = vsub.s32 %v4534, %v4536
        %v4538 = vrot.slane %v4516, %v4537
        %v4540 = vunpack.c.l.s4 1966171168
        %v4541 = vunpack.c.0.s8 %v4540
        %v4542 = vlaneseq
        %v4543 = vshrl.u32 %v4542, 7
        %v4544 = vsub.s32 %v4541, %v4543
        %v4545 = vrot.slane %v4517, %v4544
        %v4546 = vcombine.high %v4524, %v4524
        %v4547 = vcombine.high %v4531, %v4531
        %v4548 = vcombine.high %v4538, %v4538
        %v4549 = vcombine.high %v4545, %v4545
        %v4550 = vcombine.high %v1958, %v1958
        %v4552 = vunpack.c.l.s4 1966171168
        %v4553 = vunpack.c.0.s8 %v4552
        %v4554 = vlaneseq
        %v4555 = vshrl.u32 %v4554, 7
        %v4556 = vsub.s32 %v4553, %v4555
        %v4557 = vrot.slane %v1958, %v4556
        %v4559 = vunpack.c.l.s4 1966171168
        %v4560 = vunpack.c.0.s8 %v4559
        %v4561 = vlaneseq
        %v4562 = vshrl.u32 %v4561, 7
        %v4563 = vsub.s32 %v4560, %v4562
        %v4564 = vrot.slane %v4550, %v4563
        %v4565 = vcombine.high %v4557, %v4557
        %v4566 = vcombine.high %v4564, %v4564
        %v4568 = vunpack.c.l.s4 1966171168
        %v4569 = vunpack.c.0.s8 %v4568
        %v4570 = vlaneseq
        %v4571 = vshrl.u32 %v4570, 7
        %v4572 = vsub.s32 %v4569, %v4571
        %v4573 = vrot.slane %v4557, %v4572
        %v4575 = vunpack.c.l.s4 1966171168
        %v4576 = vunpack.c.0.s8 %v4575
        %v4577 = vlaneseq
        %v4578 = vshrl.u32 %v4577, 7
        %v4579 = vsub.s32 %v4576, %v4578
        %v4580 = vrot.slane %v4564, %v4579
        %v4582 = vunpack.c.l.s4 1966171168
        %v4583 = vunpack.c.0.s8 %v4582
        %v4584 = vlaneseq
        %v4585 = vshrl.u32 %v4584, 7
        %v4586 = vsub.s32 %v4583, %v4585
        %v4587 = vrot.slane %v4565, %v4586
        %v4589 = vunpack.c.l.s4 1966171168
        %v4590 = vunpack.c.0.s8 %v4589
        %v4591 = vlaneseq
        %v4592 = vshrl.u32 %v4591, 7
        %v4593 = vsub.s32 %v4590, %v4592
        %v4594 = vrot.slane %v4566, %v4593
        %v4595 = vcombine.high %v4573, %v4573
        %v4596 = vcombine.high %v4580, %v4580
        %v4597 = vcombine.high %v4587, %v4587
        %v4598 = vcombine.high %v4594, %v4594
        %v4599 = vcombine.high %v1959, %v1959
        %v4601 = vunpack.c.l.s4 1966171168
        %v4602 = vunpack.c.0.s8 %v4601
        %v4603 = vlaneseq
        %v4604 = vshrl.u32 %v4603, 7
        %v4605 = vsub.s32 %v4602, %v4604
        %v4606 = vrot.slane %v1959, %v4605
        %v4608 = vunpack.c.l.s4 1966171168
        %v4609 = vunpack.c.0.s8 %v4608
        %v4610 = vlaneseq
        %v4611 = vshrl.u32 %v4610, 7
        %v4612 = vsub.s32 %v4609, %v4611
        %v4613 = vrot.slane %v4599, %v4612
        %v4614 = vcombine.high %v4606, %v4606
        %v4615 = vcombine.high %v4613, %v4613
        %v4617 = vunpack.c.l.s4 1966171168
        %v4618 = vunpack.c.0.s8 %v4617
        %v4619 = vlaneseq
        %v4620 = vshrl.u32 %v4619, 7
        %v4621 = vsub.s32 %v4618, %v4620
        %v4622 = vrot.slane %v4606, %v4621
        %v4624 = vunpack.c.l.s4 1966171168
        %v4625 = vunpack.c.0.s8 %v4624
        %v4626 = vlaneseq
        %v4627 = vshrl.u32 %v4626, 7
        %v4628 = vsub.s32 %v4625, %v4627
        %v4629 = vrot.slane %v4613, %v4628
        %v4631 = vunpack.c.l.s4 1966171168
        %v4632 = vunpack.c.0.s8 %v4631
        %v4633 = vlaneseq
        %v4634 = vshrl.u32 %v4633, 7
        %v4635 = vsub.s32 %v4632, %v4634
        %v4636 = vrot.slane %v4614, %v4635
        %v4638 = vunpack.c.l.s4 1966171168
        %v4639 = vunpack.c.0.s8 %v4638
        %v4640 = vlaneseq
        %v4641 = vshrl.u32 %v4640, 7
        %v4642 = vsub.s32 %v4639, %v4641
        %v4643 = vrot.slane %v4615, %v4642
        %v4644 = vcombine.high %v4622, %v4622
        %v4645 = vcombine.high %v4629, %v4629
        %v4646 = vcombine.high %v4636, %v4636
        %v4647 = vcombine.high %v4643, %v4643
        %v4648 = vcombine.high %v1960, %v1960
        %v4650 = vunpack.c.l.s4 1966171168
        %v4651 = vunpack.c.0.s8 %v4650
        %v4652 = vlaneseq
        %v4653 = vshrl.u32 %v4652, 7
        %v4654 = vsub.s32 %v4651, %v4653
        %v4655 = vrot.slane %v1960, %v4654
        %v4657 = vunpack.c.l.s4 1966171168
        %v4658 = vunpack.c.0.s8 %v4657
        %v4659 = vlaneseq
        %v4660 = vshrl.u32 %v4659, 7
        %v4661 = vsub.s32 %v4658, %v4660
        %v4662 = vrot.slane %v4648, %v4661
        %v4663 = vcombine.high %v4655, %v4655
        %v4664 = vcombine.high %v4662, %v4662
        %v4666 = vunpack.c.l.s4 1966171168
        %v4667 = vunpack.c.0.s8 %v4666
        %v4668 = vlaneseq
        %v4669 = vshrl.u32 %v4668, 7
        %v4670 = vsub.s32 %v4667, %v4669
        %v4671 = vrot.slane %v4655, %v4670
        %v4673 = vunpack.c.l.s4 1966171168
        %v4674 = vunpack.c.0.s8 %v4673
        %v4675 = vlaneseq
        %v4676 = vshrl.u32 %v4675, 7
        %v4677 = vsub.s32 %v4674, %v4676
        %v4678 = vrot.slane %v4662, %v4677
        %v4680 = vunpack.c.l.s4 1966171168
        %v4681 = vunpack.c.0.s8 %v4680
        %v4682 = vlaneseq
        %v4683 = vshrl.u32 %v4682, 7
        %v4684 = vsub.s32 %v4681, %v4683
        %v4685 = vrot.slane %v4663, %v4684
        %v4687 = vunpack.c.l.s4 1966171168
        %v4688 = vunpack.c.0.s8 %v4687
        %v4689 = vlaneseq
        %v4690 = vshrl.u32 %v4689, 7
        %v4691 = vsub.s32 %v4688, %v4690
        %v4692 = vrot.slane %v4664, %v4691
        %v4693 = vcombine.high %v4671, %v4671
        %v4694 = vcombine.high %v4678, %v4678
        %v4695 = vcombine.high %v4685, %v4685
        %v4696 = vcombine.high %v4692, %v4692
        %v4697 = vcombine.high %v1961, %v1961
        %v4699 = vunpack.c.l.s4 1966171168
        %v4700 = vunpack.c.0.s8 %v4699
        %v4701 = vlaneseq
        %v4702 = vshrl.u32 %v4701, 7
        %v4703 = vsub.s32 %v4700, %v4702
        %v4704 = vrot.slane %v1961, %v4703
        %v4706 = vunpack.c.l.s4 1966171168
        %v4707 = vunpack.c.0.s8 %v4706
        %v4708 = vlaneseq
        %v4709 = vshrl.u32 %v4708, 7
        %v4710 = vsub.s32 %v4707, %v4709
        %v4711 = vrot.slane %v4697, %v4710
        %v4712 = vcombine.high %v4704, %v4704
        %v4713 = vcombine.high %v4711, %v4711
        %v4715 = vunpack.c.l.s4 1966171168
        %v4716 = vunpack.c.0.s8 %v4715
        %v4717 = vlaneseq
        %v4718 = vshrl.u32 %v4717, 7
        %v4719 = vsub.s32 %v4716, %v4718
        %v4720 = vrot.slane %v4704, %v4719
        %v4722 = vunpack.c.l.s4 1966171168
        %v4723 = vunpack.c.0.s8 %v4722
        %v4724 = vlaneseq
        %v4725 = vshrl.u32 %v4724, 7
        %v4726 = vsub.s32 %v4723, %v4725
        %v4727 = vrot.slane %v4711, %v4726
        %v4729 = vunpack.c.l.s4 1966171168
        %v4730 = vunpack.c.0.s8 %v4729
        %v4731 = vlaneseq
        %v4732 = vshrl.u32 %v4731, 7
        %v4733 = vsub.s32 %v4730, %v4732
        %v4734 = vrot.slane %v4712, %v4733
        %v4736 = vunpack.c.l.s4 1966171168
        %v4737 = vunpack.c.0.s8 %v4736
        %v4738 = vlaneseq
        %v4739 = vshrl.u32 %v4738, 7
        %v4740 = vsub.s32 %v4737, %v4739
        %v4741 = vrot.slane %v4713, %v4740
        %v4742 = vcombine.high %v4720, %v4720
        %v4743 = vcombine.high %v4727, %v4727
        %v4744 = vcombine.high %v4734, %v4734
        %v4745 = vcombine.high %v4741, %v4741
        %v4746 = vcombine.high %v1962, %v1962
        %v4748 = vunpack.c.l.s4 1966171168
        %v4749 = vunpack.c.0.s8 %v4748
        %v4750 = vlaneseq
        %v4751 = vshrl.u32 %v4750, 7
        %v4752 = vsub.s32 %v4749, %v4751
        %v4753 = vrot.slane %v1962, %v4752
        %v4755 = vunpack.c.l.s4 1966171168
        %v4756 = vunpack.c.0.s8 %v4755
        %v4757 = vlaneseq
        %v4758 = vshrl.u32 %v4757, 7
        %v4759 = vsub.s32 %v4756, %v4758
        %v4760 = vrot.slane %v4746, %v4759
        %v4761 = vcombine.high %v4753, %v4753
        %v4762 = vcombine.high %v4760, %v4760
        %v4764 = vunpack.c.l.s4 1966171168
        %v4765 = vunpack.c.0.s8 %v4764
        %v4766 = vlaneseq
        %v4767 = vshrl.u32 %v4766, 7
        %v4768 = vsub.s32 %v4765, %v4767
        %v4769 = vrot.slane %v4753, %v4768
        %v4771 = vunpack.c.l.s4 1966171168
        %v4772 = vunpack.c.0.s8 %v4771
        %v4773 = vlaneseq
        %v4774 = vshrl.u32 %v4773, 7
        %v4775 = vsub.s32 %v4772, %v4774
        %v4776 = vrot.slane %v4760, %v4775
        %v4778 = vunpack.c.l.s4 1966171168
        %v4779 = vunpack.c.0.s8 %v4778
        %v4780 = vlaneseq
        %v4781 = vshrl.u32 %v4780, 7
        %v4782 = vsub.s32 %v4779, %v4781
        %v4783 = vrot.slane %v4761, %v4782
        %v4785 = vunpack.c.l.s4 1966171168
        %v4786 = vunpack.c.0.s8 %v4785
        %v4787 = vlaneseq
        %v4788 = vshrl.u32 %v4787, 7
        %v4789 = vsub.s32 %v4786, %v4788
        %v4790 = vrot.slane %v4762, %v4789
        %v4791 = vcombine.high %v4769, %v4769
        %v4792 = vcombine.high %v4776, %v4776
        %v4793 = vcombine.high %v4783, %v4783
        %v4794 = vcombine.high %v4790, %v4790
        %v4795 = vcombine.high %v1963, %v1963
        %v4797 = vunpack.c.l.s4 1966171168
        %v4798 = vunpack.c.0.s8 %v4797
        %v4799 = vlaneseq
        %v4800 = vshrl.u32 %v4799, 7
        %v4801 = vsub.s32 %v4798, %v4800
        %v4802 = vrot.slane %v1963, %v4801
        %v4804 = vunpack.c.l.s4 1966171168
        %v4805 = vunpack.c.0.s8 %v4804
        %v4806 = vlaneseq
        %v4807 = vshrl.u32 %v4806, 7
        %v4808 = vsub.s32 %v4805, %v4807
        %v4809 = vrot.slane %v4795, %v4808
        %v4810 = vcombine.high %v4802, %v4802
        %v4811 = vcombine.high %v4809, %v4809
        %v4813 = vunpack.c.l.s4 1966171168
        %v4814 = vunpack.c.0.s8 %v4813
        %v4815 = vlaneseq
        %v4816 = vshrl.u32 %v4815, 7
        %v4817 = vsub.s32 %v4814, %v4816
        %v4818 = vrot.slane %v4802, %v4817
        %v4820 = vunpack.c.l.s4 1966171168
        %v4821 = vunpack.c.0.s8 %v4820
        %v4822 = vlaneseq
        %v4823 = vshrl.u32 %v4822, 7
        %v4824 = vsub.s32 %v4821, %v4823
        %v4825 = vrot.slane %v4809, %v4824
        %v4827 = vunpack.c.l.s4 1966171168
        %v4828 = vunpack.c.0.s8 %v4827
        %v4829 = vlaneseq
        %v4830 = vshrl.u32 %v4829, 7
        %v4831 = vsub.s32 %v4828, %v4830
        %v4832 = vrot.slane %v4810, %v4831
        %v4834 = vunpack.c.l.s4 1966171168
        %v4835 = vunpack.c.0.s8 %v4834
        %v4836 = vlaneseq
        %v4837 = vshrl.u32 %v4836, 7
        %v4838 = vsub.s32 %v4835, %v4837
        %v4839 = vrot.slane %v4811, %v4838
        %v4840 = vcombine.high %v4818, %v4818
        %v4841 = vcombine.high %v4825, %v4825
        %v4842 = vcombine.high %v4832, %v4832
        %v4843 = vcombine.high %v4839, %v4839
        %v4844 = vcombine.high %v1964, %v1964
        %v4846 = vunpack.c.l.s4 1966171168
        %v4847 = vunpack.c.0.s8 %v4846
        %v4848 = vlaneseq
        %v4849 = vshrl.u32 %v4848, 7
        %v4850 = vsub.s32 %v4847, %v4849
        %v4851 = vrot.slane %v1964, %v4850
        %v4853 = vunpack.c.l.s4 1966171168
        %v4854 = vunpack.c.0.s8 %v4853
        %v4855 = vlaneseq
        %v4856 = vshrl.u32 %v4855, 7
        %v4857 = vsub.s32 %v4854, %v4856
        %v4858 = vrot.slane %v4844, %v4857
        %v4859 = vcombine.high %v4851, %v4851
        %v4860 = vcombine.high %v4858, %v4858
        %v4862 = vunpack.c.l.s4 1966171168
        %v4863 = vunpack.c.0.s8 %v4862
        %v4864 = vlaneseq
        %v4865 = vshrl.u32 %v4864, 7
        %v4866 = vsub.s32 %v4863, %v4865
        %v4867 = vrot.slane %v4851, %v4866
        %v4869 = vunpack.c.l.s4 1966171168
        %v4870 = vunpack.c.0.s8 %v4869
        %v4871 = vlaneseq
        %v4872 = vshrl.u32 %v4871, 7
        %v4873 = vsub.s32 %v4870, %v4872
        %v4874 = vrot.slane %v4858, %v4873
        %v4876 = vunpack.c.l.s4 1966171168
        %v4877 = vunpack.c.0.s8 %v4876
        %v4878 = vlaneseq
        %v4879 = vshrl.u32 %v4878, 7
        %v4880 = vsub.s32 %v4877, %v4879
        %v4881 = vrot.slane %v4859, %v4880
        %v4883 = vunpack.c.l.s4 1966171168
        %v4884 = vunpack.c.0.s8 %v4883
        %v4885 = vlaneseq
        %v4886 = vshrl.u32 %v4885, 7
        %v4887 = vsub.s32 %v4884, %v4886
        %v4888 = vrot.slane %v4860, %v4887
        %v4889 = vcombine.high %v4867, %v4867
        %v4890 = vcombine.high %v4874, %v4874
        %v4891 = vcombine.high %v4881, %v4881
        %v4892 = vcombine.high %v4888, %v4888
        %v4893 = vcombine.high %v1965, %v1965
        %v4895 = vunpack.c.l.s4 1966171168
        %v4896 = vunpack.c.0.s8 %v4895
        %v4897 = vlaneseq
        %v4898 = vshrl.u32 %v4897, 7
        %v4899 = vsub.s32 %v4896, %v4898
        %v4900 = vrot.slane %v1965, %v4899
        %v4902 = vunpack.c.l.s4 1966171168
        %v4903 = vunpack.c.0.s8 %v4902
        %v4904 = vlaneseq
        %v4905 = vshrl.u32 %v4904, 7
        %v4906 = vsub.s32 %v4903, %v4905
        %v4907 = vrot.slane %v4893, %v4906
        %v4908 = vcombine.high %v4900, %v4900
        %v4909 = vcombine.high %v4907, %v4907
        %v4911 = vunpack.c.l.s4 1966171168
        %v4912 = vunpack.c.0.s8 %v4911
        %v4913 = vlaneseq
        %v4914 = vshrl.u32 %v4913, 7
        %v4915 = vsub.s32 %v4912, %v4914
        %v4916 = vrot.slane %v4900, %v4915
        %v4918 = vunpack.c.l.s4 1966171168
        %v4919 = vunpack.c.0.s8 %v4918
        %v4920 = vlaneseq
        %v4921 = vshrl.u32 %v4920, 7
        %v4922 = vsub.s32 %v4919, %v4921
        %v4923 = vrot.slane %v4907, %v4922
        %v4925 = vunpack.c.l.s4 1966171168
        %v4926 = vunpack.c.0.s8 %v4925
        %v4927 = vlaneseq
        %v4928 = vshrl.u32 %v4927, 7
        %v4929 = vsub.s32 %v4926, %v4928
        %v4930 = vrot.slane %v4908, %v4929
        %v4932 = vunpack.c.l.s4 1966171168
        %v4933 = vunpack.c.0.s8 %v4932
        %v4934 = vlaneseq
        %v4935 = vshrl.u32 %v4934, 7
        %v4936 = vsub.s32 %v4933, %v4935
        %v4937 = vrot.slane %v4909, %v4936
        %v4938 = vcombine.high %v4916, %v4916
        %v4939 = vcombine.high %v4923, %v4923
        %v4940 = vcombine.high %v4930, %v4930
        %v4941 = vcombine.high %v4937, %v4937
        %v4942 = vcombine.high %v1966, %v1966
        %v4944 = vunpack.c.l.s4 1966171168
        %v4945 = vunpack.c.0.s8 %v4944
        %v4946 = vlaneseq
        %v4947 = vshrl.u32 %v4946, 7
        %v4948 = vsub.s32 %v4945, %v4947
        %v4949 = vrot.slane %v1966, %v4948
        %v4951 = vunpack.c.l.s4 1966171168
        %v4952 = vunpack.c.0.s8 %v4951
        %v4953 = vlaneseq
        %v4954 = vshrl.u32 %v4953, 7
        %v4955 = vsub.s32 %v4952, %v4954
        %v4956 = vrot.slane %v4942, %v4955
        %v4957 = vcombine.high %v4949, %v4949
        %v4958 = vcombine.high %v4956, %v4956
        %v4960 = vunpack.c.l.s4 1966171168
        %v4961 = vunpack.c.0.s8 %v4960
        %v4962 = vlaneseq
        %v4963 = vshrl.u32 %v4962, 7
        %v4964 = vsub.s32 %v4961, %v4963
        %v4965 = vrot.slane %v4949, %v4964
        %v4967 = vunpack.c.l.s4 1966171168
        %v4968 = vunpack.c.0.s8 %v4967
        %v4969 = vlaneseq
        %v4970 = vshrl.u32 %v4969, 7
        %v4971 = vsub.s32 %v4968, %v4970
        %v4972 = vrot.slane %v4956, %v4971
        %v4974 = vunpack.c.l.s4 1966171168
        %v4975 = vunpack.c.0.s8 %v4974
        %v4976 = vlaneseq
        %v4977 = vshrl.u32 %v4976, 7
        %v4978 = vsub.s32 %v4975, %v4977
        %v4979 = vrot.slane %v4957, %v4978
        %v4981 = vunpack.c.l.s4 1966171168
        %v4982 = vunpack.c.0.s8 %v4981
        %v4983 = vlaneseq
        %v4984 = vshrl.u32 %v4983, 7
        %v4985 = vsub.s32 %v4982, %v4984
        %v4986 = vrot.slane %v4958, %v4985
        %v4987 = vcombine.high %v4965, %v4965
        %v4988 = vcombine.high %v4972, %v4972
        %v4989 = vcombine.high %v4979, %v4979
        %v4990 = vcombine.high %v4986, %v4986
        %v4991 = vcombine.high %v1967, %v1967
        %v4993 = vunpack.c.l.s4 1966171168
        %v4994 = vunpack.c.0.s8 %v4993
        %v4995 = vlaneseq
        %v4996 = vshrl.u32 %v4995, 7
        %v4997 = vsub.s32 %v4994, %v4996
        %v4998 = vrot.slane %v1967, %v4997
        %v5000 = vunpack.c.l.s4 1966171168
        %v5001 = vunpack.c.0.s8 %v5000
        %v5002 = vlaneseq
        %v5003 = vshrl.u32 %v5002, 7
        %v5004 = vsub.s32 %v5001, %v5003
        %v5005 = vrot.slane %v4991, %v5004
        %v5006 = vcombine.high %v4998, %v4998
        %v5007 = vcombine.high %v5005, %v5005
        %v5009 = vunpack.c.l.s4 1966171168
        %v5010 = vunpack.c.0.s8 %v5009
        %v5011 = vlaneseq
        %v5012 = vshrl.u32 %v5011, 7
        %v5013 = vsub.s32 %v5010, %v5012
        %v5014 = vrot.slane %v4998, %v5013
        %v5016 = vunpack.c.l.s4 1966171168
        %v5017 = vunpack.c.0.s8 %v5016
        %v5018 = vlaneseq
        %v5019 = vshrl.u32 %v5018, 7
        %v5020 = vsub.s32 %v5017, %v5019
        %v5021 = vrot.slane %v5005, %v5020
        %v5023 = vunpack.c.l.s4 1966171168
        %v5024 = vunpack.c.0.s8 %v5023
        %v5025 = vlaneseq
        %v5026 = vshrl.u32 %v5025, 7
        %v5027 = vsub.s32 %v5024, %v5026
        %v5028 = vrot.slane %v5006, %v5027
        %v5030 = vunpack.c.l.s4 1966171168
        %v5031 = vunpack.c.0.s8 %v5030
        %v5032 = vlaneseq
        %v5033 = vshrl.u32 %v5032, 7
        %v5034 = vsub.s32 %v5031, %v5033
        %v5035 = vrot.slane %v5007, %v5034
        %v5036 = vcombine.high %v5014, %v5014
        %v5037 = vcombine.high %v5021, %v5021
        %v5038 = vcombine.high %v5028, %v5028
        %v5039 = vcombine.high %v5035, %v5035
        %v5040 = vcombine.high %v1968, %v1968
        %v5042 = vunpack.c.l.s4 1966171168
        %v5043 = vunpack.c.0.s8 %v5042
        %v5044 = vlaneseq
        %v5045 = vshrl.u32 %v5044, 7
        %v5046 = vsub.s32 %v5043, %v5045
        %v5047 = vrot.slane %v1968, %v5046
        %v5049 = vunpack.c.l.s4 1966171168
        %v5050 = vunpack.c.0.s8 %v5049
        %v5051 = vlaneseq
        %v5052 = vshrl.u32 %v5051, 7
        %v5053 = vsub.s32 %v5050, %v5052
        %v5054 = vrot.slane %v5040, %v5053
        %v5055 = vcombine.high %v5047, %v5047
        %v5056 = vcombine.high %v5054, %v5054
        %v5058 = vunpack.c.l.s4 1966171168
        %v5059 = vunpack.c.0.s8 %v5058
        %v5060 = vlaneseq
        %v5061 = vshrl.u32 %v5060, 7
        %v5062 = vsub.s32 %v5059, %v5061
        %v5063 = vrot.slane %v5047, %v5062
        %v5065 = vunpack.c.l.s4 1966171168
        %v5066 = vunpack.c.0.s8 %v5065
        %v5067 = vlaneseq
        %v5068 = vshrl.u32 %v5067, 7
        %v5069 = vsub.s32 %v5066, %v5068
        %v5070 = vrot.slane %v5054, %v5069
        %v5072 = vunpack.c.l.s4 1966171168
        %v5073 = vunpack.c.0.s8 %v5072
        %v5074 = vlaneseq
        %v5075 = vshrl.u32 %v5074, 7
        %v5076 = vsub.s32 %v5073, %v5075
        %v5077 = vrot.slane %v5055, %v5076
        %v5079 = vunpack.c.l.s4 1966171168
        %v5080 = vunpack.c.0.s8 %v5079
        %v5081 = vlaneseq
        %v5082 = vshrl.u32 %v5081, 7
        %v5083 = vsub.s32 %v5080, %v5082
        %v5084 = vrot.slane %v5056, %v5083
        %v5085 = vcombine.high %v5063, %v5063
        %v5086 = vcombine.high %v5070, %v5070
        %v5087 = vcombine.high %v5077, %v5077
        %v5088 = vcombine.high %v5084, %v5084
        %v5089 = vcombine.high %v1969, %v1969
        %v5091 = vunpack.c.l.s4 1966171168
        %v5092 = vunpack.c.0.s8 %v5091
        %v5093 = vlaneseq
        %v5094 = vshrl.u32 %v5093, 7
        %v5095 = vsub.s32 %v5092, %v5094
        %v5096 = vrot.slane %v1969, %v5095
        %v5098 = vunpack.c.l.s4 1966171168
        %v5099 = vunpack.c.0.s8 %v5098
        %v5100 = vlaneseq
        %v5101 = vshrl.u32 %v5100, 7
        %v5102 = vsub.s32 %v5099, %v5101
        %v5103 = vrot.slane %v5089, %v5102
        %v5104 = vcombine.high %v5096, %v5096
        %v5105 = vcombine.high %v5103, %v5103
        %v5107 = vunpack.c.l.s4 1966171168
        %v5108 = vunpack.c.0.s8 %v5107
        %v5109 = vlaneseq
        %v5110 = vshrl.u32 %v5109, 7
        %v5111 = vsub.s32 %v5108, %v5110
        %v5112 = vrot.slane %v5096, %v5111
        %v5114 = vunpack.c.l.s4 1966171168
        %v5115 = vunpack.c.0.s8 %v5114
        %v5116 = vlaneseq
        %v5117 = vshrl.u32 %v5116, 7
        %v5118 = vsub.s32 %v5115, %v5117
        %v5119 = vrot.slane %v5103, %v5118
        %v5121 = vunpack.c.l.s4 1966171168
        %v5122 = vunpack.c.0.s8 %v5121
        %v5123 = vlaneseq
        %v5124 = vshrl.u32 %v5123, 7
        %v5125 = vsub.s32 %v5122, %v5124
        %v5126 = vrot.slane %v5104, %v5125
        %v5128 = vunpack.c.l.s4 1966171168
        %v5129 = vunpack.c.0.s8 %v5128
        %v5130 = vlaneseq
        %v5131 = vshrl.u32 %v5130, 7
        %v5132 = vsub.s32 %v5129, %v5131
        %v5133 = vrot.slane %v5105, %v5132
        %v5134 = vcombine.high %v5112, %v5112
        %v5135 = vcombine.high %v5119, %v5119
        %v5136 = vcombine.high %v5126, %v5126
        %v5137 = vcombine.high %v5133, %v5133
        %v5138 = vcombine.high %v1970, %v1970
        %v5140 = vunpack.c.l.s4 1966171168
        %v5141 = vunpack.c.0.s8 %v5140
        %v5142 = vlaneseq
        %v5143 = vshrl.u32 %v5142, 7
        %v5144 = vsub.s32 %v5141, %v5143
        %v5145 = vrot.slane %v1970, %v5144
        %v5147 = vunpack.c.l.s4 1966171168
        %v5148 = vunpack.c.0.s8 %v5147
        %v5149 = vlaneseq
        %v5150 = vshrl.u32 %v5149, 7
        %v5151 = vsub.s32 %v5148, %v5150
        %v5152 = vrot.slane %v5138, %v5151
        %v5153 = vcombine.high %v5145, %v5145
        %v5154 = vcombine.high %v5152, %v5152
        %v5156 = vunpack.c.l.s4 1966171168
        %v5157 = vunpack.c.0.s8 %v5156
        %v5158 = vlaneseq
        %v5159 = vshrl.u32 %v5158, 7
        %v5160 = vsub.s32 %v5157, %v5159
        %v5161 = vrot.slane %v5145, %v5160
        %v5163 = vunpack.c.l.s4 1966171168
        %v5164 = vunpack.c.0.s8 %v5163
        %v5165 = vlaneseq
        %v5166 = vshrl.u32 %v5165, 7
        %v5167 = vsub.s32 %v5164, %v5166
        %v5168 = vrot.slane %v5152, %v5167
        %v5170 = vunpack.c.l.s4 1966171168
        %v5171 = vunpack.c.0.s8 %v5170
        %v5172 = vlaneseq
        %v5173 = vshrl.u32 %v5172, 7
        %v5174 = vsub.s32 %v5171, %v5173
        %v5175 = vrot.slane %v5153, %v5174
        %v5177 = vunpack.c.l.s4 1966171168
        %v5178 = vunpack.c.0.s8 %v5177
        %v5179 = vlaneseq
        %v5180 = vshrl.u32 %v5179, 7
        %v5181 = vsub.s32 %v5178, %v5180
        %v5182 = vrot.slane %v5154, %v5181
        %v5183 = vcombine.high %v5161, %v5161
        %v5184 = vcombine.high %v5168, %v5168
        %v5185 = vcombine.high %v5175, %v5175
        %v5186 = vcombine.high %v5182, %v5182
        %v5187 = vcombine.high %v1971, %v1971
        %v5189 = vunpack.c.l.s4 1966171168
        %v5190 = vunpack.c.0.s8 %v5189
        %v5191 = vlaneseq
        %v5192 = vshrl.u32 %v5191, 7
        %v5193 = vsub.s32 %v5190, %v5192
        %v5194 = vrot.slane %v1971, %v5193
        %v5196 = vunpack.c.l.s4 1966171168
        %v5197 = vunpack.c.0.s8 %v5196
        %v5198 = vlaneseq
        %v5199 = vshrl.u32 %v5198, 7
        %v5200 = vsub.s32 %v5197, %v5199
        %v5201 = vrot.slane %v5187, %v5200
        %v5202 = vcombine.high %v5194, %v5194
        %v5203 = vcombine.high %v5201, %v5201
        %v5205 = vunpack.c.l.s4 1966171168
        %v5206 = vunpack.c.0.s8 %v5205
        %v5207 = vlaneseq
        %v5208 = vshrl.u32 %v5207, 7
        %v5209 = vsub.s32 %v5206, %v5208
        %v5210 = vrot.slane %v5194, %v5209
        %v5212 = vunpack.c.l.s4 1966171168
        %v5213 = vunpack.c.0.s8 %v5212
        %v5214 = vlaneseq
        %v5215 = vshrl.u32 %v5214, 7
        %v5216 = vsub.s32 %v5213, %v5215
        %v5217 = vrot.slane %v5201, %v5216
        %v5219 = vunpack.c.l.s4 1966171168
        %v5220 = vunpack.c.0.s8 %v5219
        %v5221 = vlaneseq
        %v5222 = vshrl.u32 %v5221, 7
        %v5223 = vsub.s32 %v5220, %v5222
        %v5224 = vrot.slane %v5202, %v5223
        %v5226 = vunpack.c.l.s4 1966171168
        %v5227 = vunpack.c.0.s8 %v5226
        %v5228 = vlaneseq
        %v5229 = vshrl.u32 %v5228, 7
        %v5230 = vsub.s32 %v5227, %v5229
        %v5231 = vrot.slane %v5203, %v5230
        %v5232 = vcombine.high %v5210, %v5210
        %v5233 = vcombine.high %v5217, %v5217
        %v5234 = vcombine.high %v5224, %v5224
        %v5235 = vcombine.high %v5231, %v5231
        %v5236 = vlaneseq
        %v5237 = vshrl.u32 %v5236, 7
        %v5238 = vsub.s32 0, %v5237
        %v5239 = vrot.slane %v1724, %v5238
        %5241 = vbcast.lane.b32.xlu0 %v5239, 256
        %v5242 = vpop.permute.xlu0 %5241
        %s5244 = sor.u32 256, 8
        %5245 = vbcast.lane.b32.xlu0 %v5239, %s5244
        %v5246 = vpop.permute.xlu0 %5245
        %v5247 = vlaneseq
        %v5248 = vshrl.u32 %v5247, 7
        %v5249 = vsub.s32 1, %v5248
        %v5250 = vrot.slane %v1724, %v5249
        %5252 = vbcast.lane.b32.xlu0 %v5250, 256
        %v5253 = vpop.permute.xlu0 %5252
        %s5255 = sor.u32 256, 8
        %5256 = vbcast.lane.b32.xlu0 %v5250, %s5255
        %v5257 = vpop.permute.xlu0 %5256
        %v5258 = vlaneseq
        %v5259 = vshrl.u32 %v5258, 7
        %v5260 = vsub.s32 2, %v5259
        %v5261 = vrot.slane %v1724, %v5260
        %5263 = vbcast.lane.b32.xlu0 %v5261, 256
        %v5264 = vpop.permute.xlu0 %5263
        %s5266 = sor.u32 256, 8
        %5267 = vbcast.lane.b32.xlu0 %v5261, %s5266
        %v5268 = vpop.permute.xlu0 %5267
        %v5269 = vlaneseq
        %v5270 = vshrl.u32 %v5269, 7
        %v5271 = vsub.s32 3, %v5270
        %v5272 = vrot.slane %v1724, %v5271
        %5274 = vbcast.lane.b32.xlu0 %v5272, 256
        %v5275 = vpop.permute.xlu0 %5274
        %s5277 = sor.u32 256, 8
        %5278 = vbcast.lane.b32.xlu0 %v5272, %s5277
        %v5279 = vpop.permute.xlu0 %5278
        %v5280 = vlaneseq
        %v5281 = vshrl.u32 %v5280, 7
        %v5282 = vsub.s32 4, %v5281
        %v5283 = vrot.slane %v1724, %v5282
        %5285 = vbcast.lane.b32.xlu0 %v5283, 256
        %v5286 = vpop.permute.xlu0 %5285
        %s5288 = sor.u32 256, 8
        %5289 = vbcast.lane.b32.xlu0 %v5283, %s5288
        %v5290 = vpop.permute.xlu0 %5289
        %v5291 = vlaneseq
        %v5292 = vshrl.u32 %v5291, 7
        %v5293 = vsub.s32 5, %v5292
        %v5294 = vrot.slane %v1724, %v5293
        %5296 = vbcast.lane.b32.xlu0 %v5294, 256
        %v5297 = vpop.permute.xlu0 %5296
        %s5299 = sor.u32 256, 8
        %5300 = vbcast.lane.b32.xlu0 %v5294, %s5299
        %v5301 = vpop.permute.xlu0 %5300
        %v5302 = vlaneseq
        %v5303 = vshrl.u32 %v5302, 7
        %v5304 = vsub.s32 6, %v5303
        %v5305 = vrot.slane %v1724, %v5304
        %5307 = vbcast.lane.b32.xlu0 %v5305, 256
        %v5308 = vpop.permute.xlu0 %5307
        %s5310 = sor.u32 256, 8
        %5311 = vbcast.lane.b32.xlu0 %v5305, %s5310
        %v5312 = vpop.permute.xlu0 %5311
        %v5313 = vlaneseq
        %v5314 = vshrl.u32 %v5313, 7
        %v5315 = vsub.s32 7, %v5314
        %v5316 = vrot.slane %v1724, %v5315
        %5318 = vbcast.lane.b32.xlu0 %v5316, 256
        %v5319 = vpop.permute.xlu0 %5318
        %s5321 = sor.u32 256, 8
        %5322 = vbcast.lane.b32.xlu0 %v5316, %s5321
        %v5323 = vpop.permute.xlu0 %5322
        %v5324 = vlaneseq
        %v5325 = vshrl.u32 %v5324, 7
        %v5326 = vsub.s32 0, %v5325
        %v5327 = vrot.slane %v1729, %v5326
        %5329 = vbcast.lane.b32.xlu0 %v5327, 256
        %v5330 = vpop.permute.xlu0 %5329
        %s5332 = sor.u32 256, 8
        %5333 = vbcast.lane.b32.xlu0 %v5327, %s5332
        %v5334 = vpop.permute.xlu0 %5333
        %v5335 = vlaneseq
        %v5336 = vshrl.u32 %v5335, 7
        %v5337 = vsub.s32 1, %v5336
        %v5338 = vrot.slane %v1729, %v5337
        %5340 = vbcast.lane.b32.xlu0 %v5338, 256
        %v5341 = vpop.permute.xlu0 %5340
        %s5343 = sor.u32 256, 8
        %5344 = vbcast.lane.b32.xlu0 %v5338, %s5343
        %v5345 = vpop.permute.xlu0 %5344
        %v5346 = vlaneseq
        %v5347 = vshrl.u32 %v5346, 7
        %v5348 = vsub.s32 2, %v5347
        %v5349 = vrot.slane %v1729, %v5348
        %5351 = vbcast.lane.b32.xlu0 %v5349, 256
        %v5352 = vpop.permute.xlu0 %5351
        %s5354 = sor.u32 256, 8
        %5355 = vbcast.lane.b32.xlu0 %v5349, %s5354
        %v5356 = vpop.permute.xlu0 %5355
        %v5357 = vlaneseq
        %v5358 = vshrl.u32 %v5357, 7
        %v5359 = vsub.s32 3, %v5358
        %v5360 = vrot.slane %v1729, %v5359
        %5362 = vbcast.lane.b32.xlu0 %v5360, 256
        %v5363 = vpop.permute.xlu0 %5362
        %s5365 = sor.u32 256, 8
        %5366 = vbcast.lane.b32.xlu0 %v5360, %s5365
        %v5367 = vpop.permute.xlu0 %5366
        %v5368 = vlaneseq
        %v5369 = vshrl.u32 %v5368, 7
        %v5370 = vsub.s32 4, %v5369
        %v5371 = vrot.slane %v1729, %v5370
        %5373 = vbcast.lane.b32.xlu0 %v5371, 256
        %v5374 = vpop.permute.xlu0 %5373
        %s5376 = sor.u32 256, 8
        %5377 = vbcast.lane.b32.xlu0 %v5371, %s5376
        %v5378 = vpop.permute.xlu0 %5377
        %v5379 = vlaneseq
        %v5380 = vshrl.u32 %v5379, 7
        %v5381 = vsub.s32 5, %v5380
        %v5382 = vrot.slane %v1729, %v5381
        %5384 = vbcast.lane.b32.xlu0 %v5382, 256
        %v5385 = vpop.permute.xlu0 %5384
        %s5387 = sor.u32 256, 8
        %5388 = vbcast.lane.b32.xlu0 %v5382, %s5387
        %v5389 = vpop.permute.xlu0 %5388
        %v5390 = vlaneseq
        %v5391 = vshrl.u32 %v5390, 7
        %v5392 = vsub.s32 6, %v5391
        %v5393 = vrot.slane %v1729, %v5392
        %5395 = vbcast.lane.b32.xlu0 %v5393, 256
        %v5396 = vpop.permute.xlu0 %5395
        %s5398 = sor.u32 256, 8
        %5399 = vbcast.lane.b32.xlu0 %v5393, %s5398
        %v5400 = vpop.permute.xlu0 %5399
        %v5401 = vlaneseq
        %v5402 = vshrl.u32 %v5401, 7
        %v5403 = vsub.s32 7, %v5402
        %v5404 = vrot.slane %v1729, %v5403
        %5406 = vbcast.lane.b32.xlu0 %v5404, 256
        %v5407 = vpop.permute.xlu0 %5406
        %s5409 = sor.u32 256, 8
        %5410 = vbcast.lane.b32.xlu0 %v5404, %s5409
        %v5411 = vpop.permute.xlu0 %5410
        %v5412 = vlaneseq
        %v5413 = vshrl.u32 %v5412, 7
        %v5414 = vsub.s32 0, %v5413
        %v5415 = vrot.slane %v1734, %v5414
        %5417 = vbcast.lane.b32.xlu0 %v5415, 256
        %v5418 = vpop.permute.xlu0 %5417
        %s5420 = sor.u32 256, 8
        %5421 = vbcast.lane.b32.xlu0 %v5415, %s5420
        %v5422 = vpop.permute.xlu0 %5421
        %v5423 = vlaneseq
        %v5424 = vshrl.u32 %v5423, 7
        %v5425 = vsub.s32 1, %v5424
        %v5426 = vrot.slane %v1734, %v5425
        %5428 = vbcast.lane.b32.xlu0 %v5426, 256
        %v5429 = vpop.permute.xlu0 %5428
        %s5431 = sor.u32 256, 8
        %5432 = vbcast.lane.b32.xlu0 %v5426, %s5431
        %v5433 = vpop.permute.xlu0 %5432
        %v5434 = vlaneseq
        %v5435 = vshrl.u32 %v5434, 7
        %v5436 = vsub.s32 2, %v5435
        %v5437 = vrot.slane %v1734, %v5436
        %5439 = vbcast.lane.b32.xlu0 %v5437, 256
        %v5440 = vpop.permute.xlu0 %5439
        %s5442 = sor.u32 256, 8
        %5443 = vbcast.lane.b32.xlu0 %v5437, %s5442
        %v5444 = vpop.permute.xlu0 %5443
        %v5445 = vlaneseq
        %v5446 = vshrl.u32 %v5445, 7
        %v5447 = vsub.s32 3, %v5446
        %v5448 = vrot.slane %v1734, %v5447
        %5450 = vbcast.lane.b32.xlu0 %v5448, 256
        %v5451 = vpop.permute.xlu0 %5450
        %s5453 = sor.u32 256, 8
        %5454 = vbcast.lane.b32.xlu0 %v5448, %s5453
        %v5455 = vpop.permute.xlu0 %5454
        %v5456 = vlaneseq
        %v5457 = vshrl.u32 %v5456, 7
        %v5458 = vsub.s32 4, %v5457
        %v5459 = vrot.slane %v1734, %v5458
        %5461 = vbcast.lane.b32.xlu0 %v5459, 256
        %v5462 = vpop.permute.xlu0 %5461
        %s5464 = sor.u32 256, 8
        %5465 = vbcast.lane.b32.xlu0 %v5459, %s5464
        %v5466 = vpop.permute.xlu0 %5465
        %v5467 = vlaneseq
        %v5468 = vshrl.u32 %v5467, 7
        %v5469 = vsub.s32 5, %v5468
        %v5470 = vrot.slane %v1734, %v5469
        %5472 = vbcast.lane.b32.xlu0 %v5470, 256
        %v5473 = vpop.permute.xlu0 %5472
        %s5475 = sor.u32 256, 8
        %5476 = vbcast.lane.b32.xlu0 %v5470, %s5475
        %v5477 = vpop.permute.xlu0 %5476
        %v5478 = vlaneseq
        %v5479 = vshrl.u32 %v5478, 7
        %v5480 = vsub.s32 6, %v5479
        %v5481 = vrot.slane %v1734, %v5480
        %5483 = vbcast.lane.b32.xlu0 %v5481, 256
        %v5484 = vpop.permute.xlu0 %5483
        %s5486 = sor.u32 256, 8
        %5487 = vbcast.lane.b32.xlu0 %v5481, %s5486
        %v5488 = vpop.permute.xlu0 %5487
        %v5489 = vlaneseq
        %v5490 = vshrl.u32 %v5489, 7
        %v5491 = vsub.s32 7, %v5490
        %v5492 = vrot.slane %v1734, %v5491
        %5494 = vbcast.lane.b32.xlu0 %v5492, 256
        %v5495 = vpop.permute.xlu0 %5494
        %s5497 = sor.u32 256, 8
        %5498 = vbcast.lane.b32.xlu0 %v5492, %s5497
        %v5499 = vpop.permute.xlu0 %5498
        %v5500 = vlaneseq
        %v5501 = vshrl.u32 %v5500, 7
        %v5502 = vsub.s32 0, %v5501
        %v5503 = vrot.slane %v1739, %v5502
        %5505 = vbcast.lane.b32.xlu0 %v5503, 256
        %v5506 = vpop.permute.xlu0 %5505
        %s5508 = sor.u32 256, 8
        %5509 = vbcast.lane.b32.xlu0 %v5503, %s5508
        %v5510 = vpop.permute.xlu0 %5509
        %v5511 = vlaneseq
        %v5512 = vshrl.u32 %v5511, 7
        %v5513 = vsub.s32 1, %v5512
        %v5514 = vrot.slane %v1739, %v5513
        %5516 = vbcast.lane.b32.xlu0 %v5514, 256
        %v5517 = vpop.permute.xlu0 %5516
        %s5519 = sor.u32 256, 8
        %5520 = vbcast.lane.b32.xlu0 %v5514, %s5519
        %v5521 = vpop.permute.xlu0 %5520
        %v5522 = vlaneseq
        %v5523 = vshrl.u32 %v5522, 7
        %v5524 = vsub.s32 2, %v5523
        %v5525 = vrot.slane %v1739, %v5524
        %5527 = vbcast.lane.b32.xlu0 %v5525, 256
        %v5528 = vpop.permute.xlu0 %5527
        %s5530 = sor.u32 256, 8
        %5531 = vbcast.lane.b32.xlu0 %v5525, %s5530
        %v5532 = vpop.permute.xlu0 %5531
        %v5533 = vlaneseq
        %v5534 = vshrl.u32 %v5533, 7
        %v5535 = vsub.s32 3, %v5534
        %v5536 = vrot.slane %v1739, %v5535
        %5538 = vbcast.lane.b32.xlu0 %v5536, 256
        %v5539 = vpop.permute.xlu0 %5538
        %s5541 = sor.u32 256, 8
        %5542 = vbcast.lane.b32.xlu0 %v5536, %s5541
        %v5543 = vpop.permute.xlu0 %5542
        %v5544 = vlaneseq
        %v5545 = vshrl.u32 %v5544, 7
        %v5546 = vsub.s32 4, %v5545
        %v5547 = vrot.slane %v1739, %v5546
        %5549 = vbcast.lane.b32.xlu0 %v5547, 256
        %v5550 = vpop.permute.xlu0 %5549
        %s5552 = sor.u32 256, 8
        %5553 = vbcast.lane.b32.xlu0 %v5547, %s5552
        %v5554 = vpop.permute.xlu0 %5553
        %v5555 = vlaneseq
        %v5556 = vshrl.u32 %v5555, 7
        %v5557 = vsub.s32 5, %v5556
        %v5558 = vrot.slane %v1739, %v5557
        %5560 = vbcast.lane.b32.xlu0 %v5558, 256
        %v5561 = vpop.permute.xlu0 %5560
        %s5563 = sor.u32 256, 8
        %5564 = vbcast.lane.b32.xlu0 %v5558, %s5563
        %v5565 = vpop.permute.xlu0 %5564
        %v5566 = vlaneseq
        %v5567 = vshrl.u32 %v5566, 7
        %v5568 = vsub.s32 6, %v5567
        %v5569 = vrot.slane %v1739, %v5568
        %5571 = vbcast.lane.b32.xlu0 %v5569, 256
        %v5572 = vpop.permute.xlu0 %5571
        %s5574 = sor.u32 256, 8
        %5575 = vbcast.lane.b32.xlu0 %v5569, %s5574
        %v5576 = vpop.permute.xlu0 %5575
        %v5577 = vlaneseq
        %v5578 = vshrl.u32 %v5577, 7
        %v5579 = vsub.s32 7, %v5578
        %v5580 = vrot.slane %v1739, %v5579
        %5582 = vbcast.lane.b32.xlu0 %v5580, 256
        %v5583 = vpop.permute.xlu0 %5582
        %s5585 = sor.u32 256, 8
        %5586 = vbcast.lane.b32.xlu0 %v5580, %s5585
        %v5587 = vpop.permute.xlu0 %5586
        %v5588 = vlaneseq
        %v5589 = vshrl.u32 %v5588, 7
        %v5590 = vsub.s32 0, %v5589
        %v5591 = vrot.slane %v1744, %v5590
        %5593 = vbcast.lane.b32.xlu0 %v5591, 256
        %v5594 = vpop.permute.xlu0 %5593
        %s5596 = sor.u32 256, 8
        %5597 = vbcast.lane.b32.xlu0 %v5591, %s5596
        %v5598 = vpop.permute.xlu0 %5597
        %v5599 = vlaneseq
        %v5600 = vshrl.u32 %v5599, 7
        %v5601 = vsub.s32 1, %v5600
        %v5602 = vrot.slane %v1744, %v5601
        %5604 = vbcast.lane.b32.xlu0 %v5602, 256
        %v5605 = vpop.permute.xlu0 %5604
        %s5607 = sor.u32 256, 8
        %5608 = vbcast.lane.b32.xlu0 %v5602, %s5607
        %v5609 = vpop.permute.xlu0 %5608
        %v5610 = vlaneseq
        %v5611 = vshrl.u32 %v5610, 7
        %v5612 = vsub.s32 2, %v5611
        %v5613 = vrot.slane %v1744, %v5612
        %5615 = vbcast.lane.b32.xlu0 %v5613, 256
        %v5616 = vpop.permute.xlu0 %5615
        %s5618 = sor.u32 256, 8
        %5619 = vbcast.lane.b32.xlu0 %v5613, %s5618
        %v5620 = vpop.permute.xlu0 %5619
        %v5621 = vlaneseq
        %v5622 = vshrl.u32 %v5621, 7
        %v5623 = vsub.s32 3, %v5622
        %v5624 = vrot.slane %v1744, %v5623
        %5626 = vbcast.lane.b32.xlu0 %v5624, 256
        %v5627 = vpop.permute.xlu0 %5626
        %s5629 = sor.u32 256, 8
        %5630 = vbcast.lane.b32.xlu0 %v5624, %s5629
        %v5631 = vpop.permute.xlu0 %5630
        %v5632 = vlaneseq
        %v5633 = vshrl.u32 %v5632, 7
        %v5634 = vsub.s32 4, %v5633
        %v5635 = vrot.slane %v1744, %v5634
        %5637 = vbcast.lane.b32.xlu0 %v5635, 256
        %v5638 = vpop.permute.xlu0 %5637
        %s5640 = sor.u32 256, 8
        %5641 = vbcast.lane.b32.xlu0 %v5635, %s5640
        %v5642 = vpop.permute.xlu0 %5641
        %v5643 = vlaneseq
        %v5644 = vshrl.u32 %v5643, 7
        %v5645 = vsub.s32 5, %v5644
        %v5646 = vrot.slane %v1744, %v5645
        %5648 = vbcast.lane.b32.xlu0 %v5646, 256
        %v5649 = vpop.permute.xlu0 %5648
        %s5651 = sor.u32 256, 8
        %5652 = vbcast.lane.b32.xlu0 %v5646, %s5651
        %v5653 = vpop.permute.xlu0 %5652
        %v5654 = vlaneseq
        %v5655 = vshrl.u32 %v5654, 7
        %v5656 = vsub.s32 6, %v5655
        %v5657 = vrot.slane %v1744, %v5656
        %5659 = vbcast.lane.b32.xlu0 %v5657, 256
        %v5660 = vpop.permute.xlu0 %5659
        %s5662 = sor.u32 256, 8
        %5663 = vbcast.lane.b32.xlu0 %v5657, %s5662
        %v5664 = vpop.permute.xlu0 %5663
        %v5665 = vlaneseq
        %v5666 = vshrl.u32 %v5665, 7
        %v5667 = vsub.s32 7, %v5666
        %v5668 = vrot.slane %v1744, %v5667
        %5670 = vbcast.lane.b32.xlu0 %v5668, 256
        %v5671 = vpop.permute.xlu0 %5670
        %s5673 = sor.u32 256, 8
        %5674 = vbcast.lane.b32.xlu0 %v5668, %s5673
        %v5675 = vpop.permute.xlu0 %5674
        %v5676 = vlaneseq
        %v5677 = vshrl.u32 %v5676, 7
        %v5678 = vsub.s32 0, %v5677
        %v5679 = vrot.slane %v1749, %v5678
        %5681 = vbcast.lane.b32.xlu0 %v5679, 256
        %v5682 = vpop.permute.xlu0 %5681
        %s5684 = sor.u32 256, 8
        %5685 = vbcast.lane.b32.xlu0 %v5679, %s5684
        %v5686 = vpop.permute.xlu0 %5685
        %v5687 = vlaneseq
        %v5688 = vshrl.u32 %v5687, 7
        %v5689 = vsub.s32 1, %v5688
        %v5690 = vrot.slane %v1749, %v5689
        %5692 = vbcast.lane.b32.xlu0 %v5690, 256
        %v5693 = vpop.permute.xlu0 %5692
        %s5695 = sor.u32 256, 8
        %5696 = vbcast.lane.b32.xlu0 %v5690, %s5695
        %v5697 = vpop.permute.xlu0 %5696
        %v5698 = vlaneseq
        %v5699 = vshrl.u32 %v5698, 7
        %v5700 = vsub.s32 2, %v5699
        %v5701 = vrot.slane %v1749, %v5700
        %5703 = vbcast.lane.b32.xlu0 %v5701, 256
        %v5704 = vpop.permute.xlu0 %5703
        %s5706 = sor.u32 256, 8
        %5707 = vbcast.lane.b32.xlu0 %v5701, %s5706
        %v5708 = vpop.permute.xlu0 %5707
        %v5709 = vlaneseq
        %v5710 = vshrl.u32 %v5709, 7
        %v5711 = vsub.s32 3, %v5710
        %v5712 = vrot.slane %v1749, %v5711
        %5714 = vbcast.lane.b32.xlu0 %v5712, 256
        %v5715 = vpop.permute.xlu0 %5714
        %s5717 = sor.u32 256, 8
        %5718 = vbcast.lane.b32.xlu0 %v5712, %s5717
        %v5719 = vpop.permute.xlu0 %5718
        %v5720 = vlaneseq
        %v5721 = vshrl.u32 %v5720, 7
        %v5722 = vsub.s32 4, %v5721
        %v5723 = vrot.slane %v1749, %v5722
        %5725 = vbcast.lane.b32.xlu0 %v5723, 256
        %v5726 = vpop.permute.xlu0 %5725
        %s5728 = sor.u32 256, 8
        %5729 = vbcast.lane.b32.xlu0 %v5723, %s5728
        %v5730 = vpop.permute.xlu0 %5729
        %v5731 = vlaneseq
        %v5732 = vshrl.u32 %v5731, 7
        %v5733 = vsub.s32 5, %v5732
        %v5734 = vrot.slane %v1749, %v5733
        %5736 = vbcast.lane.b32.xlu0 %v5734, 256
        %v5737 = vpop.permute.xlu0 %5736
        %s5739 = sor.u32 256, 8
        %5740 = vbcast.lane.b32.xlu0 %v5734, %s5739
        %v5741 = vpop.permute.xlu0 %5740
        %v5742 = vlaneseq
        %v5743 = vshrl.u32 %v5742, 7
        %v5744 = vsub.s32 6, %v5743
        %v5745 = vrot.slane %v1749, %v5744
        %5747 = vbcast.lane.b32.xlu0 %v5745, 256
        %v5748 = vpop.permute.xlu0 %5747
        %s5750 = sor.u32 256, 8
        %5751 = vbcast.lane.b32.xlu0 %v5745, %s5750
        %v5752 = vpop.permute.xlu0 %5751
        %v5753 = vlaneseq
        %v5754 = vshrl.u32 %v5753, 7
        %v5755 = vsub.s32 7, %v5754
        %v5756 = vrot.slane %v1749, %v5755
        %5758 = vbcast.lane.b32.xlu0 %v5756, 256
        %v5759 = vpop.permute.xlu0 %5758
        %s5761 = sor.u32 256, 8
        %5762 = vbcast.lane.b32.xlu0 %v5756, %s5761
        %v5763 = vpop.permute.xlu0 %5762
        %v5764 = vlaneseq
        %v5765 = vshrl.u32 %v5764, 7
        %v5766 = vsub.s32 0, %v5765
        %v5767 = vrot.slane %v1754, %v5766
        %5769 = vbcast.lane.b32.xlu0 %v5767, 256
        %v5770 = vpop.permute.xlu0 %5769
        %s5772 = sor.u32 256, 8
        %5773 = vbcast.lane.b32.xlu0 %v5767, %s5772
        %v5774 = vpop.permute.xlu0 %5773
        %v5775 = vlaneseq
        %v5776 = vshrl.u32 %v5775, 7
        %v5777 = vsub.s32 1, %v5776
        %v5778 = vrot.slane %v1754, %v5777
        %5780 = vbcast.lane.b32.xlu0 %v5778, 256
        %v5781 = vpop.permute.xlu0 %5780
        %s5783 = sor.u32 256, 8
        %5784 = vbcast.lane.b32.xlu0 %v5778, %s5783
        %v5785 = vpop.permute.xlu0 %5784
        %v5786 = vlaneseq
        %v5787 = vshrl.u32 %v5786, 7
        %v5788 = vsub.s32 2, %v5787
        %v5789 = vrot.slane %v1754, %v5788
        %5791 = vbcast.lane.b32.xlu0 %v5789, 256
        %v5792 = vpop.permute.xlu0 %5791
        %s5794 = sor.u32 256, 8
        %5795 = vbcast.lane.b32.xlu0 %v5789, %s5794
        %v5796 = vpop.permute.xlu0 %5795
        %v5797 = vlaneseq
        %v5798 = vshrl.u32 %v5797, 7
        %v5799 = vsub.s32 3, %v5798
        %v5800 = vrot.slane %v1754, %v5799
        %5802 = vbcast.lane.b32.xlu0 %v5800, 256
        %v5803 = vpop.permute.xlu0 %5802
        %s5805 = sor.u32 256, 8
        %5806 = vbcast.lane.b32.xlu0 %v5800, %s5805
        %v5807 = vpop.permute.xlu0 %5806
        %v5808 = vlaneseq
        %v5809 = vshrl.u32 %v5808, 7
        %v5810 = vsub.s32 4, %v5809
        %v5811 = vrot.slane %v1754, %v5810
        %5813 = vbcast.lane.b32.xlu0 %v5811, 256
        %v5814 = vpop.permute.xlu0 %5813
        %s5816 = sor.u32 256, 8
        %5817 = vbcast.lane.b32.xlu0 %v5811, %s5816
        %v5818 = vpop.permute.xlu0 %5817
        %v5819 = vlaneseq
        %v5820 = vshrl.u32 %v5819, 7
        %v5821 = vsub.s32 5, %v5820
        %v5822 = vrot.slane %v1754, %v5821
        %5824 = vbcast.lane.b32.xlu0 %v5822, 256
        %v5825 = vpop.permute.xlu0 %5824
        %s5827 = sor.u32 256, 8
        %5828 = vbcast.lane.b32.xlu0 %v5822, %s5827
        %v5829 = vpop.permute.xlu0 %5828
        %v5830 = vlaneseq
        %v5831 = vshrl.u32 %v5830, 7
        %v5832 = vsub.s32 6, %v5831
        %v5833 = vrot.slane %v1754, %v5832
        %5835 = vbcast.lane.b32.xlu0 %v5833, 256
        %v5836 = vpop.permute.xlu0 %5835
        %s5838 = sor.u32 256, 8
        %5839 = vbcast.lane.b32.xlu0 %v5833, %s5838
        %v5840 = vpop.permute.xlu0 %5839
        %v5841 = vlaneseq
        %v5842 = vshrl.u32 %v5841, 7
        %v5843 = vsub.s32 7, %v5842
        %v5844 = vrot.slane %v1754, %v5843
        %5846 = vbcast.lane.b32.xlu0 %v5844, 256
        %v5847 = vpop.permute.xlu0 %5846
        %s5849 = sor.u32 256, 8
        %5850 = vbcast.lane.b32.xlu0 %v5844, %s5849
        %v5851 = vpop.permute.xlu0 %5850
        %v5852 = vlaneseq
        %v5853 = vshrl.u32 %v5852, 7
        %v5854 = vsub.s32 0, %v5853
        %v5855 = vrot.slane %v1759, %v5854
        %5857 = vbcast.lane.b32.xlu0 %v5855, 256
        %v5858 = vpop.permute.xlu0 %5857
        %s5860 = sor.u32 256, 8
        %5861 = vbcast.lane.b32.xlu0 %v5855, %s5860
        %v5862 = vpop.permute.xlu0 %5861
        %v5863 = vlaneseq
        %v5864 = vshrl.u32 %v5863, 7
        %v5865 = vsub.s32 1, %v5864
        %v5866 = vrot.slane %v1759, %v5865
        %5868 = vbcast.lane.b32.xlu0 %v5866, 256
        %v5869 = vpop.permute.xlu0 %5868
        %s5871 = sor.u32 256, 8
        %5872 = vbcast.lane.b32.xlu0 %v5866, %s5871
        %v5873 = vpop.permute.xlu0 %5872
        %v5874 = vlaneseq
        %v5875 = vshrl.u32 %v5874, 7
        %v5876 = vsub.s32 2, %v5875
        %v5877 = vrot.slane %v1759, %v5876
        %5879 = vbcast.lane.b32.xlu0 %v5877, 256
        %v5880 = vpop.permute.xlu0 %5879
        %s5882 = sor.u32 256, 8
        %5883 = vbcast.lane.b32.xlu0 %v5877, %s5882
        %v5884 = vpop.permute.xlu0 %5883
        %v5885 = vlaneseq
        %v5886 = vshrl.u32 %v5885, 7
        %v5887 = vsub.s32 3, %v5886
        %v5888 = vrot.slane %v1759, %v5887
        %5890 = vbcast.lane.b32.xlu0 %v5888, 256
        %v5891 = vpop.permute.xlu0 %5890
        %s5893 = sor.u32 256, 8
        %5894 = vbcast.lane.b32.xlu0 %v5888, %s5893
        %v5895 = vpop.permute.xlu0 %5894
        %v5896 = vlaneseq
        %v5897 = vshrl.u32 %v5896, 7
        %v5898 = vsub.s32 4, %v5897
        %v5899 = vrot.slane %v1759, %v5898
        %5901 = vbcast.lane.b32.xlu0 %v5899, 256
        %v5902 = vpop.permute.xlu0 %5901
        %s5904 = sor.u32 256, 8
        %5905 = vbcast.lane.b32.xlu0 %v5899, %s5904
        %v5906 = vpop.permute.xlu0 %5905
        %v5907 = vlaneseq
        %v5908 = vshrl.u32 %v5907, 7
        %v5909 = vsub.s32 5, %v5908
        %v5910 = vrot.slane %v1759, %v5909
        %5912 = vbcast.lane.b32.xlu0 %v5910, 256
        %v5913 = vpop.permute.xlu0 %5912
        %s5915 = sor.u32 256, 8
        %5916 = vbcast.lane.b32.xlu0 %v5910, %s5915
        %v5917 = vpop.permute.xlu0 %5916
        %v5918 = vlaneseq
        %v5919 = vshrl.u32 %v5918, 7
        %v5920 = vsub.s32 6, %v5919
        %v5921 = vrot.slane %v1759, %v5920
        %5923 = vbcast.lane.b32.xlu0 %v5921, 256
        %v5924 = vpop.permute.xlu0 %5923
        %s5926 = sor.u32 256, 8
        %5927 = vbcast.lane.b32.xlu0 %v5921, %s5926
        %v5928 = vpop.permute.xlu0 %5927
        %v5929 = vlaneseq
        %v5930 = vshrl.u32 %v5929, 7
        %v5931 = vsub.s32 7, %v5930
        %v5932 = vrot.slane %v1759, %v5931
        %5934 = vbcast.lane.b32.xlu0 %v5932, 256
        %v5935 = vpop.permute.xlu0 %5934
        %s5937 = sor.u32 256, 8
        %5938 = vbcast.lane.b32.xlu0 %v5932, %s5937
        %v5939 = vpop.permute.xlu0 %5938
        %v5940 = vlaneseq
        %v5941 = vshrl.u32 %v5940, 7
        %v5942 = vsub.s32 0, %v5941
        %v5943 = vrot.slane %v1764, %v5942
        %5945 = vbcast.lane.b32.xlu0 %v5943, 256
        %v5946 = vpop.permute.xlu0 %5945
        %s5948 = sor.u32 256, 8
        %5949 = vbcast.lane.b32.xlu0 %v5943, %s5948
        %v5950 = vpop.permute.xlu0 %5949
        %v5951 = vlaneseq
        %v5952 = vshrl.u32 %v5951, 7
        %v5953 = vsub.s32 1, %v5952
        %v5954 = vrot.slane %v1764, %v5953
        %5956 = vbcast.lane.b32.xlu0 %v5954, 256
        %v5957 = vpop.permute.xlu0 %5956
        %s5959 = sor.u32 256, 8
        %5960 = vbcast.lane.b32.xlu0 %v5954, %s5959
        %v5961 = vpop.permute.xlu0 %5960
        %v5962 = vlaneseq
        %v5963 = vshrl.u32 %v5962, 7
        %v5964 = vsub.s32 2, %v5963
        %v5965 = vrot.slane %v1764, %v5964
        %5967 = vbcast.lane.b32.xlu0 %v5965, 256
        %v5968 = vpop.permute.xlu0 %5967
        %s5970 = sor.u32 256, 8
        %5971 = vbcast.lane.b32.xlu0 %v5965, %s5970
        %v5972 = vpop.permute.xlu0 %5971
        %v5973 = vlaneseq
        %v5974 = vshrl.u32 %v5973, 7
        %v5975 = vsub.s32 3, %v5974
        %v5976 = vrot.slane %v1764, %v5975
        %5978 = vbcast.lane.b32.xlu0 %v5976, 256
        %v5979 = vpop.permute.xlu0 %5978
        %s5981 = sor.u32 256, 8
        %5982 = vbcast.lane.b32.xlu0 %v5976, %s5981
        %v5983 = vpop.permute.xlu0 %5982
        %v5984 = vlaneseq
        %v5985 = vshrl.u32 %v5984, 7
        %v5986 = vsub.s32 4, %v5985
        %v5987 = vrot.slane %v1764, %v5986
        %5989 = vbcast.lane.b32.xlu0 %v5987, 256
        %v5990 = vpop.permute.xlu0 %5989
        %s5992 = sor.u32 256, 8
        %5993 = vbcast.lane.b32.xlu0 %v5987, %s5992
        %v5994 = vpop.permute.xlu0 %5993
        %v5995 = vlaneseq
        %v5996 = vshrl.u32 %v5995, 7
        %v5997 = vsub.s32 5, %v5996
        %v5998 = vrot.slane %v1764, %v5997
        %6000 = vbcast.lane.b32.xlu0 %v5998, 256
        %v6001 = vpop.permute.xlu0 %6000
        %s6003 = sor.u32 256, 8
        %6004 = vbcast.lane.b32.xlu0 %v5998, %s6003
        %v6005 = vpop.permute.xlu0 %6004
        %v6006 = vlaneseq
        %v6007 = vshrl.u32 %v6006, 7
        %v6008 = vsub.s32 6, %v6007
        %v6009 = vrot.slane %v1764, %v6008
        %6011 = vbcast.lane.b32.xlu0 %v6009, 256
        %v6012 = vpop.permute.xlu0 %6011
        %s6014 = sor.u32 256, 8
        %6015 = vbcast.lane.b32.xlu0 %v6009, %s6014
        %v6016 = vpop.permute.xlu0 %6015
        %v6017 = vlaneseq
        %v6018 = vshrl.u32 %v6017, 7
        %v6019 = vsub.s32 7, %v6018
        %v6020 = vrot.slane %v1764, %v6019
        %6022 = vbcast.lane.b32.xlu0 %v6020, 256
        %v6023 = vpop.permute.xlu0 %6022
        %s6025 = sor.u32 256, 8
        %6026 = vbcast.lane.b32.xlu0 %v6020, %s6025
        %v6027 = vpop.permute.xlu0 %6026
        %v6028 = vlaneseq
        %v6029 = vshrl.u32 %v6028, 7
        %v6030 = vsub.s32 0, %v6029
        %v6031 = vrot.slane %v1769, %v6030
        %6033 = vbcast.lane.b32.xlu0 %v6031, 256
        %v6034 = vpop.permute.xlu0 %6033
        %s6036 = sor.u32 256, 8
        %6037 = vbcast.lane.b32.xlu0 %v6031, %s6036
        %v6038 = vpop.permute.xlu0 %6037
        %v6039 = vlaneseq
        %v6040 = vshrl.u32 %v6039, 7
        %v6041 = vsub.s32 1, %v6040
        %v6042 = vrot.slane %v1769, %v6041
        %6044 = vbcast.lane.b32.xlu0 %v6042, 256
        %v6045 = vpop.permute.xlu0 %6044
        %s6047 = sor.u32 256, 8
        %6048 = vbcast.lane.b32.xlu0 %v6042, %s6047
        %v6049 = vpop.permute.xlu0 %6048
        %v6050 = vlaneseq
        %v6051 = vshrl.u32 %v6050, 7
        %v6052 = vsub.s32 2, %v6051
        %v6053 = vrot.slane %v1769, %v6052
        %6055 = vbcast.lane.b32.xlu0 %v6053, 256
        %v6056 = vpop.permute.xlu0 %6055
        %s6058 = sor.u32 256, 8
        %6059 = vbcast.lane.b32.xlu0 %v6053, %s6058
        %v6060 = vpop.permute.xlu0 %6059
        %v6061 = vlaneseq
        %v6062 = vshrl.u32 %v6061, 7
        %v6063 = vsub.s32 3, %v6062
        %v6064 = vrot.slane %v1769, %v6063
        %6066 = vbcast.lane.b32.xlu0 %v6064, 256
        %v6067 = vpop.permute.xlu0 %6066
        %s6069 = sor.u32 256, 8
        %6070 = vbcast.lane.b32.xlu0 %v6064, %s6069
        %v6071 = vpop.permute.xlu0 %6070
        %v6072 = vlaneseq
        %v6073 = vshrl.u32 %v6072, 7
        %v6074 = vsub.s32 4, %v6073
        %v6075 = vrot.slane %v1769, %v6074
        %6077 = vbcast.lane.b32.xlu0 %v6075, 256
        %v6078 = vpop.permute.xlu0 %6077
        %s6080 = sor.u32 256, 8
        %6081 = vbcast.lane.b32.xlu0 %v6075, %s6080
        %v6082 = vpop.permute.xlu0 %6081
        %v6083 = vlaneseq
        %v6084 = vshrl.u32 %v6083, 7
        %v6085 = vsub.s32 5, %v6084
        %v6086 = vrot.slane %v1769, %v6085
        %6088 = vbcast.lane.b32.xlu0 %v6086, 256
        %v6089 = vpop.permute.xlu0 %6088
        %s6091 = sor.u32 256, 8
        %6092 = vbcast.lane.b32.xlu0 %v6086, %s6091
        %v6093 = vpop.permute.xlu0 %6092
        %v6094 = vlaneseq
        %v6095 = vshrl.u32 %v6094, 7
        %v6096 = vsub.s32 6, %v6095
        %v6097 = vrot.slane %v1769, %v6096
        %6099 = vbcast.lane.b32.xlu0 %v6097, 256
        %v6100 = vpop.permute.xlu0 %6099
        %s6102 = sor.u32 256, 8
        %6103 = vbcast.lane.b32.xlu0 %v6097, %s6102
        %v6104 = vpop.permute.xlu0 %6103
        %v6105 = vlaneseq
        %v6106 = vshrl.u32 %v6105, 7
        %v6107 = vsub.s32 7, %v6106
        %v6108 = vrot.slane %v1769, %v6107
        %6110 = vbcast.lane.b32.xlu0 %v6108, 256
        %v6111 = vpop.permute.xlu0 %6110
        %s6113 = sor.u32 256, 8
        %6114 = vbcast.lane.b32.xlu0 %v6108, %s6113
        %v6115 = vpop.permute.xlu0 %6114
        %v6116 = vlaneseq
        %v6117 = vshrl.u32 %v6116, 7
        %v6118 = vsub.s32 0, %v6117
        %v6119 = vrot.slane %v1774, %v6118
        %6121 = vbcast.lane.b32.xlu0 %v6119, 256
        %v6122 = vpop.permute.xlu0 %6121
        %s6124 = sor.u32 256, 8
        %6125 = vbcast.lane.b32.xlu0 %v6119, %s6124
        %v6126 = vpop.permute.xlu0 %6125
        %v6127 = vlaneseq
        %v6128 = vshrl.u32 %v6127, 7
        %v6129 = vsub.s32 1, %v6128
        %v6130 = vrot.slane %v1774, %v6129
        %6132 = vbcast.lane.b32.xlu0 %v6130, 256
        %v6133 = vpop.permute.xlu0 %6132
        %s6135 = sor.u32 256, 8
        %6136 = vbcast.lane.b32.xlu0 %v6130, %s6135
        %v6137 = vpop.permute.xlu0 %6136
        %v6138 = vlaneseq
        %v6139 = vshrl.u32 %v6138, 7
        %v6140 = vsub.s32 2, %v6139
        %v6141 = vrot.slane %v1774, %v6140
        %6143 = vbcast.lane.b32.xlu0 %v6141, 256
        %v6144 = vpop.permute.xlu0 %6143
        %s6146 = sor.u32 256, 8
        %6147 = vbcast.lane.b32.xlu0 %v6141, %s6146
        %v6148 = vpop.permute.xlu0 %6147
        %v6149 = vlaneseq
        %v6150 = vshrl.u32 %v6149, 7
        %v6151 = vsub.s32 3, %v6150
        %v6152 = vrot.slane %v1774, %v6151
        %6154 = vbcast.lane.b32.xlu0 %v6152, 256
        %v6155 = vpop.permute.xlu0 %6154
        %s6157 = sor.u32 256, 8
        %6158 = vbcast.lane.b32.xlu0 %v6152, %s6157
        %v6159 = vpop.permute.xlu0 %6158
        %v6160 = vlaneseq
        %v6161 = vshrl.u32 %v6160, 7
        %v6162 = vsub.s32 4, %v6161
        %v6163 = vrot.slane %v1774, %v6162
        %6165 = vbcast.lane.b32.xlu0 %v6163, 256
        %v6166 = vpop.permute.xlu0 %6165
        %s6168 = sor.u32 256, 8
        %6169 = vbcast.lane.b32.xlu0 %v6163, %s6168
        %v6170 = vpop.permute.xlu0 %6169
        %v6171 = vlaneseq
        %v6172 = vshrl.u32 %v6171, 7
        %v6173 = vsub.s32 5, %v6172
        %v6174 = vrot.slane %v1774, %v6173
        %6176 = vbcast.lane.b32.xlu0 %v6174, 256
        %v6177 = vpop.permute.xlu0 %6176
        %s6179 = sor.u32 256, 8
        %6180 = vbcast.lane.b32.xlu0 %v6174, %s6179
        %v6181 = vpop.permute.xlu0 %6180
        %v6182 = vlaneseq
        %v6183 = vshrl.u32 %v6182, 7
        %v6184 = vsub.s32 6, %v6183
        %v6185 = vrot.slane %v1774, %v6184
        %6187 = vbcast.lane.b32.xlu0 %v6185, 256
        %v6188 = vpop.permute.xlu0 %6187
        %s6190 = sor.u32 256, 8
        %6191 = vbcast.lane.b32.xlu0 %v6185, %s6190
        %v6192 = vpop.permute.xlu0 %6191
        %v6193 = vlaneseq
        %v6194 = vshrl.u32 %v6193, 7
        %v6195 = vsub.s32 7, %v6194
        %v6196 = vrot.slane %v1774, %v6195
        %6198 = vbcast.lane.b32.xlu0 %v6196, 256
        %v6199 = vpop.permute.xlu0 %6198
        %s6201 = sor.u32 256, 8
        %6202 = vbcast.lane.b32.xlu0 %v6196, %s6201
        %v6203 = vpop.permute.xlu0 %6202
        %v6204 = vlaneseq
        %v6205 = vshrl.u32 %v6204, 7
        %v6206 = vsub.s32 0, %v6205
        %v6207 = vrot.slane %v1779, %v6206
        %6209 = vbcast.lane.b32.xlu0 %v6207, 256
        %v6210 = vpop.permute.xlu0 %6209
        %s6212 = sor.u32 256, 8
        %6213 = vbcast.lane.b32.xlu0 %v6207, %s6212
        %v6214 = vpop.permute.xlu0 %6213
        %v6215 = vlaneseq
        %v6216 = vshrl.u32 %v6215, 7
        %v6217 = vsub.s32 1, %v6216
        %v6218 = vrot.slane %v1779, %v6217
        %6220 = vbcast.lane.b32.xlu0 %v6218, 256
        %v6221 = vpop.permute.xlu0 %6220
        %s6223 = sor.u32 256, 8
        %6224 = vbcast.lane.b32.xlu0 %v6218, %s6223
        %v6225 = vpop.permute.xlu0 %6224
        %v6226 = vlaneseq
        %v6227 = vshrl.u32 %v6226, 7
        %v6228 = vsub.s32 2, %v6227
        %v6229 = vrot.slane %v1779, %v6228
        %6231 = vbcast.lane.b32.xlu0 %v6229, 256
        %v6232 = vpop.permute.xlu0 %6231
        %s6234 = sor.u32 256, 8
        %6235 = vbcast.lane.b32.xlu0 %v6229, %s6234
        %v6236 = vpop.permute.xlu0 %6235
        %v6237 = vlaneseq
        %v6238 = vshrl.u32 %v6237, 7
        %v6239 = vsub.s32 3, %v6238
        %v6240 = vrot.slane %v1779, %v6239
        %6242 = vbcast.lane.b32.xlu0 %v6240, 256
        %v6243 = vpop.permute.xlu0 %6242
        %s6245 = sor.u32 256, 8
        %6246 = vbcast.lane.b32.xlu0 %v6240, %s6245
        %v6247 = vpop.permute.xlu0 %6246
        %v6248 = vlaneseq
        %v6249 = vshrl.u32 %v6248, 7
        %v6250 = vsub.s32 4, %v6249
        %v6251 = vrot.slane %v1779, %v6250
        %6253 = vbcast.lane.b32.xlu0 %v6251, 256
        %v6254 = vpop.permute.xlu0 %6253
        %s6256 = sor.u32 256, 8
        %6257 = vbcast.lane.b32.xlu0 %v6251, %s6256
        %v6258 = vpop.permute.xlu0 %6257
        %v6259 = vlaneseq
        %v6260 = vshrl.u32 %v6259, 7
        %v6261 = vsub.s32 5, %v6260
        %v6262 = vrot.slane %v1779, %v6261
        %6264 = vbcast.lane.b32.xlu0 %v6262, 256
        %v6265 = vpop.permute.xlu0 %6264
        %s6267 = sor.u32 256, 8
        %6268 = vbcast.lane.b32.xlu0 %v6262, %s6267
        %v6269 = vpop.permute.xlu0 %6268
        %v6270 = vlaneseq
        %v6271 = vshrl.u32 %v6270, 7
        %v6272 = vsub.s32 6, %v6271
        %v6273 = vrot.slane %v1779, %v6272
        %6275 = vbcast.lane.b32.xlu0 %v6273, 256
        %v6276 = vpop.permute.xlu0 %6275
        %s6278 = sor.u32 256, 8
        %6279 = vbcast.lane.b32.xlu0 %v6273, %s6278
        %v6280 = vpop.permute.xlu0 %6279
        %v6281 = vlaneseq
        %v6282 = vshrl.u32 %v6281, 7
        %v6283 = vsub.s32 7, %v6282
        %v6284 = vrot.slane %v1779, %v6283
        %6286 = vbcast.lane.b32.xlu0 %v6284, 256
        %v6287 = vpop.permute.xlu0 %6286
        %s6289 = sor.u32 256, 8
        %6290 = vbcast.lane.b32.xlu0 %v6284, %s6289
        %v6291 = vpop.permute.xlu0 %6290
        %v6292 = vlaneseq
        %v6293 = vshrl.u32 %v6292, 7
        %v6294 = vsub.s32 0, %v6293
        %v6295 = vrot.slane %v1784, %v6294
        %6297 = vbcast.lane.b32.xlu0 %v6295, 256
        %v6298 = vpop.permute.xlu0 %6297
        %s6300 = sor.u32 256, 8
        %6301 = vbcast.lane.b32.xlu0 %v6295, %s6300
        %v6302 = vpop.permute.xlu0 %6301
        %v6303 = vlaneseq
        %v6304 = vshrl.u32 %v6303, 7
        %v6305 = vsub.s32 1, %v6304
        %v6306 = vrot.slane %v1784, %v6305
        %6308 = vbcast.lane.b32.xlu0 %v6306, 256
        %v6309 = vpop.permute.xlu0 %6308
        %s6311 = sor.u32 256, 8
        %6312 = vbcast.lane.b32.xlu0 %v6306, %s6311
        %v6313 = vpop.permute.xlu0 %6312
        %v6314 = vlaneseq
        %v6315 = vshrl.u32 %v6314, 7
        %v6316 = vsub.s32 2, %v6315
        %v6317 = vrot.slane %v1784, %v6316
        %6319 = vbcast.lane.b32.xlu0 %v6317, 256
        %v6320 = vpop.permute.xlu0 %6319
        %s6322 = sor.u32 256, 8
        %6323 = vbcast.lane.b32.xlu0 %v6317, %s6322
        %v6324 = vpop.permute.xlu0 %6323
        %v6325 = vlaneseq
        %v6326 = vshrl.u32 %v6325, 7
        %v6327 = vsub.s32 3, %v6326
        %v6328 = vrot.slane %v1784, %v6327
        %6330 = vbcast.lane.b32.xlu0 %v6328, 256
        %v6331 = vpop.permute.xlu0 %6330
        %s6333 = sor.u32 256, 8
        %6334 = vbcast.lane.b32.xlu0 %v6328, %s6333
        %v6335 = vpop.permute.xlu0 %6334
        %v6336 = vlaneseq
        %v6337 = vshrl.u32 %v6336, 7
        %v6338 = vsub.s32 4, %v6337
        %v6339 = vrot.slane %v1784, %v6338
        %6341 = vbcast.lane.b32.xlu0 %v6339, 256
        %v6342 = vpop.permute.xlu0 %6341
        %s6344 = sor.u32 256, 8
        %6345 = vbcast.lane.b32.xlu0 %v6339, %s6344
        %v6346 = vpop.permute.xlu0 %6345
        %v6347 = vlaneseq
        %v6348 = vshrl.u32 %v6347, 7
        %v6349 = vsub.s32 5, %v6348
        %v6350 = vrot.slane %v1784, %v6349
        %6352 = vbcast.lane.b32.xlu0 %v6350, 256
        %v6353 = vpop.permute.xlu0 %6352
        %s6355 = sor.u32 256, 8
        %6356 = vbcast.lane.b32.xlu0 %v6350, %s6355
        %v6357 = vpop.permute.xlu0 %6356
        %v6358 = vlaneseq
        %v6359 = vshrl.u32 %v6358, 7
        %v6360 = vsub.s32 6, %v6359
        %v6361 = vrot.slane %v1784, %v6360
        %6363 = vbcast.lane.b32.xlu0 %v6361, 256
        %v6364 = vpop.permute.xlu0 %6363
        %s6366 = sor.u32 256, 8
        %6367 = vbcast.lane.b32.xlu0 %v6361, %s6366
        %v6368 = vpop.permute.xlu0 %6367
        %v6369 = vlaneseq
        %v6370 = vshrl.u32 %v6369, 7
        %v6371 = vsub.s32 7, %v6370
        %v6372 = vrot.slane %v1784, %v6371
        %6374 = vbcast.lane.b32.xlu0 %v6372, 256
        %v6375 = vpop.permute.xlu0 %6374
        %s6377 = sor.u32 256, 8
        %6378 = vbcast.lane.b32.xlu0 %v6372, %s6377
        %v6379 = vpop.permute.xlu0 %6378
        %v6380 = vlaneseq
        %v6381 = vshrl.u32 %v6380, 7
        %v6382 = vsub.s32 0, %v6381
        %v6383 = vrot.slane %v1789, %v6382
        %6385 = vbcast.lane.b32.xlu0 %v6383, 256
        %v6386 = vpop.permute.xlu0 %6385
        %s6388 = sor.u32 256, 8
        %6389 = vbcast.lane.b32.xlu0 %v6383, %s6388
        %v6390 = vpop.permute.xlu0 %6389
        %v6391 = vlaneseq
        %v6392 = vshrl.u32 %v6391, 7
        %v6393 = vsub.s32 1, %v6392
        %v6394 = vrot.slane %v1789, %v6393
        %6396 = vbcast.lane.b32.xlu0 %v6394, 256
        %v6397 = vpop.permute.xlu0 %6396
        %s6399 = sor.u32 256, 8
        %6400 = vbcast.lane.b32.xlu0 %v6394, %s6399
        %v6401 = vpop.permute.xlu0 %6400
        %v6402 = vlaneseq
        %v6403 = vshrl.u32 %v6402, 7
        %v6404 = vsub.s32 2, %v6403
        %v6405 = vrot.slane %v1789, %v6404
        %6407 = vbcast.lane.b32.xlu0 %v6405, 256
        %v6408 = vpop.permute.xlu0 %6407
        %s6410 = sor.u32 256, 8
        %6411 = vbcast.lane.b32.xlu0 %v6405, %s6410
        %v6412 = vpop.permute.xlu0 %6411
        %v6413 = vlaneseq
        %v6414 = vshrl.u32 %v6413, 7
        %v6415 = vsub.s32 3, %v6414
        %v6416 = vrot.slane %v1789, %v6415
        %6418 = vbcast.lane.b32.xlu0 %v6416, 256
        %v6419 = vpop.permute.xlu0 %6418
        %s6421 = sor.u32 256, 8
        %6422 = vbcast.lane.b32.xlu0 %v6416, %s6421
        %v6423 = vpop.permute.xlu0 %6422
        %v6424 = vlaneseq
        %v6425 = vshrl.u32 %v6424, 7
        %v6426 = vsub.s32 4, %v6425
        %v6427 = vrot.slane %v1789, %v6426
        %6429 = vbcast.lane.b32.xlu0 %v6427, 256
        %v6430 = vpop.permute.xlu0 %6429
        %s6432 = sor.u32 256, 8
        %6433 = vbcast.lane.b32.xlu0 %v6427, %s6432
        %v6434 = vpop.permute.xlu0 %6433
        %v6435 = vlaneseq
        %v6436 = vshrl.u32 %v6435, 7
        %v6437 = vsub.s32 5, %v6436
        %v6438 = vrot.slane %v1789, %v6437
        %6440 = vbcast.lane.b32.xlu0 %v6438, 256
        %v6441 = vpop.permute.xlu0 %6440
        %s6443 = sor.u32 256, 8
        %6444 = vbcast.lane.b32.xlu0 %v6438, %s6443
        %v6445 = vpop.permute.xlu0 %6444
        %v6446 = vlaneseq
        %v6447 = vshrl.u32 %v6446, 7
        %v6448 = vsub.s32 6, %v6447
        %v6449 = vrot.slane %v1789, %v6448
        %6451 = vbcast.lane.b32.xlu0 %v6449, 256
        %v6452 = vpop.permute.xlu0 %6451
        %s6454 = sor.u32 256, 8
        %6455 = vbcast.lane.b32.xlu0 %v6449, %s6454
        %v6456 = vpop.permute.xlu0 %6455
        %v6457 = vlaneseq
        %v6458 = vshrl.u32 %v6457, 7
        %v6459 = vsub.s32 7, %v6458
        %v6460 = vrot.slane %v1789, %v6459
        %6462 = vbcast.lane.b32.xlu0 %v6460, 256
        %v6463 = vpop.permute.xlu0 %6462
        %s6465 = sor.u32 256, 8
        %6466 = vbcast.lane.b32.xlu0 %v6460, %s6465
        %v6467 = vpop.permute.xlu0 %6466
        %v6468 = vlaneseq
        %v6469 = vshrl.u32 %v6468, 7
        %v6470 = vsub.s32 0, %v6469
        %v6471 = vrot.slane %v1794, %v6470
        %6473 = vbcast.lane.b32.xlu0 %v6471, 256
        %v6474 = vpop.permute.xlu0 %6473
        %s6476 = sor.u32 256, 8
        %6477 = vbcast.lane.b32.xlu0 %v6471, %s6476
        %v6478 = vpop.permute.xlu0 %6477
        %v6479 = vlaneseq
        %v6480 = vshrl.u32 %v6479, 7
        %v6481 = vsub.s32 1, %v6480
        %v6482 = vrot.slane %v1794, %v6481
        %6484 = vbcast.lane.b32.xlu0 %v6482, 256
        %v6485 = vpop.permute.xlu0 %6484
        %s6487 = sor.u32 256, 8
        %6488 = vbcast.lane.b32.xlu0 %v6482, %s6487
        %v6489 = vpop.permute.xlu0 %6488
        %v6490 = vlaneseq
        %v6491 = vshrl.u32 %v6490, 7
        %v6492 = vsub.s32 2, %v6491
        %v6493 = vrot.slane %v1794, %v6492
        %6495 = vbcast.lane.b32.xlu0 %v6493, 256
        %v6496 = vpop.permute.xlu0 %6495
        %s6498 = sor.u32 256, 8
        %6499 = vbcast.lane.b32.xlu0 %v6493, %s6498
        %v6500 = vpop.permute.xlu0 %6499
        %v6501 = vlaneseq
        %v6502 = vshrl.u32 %v6501, 7
        %v6503 = vsub.s32 3, %v6502
        %v6504 = vrot.slane %v1794, %v6503
        %6506 = vbcast.lane.b32.xlu0 %v6504, 256
        %v6507 = vpop.permute.xlu0 %6506
        %s6509 = sor.u32 256, 8
        %6510 = vbcast.lane.b32.xlu0 %v6504, %s6509
        %v6511 = vpop.permute.xlu0 %6510
        %v6512 = vlaneseq
        %v6513 = vshrl.u32 %v6512, 7
        %v6514 = vsub.s32 4, %v6513
        %v6515 = vrot.slane %v1794, %v6514
        %6517 = vbcast.lane.b32.xlu0 %v6515, 256
        %v6518 = vpop.permute.xlu0 %6517
        %s6520 = sor.u32 256, 8
        %6521 = vbcast.lane.b32.xlu0 %v6515, %s6520
        %v6522 = vpop.permute.xlu0 %6521
        %v6523 = vlaneseq
        %v6524 = vshrl.u32 %v6523, 7
        %v6525 = vsub.s32 5, %v6524
        %v6526 = vrot.slane %v1794, %v6525
        %6528 = vbcast.lane.b32.xlu0 %v6526, 256
        %v6529 = vpop.permute.xlu0 %6528
        %s6531 = sor.u32 256, 8
        %6532 = vbcast.lane.b32.xlu0 %v6526, %s6531
        %v6533 = vpop.permute.xlu0 %6532
        %v6534 = vlaneseq
        %v6535 = vshrl.u32 %v6534, 7
        %v6536 = vsub.s32 6, %v6535
        %v6537 = vrot.slane %v1794, %v6536
        %6539 = vbcast.lane.b32.xlu0 %v6537, 256
        %v6540 = vpop.permute.xlu0 %6539
        %s6542 = sor.u32 256, 8
        %6543 = vbcast.lane.b32.xlu0 %v6537, %s6542
        %v6544 = vpop.permute.xlu0 %6543
        %v6545 = vlaneseq
        %v6546 = vshrl.u32 %v6545, 7
        %v6547 = vsub.s32 7, %v6546
        %v6548 = vrot.slane %v1794, %v6547
        %6550 = vbcast.lane.b32.xlu0 %v6548, 256
        %v6551 = vpop.permute.xlu0 %6550
        %s6553 = sor.u32 256, 8
        %6554 = vbcast.lane.b32.xlu0 %v6548, %s6553
        %v6555 = vpop.permute.xlu0 %6554
        %v6556 = vlaneseq
        %v6557 = vshrl.u32 %v6556, 7
        %v6558 = vsub.s32 0, %v6557
        %v6559 = vrot.slane %v1799, %v6558
        %6561 = vbcast.lane.b32.xlu0 %v6559, 256
        %v6562 = vpop.permute.xlu0 %6561
        %s6564 = sor.u32 256, 8
        %6565 = vbcast.lane.b32.xlu0 %v6559, %s6564
        %v6566 = vpop.permute.xlu0 %6565
        %v6567 = vlaneseq
        %v6568 = vshrl.u32 %v6567, 7
        %v6569 = vsub.s32 1, %v6568
        %v6570 = vrot.slane %v1799, %v6569
        %6572 = vbcast.lane.b32.xlu0 %v6570, 256
        %v6573 = vpop.permute.xlu0 %6572
        %s6575 = sor.u32 256, 8
        %6576 = vbcast.lane.b32.xlu0 %v6570, %s6575
        %v6577 = vpop.permute.xlu0 %6576
        %v6578 = vlaneseq
        %v6579 = vshrl.u32 %v6578, 7
        %v6580 = vsub.s32 2, %v6579
        %v6581 = vrot.slane %v1799, %v6580
        %6583 = vbcast.lane.b32.xlu0 %v6581, 256
        %v6584 = vpop.permute.xlu0 %6583
        %s6586 = sor.u32 256, 8
        %6587 = vbcast.lane.b32.xlu0 %v6581, %s6586
        %v6588 = vpop.permute.xlu0 %6587
        %v6589 = vlaneseq
        %v6590 = vshrl.u32 %v6589, 7
        %v6591 = vsub.s32 3, %v6590
        %v6592 = vrot.slane %v1799, %v6591
        %6594 = vbcast.lane.b32.xlu0 %v6592, 256
        %v6595 = vpop.permute.xlu0 %6594
        %s6597 = sor.u32 256, 8
        %6598 = vbcast.lane.b32.xlu0 %v6592, %s6597
        %v6599 = vpop.permute.xlu0 %6598
        %v6600 = vlaneseq
        %v6601 = vshrl.u32 %v6600, 7
        %v6602 = vsub.s32 4, %v6601
        %v6603 = vrot.slane %v1799, %v6602
        %6605 = vbcast.lane.b32.xlu0 %v6603, 256
        %v6606 = vpop.permute.xlu0 %6605
        %s6608 = sor.u32 256, 8
        %6609 = vbcast.lane.b32.xlu0 %v6603, %s6608
        %v6610 = vpop.permute.xlu0 %6609
        %v6611 = vlaneseq
        %v6612 = vshrl.u32 %v6611, 7
        %v6613 = vsub.s32 5, %v6612
        %v6614 = vrot.slane %v1799, %v6613
        %6616 = vbcast.lane.b32.xlu0 %v6614, 256
        %v6617 = vpop.permute.xlu0 %6616
        %s6619 = sor.u32 256, 8
        %6620 = vbcast.lane.b32.xlu0 %v6614, %s6619
        %v6621 = vpop.permute.xlu0 %6620
        %v6622 = vlaneseq
        %v6623 = vshrl.u32 %v6622, 7
        %v6624 = vsub.s32 6, %v6623
        %v6625 = vrot.slane %v1799, %v6624
        %6627 = vbcast.lane.b32.xlu0 %v6625, 256
        %v6628 = vpop.permute.xlu0 %6627
        %s6630 = sor.u32 256, 8
        %6631 = vbcast.lane.b32.xlu0 %v6625, %s6630
        %v6632 = vpop.permute.xlu0 %6631
        %v6633 = vlaneseq
        %v6634 = vshrl.u32 %v6633, 7
        %v6635 = vsub.s32 7, %v6634
        %v6636 = vrot.slane %v1799, %v6635
        %6638 = vbcast.lane.b32.xlu0 %v6636, 256
        %v6639 = vpop.permute.xlu0 %6638
        %s6641 = sor.u32 256, 8
        %6642 = vbcast.lane.b32.xlu0 %v6636, %s6641
        %v6643 = vpop.permute.xlu0 %6642
        %v6644 = vlaneseq
        %v6645 = vshrl.u32 %v6644, 7
        %v6646 = vsub.s32 0, %v6645
        %v6647 = vrot.slane %v4475, %v6646
        %v6648 = vlaneseq
        %v6649 = vshrl.u32 %v6648, 7
        %v6650 = vsub.s32 0, %v6649
        %v6651 = vrot.slane %v4489, %v6650
        %v6652 = vlaneseq
        %v6653 = vshrl.u32 %v6652, 7
        %v6654 = vsub.s32 0, %v6653
        %v6655 = vrot.slane %v4497, %v6654
        %v6656 = vlaneseq
        %v6657 = vshrl.u32 %v6656, 7
        %v6658 = vsub.s32 0, %v6657
        %v6659 = vrot.slane %v4499, %v6658
        %v6660 = vlaneseq
        %v6661 = vshrl.u32 %v6660, 7
        %v6662 = vsub.s32 0, %v6661
        %v6663 = vrot.slane %v4482, %v6662
        %v6664 = vlaneseq
        %v6665 = vshrl.u32 %v6664, 7
        %v6666 = vsub.s32 0, %v6665
        %v6667 = vrot.slane %v4496, %v6666
        %v6668 = vlaneseq
        %v6669 = vshrl.u32 %v6668, 7
        %v6670 = vsub.s32 0, %v6669
        %v6671 = vrot.slane %v4498, %v6670
        %v6672 = vlaneseq
        %v6673 = vshrl.u32 %v6672, 7
        %v6674 = vsub.s32 0, %v6673
        %v6675 = vrot.slane %v4500, %v6674
        %v6676 = vlaneseq
        %v6677 = vshrl.u32 %v6676, 7
        %v6678 = vsub.s32 0, %v6677
        %v6679 = vrot.slane %v4524, %v6678
        %v6680 = vlaneseq
        %v6681 = vshrl.u32 %v6680, 7
        %v6682 = vsub.s32 0, %v6681
        %v6683 = vrot.slane %v4538, %v6682
        %v6684 = vlaneseq
        %v6685 = vshrl.u32 %v6684, 7
        %v6686 = vsub.s32 0, %v6685
        %v6687 = vrot.slane %v4546, %v6686
        %v6688 = vlaneseq
        %v6689 = vshrl.u32 %v6688, 7
        %v6690 = vsub.s32 0, %v6689
        %v6691 = vrot.slane %v4548, %v6690
        %v6692 = vlaneseq
        %v6693 = vshrl.u32 %v6692, 7
        %v6694 = vsub.s32 0, %v6693
        %v6695 = vrot.slane %v4531, %v6694
        %v6696 = vlaneseq
        %v6697 = vshrl.u32 %v6696, 7
        %v6698 = vsub.s32 0, %v6697
        %v6699 = vrot.slane %v4545, %v6698
        %v6700 = vlaneseq
        %v6701 = vshrl.u32 %v6700, 7
        %v6702 = vsub.s32 0, %v6701
        %v6703 = vrot.slane %v4547, %v6702
        %v6704 = vlaneseq
        %v6705 = vshrl.u32 %v6704, 7
        %v6706 = vsub.s32 0, %v6705
        %v6707 = vrot.slane %v4549, %v6706
        %v6708 = vlaneseq
        %v6709 = vshrl.u32 %v6708, 7
        %v6710 = vsub.s32 0, %v6709
        %v6711 = vrot.slane %v4573, %v6710
        %v6712 = vlaneseq
        %v6713 = vshrl.u32 %v6712, 7
        %v6714 = vsub.s32 0, %v6713
        %v6715 = vrot.slane %v4587, %v6714
        %v6716 = vlaneseq
        %v6717 = vshrl.u32 %v6716, 7
        %v6718 = vsub.s32 0, %v6717
        %v6719 = vrot.slane %v4595, %v6718
        %v6720 = vlaneseq
        %v6721 = vshrl.u32 %v6720, 7
        %v6722 = vsub.s32 0, %v6721
        %v6723 = vrot.slane %v4597, %v6722
        %v6724 = vlaneseq
        %v6725 = vshrl.u32 %v6724, 7
        %v6726 = vsub.s32 0, %v6725
        %v6727 = vrot.slane %v4580, %v6726
        %v6728 = vlaneseq
        %v6729 = vshrl.u32 %v6728, 7
        %v6730 = vsub.s32 0, %v6729
        %v6731 = vrot.slane %v4594, %v6730
        %v6732 = vlaneseq
        %v6733 = vshrl.u32 %v6732, 7
        %v6734 = vsub.s32 0, %v6733
        %v6735 = vrot.slane %v4596, %v6734
        %v6736 = vlaneseq
        %v6737 = vshrl.u32 %v6736, 7
        %v6738 = vsub.s32 0, %v6737
        %v6739 = vrot.slane %v4598, %v6738
        %v6740 = vlaneseq
        %v6741 = vshrl.u32 %v6740, 7
        %v6742 = vsub.s32 0, %v6741
        %v6743 = vrot.slane %v4622, %v6742
        %v6744 = vlaneseq
        %v6745 = vshrl.u32 %v6744, 7
        %v6746 = vsub.s32 0, %v6745
        %v6747 = vrot.slane %v4636, %v6746
        %v6748 = vlaneseq
        %v6749 = vshrl.u32 %v6748, 7
        %v6750 = vsub.s32 0, %v6749
        %v6751 = vrot.slane %v4644, %v6750
        %v6752 = vlaneseq
        %v6753 = vshrl.u32 %v6752, 7
        %v6754 = vsub.s32 0, %v6753
        %v6755 = vrot.slane %v4646, %v6754
        %v6756 = vlaneseq
        %v6757 = vshrl.u32 %v6756, 7
        %v6758 = vsub.s32 0, %v6757
        %v6759 = vrot.slane %v4629, %v6758
        %v6760 = vlaneseq
        %v6761 = vshrl.u32 %v6760, 7
        %v6762 = vsub.s32 0, %v6761
        %v6763 = vrot.slane %v4643, %v6762
        %v6764 = vlaneseq
        %v6765 = vshrl.u32 %v6764, 7
        %v6766 = vsub.s32 0, %v6765
        %v6767 = vrot.slane %v4645, %v6766
        %v6768 = vlaneseq
        %v6769 = vshrl.u32 %v6768, 7
        %v6770 = vsub.s32 0, %v6769
        %v6771 = vrot.slane %v4647, %v6770
        %v6772 = vlaneseq
        %v6773 = vshrl.u32 %v6772, 7
        %v6774 = vsub.s32 0, %v6773
        %v6775 = vrot.slane %v4671, %v6774
        %v6776 = vlaneseq
        %v6777 = vshrl.u32 %v6776, 7
        %v6778 = vsub.s32 0, %v6777
        %v6779 = vrot.slane %v4685, %v6778
        %v6780 = vlaneseq
        %v6781 = vshrl.u32 %v6780, 7
        %v6782 = vsub.s32 0, %v6781
        %v6783 = vrot.slane %v4693, %v6782
        %v6784 = vlaneseq
        %v6785 = vshrl.u32 %v6784, 7
        %v6786 = vsub.s32 0, %v6785
        %v6787 = vrot.slane %v4695, %v6786
        %v6788 = vlaneseq
        %v6789 = vshrl.u32 %v6788, 7
        %v6790 = vsub.s32 0, %v6789
        %v6791 = vrot.slane %v4678, %v6790
        %v6792 = vlaneseq
        %v6793 = vshrl.u32 %v6792, 7
        %v6794 = vsub.s32 0, %v6793
        %v6795 = vrot.slane %v4692, %v6794
        %v6796 = vlaneseq
        %v6797 = vshrl.u32 %v6796, 7
        %v6798 = vsub.s32 0, %v6797
        %v6799 = vrot.slane %v4694, %v6798
        %v6800 = vlaneseq
        %v6801 = vshrl.u32 %v6800, 7
        %v6802 = vsub.s32 0, %v6801
        %v6803 = vrot.slane %v4696, %v6802
        %v6804 = vlaneseq
        %v6805 = vshrl.u32 %v6804, 7
        %v6806 = vsub.s32 0, %v6805
        %v6807 = vrot.slane %v4720, %v6806
        %v6808 = vlaneseq
        %v6809 = vshrl.u32 %v6808, 7
        %v6810 = vsub.s32 0, %v6809
        %v6811 = vrot.slane %v4734, %v6810
        %v6812 = vlaneseq
        %v6813 = vshrl.u32 %v6812, 7
        %v6814 = vsub.s32 0, %v6813
        %v6815 = vrot.slane %v4742, %v6814
        %v6816 = vlaneseq
        %v6817 = vshrl.u32 %v6816, 7
        %v6818 = vsub.s32 0, %v6817
        %v6819 = vrot.slane %v4744, %v6818
        %v6820 = vlaneseq
        %v6821 = vshrl.u32 %v6820, 7
        %v6822 = vsub.s32 0, %v6821
        %v6823 = vrot.slane %v4727, %v6822
        %v6824 = vlaneseq
        %v6825 = vshrl.u32 %v6824, 7
        %v6826 = vsub.s32 0, %v6825
        %v6827 = vrot.slane %v4741, %v6826
        %v6828 = vlaneseq
        %v6829 = vshrl.u32 %v6828, 7
        %v6830 = vsub.s32 0, %v6829
        %v6831 = vrot.slane %v4743, %v6830
        %v6832 = vlaneseq
        %v6833 = vshrl.u32 %v6832, 7
        %v6834 = vsub.s32 0, %v6833
        %v6835 = vrot.slane %v4745, %v6834
        %v6836 = vlaneseq
        %v6837 = vshrl.u32 %v6836, 7
        %v6838 = vsub.s32 0, %v6837
        %v6839 = vrot.slane %v4769, %v6838
        %v6840 = vlaneseq
        %v6841 = vshrl.u32 %v6840, 7
        %v6842 = vsub.s32 0, %v6841
        %v6843 = vrot.slane %v4783, %v6842
        %v6844 = vlaneseq
        %v6845 = vshrl.u32 %v6844, 7
        %v6846 = vsub.s32 0, %v6845
        %v6847 = vrot.slane %v4791, %v6846
        %v6848 = vlaneseq
        %v6849 = vshrl.u32 %v6848, 7
        %v6850 = vsub.s32 0, %v6849
        %v6851 = vrot.slane %v4793, %v6850
        %v6852 = vlaneseq
        %v6853 = vshrl.u32 %v6852, 7
        %v6854 = vsub.s32 0, %v6853
        %v6855 = vrot.slane %v4776, %v6854
        %v6856 = vlaneseq
        %v6857 = vshrl.u32 %v6856, 7
        %v6858 = vsub.s32 0, %v6857
        %v6859 = vrot.slane %v4790, %v6858
        %v6860 = vlaneseq
        %v6861 = vshrl.u32 %v6860, 7
        %v6862 = vsub.s32 0, %v6861
        %v6863 = vrot.slane %v4792, %v6862
        %v6864 = vlaneseq
        %v6865 = vshrl.u32 %v6864, 7
        %v6866 = vsub.s32 0, %v6865
        %v6867 = vrot.slane %v4794, %v6866
        %v6868 = vlaneseq
        %v6869 = vshrl.u32 %v6868, 7
        %v6870 = vsub.s32 0, %v6869
        %v6871 = vrot.slane %v4818, %v6870
        %v6872 = vlaneseq
        %v6873 = vshrl.u32 %v6872, 7
        %v6874 = vsub.s32 0, %v6873
        %v6875 = vrot.slane %v4832, %v6874
        %v6876 = vlaneseq
        %v6877 = vshrl.u32 %v6876, 7
        %v6878 = vsub.s32 0, %v6877
        %v6879 = vrot.slane %v4840, %v6878
        %v6880 = vlaneseq
        %v6881 = vshrl.u32 %v6880, 7
        %v6882 = vsub.s32 0, %v6881
        %v6883 = vrot.slane %v4842, %v6882
        %v6884 = vlaneseq
        %v6885 = vshrl.u32 %v6884, 7
        %v6886 = vsub.s32 0, %v6885
        %v6887 = vrot.slane %v4825, %v6886
        %v6888 = vlaneseq
        %v6889 = vshrl.u32 %v6888, 7
        %v6890 = vsub.s32 0, %v6889
        %v6891 = vrot.slane %v4839, %v6890
        %v6892 = vlaneseq
        %v6893 = vshrl.u32 %v6892, 7
        %v6894 = vsub.s32 0, %v6893
        %v6895 = vrot.slane %v4841, %v6894
        %v6896 = vlaneseq
        %v6897 = vshrl.u32 %v6896, 7
        %v6898 = vsub.s32 0, %v6897
        %v6899 = vrot.slane %v4843, %v6898
        %v6900 = vlaneseq
        %v6901 = vshrl.u32 %v6900, 7
        %v6902 = vsub.s32 0, %v6901
        %v6903 = vrot.slane %v4867, %v6902
        %v6904 = vlaneseq
        %v6905 = vshrl.u32 %v6904, 7
        %v6906 = vsub.s32 0, %v6905
        %v6907 = vrot.slane %v4881, %v6906
        %v6908 = vlaneseq
        %v6909 = vshrl.u32 %v6908, 7
        %v6910 = vsub.s32 0, %v6909
        %v6911 = vrot.slane %v4889, %v6910
        %v6912 = vlaneseq
        %v6913 = vshrl.u32 %v6912, 7
        %v6914 = vsub.s32 0, %v6913
        %v6915 = vrot.slane %v4891, %v6914
        %v6916 = vlaneseq
        %v6917 = vshrl.u32 %v6916, 7
        %v6918 = vsub.s32 0, %v6917
        %v6919 = vrot.slane %v4874, %v6918
        %v6920 = vlaneseq
        %v6921 = vshrl.u32 %v6920, 7
        %v6922 = vsub.s32 0, %v6921
        %v6923 = vrot.slane %v4888, %v6922
        %v6924 = vlaneseq
        %v6925 = vshrl.u32 %v6924, 7
        %v6926 = vsub.s32 0, %v6925
        %v6927 = vrot.slane %v4890, %v6926
        %v6928 = vlaneseq
        %v6929 = vshrl.u32 %v6928, 7
        %v6930 = vsub.s32 0, %v6929
        %v6931 = vrot.slane %v4892, %v6930
        %v6932 = vlaneseq
        %v6933 = vshrl.u32 %v6932, 7
        %v6934 = vsub.s32 0, %v6933
        %v6935 = vrot.slane %v4916, %v6934
        %v6936 = vlaneseq
        %v6937 = vshrl.u32 %v6936, 7
        %v6938 = vsub.s32 0, %v6937
        %v6939 = vrot.slane %v4930, %v6938
        %v6940 = vlaneseq
        %v6941 = vshrl.u32 %v6940, 7
        %v6942 = vsub.s32 0, %v6941
        %v6943 = vrot.slane %v4938, %v6942
        %v6944 = vlaneseq
        %v6945 = vshrl.u32 %v6944, 7
        %v6946 = vsub.s32 0, %v6945
        %v6947 = vrot.slane %v4940, %v6946
        %v6948 = vlaneseq
        %v6949 = vshrl.u32 %v6948, 7
        %v6950 = vsub.s32 0, %v6949
        %v6951 = vrot.slane %v4923, %v6950
        %v6952 = vlaneseq
        %v6953 = vshrl.u32 %v6952, 7
        %v6954 = vsub.s32 0, %v6953
        %v6955 = vrot.slane %v4937, %v6954
        %v6956 = vlaneseq
        %v6957 = vshrl.u32 %v6956, 7
        %v6958 = vsub.s32 0, %v6957
        %v6959 = vrot.slane %v4939, %v6958
        %v6960 = vlaneseq
        %v6961 = vshrl.u32 %v6960, 7
        %v6962 = vsub.s32 0, %v6961
        %v6963 = vrot.slane %v4941, %v6962
        %v6964 = vlaneseq
        %v6965 = vshrl.u32 %v6964, 7
        %v6966 = vsub.s32 0, %v6965
        %v6967 = vrot.slane %v4965, %v6966
        %v6968 = vlaneseq
        %v6969 = vshrl.u32 %v6968, 7
        %v6970 = vsub.s32 0, %v6969
        %v6971 = vrot.slane %v4979, %v6970
        %v6972 = vlaneseq
        %v6973 = vshrl.u32 %v6972, 7
        %v6974 = vsub.s32 0, %v6973
        %v6975 = vrot.slane %v4987, %v6974
        %v6976 = vlaneseq
        %v6977 = vshrl.u32 %v6976, 7
        %v6978 = vsub.s32 0, %v6977
        %v6979 = vrot.slane %v4989, %v6978
        %v6980 = vlaneseq
        %v6981 = vshrl.u32 %v6980, 7
        %v6982 = vsub.s32 0, %v6981
        %v6983 = vrot.slane %v4972, %v6982
        %v6984 = vlaneseq
        %v6985 = vshrl.u32 %v6984, 7
        %v6986 = vsub.s32 0, %v6985
        %v6987 = vrot.slane %v4986, %v6986
        %v6988 = vlaneseq
        %v6989 = vshrl.u32 %v6988, 7
        %v6990 = vsub.s32 0, %v6989
        %v6991 = vrot.slane %v4988, %v6990
        %v6992 = vlaneseq
        %v6993 = vshrl.u32 %v6992, 7
        %v6994 = vsub.s32 0, %v6993
        %v6995 = vrot.slane %v4990, %v6994
        %v6996 = vlaneseq
        %v6997 = vshrl.u32 %v6996, 7
        %v6998 = vsub.s32 0, %v6997
        %v6999 = vrot.slane %v5014, %v6998
        %v7000 = vlaneseq
        %v7001 = vshrl.u32 %v7000, 7
        %v7002 = vsub.s32 0, %v7001
        %v7003 = vrot.slane %v5028, %v7002
        %v7004 = vlaneseq
        %v7005 = vshrl.u32 %v7004, 7
        %v7006 = vsub.s32 0, %v7005
        %v7007 = vrot.slane %v5036, %v7006
        %v7008 = vlaneseq
        %v7009 = vshrl.u32 %v7008, 7
        %v7010 = vsub.s32 0, %v7009
        %v7011 = vrot.slane %v5038, %v7010
        %v7012 = vlaneseq
        %v7013 = vshrl.u32 %v7012, 7
        %v7014 = vsub.s32 0, %v7013
        %v7015 = vrot.slane %v5021, %v7014
        %v7016 = vlaneseq
        %v7017 = vshrl.u32 %v7016, 7
        %v7018 = vsub.s32 0, %v7017
        %v7019 = vrot.slane %v5035, %v7018
        %v7020 = vlaneseq
        %v7021 = vshrl.u32 %v7020, 7
        %v7022 = vsub.s32 0, %v7021
        %v7023 = vrot.slane %v5037, %v7022
        %v7024 = vlaneseq
        %v7025 = vshrl.u32 %v7024, 7
        %v7026 = vsub.s32 0, %v7025
        %v7027 = vrot.slane %v5039, %v7026
        %v7028 = vlaneseq
        %v7029 = vshrl.u32 %v7028, 7
        %v7030 = vsub.s32 0, %v7029
        %v7031 = vrot.slane %v5063, %v7030
        %v7032 = vlaneseq
        %v7033 = vshrl.u32 %v7032, 7
        %v7034 = vsub.s32 0, %v7033
        %v7035 = vrot.slane %v5077, %v7034
        %v7036 = vlaneseq
        %v7037 = vshrl.u32 %v7036, 7
        %v7038 = vsub.s32 0, %v7037
        %v7039 = vrot.slane %v5085, %v7038
        %v7040 = vlaneseq
        %v7041 = vshrl.u32 %v7040, 7
        %v7042 = vsub.s32 0, %v7041
        %v7043 = vrot.slane %v5087, %v7042
        %v7044 = vlaneseq
        %v7045 = vshrl.u32 %v7044, 7
        %v7046 = vsub.s32 0, %v7045
        %v7047 = vrot.slane %v5070, %v7046
        %v7048 = vlaneseq
        %v7049 = vshrl.u32 %v7048, 7
        %v7050 = vsub.s32 0, %v7049
        %v7051 = vrot.slane %v5084, %v7050
        %v7052 = vlaneseq
        %v7053 = vshrl.u32 %v7052, 7
        %v7054 = vsub.s32 0, %v7053
        %v7055 = vrot.slane %v5086, %v7054
        %v7056 = vlaneseq
        %v7057 = vshrl.u32 %v7056, 7
        %v7058 = vsub.s32 0, %v7057
        %v7059 = vrot.slane %v5088, %v7058
        %v7060 = vlaneseq
        %v7061 = vshrl.u32 %v7060, 7
        %v7062 = vsub.s32 0, %v7061
        %v7063 = vrot.slane %v5112, %v7062
        %v7064 = vlaneseq
        %v7065 = vshrl.u32 %v7064, 7
        %v7066 = vsub.s32 0, %v7065
        %v7067 = vrot.slane %v5126, %v7066
        %v7068 = vlaneseq
        %v7069 = vshrl.u32 %v7068, 7
        %v7070 = vsub.s32 0, %v7069
        %v7071 = vrot.slane %v5134, %v7070
        %v7072 = vlaneseq
        %v7073 = vshrl.u32 %v7072, 7
        %v7074 = vsub.s32 0, %v7073
        %v7075 = vrot.slane %v5136, %v7074
        %v7076 = vlaneseq
        %v7077 = vshrl.u32 %v7076, 7
        %v7078 = vsub.s32 0, %v7077
        %v7079 = vrot.slane %v5119, %v7078
        %v7080 = vlaneseq
        %v7081 = vshrl.u32 %v7080, 7
        %v7082 = vsub.s32 0, %v7081
        %v7083 = vrot.slane %v5133, %v7082
        %v7084 = vlaneseq
        %v7085 = vshrl.u32 %v7084, 7
        %v7086 = vsub.s32 0, %v7085
        %v7087 = vrot.slane %v5135, %v7086
        %v7088 = vlaneseq
        %v7089 = vshrl.u32 %v7088, 7
        %v7090 = vsub.s32 0, %v7089
        %v7091 = vrot.slane %v5137, %v7090
        %v7092 = vlaneseq
        %v7093 = vshrl.u32 %v7092, 7
        %v7094 = vsub.s32 0, %v7093
        %v7095 = vrot.slane %v5161, %v7094
        %v7096 = vlaneseq
        %v7097 = vshrl.u32 %v7096, 7
        %v7098 = vsub.s32 0, %v7097
        %v7099 = vrot.slane %v5175, %v7098
        %v7100 = vlaneseq
        %v7101 = vshrl.u32 %v7100, 7
        %v7102 = vsub.s32 0, %v7101
        %v7103 = vrot.slane %v5183, %v7102
        %v7104 = vlaneseq
        %v7105 = vshrl.u32 %v7104, 7
        %v7106 = vsub.s32 0, %v7105
        %v7107 = vrot.slane %v5185, %v7106
        %v7108 = vlaneseq
        %v7109 = vshrl.u32 %v7108, 7
        %v7110 = vsub.s32 0, %v7109
        %v7111 = vrot.slane %v5168, %v7110
        %v7112 = vlaneseq
        %v7113 = vshrl.u32 %v7112, 7
        %v7114 = vsub.s32 0, %v7113
        %v7115 = vrot.slane %v5182, %v7114
        %v7116 = vlaneseq
        %v7117 = vshrl.u32 %v7116, 7
        %v7118 = vsub.s32 0, %v7117
        %v7119 = vrot.slane %v5184, %v7118
        %v7120 = vlaneseq
        %v7121 = vshrl.u32 %v7120, 7
        %v7122 = vsub.s32 0, %v7121
        %v7123 = vrot.slane %v5186, %v7122
        %v7124 = vlaneseq
        %v7125 = vshrl.u32 %v7124, 7
        %v7126 = vsub.s32 0, %v7125
        %v7127 = vrot.slane %v5210, %v7126
        %v7128 = vlaneseq
        %v7129 = vshrl.u32 %v7128, 7
        %v7130 = vsub.s32 0, %v7129
        %v7131 = vrot.slane %v5224, %v7130
        %v7132 = vlaneseq
        %v7133 = vshrl.u32 %v7132, 7
        %v7134 = vsub.s32 0, %v7133
        %v7135 = vrot.slane %v5232, %v7134
        %v7136 = vlaneseq
        %v7137 = vshrl.u32 %v7136, 7
        %v7138 = vsub.s32 0, %v7137
        %v7139 = vrot.slane %v5234, %v7138
        %v7140 = vlaneseq
        %v7141 = vshrl.u32 %v7140, 7
        %v7142 = vsub.s32 0, %v7141
        %v7143 = vrot.slane %v5217, %v7142
        %v7144 = vlaneseq
        %v7145 = vshrl.u32 %v7144, 7
        %v7146 = vsub.s32 0, %v7145
        %v7147 = vrot.slane %v5231, %v7146
        %v7148 = vlaneseq
        %v7149 = vshrl.u32 %v7148, 7
        %v7150 = vsub.s32 0, %v7149
        %v7151 = vrot.slane %v5233, %v7150
        %v7152 = vlaneseq
        %v7153 = vshrl.u32 %v7152, 7
        %v7154 = vsub.s32 0, %v7153
        %v7155 = vrot.slane %v5235, %v7154
        %v7284 = vmul.f32 %v6647, %v5242
        %v7285 = vmul.f32 %v6647, %v5246
        %v7286 = vmul.f32 %v6651, %v5253
        %v7287 = vmul.f32 %v6651, %v5257
        %v7288 = vmul.f32 %v6655, %v5264
        %v7289 = vmul.f32 %v6655, %v5268
        %v7290 = vmul.f32 %v6659, %v5275
        %v7291 = vmul.f32 %v6659, %v5279
        %v7292 = vmul.f32 %v6663, %v5286
        %v7293 = vmul.f32 %v6663, %v5290
        %v7294 = vmul.f32 %v6667, %v5297
        %v7295 = vmul.f32 %v6667, %v5301
        %v7296 = vmul.f32 %v6671, %v5308
        %v7297 = vmul.f32 %v6671, %v5312
        %v7298 = vmul.f32 %v6675, %v5319
        %v7299 = vmul.f32 %v6675, %v5323
        %v7300 = vmul.f32 %v6679, %v5330
        %v7301 = vmul.f32 %v6679, %v5334
        %v7302 = vmul.f32 %v6683, %v5341
        %v7303 = vmul.f32 %v6683, %v5345
        %v7304 = vmul.f32 %v6687, %v5352
        %v7305 = vmul.f32 %v6687, %v5356
        %v7306 = vmul.f32 %v6691, %v5363
        %v7307 = vmul.f32 %v6691, %v5367
        %v7308 = vmul.f32 %v6695, %v5374
        %v7309 = vmul.f32 %v6695, %v5378
        %v7310 = vmul.f32 %v6699, %v5385
        %v7311 = vmul.f32 %v6699, %v5389
        %v7312 = vmul.f32 %v6703, %v5396
        %v7313 = vmul.f32 %v6703, %v5400
        %v7314 = vmul.f32 %v6707, %v5407
        %v7315 = vmul.f32 %v6707, %v5411
        %v7316 = vmul.f32 %v6711, %v5418
        %v7317 = vmul.f32 %v6711, %v5422
        %v7318 = vmul.f32 %v6715, %v5429
        %v7319 = vmul.f32 %v6715, %v5433
        %v7320 = vmul.f32 %v6719, %v5440
        %v7321 = vmul.f32 %v6719, %v5444
        %v7322 = vmul.f32 %v6723, %v5451
        %v7323 = vmul.f32 %v6723, %v5455
        %v7324 = vmul.f32 %v6727, %v5462
        %v7325 = vmul.f32 %v6727, %v5466
        %v7326 = vmul.f32 %v6731, %v5473
        %v7327 = vmul.f32 %v6731, %v5477
        %v7328 = vmul.f32 %v6735, %v5484
        %v7329 = vmul.f32 %v6735, %v5488
        %v7330 = vmul.f32 %v6739, %v5495
        %v7331 = vmul.f32 %v6739, %v5499
        %v7332 = vmul.f32 %v6743, %v5506
        %v7333 = vmul.f32 %v6743, %v5510
        %v7334 = vmul.f32 %v6747, %v5517
        %v7335 = vmul.f32 %v6747, %v5521
        %v7336 = vmul.f32 %v6751, %v5528
        %v7337 = vmul.f32 %v6751, %v5532
        %v7338 = vmul.f32 %v6755, %v5539
        %v7339 = vmul.f32 %v6755, %v5543
        %v7340 = vmul.f32 %v6759, %v5550
        %v7341 = vmul.f32 %v6759, %v5554
        %v7342 = vmul.f32 %v6763, %v5561
        %v7343 = vmul.f32 %v6763, %v5565
        %v7344 = vmul.f32 %v6767, %v5572
        %v7345 = vmul.f32 %v6767, %v5576
        %v7346 = vmul.f32 %v6771, %v5583
        %v7347 = vmul.f32 %v6771, %v5587
        %v7348 = vmul.f32 %v6775, %v5594
        %v7349 = vmul.f32 %v6775, %v5598
        %v7350 = vmul.f32 %v6779, %v5605
        %v7351 = vmul.f32 %v6779, %v5609
        %v7352 = vmul.f32 %v6783, %v5616
        %v7353 = vmul.f32 %v6783, %v5620
        %v7354 = vmul.f32 %v6787, %v5627
        %v7355 = vmul.f32 %v6787, %v5631
        %v7356 = vmul.f32 %v6791, %v5638
        %v7357 = vmul.f32 %v6791, %v5642
        %v7358 = vmul.f32 %v6795, %v5649
        %v7359 = vmul.f32 %v6795, %v5653
        %v7360 = vmul.f32 %v6799, %v5660
        %v7361 = vmul.f32 %v6799, %v5664
        %v7362 = vmul.f32 %v6803, %v5671
        %v7363 = vmul.f32 %v6803, %v5675
        %v7364 = vmul.f32 %v6807, %v5682
        %v7365 = vmul.f32 %v6807, %v5686
        %v7366 = vmul.f32 %v6811, %v5693
        %v7367 = vmul.f32 %v6811, %v5697
        %v7368 = vmul.f32 %v6815, %v5704
        %v7369 = vmul.f32 %v6815, %v5708
        %v7370 = vmul.f32 %v6819, %v5715
        %v7371 = vmul.f32 %v6819, %v5719
        %v7372 = vmul.f32 %v6823, %v5726
        %v7373 = vmul.f32 %v6823, %v5730
        %v7374 = vmul.f32 %v6827, %v5737
        %v7375 = vmul.f32 %v6827, %v5741
        %v7376 = vmul.f32 %v6831, %v5748
        %v7377 = vmul.f32 %v6831, %v5752
        %v7378 = vmul.f32 %v6835, %v5759
        %v7379 = vmul.f32 %v6835, %v5763
        %v7380 = vmul.f32 %v6839, %v5770
        %v7381 = vmul.f32 %v6839, %v5774
        %v7382 = vmul.f32 %v6843, %v5781
        %v7383 = vmul.f32 %v6843, %v5785
        %v7384 = vmul.f32 %v6847, %v5792
        %v7385 = vmul.f32 %v6847, %v5796
        %v7386 = vmul.f32 %v6851, %v5803
        %v7387 = vmul.f32 %v6851, %v5807
        %v7388 = vmul.f32 %v6855, %v5814
        %v7389 = vmul.f32 %v6855, %v5818
        %v7390 = vmul.f32 %v6859, %v5825
        %v7391 = vmul.f32 %v6859, %v5829
        %v7392 = vmul.f32 %v6863, %v5836
        %v7393 = vmul.f32 %v6863, %v5840
        %v7394 = vmul.f32 %v6867, %v5847
        %v7395 = vmul.f32 %v6867, %v5851
        %v7396 = vmul.f32 %v6871, %v5858
        %v7397 = vmul.f32 %v6871, %v5862
        %v7398 = vmul.f32 %v6875, %v5869
        %v7399 = vmul.f32 %v6875, %v5873
        %v7400 = vmul.f32 %v6879, %v5880
        %v7401 = vmul.f32 %v6879, %v5884
        %v7402 = vmul.f32 %v6883, %v5891
        %v7403 = vmul.f32 %v6883, %v5895
        %v7404 = vmul.f32 %v6887, %v5902
        %v7405 = vmul.f32 %v6887, %v5906
        %v7406 = vmul.f32 %v6891, %v5913
        %v7407 = vmul.f32 %v6891, %v5917
        %v7408 = vmul.f32 %v6895, %v5924
        %v7409 = vmul.f32 %v6895, %v5928
        %v7410 = vmul.f32 %v6899, %v5935
        %v7411 = vmul.f32 %v6899, %v5939
        %v7412 = vmul.f32 %v6903, %v5946
        %v7413 = vmul.f32 %v6903, %v5950
        %v7414 = vmul.f32 %v6907, %v5957
        %v7415 = vmul.f32 %v6907, %v5961
        %v7416 = vmul.f32 %v6911, %v5968
        %v7417 = vmul.f32 %v6911, %v5972
        %v7418 = vmul.f32 %v6915, %v5979
        %v7419 = vmul.f32 %v6915, %v5983
        %v7420 = vmul.f32 %v6919, %v5990
        %v7421 = vmul.f32 %v6919, %v5994
        %v7422 = vmul.f32 %v6923, %v6001
        %v7423 = vmul.f32 %v6923, %v6005
        %v7424 = vmul.f32 %v6927, %v6012
        %v7425 = vmul.f32 %v6927, %v6016
        %v7426 = vmul.f32 %v6931, %v6023
        %v7427 = vmul.f32 %v6931, %v6027
        %v7428 = vmul.f32 %v6935, %v6034
        %v7429 = vmul.f32 %v6935, %v6038
        %v7430 = vmul.f32 %v6939, %v6045
        %v7431 = vmul.f32 %v6939, %v6049
        %v7432 = vmul.f32 %v6943, %v6056
        %v7433 = vmul.f32 %v6943, %v6060
        %v7434 = vmul.f32 %v6947, %v6067
        %v7435 = vmul.f32 %v6947, %v6071
        %v7436 = vmul.f32 %v6951, %v6078
        %v7437 = vmul.f32 %v6951, %v6082
        %v7438 = vmul.f32 %v6955, %v6089
        %v7439 = vmul.f32 %v6955, %v6093
        %v7440 = vmul.f32 %v6959, %v6100
        %v7441 = vmul.f32 %v6959, %v6104
        %v7442 = vmul.f32 %v6963, %v6111
        %v7443 = vmul.f32 %v6963, %v6115
        %v7444 = vmul.f32 %v6967, %v6122
        %v7445 = vmul.f32 %v6967, %v6126
        %v7446 = vmul.f32 %v6971, %v6133
        %v7447 = vmul.f32 %v6971, %v6137
        %v7448 = vmul.f32 %v6975, %v6144
        %v7449 = vmul.f32 %v6975, %v6148
        %v7450 = vmul.f32 %v6979, %v6155
        %v7451 = vmul.f32 %v6979, %v6159
        %v7452 = vmul.f32 %v6983, %v6166
        %v7453 = vmul.f32 %v6983, %v6170
        %v7454 = vmul.f32 %v6987, %v6177
        %v7455 = vmul.f32 %v6987, %v6181
        %v7456 = vmul.f32 %v6991, %v6188
        %v7457 = vmul.f32 %v6991, %v6192
        %v7458 = vmul.f32 %v6995, %v6199
        %v7459 = vmul.f32 %v6995, %v6203
        %v7460 = vmul.f32 %v6999, %v6210
        %v7461 = vmul.f32 %v6999, %v6214
        %v7462 = vmul.f32 %v7003, %v6221
        %v7463 = vmul.f32 %v7003, %v6225
        %v7464 = vmul.f32 %v7007, %v6232
        %v7465 = vmul.f32 %v7007, %v6236
        %v7466 = vmul.f32 %v7011, %v6243
        %v7467 = vmul.f32 %v7011, %v6247
        %v7468 = vmul.f32 %v7015, %v6254
        %v7469 = vmul.f32 %v7015, %v6258
        %v7470 = vmul.f32 %v7019, %v6265
        %v7471 = vmul.f32 %v7019, %v6269
        %v7472 = vmul.f32 %v7023, %v6276
        %v7473 = vmul.f32 %v7023, %v6280
        %v7474 = vmul.f32 %v7027, %v6287
        %v7475 = vmul.f32 %v7027, %v6291
        %v7476 = vmul.f32 %v7031, %v6298
        %v7477 = vmul.f32 %v7031, %v6302
        %v7478 = vmul.f32 %v7035, %v6309
        %v7479 = vmul.f32 %v7035, %v6313
        %v7480 = vmul.f32 %v7039, %v6320
        %v7481 = vmul.f32 %v7039, %v6324
        %v7482 = vmul.f32 %v7043, %v6331
        %v7483 = vmul.f32 %v7043, %v6335
        %v7484 = vmul.f32 %v7047, %v6342
        %v7485 = vmul.f32 %v7047, %v6346
        %v7486 = vmul.f32 %v7051, %v6353
        %v7487 = vmul.f32 %v7051, %v6357
        %v7488 = vmul.f32 %v7055, %v6364
        %v7489 = vmul.f32 %v7055, %v6368
        %v7490 = vmul.f32 %v7059, %v6375
        %v7491 = vmul.f32 %v7059, %v6379
        %v7492 = vmul.f32 %v7063, %v6386
        %v7493 = vmul.f32 %v7063, %v6390
        %v7494 = vmul.f32 %v7067, %v6397
        %v7495 = vmul.f32 %v7067, %v6401
        %v7496 = vmul.f32 %v7071, %v6408
        %v7497 = vmul.f32 %v7071, %v6412
        %v7498 = vmul.f32 %v7075, %v6419
        %v7499 = vmul.f32 %v7075, %v6423
        %v7500 = vmul.f32 %v7079, %v6430
        %v7501 = vmul.f32 %v7079, %v6434
        %v7502 = vmul.f32 %v7083, %v6441
        %v7503 = vmul.f32 %v7083, %v6445
        %v7504 = vmul.f32 %v7087, %v6452
        %v7505 = vmul.f32 %v7087, %v6456
        %v7506 = vmul.f32 %v7091, %v6463
        %v7507 = vmul.f32 %v7091, %v6467
        %v7508 = vmul.f32 %v7095, %v6474
        %v7509 = vmul.f32 %v7095, %v6478
        %v7510 = vmul.f32 %v7099, %v6485
        %v7511 = vmul.f32 %v7099, %v6489
        %v7512 = vmul.f32 %v7103, %v6496
        %v7513 = vmul.f32 %v7103, %v6500
        %v7514 = vmul.f32 %v7107, %v6507
        %v7515 = vmul.f32 %v7107, %v6511
        %v7516 = vmul.f32 %v7111, %v6518
        %v7517 = vmul.f32 %v7111, %v6522
        %v7518 = vmul.f32 %v7115, %v6529
        %v7519 = vmul.f32 %v7115, %v6533
        %v7520 = vmul.f32 %v7119, %v6540
        %v7521 = vmul.f32 %v7119, %v6544
        %v7522 = vmul.f32 %v7123, %v6551
        %v7523 = vmul.f32 %v7123, %v6555
        %v7524 = vmul.f32 %v7127, %v6562
        %v7525 = vmul.f32 %v7127, %v6566
        %v7526 = vmul.f32 %v7131, %v6573
        %v7527 = vmul.f32 %v7131, %v6577
        %v7528 = vmul.f32 %v7135, %v6584
        %v7529 = vmul.f32 %v7135, %v6588
        %v7530 = vmul.f32 %v7139, %v6595
        %v7531 = vmul.f32 %v7139, %v6599
        %v7532 = vmul.f32 %v7143, %v6606
        %v7533 = vmul.f32 %v7143, %v6610
        %v7534 = vmul.f32 %v7147, %v6617
        %v7535 = vmul.f32 %v7147, %v6621
        %v7536 = vmul.f32 %v7151, %v6628
        %v7537 = vmul.f32 %v7151, %v6632
        %v7538 = vmul.f32 %v7155, %v6639
        %v7539 = vmul.f32 %v7155, %v6643
        %7540 = vst.msk [vmem:[#allocation3] sm:$0xff] %vm868, %v7284
        %7541 = vst.msk [vmem:[#allocation3 + $0x8] sm:$0xff] %vm868, %v7285
        %7542 = vst.msk [vmem:[#allocation3 + $0x10] sm:$0xff] %vm868, %v7286
        %7543 = vst.msk [vmem:[#allocation3 + $0x18] sm:$0xff] %vm868, %v7287
        %7544 = vst.msk [vmem:[#allocation3 + $0x20] sm:$0xff] %vm868, %v7288
        %7545 = vst.msk [vmem:[#allocation3 + $0x28] sm:$0xff] %vm868, %v7289
        %7546 = vst.msk [vmem:[#allocation3 + $0x30] sm:$0xff] %vm868, %v7290
        %7547 = vst.msk [vmem:[#allocation3 + $0x38] sm:$0xff] %vm868, %v7291
        %7548 = vst.msk [vmem:[#allocation3 + $0x40] sm:$0xff] %vm868, %v7292
        %7549 = vst.msk [vmem:[#allocation3 + $0x48] sm:$0xff] %vm868, %v7293
        %7550 = vst.msk [vmem:[#allocation3 + $0x50] sm:$0xff] %vm868, %v7294
        %7551 = vst.msk [vmem:[#allocation3 + $0x58] sm:$0xff] %vm868, %v7295
        %7552 = vst.msk [vmem:[#allocation3 + $0x60] sm:$0xff] %vm868, %v7296
        %7553 = vst.msk [vmem:[#allocation3 + $0x68] sm:$0xff] %vm868, %v7297
        %7554 = vst.msk [vmem:[#allocation3 + $0x70] sm:$0xff] %vm868, %v7298
        %7555 = vst.msk [vmem:[#allocation3 + $0x78] sm:$0xff] %vm868, %v7299
        %7556 = vst.msk [vmem:[#allocation3 + $0x80] sm:$0xff] %vm868, %v7300
        %7557 = vst.msk [vmem:[#allocation3 + $0x88] sm:$0xff] %vm868, %v7301
        %7558 = vst.msk [vmem:[#allocation3 + $0x90] sm:$0xff] %vm868, %v7302
        %7559 = vst.msk [vmem:[#allocation3 + $0x98] sm:$0xff] %vm868, %v7303
        %7560 = vst.msk [vmem:[#allocation3 + $0xa0] sm:$0xff] %vm868, %v7304
        %7561 = vst.msk [vmem:[#allocation3 + $0xa8] sm:$0xff] %vm868, %v7305
        %7562 = vst.msk [vmem:[#allocation3 + $0xb0] sm:$0xff] %vm868, %v7306
        %7563 = vst.msk [vmem:[#allocation3 + $0xb8] sm:$0xff] %vm868, %v7307
        %7564 = vst.msk [vmem:[#allocation3 + $0xc0] sm:$0xff] %vm868, %v7308
        %7565 = vst.msk [vmem:[#allocation3 + $0xc8] sm:$0xff] %vm868, %v7309
        %7566 = vst.msk [vmem:[#allocation3 + $0xd0] sm:$0xff] %vm868, %v7310
        %7567 = vst.msk [vmem:[#allocation3 + $0xd8] sm:$0xff] %vm868, %v7311
        %7568 = vst.msk [vmem:[#allocation3 + $0xe0] sm:$0xff] %vm868, %v7312
        %7569 = vst.msk [vmem:[#allocation3 + $0xe8] sm:$0xff] %vm868, %v7313
        %7570 = vst.msk [vmem:[#allocation3 + $0xf0] sm:$0xff] %vm868, %v7314
        %7571 = vst.msk [vmem:[#allocation3 + $0xf8] sm:$0xff] %vm868, %v7315
        %7572 = vst.msk [vmem:[#allocation3 + $0x100] sm:$0xff] %vm868, %v7316
        %7573 = vst.msk [vmem:[#allocation3 + $0x108] sm:$0xff] %vm868, %v7317
        %7574 = vst.msk [vmem:[#allocation3 + $0x110] sm:$0xff] %vm868, %v7318
        %7575 = vst.msk [vmem:[#allocation3 + $0x118] sm:$0xff] %vm868, %v7319
        %7576 = vst.msk [vmem:[#allocation3 + $0x120] sm:$0xff] %vm868, %v7320
        %7577 = vst.msk [vmem:[#allocation3 + $0x128] sm:$0xff] %vm868, %v7321
        %7578 = vst.msk [vmem:[#allocation3 + $0x130] sm:$0xff] %vm868, %v7322
        %7579 = vst.msk [vmem:[#allocation3 + $0x138] sm:$0xff] %vm868, %v7323
        %7580 = vst.msk [vmem:[#allocation3 + $0x140] sm:$0xff] %vm868, %v7324
        %7581 = vst.msk [vmem:[#allocation3 + $0x148] sm:$0xff] %vm868, %v7325
        %7582 = vst.msk [vmem:[#allocation3 + $0x150] sm:$0xff] %vm868, %v7326
        %7583 = vst.msk [vmem:[#allocation3 + $0x158] sm:$0xff] %vm868, %v7327
        %7584 = vst.msk [vmem:[#allocation3 + $0x160] sm:$0xff] %vm868, %v7328
        %7585 = vst.msk [vmem:[#allocation3 + $0x168] sm:$0xff] %vm868, %v7329
        %7586 = vst.msk [vmem:[#allocation3 + $0x170] sm:$0xff] %vm868, %v7330
        %7587 = vst.msk [vmem:[#allocation3 + $0x178] sm:$0xff] %vm868, %v7331
        %7588 = vst.msk [vmem:[#allocation3 + $0x180] sm:$0xff] %vm868, %v7332
        %7589 = vst.msk [vmem:[#allocation3 + $0x188] sm:$0xff] %vm868, %v7333
        %7590 = vst.msk [vmem:[#allocation3 + $0x190] sm:$0xff] %vm868, %v7334
        %7591 = vst.msk [vmem:[#allocation3 + $0x198] sm:$0xff] %vm868, %v7335
        %7592 = vst.msk [vmem:[#allocation3 + $0x1a0] sm:$0xff] %vm868, %v7336
        %7593 = vst.msk [vmem:[#allocation3 + $0x1a8] sm:$0xff] %vm868, %v7337
        %7594 = vst.msk [vmem:[#allocation3 + $0x1b0] sm:$0xff] %vm868, %v7338
        %7595 = vst.msk [vmem:[#allocation3 + $0x1b8] sm:$0xff] %vm868, %v7339
        %7596 = vst.msk [vmem:[#allocation3 + $0x1c0] sm:$0xff] %vm868, %v7340
        %7597 = vst.msk [vmem:[#allocation3 + $0x1c8] sm:$0xff] %vm868, %v7341
        %7598 = vst.msk [vmem:[#allocation3 + $0x1d0] sm:$0xff] %vm868, %v7342
        %7599 = vst.msk [vmem:[#allocation3 + $0x1d8] sm:$0xff] %vm868, %v7343
        %7600 = vst.msk [vmem:[#allocation3 + $0x1e0] sm:$0xff] %vm868, %v7344
        %7601 = vst.msk [vmem:[#allocation3 + $0x1e8] sm:$0xff] %vm868, %v7345
        %7602 = vst.msk [vmem:[#allocation3 + $0x1f0] sm:$0xff] %vm868, %v7346
        %7603 = vst.msk [vmem:[#allocation3 + $0x1f8] sm:$0xff] %vm868, %v7347
        %7604 = vst.msk [vmem:[#allocation3 + $0x200] sm:$0xff] %vm868, %v7348
        %7605 = vst.msk [vmem:[#allocation3 + $0x208] sm:$0xff] %vm868, %v7349
        %7606 = vst.msk [vmem:[#allocation3 + $0x210] sm:$0xff] %vm868, %v7350
        %7607 = vst.msk [vmem:[#allocation3 + $0x218] sm:$0xff] %vm868, %v7351
        %7608 = vst.msk [vmem:[#allocation3 + $0x220] sm:$0xff] %vm868, %v7352
        %7609 = vst.msk [vmem:[#allocation3 + $0x228] sm:$0xff] %vm868, %v7353
        %7610 = vst.msk [vmem:[#allocation3 + $0x230] sm:$0xff] %vm868, %v7354
        %7611 = vst.msk [vmem:[#allocation3 + $0x238] sm:$0xff] %vm868, %v7355
        %7612 = vst.msk [vmem:[#allocation3 + $0x240] sm:$0xff] %vm868, %v7356
        %7613 = vst.msk [vmem:[#allocation3 + $0x248] sm:$0xff] %vm868, %v7357
        %7614 = vst.msk [vmem:[#allocation3 + $0x250] sm:$0xff] %vm868, %v7358
        %7615 = vst.msk [vmem:[#allocation3 + $0x258] sm:$0xff] %vm868, %v7359
        %7616 = vst.msk [vmem:[#allocation3 + $0x260] sm:$0xff] %vm868, %v7360
        %7617 = vst.msk [vmem:[#allocation3 + $0x268] sm:$0xff] %vm868, %v7361
        %7618 = vst.msk [vmem:[#allocation3 + $0x270] sm:$0xff] %vm868, %v7362
        %7619 = vst.msk [vmem:[#allocation3 + $0x278] sm:$0xff] %vm868, %v7363
        %7620 = vst.msk [vmem:[#allocation3 + $0x280] sm:$0xff] %vm868, %v7364
        %7621 = vst.msk [vmem:[#allocation3 + $0x288] sm:$0xff] %vm868, %v7365
        %7622 = vst.msk [vmem:[#allocation3 + $0x290] sm:$0xff] %vm868, %v7366
        %7623 = vst.msk [vmem:[#allocation3 + $0x298] sm:$0xff] %vm868, %v7367
        %7624 = vst.msk [vmem:[#allocation3 + $0x2a0] sm:$0xff] %vm868, %v7368
        %7625 = vst.msk [vmem:[#allocation3 + $0x2a8] sm:$0xff] %vm868, %v7369
        %7626 = vst.msk [vmem:[#allocation3 + $0x2b0] sm:$0xff] %vm868, %v7370
        %7627 = vst.msk [vmem:[#allocation3 + $0x2b8] sm:$0xff] %vm868, %v7371
        %7628 = vst.msk [vmem:[#allocation3 + $0x2c0] sm:$0xff] %vm868, %v7372
        %7629 = vst.msk [vmem:[#allocation3 + $0x2c8] sm:$0xff] %vm868, %v7373
        %7630 = vst.msk [vmem:[#allocation3 + $0x2d0] sm:$0xff] %vm868, %v7374
        %7631 = vst.msk [vmem:[#allocation3 + $0x2d8] sm:$0xff] %vm868, %v7375
        %7632 = vst.msk [vmem:[#allocation3 + $0x2e0] sm:$0xff] %vm868, %v7376
        %7633 = vst.msk [vmem:[#allocation3 + $0x2e8] sm:$0xff] %vm868, %v7377
        %7634 = vst.msk [vmem:[#allocation3 + $0x2f0] sm:$0xff] %vm868, %v7378
        %7635 = vst.msk [vmem:[#allocation3 + $0x2f8] sm:$0xff] %vm868, %v7379
        %7636 = vst.msk [vmem:[#allocation3 + $0x300] sm:$0xff] %vm868, %v7380
        %7637 = vst.msk [vmem:[#allocation3 + $0x308] sm:$0xff] %vm868, %v7381
        %7638 = vst.msk [vmem:[#allocation3 + $0x310] sm:$0xff] %vm868, %v7382
        %7639 = vst.msk [vmem:[#allocation3 + $0x318] sm:$0xff] %vm868, %v7383
        %7640 = vst.msk [vmem:[#allocation3 + $0x320] sm:$0xff] %vm868, %v7384
        %7641 = vst.msk [vmem:[#allocation3 + $0x328] sm:$0xff] %vm868, %v7385
        %7642 = vst.msk [vmem:[#allocation3 + $0x330] sm:$0xff] %vm868, %v7386
        %7643 = vst.msk [vmem:[#allocation3 + $0x338] sm:$0xff] %vm868, %v7387
        %7644 = vst.msk [vmem:[#allocation3 + $0x340] sm:$0xff] %vm868, %v7388
        %7645 = vst.msk [vmem:[#allocation3 + $0x348] sm:$0xff] %vm868, %v7389
        %7646 = vst.msk [vmem:[#allocation3 + $0x350] sm:$0xff] %vm868, %v7390
        %7647 = vst.msk [vmem:[#allocation3 + $0x358] sm:$0xff] %vm868, %v7391
        %7648 = vst.msk [vmem:[#allocation3 + $0x360] sm:$0xff] %vm868, %v7392
        %7649 = vst.msk [vmem:[#allocation3 + $0x368] sm:$0xff] %vm868, %v7393
        %7650 = vst.msk [vmem:[#allocation3 + $0x370] sm:$0xff] %vm868, %v7394
        %7651 = vst.msk [vmem:[#allocation3 + $0x378] sm:$0xff] %vm868, %v7395
        %7652 = vst.msk [vmem:[#allocation3 + $0x380] sm:$0xff] %vm868, %v7396
        %7653 = vst.msk [vmem:[#allocation3 + $0x388] sm:$0xff] %vm868, %v7397
        %7654 = vst.msk [vmem:[#allocation3 + $0x390] sm:$0xff] %vm868, %v7398
        %7655 = vst.msk [vmem:[#allocation3 + $0x398] sm:$0xff] %vm868, %v7399
        %7656 = vst.msk [vmem:[#allocation3 + $0x3a0] sm:$0xff] %vm868, %v7400
        %7657 = vst.msk [vmem:[#allocation3 + $0x3a8] sm:$0xff] %vm868, %v7401
        %7658 = vst.msk [vmem:[#allocation3 + $0x3b0] sm:$0xff] %vm868, %v7402
        %7659 = vst.msk [vmem:[#allocation3 + $0x3b8] sm:$0xff] %vm868, %v7403
        %7660 = vst.msk [vmem:[#allocation3 + $0x3c0] sm:$0xff] %vm868, %v7404
        %7661 = vst.msk [vmem:[#allocation3 + $0x3c8] sm:$0xff] %vm868, %v7405
        %7662 = vst.msk [vmem:[#allocation3 + $0x3d0] sm:$0xff] %vm868, %v7406
        %7663 = vst.msk [vmem:[#allocation3 + $0x3d8] sm:$0xff] %vm868, %v7407
        %7664 = vst.msk [vmem:[#allocation3 + $0x3e0] sm:$0xff] %vm868, %v7408
        %7665 = vst.msk [vmem:[#allocation3 + $0x3e8] sm:$0xff] %vm868, %v7409
        %7666 = vst.msk [vmem:[#allocation3 + $0x3f0] sm:$0xff] %vm868, %v7410
        %7667 = vst.msk [vmem:[#allocation3 + $0x3f8] sm:$0xff] %vm868, %v7411
        %7668 = vst.msk [vmem:[#allocation3 + $0x400] sm:$0xff] %vm868, %v7412
        %7669 = vst.msk [vmem:[#allocation3 + $0x408] sm:$0xff] %vm868, %v7413
        %7670 = vst.msk [vmem:[#allocation3 + $0x410] sm:$0xff] %vm868, %v7414
        %7671 = vst.msk [vmem:[#allocation3 + $0x418] sm:$0xff] %vm868, %v7415
        %7672 = vst.msk [vmem:[#allocation3 + $0x420] sm:$0xff] %vm868, %v7416
        %7673 = vst.msk [vmem:[#allocation3 + $0x428] sm:$0xff] %vm868, %v7417
        %7674 = vst.msk [vmem:[#allocation3 + $0x430] sm:$0xff] %vm868, %v7418
        %7675 = vst.msk [vmem:[#allocation3 + $0x438] sm:$0xff] %vm868, %v7419
        %7676 = vst.msk [vmem:[#allocation3 + $0x440] sm:$0xff] %vm868, %v7420
        %7677 = vst.msk [vmem:[#allocation3 + $0x448] sm:$0xff] %vm868, %v7421
        %7678 = vst.msk [vmem:[#allocation3 + $0x450] sm:$0xff] %vm868, %v7422
        %7679 = vst.msk [vmem:[#allocation3 + $0x458] sm:$0xff] %vm868, %v7423
        %7680 = vst.msk [vmem:[#allocation3 + $0x460] sm:$0xff] %vm868, %v7424
        %7681 = vst.msk [vmem:[#allocation3 + $0x468] sm:$0xff] %vm868, %v7425
        %7682 = vst.msk [vmem:[#allocation3 + $0x470] sm:$0xff] %vm868, %v7426
        %7683 = vst.msk [vmem:[#allocation3 + $0x478] sm:$0xff] %vm868, %v7427
        %7684 = vst.msk [vmem:[#allocation3 + $0x480] sm:$0xff] %vm868, %v7428
        %7685 = vst.msk [vmem:[#allocation3 + $0x488] sm:$0xff] %vm868, %v7429
        %7686 = vst.msk [vmem:[#allocation3 + $0x490] sm:$0xff] %vm868, %v7430
        %7687 = vst.msk [vmem:[#allocation3 + $0x498] sm:$0xff] %vm868, %v7431
        %7688 = vst.msk [vmem:[#allocation3 + $0x4a0] sm:$0xff] %vm868, %v7432
        %7689 = vst.msk [vmem:[#allocation3 + $0x4a8] sm:$0xff] %vm868, %v7433
        %7690 = vst.msk [vmem:[#allocation3 + $0x4b0] sm:$0xff] %vm868, %v7434
        %7691 = vst.msk [vmem:[#allocation3 + $0x4b8] sm:$0xff] %vm868, %v7435
        %7692 = vst.msk [vmem:[#allocation3 + $0x4c0] sm:$0xff] %vm868, %v7436
        %7693 = vst.msk [vmem:[#allocation3 + $0x4c8] sm:$0xff] %vm868, %v7437
        %7694 = vst.msk [vmem:[#allocation3 + $0x4d0] sm:$0xff] %vm868, %v7438
        %7695 = vst.msk [vmem:[#allocation3 + $0x4d8] sm:$0xff] %vm868, %v7439
        %7696 = vst.msk [vmem:[#allocation3 + $0x4e0] sm:$0xff] %vm868, %v7440
        %7697 = vst.msk [vmem:[#allocation3 + $0x4e8] sm:$0xff] %vm868, %v7441
        %7698 = vst.msk [vmem:[#allocation3 + $0x4f0] sm:$0xff] %vm868, %v7442
        %7699 = vst.msk [vmem:[#allocation3 + $0x4f8] sm:$0xff] %vm868, %v7443
        %7700 = vst.msk [vmem:[#allocation3 + $0x500] sm:$0xff] %vm868, %v7444
        %7701 = vst.msk [vmem:[#allocation3 + $0x508] sm:$0xff] %vm868, %v7445
        %7702 = vst.msk [vmem:[#allocation3 + $0x510] sm:$0xff] %vm868, %v7446
        %7703 = vst.msk [vmem:[#allocation3 + $0x518] sm:$0xff] %vm868, %v7447
        %7704 = vst.msk [vmem:[#allocation3 + $0x520] sm:$0xff] %vm868, %v7448
        %7705 = vst.msk [vmem:[#allocation3 + $0x528] sm:$0xff] %vm868, %v7449
        %7706 = vst.msk [vmem:[#allocation3 + $0x530] sm:$0xff] %vm868, %v7450
        %7707 = vst.msk [vmem:[#allocation3 + $0x538] sm:$0xff] %vm868, %v7451
        %7708 = vst.msk [vmem:[#allocation3 + $0x540] sm:$0xff] %vm868, %v7452
        %7709 = vst.msk [vmem:[#allocation3 + $0x548] sm:$0xff] %vm868, %v7453
        %7710 = vst.msk [vmem:[#allocation3 + $0x550] sm:$0xff] %vm868, %v7454
        %7711 = vst.msk [vmem:[#allocation3 + $0x558] sm:$0xff] %vm868, %v7455
        %7712 = vst.msk [vmem:[#allocation3 + $0x560] sm:$0xff] %vm868, %v7456
        %7713 = vst.msk [vmem:[#allocation3 + $0x568] sm:$0xff] %vm868, %v7457
        %7714 = vst.msk [vmem:[#allocation3 + $0x570] sm:$0xff] %vm868, %v7458
        %7715 = vst.msk [vmem:[#allocation3 + $0x578] sm:$0xff] %vm868, %v7459
        %7716 = vst.msk [vmem:[#allocation3 + $0x580] sm:$0xff] %vm868, %v7460
        %7717 = vst.msk [vmem:[#allocation3 + $0x588] sm:$0xff] %vm868, %v7461
        %7718 = vst.msk [vmem:[#allocation3 + $0x590] sm:$0xff] %vm868, %v7462
        %7719 = vst.msk [vmem:[#allocation3 + $0x598] sm:$0xff] %vm868, %v7463
        %7720 = vst.msk [vmem:[#allocation3 + $0x5a0] sm:$0xff] %vm868, %v7464
        %7721 = vst.msk [vmem:[#allocation3 + $0x5a8] sm:$0xff] %vm868, %v7465
        %7722 = vst.msk [vmem:[#allocation3 + $0x5b0] sm:$0xff] %vm868, %v7466
        %7723 = vst.msk [vmem:[#allocation3 + $0x5b8] sm:$0xff] %vm868, %v7467
        %7724 = vst.msk [vmem:[#allocation3 + $0x5c0] sm:$0xff] %vm868, %v7468
        %7725 = vst.msk [vmem:[#allocation3 + $0x5c8] sm:$0xff] %vm868, %v7469
        %7726 = vst.msk [vmem:[#allocation3 + $0x5d0] sm:$0xff] %vm868, %v7470
        %7727 = vst.msk [vmem:[#allocation3 + $0x5d8] sm:$0xff] %vm868, %v7471
        %7728 = vst.msk [vmem:[#allocation3 + $0x5e0] sm:$0xff] %vm868, %v7472
        %7729 = vst.msk [vmem:[#allocation3 + $0x5e8] sm:$0xff] %vm868, %v7473
        %7730 = vst.msk [vmem:[#allocation3 + $0x5f0] sm:$0xff] %vm868, %v7474
        %7731 = vst.msk [vmem:[#allocation3 + $0x5f8] sm:$0xff] %vm868, %v7475
        %7732 = vst.msk [vmem:[#allocation3 + $0x600] sm:$0xff] %vm868, %v7476
        %7733 = vst.msk [vmem:[#allocation3 + $0x608] sm:$0xff] %vm868, %v7477
        %7734 = vst.msk [vmem:[#allocation3 + $0x610] sm:$0xff] %vm868, %v7478
        %7735 = vst.msk [vmem:[#allocation3 + $0x618] sm:$0xff] %vm868, %v7479
        %7736 = vst.msk [vmem:[#allocation3 + $0x620] sm:$0xff] %vm868, %v7480
        %7737 = vst.msk [vmem:[#allocation3 + $0x628] sm:$0xff] %vm868, %v7481
        %7738 = vst.msk [vmem:[#allocation3 + $0x630] sm:$0xff] %vm868, %v7482
        %7739 = vst.msk [vmem:[#allocation3 + $0x638] sm:$0xff] %vm868, %v7483
        %7740 = vst.msk [vmem:[#allocation3 + $0x640] sm:$0xff] %vm868, %v7484
        %7741 = vst.msk [vmem:[#allocation3 + $0x648] sm:$0xff] %vm868, %v7485
        %7742 = vst.msk [vmem:[#allocation3 + $0x650] sm:$0xff] %vm868, %v7486
        %7743 = vst.msk [vmem:[#allocation3 + $0x658] sm:$0xff] %vm868, %v7487
        %7744 = vst.msk [vmem:[#allocation3 + $0x660] sm:$0xff] %vm868, %v7488
        %7745 = vst.msk [vmem:[#allocation3 + $0x668] sm:$0xff] %vm868, %v7489
        %7746 = vst.msk [vmem:[#allocation3 + $0x670] sm:$0xff] %vm868, %v7490
        %7747 = vst.msk [vmem:[#allocation3 + $0x678] sm:$0xff] %vm868, %v7491
        %7748 = vst.msk [vmem:[#allocation3 + $0x680] sm:$0xff] %vm868, %v7492
        %7749 = vst.msk [vmem:[#allocation3 + $0x688] sm:$0xff] %vm868, %v7493
        %7750 = vst.msk [vmem:[#allocation3 + $0x690] sm:$0xff] %vm868, %v7494
        %7751 = vst.msk [vmem:[#allocation3 + $0x698] sm:$0xff] %vm868, %v7495
        %7752 = vst.msk [vmem:[#allocation3 + $0x6a0] sm:$0xff] %vm868, %v7496
        %7753 = vst.msk [vmem:[#allocation3 + $0x6a8] sm:$0xff] %vm868, %v7497
        %7754 = vst.msk [vmem:[#allocation3 + $0x6b0] sm:$0xff] %vm868, %v7498
        %7755 = vst.msk [vmem:[#allocation3 + $0x6b8] sm:$0xff] %vm868, %v7499
        %7756 = vst.msk [vmem:[#allocation3 + $0x6c0] sm:$0xff] %vm868, %v7500
        %7757 = vst.msk [vmem:[#allocation3 + $0x6c8] sm:$0xff] %vm868, %v7501
        %7758 = vst.msk [vmem:[#allocation3 + $0x6d0] sm:$0xff] %vm868, %v7502
        %7759 = vst.msk [vmem:[#allocation3 + $0x6d8] sm:$0xff] %vm868, %v7503
        %7760 = vst.msk [vmem:[#allocation3 + $0x6e0] sm:$0xff] %vm868, %v7504
        %7761 = vst.msk [vmem:[#allocation3 + $0x6e8] sm:$0xff] %vm868, %v7505
        %7762 = vst.msk [vmem:[#allocation3 + $0x6f0] sm:$0xff] %vm868, %v7506
        %7763 = vst.msk [vmem:[#allocation3 + $0x6f8] sm:$0xff] %vm868, %v7507
        %7764 = vst.msk [vmem:[#allocation3 + $0x700] sm:$0xff] %vm868, %v7508
        %7765 = vst.msk [vmem:[#allocation3 + $0x708] sm:$0xff] %vm868, %v7509
        %7766 = vst.msk [vmem:[#allocation3 + $0x710] sm:$0xff] %vm868, %v7510
        %7767 = vst.msk [vmem:[#allocation3 + $0x718] sm:$0xff] %vm868, %v7511
        %7768 = vst.msk [vmem:[#allocation3 + $0x720] sm:$0xff] %vm868, %v7512
        %7769 = vst.msk [vmem:[#allocation3 + $0x728] sm:$0xff] %vm868, %v7513
        %7770 = vst.msk [vmem:[#allocation3 + $0x730] sm:$0xff] %vm868, %v7514
        %7771 = vst.msk [vmem:[#allocation3 + $0x738] sm:$0xff] %vm868, %v7515
        %7772 = vst.msk [vmem:[#allocation3 + $0x740] sm:$0xff] %vm868, %v7516
        %7773 = vst.msk [vmem:[#allocation3 + $0x748] sm:$0xff] %vm868, %v7517
        %7774 = vst.msk [vmem:[#allocation3 + $0x750] sm:$0xff] %vm868, %v7518
        %7775 = vst.msk [vmem:[#allocation3 + $0x758] sm:$0xff] %vm868, %v7519
        %7776 = vst.msk [vmem:[#allocation3 + $0x760] sm:$0xff] %vm868, %v7520
        %7777 = vst.msk [vmem:[#allocation3 + $0x768] sm:$0xff] %vm868, %v7521
        %7778 = vst.msk [vmem:[#allocation3 + $0x770] sm:$0xff] %vm868, %v7522
        %7779 = vst.msk [vmem:[#allocation3 + $0x778] sm:$0xff] %vm868, %v7523
        %7780 = vst.msk [vmem:[#allocation3 + $0x780] sm:$0xff] %vm868, %v7524
        %7781 = vst.msk [vmem:[#allocation3 + $0x788] sm:$0xff] %vm868, %v7525
        %7782 = vst.msk [vmem:[#allocation3 + $0x790] sm:$0xff] %vm868, %v7526
        %7783 = vst.msk [vmem:[#allocation3 + $0x798] sm:$0xff] %vm868, %v7527
        %7784 = vst.msk [vmem:[#allocation3 + $0x7a0] sm:$0xff] %vm868, %v7528
        %7785 = vst.msk [vmem:[#allocation3 + $0x7a8] sm:$0xff] %vm868, %v7529
        %7786 = vst.msk [vmem:[#allocation3 + $0x7b0] sm:$0xff] %vm868, %v7530
        %7787 = vst.msk [vmem:[#allocation3 + $0x7b8] sm:$0xff] %vm868, %v7531
        %7788 = vst.msk [vmem:[#allocation3 + $0x7c0] sm:$0xff] %vm868, %v7532
        %7789 = vst.msk [vmem:[#allocation3 + $0x7c8] sm:$0xff] %vm868, %v7533
        %7790 = vst.msk [vmem:[#allocation3 + $0x7d0] sm:$0xff] %vm868, %v7534
        %7791 = vst.msk [vmem:[#allocation3 + $0x7d8] sm:$0xff] %vm868, %v7535
        %7792 = vst.msk [vmem:[#allocation3 + $0x7e0] sm:$0xff] %vm868, %v7536
        %7793 = vst.msk [vmem:[#allocation3 + $0x7e8] sm:$0xff] %vm868, %v7537
        %7794 = vst.msk [vmem:[#allocation3 + $0x7f0] sm:$0xff] %vm868, %v7538
        %7795 = vst.msk [vmem:[#allocation3 + $0x7f8] sm:$0xff] %vm868, %v7539
        %v7796 = vlaneseq
        %v7797 = vshrl.u32 %v7796, 7
        %v7798 = vsub.s32 0, %v7797
        %v7799 = vrot.slane %v1870, %v7798
        %7801 = vbcast.lane.b32.xlu0 %v7799, 256
        %v7802 = vpop.permute.xlu0 %7801
        %s7804 = sor.u32 256, 8
        %7805 = vbcast.lane.b32.xlu0 %v7799, %s7804
        %v7806 = vpop.permute.xlu0 %7805
        %v7807 = vlaneseq
        %v7808 = vshrl.u32 %v7807, 7
        %v7809 = vsub.s32 1, %v7808
        %v7810 = vrot.slane %v1870, %v7809
        %7812 = vbcast.lane.b32.xlu0 %v7810, 256
        %v7813 = vpop.permute.xlu0 %7812
        %s7815 = sor.u32 256, 8
        %7816 = vbcast.lane.b32.xlu0 %v7810, %s7815
        %v7817 = vpop.permute.xlu0 %7816
        %v7818 = vlaneseq
        %v7819 = vshrl.u32 %v7818, 7
        %v7820 = vsub.s32 2, %v7819
        %v7821 = vrot.slane %v1870, %v7820
        %7823 = vbcast.lane.b32.xlu0 %v7821, 256
        %v7824 = vpop.permute.xlu0 %7823
        %s7826 = sor.u32 256, 8
        %7827 = vbcast.lane.b32.xlu0 %v7821, %s7826
        %v7828 = vpop.permute.xlu0 %7827
        %v7829 = vlaneseq
        %v7830 = vshrl.u32 %v7829, 7
        %v7831 = vsub.s32 3, %v7830
        %v7832 = vrot.slane %v1870, %v7831
        %7834 = vbcast.lane.b32.xlu0 %v7832, 256
        %v7835 = vpop.permute.xlu0 %7834
        %s7837 = sor.u32 256, 8
        %7838 = vbcast.lane.b32.xlu0 %v7832, %s7837
        %v7839 = vpop.permute.xlu0 %7838
        %v7840 = vlaneseq
        %v7841 = vshrl.u32 %v7840, 7
        %v7842 = vsub.s32 4, %v7841
        %v7843 = vrot.slane %v1870, %v7842
        %7845 = vbcast.lane.b32.xlu0 %v7843, 256
        %v7846 = vpop.permute.xlu0 %7845
        %s7848 = sor.u32 256, 8
        %7849 = vbcast.lane.b32.xlu0 %v7843, %s7848
        %v7850 = vpop.permute.xlu0 %7849
        %v7851 = vlaneseq
        %v7852 = vshrl.u32 %v7851, 7
        %v7853 = vsub.s32 5, %v7852
        %v7854 = vrot.slane %v1870, %v7853
        %7856 = vbcast.lane.b32.xlu0 %v7854, 256
        %v7857 = vpop.permute.xlu0 %7856
        %s7859 = sor.u32 256, 8
        %7860 = vbcast.lane.b32.xlu0 %v7854, %s7859
        %v7861 = vpop.permute.xlu0 %7860
        %v7862 = vlaneseq
        %v7863 = vshrl.u32 %v7862, 7
        %v7864 = vsub.s32 6, %v7863
        %v7865 = vrot.slane %v1870, %v7864
        %7867 = vbcast.lane.b32.xlu0 %v7865, 256
        %v7868 = vpop.permute.xlu0 %7867
        %s7870 = sor.u32 256, 8
        %7871 = vbcast.lane.b32.xlu0 %v7865, %s7870
        %v7872 = vpop.permute.xlu0 %7871
        %v7873 = vlaneseq
        %v7874 = vshrl.u32 %v7873, 7
        %v7875 = vsub.s32 7, %v7874
        %v7876 = vrot.slane %v1870, %v7875
        %7878 = vbcast.lane.b32.xlu0 %v7876, 256
        %v7879 = vpop.permute.xlu0 %7878
        %s7881 = sor.u32 256, 8
        %7882 = vbcast.lane.b32.xlu0 %v7876, %s7881
        %v7883 = vpop.permute.xlu0 %7882
        %v7884 = vlaneseq
        %v7885 = vshrl.u32 %v7884, 7
        %v7886 = vsub.s32 0, %v7885
        %v7887 = vrot.slane %v1875, %v7886
        %7889 = vbcast.lane.b32.xlu0 %v7887, 256
        %v7890 = vpop.permute.xlu0 %7889
        %s7892 = sor.u32 256, 8
        %7893 = vbcast.lane.b32.xlu0 %v7887, %s7892
        %v7894 = vpop.permute.xlu0 %7893
        %v7895 = vlaneseq
        %v7896 = vshrl.u32 %v7895, 7
        %v7897 = vsub.s32 1, %v7896
        %v7898 = vrot.slane %v1875, %v7897
        %7900 = vbcast.lane.b32.xlu0 %v7898, 256
        %v7901 = vpop.permute.xlu0 %7900
        %s7903 = sor.u32 256, 8
        %7904 = vbcast.lane.b32.xlu0 %v7898, %s7903
        %v7905 = vpop.permute.xlu0 %7904
        %v7906 = vlaneseq
        %v7907 = vshrl.u32 %v7906, 7
        %v7908 = vsub.s32 2, %v7907
        %v7909 = vrot.slane %v1875, %v7908
        %7911 = vbcast.lane.b32.xlu0 %v7909, 256
        %v7912 = vpop.permute.xlu0 %7911
        %s7914 = sor.u32 256, 8
        %7915 = vbcast.lane.b32.xlu0 %v7909, %s7914
        %v7916 = vpop.permute.xlu0 %7915
        %v7917 = vlaneseq
        %v7918 = vshrl.u32 %v7917, 7
        %v7919 = vsub.s32 3, %v7918
        %v7920 = vrot.slane %v1875, %v7919
        %7922 = vbcast.lane.b32.xlu0 %v7920, 256
        %v7923 = vpop.permute.xlu0 %7922
        %s7925 = sor.u32 256, 8
        %7926 = vbcast.lane.b32.xlu0 %v7920, %s7925
        %v7927 = vpop.permute.xlu0 %7926
        %v7928 = vlaneseq
        %v7929 = vshrl.u32 %v7928, 7
        %v7930 = vsub.s32 4, %v7929
        %v7931 = vrot.slane %v1875, %v7930
        %7933 = vbcast.lane.b32.xlu0 %v7931, 256
        %v7934 = vpop.permute.xlu0 %7933
        %s7936 = sor.u32 256, 8
        %7937 = vbcast.lane.b32.xlu0 %v7931, %s7936
        %v7938 = vpop.permute.xlu0 %7937
        %v7939 = vlaneseq
        %v7940 = vshrl.u32 %v7939, 7
        %v7941 = vsub.s32 5, %v7940
        %v7942 = vrot.slane %v1875, %v7941
        %7944 = vbcast.lane.b32.xlu0 %v7942, 256
        %v7945 = vpop.permute.xlu0 %7944
        %s7947 = sor.u32 256, 8
        %7948 = vbcast.lane.b32.xlu0 %v7942, %s7947
        %v7949 = vpop.permute.xlu0 %7948
        %v7950 = vlaneseq
        %v7951 = vshrl.u32 %v7950, 7
        %v7952 = vsub.s32 6, %v7951
        %v7953 = vrot.slane %v1875, %v7952
        %7955 = vbcast.lane.b32.xlu0 %v7953, 256
        %v7956 = vpop.permute.xlu0 %7955
        %s7958 = sor.u32 256, 8
        %7959 = vbcast.lane.b32.xlu0 %v7953, %s7958
        %v7960 = vpop.permute.xlu0 %7959
        %v7961 = vlaneseq
        %v7962 = vshrl.u32 %v7961, 7
        %v7963 = vsub.s32 7, %v7962
        %v7964 = vrot.slane %v1875, %v7963
        %7966 = vbcast.lane.b32.xlu0 %v7964, 256
        %v7967 = vpop.permute.xlu0 %7966
        %s7969 = sor.u32 256, 8
        %7970 = vbcast.lane.b32.xlu0 %v7964, %s7969
        %v7971 = vpop.permute.xlu0 %7970
        %v7972 = vlaneseq
        %v7973 = vshrl.u32 %v7972, 7
        %v7974 = vsub.s32 0, %v7973
        %v7975 = vrot.slane %v1880, %v7974
        %7977 = vbcast.lane.b32.xlu0 %v7975, 256
        %v7978 = vpop.permute.xlu0 %7977
        %s7980 = sor.u32 256, 8
        %7981 = vbcast.lane.b32.xlu0 %v7975, %s7980
        %v7982 = vpop.permute.xlu0 %7981
        %v7983 = vlaneseq
        %v7984 = vshrl.u32 %v7983, 7
        %v7985 = vsub.s32 1, %v7984
        %v7986 = vrot.slane %v1880, %v7985
        %7988 = vbcast.lane.b32.xlu0 %v7986, 256
        %v7989 = vpop.permute.xlu0 %7988
        %s7991 = sor.u32 256, 8
        %7992 = vbcast.lane.b32.xlu0 %v7986, %s7991
        %v7993 = vpop.permute.xlu0 %7992
        %v7994 = vlaneseq
        %v7995 = vshrl.u32 %v7994, 7
        %v7996 = vsub.s32 2, %v7995
        %v7997 = vrot.slane %v1880, %v7996
        %7999 = vbcast.lane.b32.xlu0 %v7997, 256
        %v8000 = vpop.permute.xlu0 %7999
        %s8002 = sor.u32 256, 8
        %8003 = vbcast.lane.b32.xlu0 %v7997, %s8002
        %v8004 = vpop.permute.xlu0 %8003
        %v8005 = vlaneseq
        %v8006 = vshrl.u32 %v8005, 7
        %v8007 = vsub.s32 3, %v8006
        %v8008 = vrot.slane %v1880, %v8007
        %8010 = vbcast.lane.b32.xlu0 %v8008, 256
        %v8011 = vpop.permute.xlu0 %8010
        %s8013 = sor.u32 256, 8
        %8014 = vbcast.lane.b32.xlu0 %v8008, %s8013
        %v8015 = vpop.permute.xlu0 %8014
        %v8016 = vlaneseq
        %v8017 = vshrl.u32 %v8016, 7
        %v8018 = vsub.s32 4, %v8017
        %v8019 = vrot.slane %v1880, %v8018
        %8021 = vbcast.lane.b32.xlu0 %v8019, 256
        %v8022 = vpop.permute.xlu0 %8021
        %s8024 = sor.u32 256, 8
        %8025 = vbcast.lane.b32.xlu0 %v8019, %s8024
        %v8026 = vpop.permute.xlu0 %8025
        %v8027 = vlaneseq
        %v8028 = vshrl.u32 %v8027, 7
        %v8029 = vsub.s32 5, %v8028
        %v8030 = vrot.slane %v1880, %v8029
        %8032 = vbcast.lane.b32.xlu0 %v8030, 256
        %v8033 = vpop.permute.xlu0 %8032
        %s8035 = sor.u32 256, 8
        %8036 = vbcast.lane.b32.xlu0 %v8030, %s8035
        %v8037 = vpop.permute.xlu0 %8036
        %v8038 = vlaneseq
        %v8039 = vshrl.u32 %v8038, 7
        %v8040 = vsub.s32 6, %v8039
        %v8041 = vrot.slane %v1880, %v8040
        %8043 = vbcast.lane.b32.xlu0 %v8041, 256
        %v8044 = vpop.permute.xlu0 %8043
        %s8046 = sor.u32 256, 8
        %8047 = vbcast.lane.b32.xlu0 %v8041, %s8046
        %v8048 = vpop.permute.xlu0 %8047
        %v8049 = vlaneseq
        %v8050 = vshrl.u32 %v8049, 7
        %v8051 = vsub.s32 7, %v8050
        %v8052 = vrot.slane %v1880, %v8051
        %8054 = vbcast.lane.b32.xlu0 %v8052, 256
        %v8055 = vpop.permute.xlu0 %8054
        %s8057 = sor.u32 256, 8
        %8058 = vbcast.lane.b32.xlu0 %v8052, %s8057
        %v8059 = vpop.permute.xlu0 %8058
        %v8060 = vlaneseq
        %v8061 = vshrl.u32 %v8060, 7
        %v8062 = vsub.s32 0, %v8061
        %v8063 = vrot.slane %v1885, %v8062
        %8065 = vbcast.lane.b32.xlu0 %v8063, 256
        %v8066 = vpop.permute.xlu0 %8065
        %s8068 = sor.u32 256, 8
        %8069 = vbcast.lane.b32.xlu0 %v8063, %s8068
        %v8070 = vpop.permute.xlu0 %8069
        %v8071 = vlaneseq
        %v8072 = vshrl.u32 %v8071, 7
        %v8073 = vsub.s32 1, %v8072
        %v8074 = vrot.slane %v1885, %v8073
        %8076 = vbcast.lane.b32.xlu0 %v8074, 256
        %v8077 = vpop.permute.xlu0 %8076
        %s8079 = sor.u32 256, 8
        %8080 = vbcast.lane.b32.xlu0 %v8074, %s8079
        %v8081 = vpop.permute.xlu0 %8080
        %v8082 = vlaneseq
        %v8083 = vshrl.u32 %v8082, 7
        %v8084 = vsub.s32 2, %v8083
        %v8085 = vrot.slane %v1885, %v8084
        %8087 = vbcast.lane.b32.xlu0 %v8085, 256
        %v8088 = vpop.permute.xlu0 %8087
        %s8090 = sor.u32 256, 8
        %8091 = vbcast.lane.b32.xlu0 %v8085, %s8090
        %v8092 = vpop.permute.xlu0 %8091
        %v8093 = vlaneseq
        %v8094 = vshrl.u32 %v8093, 7
        %v8095 = vsub.s32 3, %v8094
        %v8096 = vrot.slane %v1885, %v8095
        %8098 = vbcast.lane.b32.xlu0 %v8096, 256
        %v8099 = vpop.permute.xlu0 %8098
        %s8101 = sor.u32 256, 8
        %8102 = vbcast.lane.b32.xlu0 %v8096, %s8101
        %v8103 = vpop.permute.xlu0 %8102
        %v8104 = vlaneseq
        %v8105 = vshrl.u32 %v8104, 7
        %v8106 = vsub.s32 4, %v8105
        %v8107 = vrot.slane %v1885, %v8106
        %8109 = vbcast.lane.b32.xlu0 %v8107, 256
        %v8110 = vpop.permute.xlu0 %8109
        %s8112 = sor.u32 256, 8
        %8113 = vbcast.lane.b32.xlu0 %v8107, %s8112
        %v8114 = vpop.permute.xlu0 %8113
        %v8115 = vlaneseq
        %v8116 = vshrl.u32 %v8115, 7
        %v8117 = vsub.s32 5, %v8116
        %v8118 = vrot.slane %v1885, %v8117
        %8120 = vbcast.lane.b32.xlu0 %v8118, 256
        %v8121 = vpop.permute.xlu0 %8120
        %s8123 = sor.u32 256, 8
        %8124 = vbcast.lane.b32.xlu0 %v8118, %s8123
        %v8125 = vpop.permute.xlu0 %8124
        %v8126 = vlaneseq
        %v8127 = vshrl.u32 %v8126, 7
        %v8128 = vsub.s32 6, %v8127
        %v8129 = vrot.slane %v1885, %v8128
        %8131 = vbcast.lane.b32.xlu0 %v8129, 256
        %v8132 = vpop.permute.xlu0 %8131
        %s8134 = sor.u32 256, 8
        %8135 = vbcast.lane.b32.xlu0 %v8129, %s8134
        %v8136 = vpop.permute.xlu0 %8135
        %v8137 = vlaneseq
        %v8138 = vshrl.u32 %v8137, 7
        %v8139 = vsub.s32 7, %v8138
        %v8140 = vrot.slane %v1885, %v8139
        %8142 = vbcast.lane.b32.xlu0 %v8140, 256
        %v8143 = vpop.permute.xlu0 %8142
        %s8145 = sor.u32 256, 8
        %8146 = vbcast.lane.b32.xlu0 %v8140, %s8145
        %v8147 = vpop.permute.xlu0 %8146
        %v8148 = vlaneseq
        %v8149 = vshrl.u32 %v8148, 7
        %v8150 = vsub.s32 0, %v8149
        %v8151 = vrot.slane %v1890, %v8150
        %8153 = vbcast.lane.b32.xlu0 %v8151, 256
        %v8154 = vpop.permute.xlu0 %8153
        %s8156 = sor.u32 256, 8
        %8157 = vbcast.lane.b32.xlu0 %v8151, %s8156
        %v8158 = vpop.permute.xlu0 %8157
        %v8159 = vlaneseq
        %v8160 = vshrl.u32 %v8159, 7
        %v8161 = vsub.s32 1, %v8160
        %v8162 = vrot.slane %v1890, %v8161
        %8164 = vbcast.lane.b32.xlu0 %v8162, 256
        %v8165 = vpop.permute.xlu0 %8164
        %s8167 = sor.u32 256, 8
        %8168 = vbcast.lane.b32.xlu0 %v8162, %s8167
        %v8169 = vpop.permute.xlu0 %8168
        %v8170 = vlaneseq
        %v8171 = vshrl.u32 %v8170, 7
        %v8172 = vsub.s32 2, %v8171
        %v8173 = vrot.slane %v1890, %v8172
        %8175 = vbcast.lane.b32.xlu0 %v8173, 256
        %v8176 = vpop.permute.xlu0 %8175
        %s8178 = sor.u32 256, 8
        %8179 = vbcast.lane.b32.xlu0 %v8173, %s8178
        %v8180 = vpop.permute.xlu0 %8179
        %v8181 = vlaneseq
        %v8182 = vshrl.u32 %v8181, 7
        %v8183 = vsub.s32 3, %v8182
        %v8184 = vrot.slane %v1890, %v8183
        %8186 = vbcast.lane.b32.xlu0 %v8184, 256
        %v8187 = vpop.permute.xlu0 %8186
        %s8189 = sor.u32 256, 8
        %8190 = vbcast.lane.b32.xlu0 %v8184, %s8189
        %v8191 = vpop.permute.xlu0 %8190
        %v8192 = vlaneseq
        %v8193 = vshrl.u32 %v8192, 7
        %v8194 = vsub.s32 4, %v8193
        %v8195 = vrot.slane %v1890, %v8194
        %8197 = vbcast.lane.b32.xlu0 %v8195, 256
        %v8198 = vpop.permute.xlu0 %8197
        %s8200 = sor.u32 256, 8
        %8201 = vbcast.lane.b32.xlu0 %v8195, %s8200
        %v8202 = vpop.permute.xlu0 %8201
        %v8203 = vlaneseq
        %v8204 = vshrl.u32 %v8203, 7
        %v8205 = vsub.s32 5, %v8204
        %v8206 = vrot.slane %v1890, %v8205
        %8208 = vbcast.lane.b32.xlu0 %v8206, 256
        %v8209 = vpop.permute.xlu0 %8208
        %s8211 = sor.u32 256, 8
        %8212 = vbcast.lane.b32.xlu0 %v8206, %s8211
        %v8213 = vpop.permute.xlu0 %8212
        %v8214 = vlaneseq
        %v8215 = vshrl.u32 %v8214, 7
        %v8216 = vsub.s32 6, %v8215
        %v8217 = vrot.slane %v1890, %v8216
        %8219 = vbcast.lane.b32.xlu0 %v8217, 256
        %v8220 = vpop.permute.xlu0 %8219
        %s8222 = sor.u32 256, 8
        %8223 = vbcast.lane.b32.xlu0 %v8217, %s8222
        %v8224 = vpop.permute.xlu0 %8223
        %v8225 = vlaneseq
        %v8226 = vshrl.u32 %v8225, 7
        %v8227 = vsub.s32 7, %v8226
        %v8228 = vrot.slane %v1890, %v8227
        %8230 = vbcast.lane.b32.xlu0 %v8228, 256
        %v8231 = vpop.permute.xlu0 %8230
        %s8233 = sor.u32 256, 8
        %8234 = vbcast.lane.b32.xlu0 %v8228, %s8233
        %v8235 = vpop.permute.xlu0 %8234
        %v8236 = vlaneseq
        %v8237 = vshrl.u32 %v8236, 7
        %v8238 = vsub.s32 0, %v8237
        %v8239 = vrot.slane %v1895, %v8238
        %8241 = vbcast.lane.b32.xlu0 %v8239, 256
        %v8242 = vpop.permute.xlu0 %8241
        %s8244 = sor.u32 256, 8
        %8245 = vbcast.lane.b32.xlu0 %v8239, %s8244
        %v8246 = vpop.permute.xlu0 %8245
        %v8247 = vlaneseq
        %v8248 = vshrl.u32 %v8247, 7
        %v8249 = vsub.s32 1, %v8248
        %v8250 = vrot.slane %v1895, %v8249
        %8252 = vbcast.lane.b32.xlu0 %v8250, 256
        %v8253 = vpop.permute.xlu0 %8252
        %s8255 = sor.u32 256, 8
        %8256 = vbcast.lane.b32.xlu0 %v8250, %s8255
        %v8257 = vpop.permute.xlu0 %8256
        %v8258 = vlaneseq
        %v8259 = vshrl.u32 %v8258, 7
        %v8260 = vsub.s32 2, %v8259
        %v8261 = vrot.slane %v1895, %v8260
        %8263 = vbcast.lane.b32.xlu0 %v8261, 256
        %v8264 = vpop.permute.xlu0 %8263
        %s8266 = sor.u32 256, 8
        %8267 = vbcast.lane.b32.xlu0 %v8261, %s8266
        %v8268 = vpop.permute.xlu0 %8267
        %v8269 = vlaneseq
        %v8270 = vshrl.u32 %v8269, 7
        %v8271 = vsub.s32 3, %v8270
        %v8272 = vrot.slane %v1895, %v8271
        %8274 = vbcast.lane.b32.xlu0 %v8272, 256
        %v8275 = vpop.permute.xlu0 %8274
        %s8277 = sor.u32 256, 8
        %8278 = vbcast.lane.b32.xlu0 %v8272, %s8277
        %v8279 = vpop.permute.xlu0 %8278
        %v8280 = vlaneseq
        %v8281 = vshrl.u32 %v8280, 7
        %v8282 = vsub.s32 4, %v8281
        %v8283 = vrot.slane %v1895, %v8282
        %8285 = vbcast.lane.b32.xlu0 %v8283, 256
        %v8286 = vpop.permute.xlu0 %8285
        %s8288 = sor.u32 256, 8
        %8289 = vbcast.lane.b32.xlu0 %v8283, %s8288
        %v8290 = vpop.permute.xlu0 %8289
        %v8291 = vlaneseq
        %v8292 = vshrl.u32 %v8291, 7
        %v8293 = vsub.s32 5, %v8292
        %v8294 = vrot.slane %v1895, %v8293
        %8296 = vbcast.lane.b32.xlu0 %v8294, 256
        %v8297 = vpop.permute.xlu0 %8296
        %s8299 = sor.u32 256, 8
        %8300 = vbcast.lane.b32.xlu0 %v8294, %s8299
        %v8301 = vpop.permute.xlu0 %8300
        %v8302 = vlaneseq
        %v8303 = vshrl.u32 %v8302, 7
        %v8304 = vsub.s32 6, %v8303
        %v8305 = vrot.slane %v1895, %v8304
        %8307 = vbcast.lane.b32.xlu0 %v8305, 256
        %v8308 = vpop.permute.xlu0 %8307
        %s8310 = sor.u32 256, 8
        %8311 = vbcast.lane.b32.xlu0 %v8305, %s8310
        %v8312 = vpop.permute.xlu0 %8311
        %v8313 = vlaneseq
        %v8314 = vshrl.u32 %v8313, 7
        %v8315 = vsub.s32 7, %v8314
        %v8316 = vrot.slane %v1895, %v8315
        %8318 = vbcast.lane.b32.xlu0 %v8316, 256
        %v8319 = vpop.permute.xlu0 %8318
        %s8321 = sor.u32 256, 8
        %8322 = vbcast.lane.b32.xlu0 %v8316, %s8321
        %v8323 = vpop.permute.xlu0 %8322
        %v8324 = vlaneseq
        %v8325 = vshrl.u32 %v8324, 7
        %v8326 = vsub.s32 0, %v8325
        %v8327 = vrot.slane %v1900, %v8326
        %8329 = vbcast.lane.b32.xlu0 %v8327, 256
        %v8330 = vpop.permute.xlu0 %8329
        %s8332 = sor.u32 256, 8
        %8333 = vbcast.lane.b32.xlu0 %v8327, %s8332
        %v8334 = vpop.permute.xlu0 %8333
        %v8335 = vlaneseq
        %v8336 = vshrl.u32 %v8335, 7
        %v8337 = vsub.s32 1, %v8336
        %v8338 = vrot.slane %v1900, %v8337
        %8340 = vbcast.lane.b32.xlu0 %v8338, 256
        %v8341 = vpop.permute.xlu0 %8340
        %s8343 = sor.u32 256, 8
        %8344 = vbcast.lane.b32.xlu0 %v8338, %s8343
        %v8345 = vpop.permute.xlu0 %8344
        %v8346 = vlaneseq
        %v8347 = vshrl.u32 %v8346, 7
        %v8348 = vsub.s32 2, %v8347
        %v8349 = vrot.slane %v1900, %v8348
        %8351 = vbcast.lane.b32.xlu0 %v8349, 256
        %v8352 = vpop.permute.xlu0 %8351
        %s8354 = sor.u32 256, 8
        %8355 = vbcast.lane.b32.xlu0 %v8349, %s8354
        %v8356 = vpop.permute.xlu0 %8355
        %v8357 = vlaneseq
        %v8358 = vshrl.u32 %v8357, 7
        %v8359 = vsub.s32 3, %v8358
        %v8360 = vrot.slane %v1900, %v8359
        %8362 = vbcast.lane.b32.xlu0 %v8360, 256
        %v8363 = vpop.permute.xlu0 %8362
        %s8365 = sor.u32 256, 8
        %8366 = vbcast.lane.b32.xlu0 %v8360, %s8365
        %v8367 = vpop.permute.xlu0 %8366
        %v8368 = vlaneseq
        %v8369 = vshrl.u32 %v8368, 7
        %v8370 = vsub.s32 4, %v8369
        %v8371 = vrot.slane %v1900, %v8370
        %8373 = vbcast.lane.b32.xlu0 %v8371, 256
        %v8374 = vpop.permute.xlu0 %8373
        %s8376 = sor.u32 256, 8
        %8377 = vbcast.lane.b32.xlu0 %v8371, %s8376
        %v8378 = vpop.permute.xlu0 %8377
        %v8379 = vlaneseq
        %v8380 = vshrl.u32 %v8379, 7
        %v8381 = vsub.s32 5, %v8380
        %v8382 = vrot.slane %v1900, %v8381
        %8384 = vbcast.lane.b32.xlu0 %v8382, 256
        %v8385 = vpop.permute.xlu0 %8384
        %s8387 = sor.u32 256, 8
        %8388 = vbcast.lane.b32.xlu0 %v8382, %s8387
        %v8389 = vpop.permute.xlu0 %8388
        %v8390 = vlaneseq
        %v8391 = vshrl.u32 %v8390, 7
        %v8392 = vsub.s32 6, %v8391
        %v8393 = vrot.slane %v1900, %v8392
        %8395 = vbcast.lane.b32.xlu0 %v8393, 256
        %v8396 = vpop.permute.xlu0 %8395
        %s8398 = sor.u32 256, 8
        %8399 = vbcast.lane.b32.xlu0 %v8393, %s8398
        %v8400 = vpop.permute.xlu0 %8399
        %v8401 = vlaneseq
        %v8402 = vshrl.u32 %v8401, 7
        %v8403 = vsub.s32 7, %v8402
        %v8404 = vrot.slane %v1900, %v8403
        %8406 = vbcast.lane.b32.xlu0 %v8404, 256
        %v8407 = vpop.permute.xlu0 %8406
        %s8409 = sor.u32 256, 8
        %8410 = vbcast.lane.b32.xlu0 %v8404, %s8409
        %v8411 = vpop.permute.xlu0 %8410
        %v8412 = vlaneseq
        %v8413 = vshrl.u32 %v8412, 7
        %v8414 = vsub.s32 0, %v8413
        %v8415 = vrot.slane %v1905, %v8414
        %8417 = vbcast.lane.b32.xlu0 %v8415, 256
        %v8418 = vpop.permute.xlu0 %8417
        %s8420 = sor.u32 256, 8
        %8421 = vbcast.lane.b32.xlu0 %v8415, %s8420
        %v8422 = vpop.permute.xlu0 %8421
        %v8423 = vlaneseq
        %v8424 = vshrl.u32 %v8423, 7
        %v8425 = vsub.s32 1, %v8424
        %v8426 = vrot.slane %v1905, %v8425
        %8428 = vbcast.lane.b32.xlu0 %v8426, 256
        %v8429 = vpop.permute.xlu0 %8428
        %s8431 = sor.u32 256, 8
        %8432 = vbcast.lane.b32.xlu0 %v8426, %s8431
        %v8433 = vpop.permute.xlu0 %8432
        %v8434 = vlaneseq
        %v8435 = vshrl.u32 %v8434, 7
        %v8436 = vsub.s32 2, %v8435
        %v8437 = vrot.slane %v1905, %v8436
        %8439 = vbcast.lane.b32.xlu0 %v8437, 256
        %v8440 = vpop.permute.xlu0 %8439
        %s8442 = sor.u32 256, 8
        %8443 = vbcast.lane.b32.xlu0 %v8437, %s8442
        %v8444 = vpop.permute.xlu0 %8443
        %v8445 = vlaneseq
        %v8446 = vshrl.u32 %v8445, 7
        %v8447 = vsub.s32 3, %v8446
        %v8448 = vrot.slane %v1905, %v8447
        %8450 = vbcast.lane.b32.xlu0 %v8448, 256
        %v8451 = vpop.permute.xlu0 %8450
        %s8453 = sor.u32 256, 8
        %8454 = vbcast.lane.b32.xlu0 %v8448, %s8453
        %v8455 = vpop.permute.xlu0 %8454
        %v8456 = vlaneseq
        %v8457 = vshrl.u32 %v8456, 7
        %v8458 = vsub.s32 4, %v8457
        %v8459 = vrot.slane %v1905, %v8458
        %8461 = vbcast.lane.b32.xlu0 %v8459, 256
        %v8462 = vpop.permute.xlu0 %8461
        %s8464 = sor.u32 256, 8
        %8465 = vbcast.lane.b32.xlu0 %v8459, %s8464
        %v8466 = vpop.permute.xlu0 %8465
        %v8467 = vlaneseq
        %v8468 = vshrl.u32 %v8467, 7
        %v8469 = vsub.s32 5, %v8468
        %v8470 = vrot.slane %v1905, %v8469
        %8472 = vbcast.lane.b32.xlu0 %v8470, 256
        %v8473 = vpop.permute.xlu0 %8472
        %s8475 = sor.u32 256, 8
        %8476 = vbcast.lane.b32.xlu0 %v8470, %s8475
        %v8477 = vpop.permute.xlu0 %8476
        %v8478 = vlaneseq
        %v8479 = vshrl.u32 %v8478, 7
        %v8480 = vsub.s32 6, %v8479
        %v8481 = vrot.slane %v1905, %v8480
        %8483 = vbcast.lane.b32.xlu0 %v8481, 256
        %v8484 = vpop.permute.xlu0 %8483
        %s8486 = sor.u32 256, 8
        %8487 = vbcast.lane.b32.xlu0 %v8481, %s8486
        %v8488 = vpop.permute.xlu0 %8487
        %v8489 = vlaneseq
        %v8490 = vshrl.u32 %v8489, 7
        %v8491 = vsub.s32 7, %v8490
        %v8492 = vrot.slane %v1905, %v8491
        %8494 = vbcast.lane.b32.xlu0 %v8492, 256
        %v8495 = vpop.permute.xlu0 %8494
        %s8497 = sor.u32 256, 8
        %8498 = vbcast.lane.b32.xlu0 %v8492, %s8497
        %v8499 = vpop.permute.xlu0 %8498
        %v8500 = vlaneseq
        %v8501 = vshrl.u32 %v8500, 7
        %v8502 = vsub.s32 0, %v8501
        %v8503 = vrot.slane %v1910, %v8502
        %8505 = vbcast.lane.b32.xlu0 %v8503, 256
        %v8506 = vpop.permute.xlu0 %8505
        %s8508 = sor.u32 256, 8
        %8509 = vbcast.lane.b32.xlu0 %v8503, %s8508
        %v8510 = vpop.permute.xlu0 %8509
        %v8511 = vlaneseq
        %v8512 = vshrl.u32 %v8511, 7
        %v8513 = vsub.s32 1, %v8512
        %v8514 = vrot.slane %v1910, %v8513
        %8516 = vbcast.lane.b32.xlu0 %v8514, 256
        %v8517 = vpop.permute.xlu0 %8516
        %s8519 = sor.u32 256, 8
        %8520 = vbcast.lane.b32.xlu0 %v8514, %s8519
        %v8521 = vpop.permute.xlu0 %8520
        %v8522 = vlaneseq
        %v8523 = vshrl.u32 %v8522, 7
        %v8524 = vsub.s32 2, %v8523
        %v8525 = vrot.slane %v1910, %v8524
        %8527 = vbcast.lane.b32.xlu0 %v8525, 256
        %v8528 = vpop.permute.xlu0 %8527
        %s8530 = sor.u32 256, 8
        %8531 = vbcast.lane.b32.xlu0 %v8525, %s8530
        %v8532 = vpop.permute.xlu0 %8531
        %v8533 = vlaneseq
        %v8534 = vshrl.u32 %v8533, 7
        %v8535 = vsub.s32 3, %v8534
        %v8536 = vrot.slane %v1910, %v8535
        %8538 = vbcast.lane.b32.xlu0 %v8536, 256
        %v8539 = vpop.permute.xlu0 %8538
        %s8541 = sor.u32 256, 8
        %8542 = vbcast.lane.b32.xlu0 %v8536, %s8541
        %v8543 = vpop.permute.xlu0 %8542
        %v8544 = vlaneseq
        %v8545 = vshrl.u32 %v8544, 7
        %v8546 = vsub.s32 4, %v8545
        %v8547 = vrot.slane %v1910, %v8546
        %8549 = vbcast.lane.b32.xlu0 %v8547, 256
        %v8550 = vpop.permute.xlu0 %8549
        %s8552 = sor.u32 256, 8
        %8553 = vbcast.lane.b32.xlu0 %v8547, %s8552
        %v8554 = vpop.permute.xlu0 %8553
        %v8555 = vlaneseq
        %v8556 = vshrl.u32 %v8555, 7
        %v8557 = vsub.s32 5, %v8556
        %v8558 = vrot.slane %v1910, %v8557
        %8560 = vbcast.lane.b32.xlu0 %v8558, 256
        %v8561 = vpop.permute.xlu0 %8560
        %s8563 = sor.u32 256, 8
        %8564 = vbcast.lane.b32.xlu0 %v8558, %s8563
        %v8565 = vpop.permute.xlu0 %8564
        %v8566 = vlaneseq
        %v8567 = vshrl.u32 %v8566, 7
        %v8568 = vsub.s32 6, %v8567
        %v8569 = vrot.slane %v1910, %v8568
        %8571 = vbcast.lane.b32.xlu0 %v8569, 256
        %v8572 = vpop.permute.xlu0 %8571
        %s8574 = sor.u32 256, 8
        %8575 = vbcast.lane.b32.xlu0 %v8569, %s8574
        %v8576 = vpop.permute.xlu0 %8575
        %v8577 = vlaneseq
        %v8578 = vshrl.u32 %v8577, 7
        %v8579 = vsub.s32 7, %v8578
        %v8580 = vrot.slane %v1910, %v8579
        %8582 = vbcast.lane.b32.xlu0 %v8580, 256
        %v8583 = vpop.permute.xlu0 %8582
        %s8585 = sor.u32 256, 8
        %8586 = vbcast.lane.b32.xlu0 %v8580, %s8585
        %v8587 = vpop.permute.xlu0 %8586
        %v8588 = vlaneseq
        %v8589 = vshrl.u32 %v8588, 7
        %v8590 = vsub.s32 0, %v8589
        %v8591 = vrot.slane %v1915, %v8590
        %8593 = vbcast.lane.b32.xlu0 %v8591, 256
        %v8594 = vpop.permute.xlu0 %8593
        %s8596 = sor.u32 256, 8
        %8597 = vbcast.lane.b32.xlu0 %v8591, %s8596
        %v8598 = vpop.permute.xlu0 %8597
        %v8599 = vlaneseq
        %v8600 = vshrl.u32 %v8599, 7
        %v8601 = vsub.s32 1, %v8600
        %v8602 = vrot.slane %v1915, %v8601
        %8604 = vbcast.lane.b32.xlu0 %v8602, 256
        %v8605 = vpop.permute.xlu0 %8604
        %s8607 = sor.u32 256, 8
        %8608 = vbcast.lane.b32.xlu0 %v8602, %s8607
        %v8609 = vpop.permute.xlu0 %8608
        %v8610 = vlaneseq
        %v8611 = vshrl.u32 %v8610, 7
        %v8612 = vsub.s32 2, %v8611
        %v8613 = vrot.slane %v1915, %v8612
        %8615 = vbcast.lane.b32.xlu0 %v8613, 256
        %v8616 = vpop.permute.xlu0 %8615
        %s8618 = sor.u32 256, 8
        %8619 = vbcast.lane.b32.xlu0 %v8613, %s8618
        %v8620 = vpop.permute.xlu0 %8619
        %v8621 = vlaneseq
        %v8622 = vshrl.u32 %v8621, 7
        %v8623 = vsub.s32 3, %v8622
        %v8624 = vrot.slane %v1915, %v8623
        %8626 = vbcast.lane.b32.xlu0 %v8624, 256
        %v8627 = vpop.permute.xlu0 %8626
        %s8629 = sor.u32 256, 8
        %8630 = vbcast.lane.b32.xlu0 %v8624, %s8629
        %v8631 = vpop.permute.xlu0 %8630
        %v8632 = vlaneseq
        %v8633 = vshrl.u32 %v8632, 7
        %v8634 = vsub.s32 4, %v8633
        %v8635 = vrot.slane %v1915, %v8634
        %8637 = vbcast.lane.b32.xlu0 %v8635, 256
        %v8638 = vpop.permute.xlu0 %8637
        %s8640 = sor.u32 256, 8
        %8641 = vbcast.lane.b32.xlu0 %v8635, %s8640
        %v8642 = vpop.permute.xlu0 %8641
        %v8643 = vlaneseq
        %v8644 = vshrl.u32 %v8643, 7
        %v8645 = vsub.s32 5, %v8644
        %v8646 = vrot.slane %v1915, %v8645
        %8648 = vbcast.lane.b32.xlu0 %v8646, 256
        %v8649 = vpop.permute.xlu0 %8648
        %s8651 = sor.u32 256, 8
        %8652 = vbcast.lane.b32.xlu0 %v8646, %s8651
        %v8653 = vpop.permute.xlu0 %8652
        %v8654 = vlaneseq
        %v8655 = vshrl.u32 %v8654, 7
        %v8656 = vsub.s32 6, %v8655
        %v8657 = vrot.slane %v1915, %v8656
        %8659 = vbcast.lane.b32.xlu0 %v8657, 256
        %v8660 = vpop.permute.xlu0 %8659
        %s8662 = sor.u32 256, 8
        %8663 = vbcast.lane.b32.xlu0 %v8657, %s8662
        %v8664 = vpop.permute.xlu0 %8663
        %v8665 = vlaneseq
        %v8666 = vshrl.u32 %v8665, 7
        %v8667 = vsub.s32 7, %v8666
        %v8668 = vrot.slane %v1915, %v8667
        %8670 = vbcast.lane.b32.xlu0 %v8668, 256
        %v8671 = vpop.permute.xlu0 %8670
        %s8673 = sor.u32 256, 8
        %8674 = vbcast.lane.b32.xlu0 %v8668, %s8673
        %v8675 = vpop.permute.xlu0 %8674
        %v8676 = vlaneseq
        %v8677 = vshrl.u32 %v8676, 7
        %v8678 = vsub.s32 0, %v8677
        %v8679 = vrot.slane %v1920, %v8678
        %8681 = vbcast.lane.b32.xlu0 %v8679, 256
        %v8682 = vpop.permute.xlu0 %8681
        %s8684 = sor.u32 256, 8
        %8685 = vbcast.lane.b32.xlu0 %v8679, %s8684
        %v8686 = vpop.permute.xlu0 %8685
        %v8687 = vlaneseq
        %v8688 = vshrl.u32 %v8687, 7
        %v8689 = vsub.s32 1, %v8688
        %v8690 = vrot.slane %v1920, %v8689
        %8692 = vbcast.lane.b32.xlu0 %v8690, 256
        %v8693 = vpop.permute.xlu0 %8692
        %s8695 = sor.u32 256, 8
        %8696 = vbcast.lane.b32.xlu0 %v8690, %s8695
        %v8697 = vpop.permute.xlu0 %8696
        %v8698 = vlaneseq
        %v8699 = vshrl.u32 %v8698, 7
        %v8700 = vsub.s32 2, %v8699
        %v8701 = vrot.slane %v1920, %v8700
        %8703 = vbcast.lane.b32.xlu0 %v8701, 256
        %v8704 = vpop.permute.xlu0 %8703
        %s8706 = sor.u32 256, 8
        %8707 = vbcast.lane.b32.xlu0 %v8701, %s8706
        %v8708 = vpop.permute.xlu0 %8707
        %v8709 = vlaneseq
        %v8710 = vshrl.u32 %v8709, 7
        %v8711 = vsub.s32 3, %v8710
        %v8712 = vrot.slane %v1920, %v8711
        %8714 = vbcast.lane.b32.xlu0 %v8712, 256
        %v8715 = vpop.permute.xlu0 %8714
        %s8717 = sor.u32 256, 8
        %8718 = vbcast.lane.b32.xlu0 %v8712, %s8717
        %v8719 = vpop.permute.xlu0 %8718
        %v8720 = vlaneseq
        %v8721 = vshrl.u32 %v8720, 7
        %v8722 = vsub.s32 4, %v8721
        %v8723 = vrot.slane %v1920, %v8722
        %8725 = vbcast.lane.b32.xlu0 %v8723, 256
        %v8726 = vpop.permute.xlu0 %8725
        %s8728 = sor.u32 256, 8
        %8729 = vbcast.lane.b32.xlu0 %v8723, %s8728
        %v8730 = vpop.permute.xlu0 %8729
        %v8731 = vlaneseq
        %v8732 = vshrl.u32 %v8731, 7
        %v8733 = vsub.s32 5, %v8732
        %v8734 = vrot.slane %v1920, %v8733
        %8736 = vbcast.lane.b32.xlu0 %v8734, 256
        %v8737 = vpop.permute.xlu0 %8736
        %s8739 = sor.u32 256, 8
        %8740 = vbcast.lane.b32.xlu0 %v8734, %s8739
        %v8741 = vpop.permute.xlu0 %8740
        %v8742 = vlaneseq
        %v8743 = vshrl.u32 %v8742, 7
        %v8744 = vsub.s32 6, %v8743
        %v8745 = vrot.slane %v1920, %v8744
        %8747 = vbcast.lane.b32.xlu0 %v8745, 256
        %v8748 = vpop.permute.xlu0 %8747
        %s8750 = sor.u32 256, 8
        %8751 = vbcast.lane.b32.xlu0 %v8745, %s8750
        %v8752 = vpop.permute.xlu0 %8751
        %v8753 = vlaneseq
        %v8754 = vshrl.u32 %v8753, 7
        %v8755 = vsub.s32 7, %v8754
        %v8756 = vrot.slane %v1920, %v8755
        %8758 = vbcast.lane.b32.xlu0 %v8756, 256
        %v8759 = vpop.permute.xlu0 %8758
        %s8761 = sor.u32 256, 8
        %8762 = vbcast.lane.b32.xlu0 %v8756, %s8761
        %v8763 = vpop.permute.xlu0 %8762
        %v8764 = vlaneseq
        %v8765 = vshrl.u32 %v8764, 7
        %v8766 = vsub.s32 0, %v8765
        %v8767 = vrot.slane %v1925, %v8766
        %8769 = vbcast.lane.b32.xlu0 %v8767, 256
        %v8770 = vpop.permute.xlu0 %8769
        %s8772 = sor.u32 256, 8
        %8773 = vbcast.lane.b32.xlu0 %v8767, %s8772
        %v8774 = vpop.permute.xlu0 %8773
        %v8775 = vlaneseq
        %v8776 = vshrl.u32 %v8775, 7
        %v8777 = vsub.s32 1, %v8776
        %v8778 = vrot.slane %v1925, %v8777
        %8780 = vbcast.lane.b32.xlu0 %v8778, 256
        %v8781 = vpop.permute.xlu0 %8780
        %s8783 = sor.u32 256, 8
        %8784 = vbcast.lane.b32.xlu0 %v8778, %s8783
        %v8785 = vpop.permute.xlu0 %8784
        %v8786 = vlaneseq
        %v8787 = vshrl.u32 %v8786, 7
        %v8788 = vsub.s32 2, %v8787
        %v8789 = vrot.slane %v1925, %v8788
        %8791 = vbcast.lane.b32.xlu0 %v8789, 256
        %v8792 = vpop.permute.xlu0 %8791
        %s8794 = sor.u32 256, 8
        %8795 = vbcast.lane.b32.xlu0 %v8789, %s8794
        %v8796 = vpop.permute.xlu0 %8795
        %v8797 = vlaneseq
        %v8798 = vshrl.u32 %v8797, 7
        %v8799 = vsub.s32 3, %v8798
        %v8800 = vrot.slane %v1925, %v8799
        %8802 = vbcast.lane.b32.xlu0 %v8800, 256
        %v8803 = vpop.permute.xlu0 %8802
        %s8805 = sor.u32 256, 8
        %8806 = vbcast.lane.b32.xlu0 %v8800, %s8805
        %v8807 = vpop.permute.xlu0 %8806
        %v8808 = vlaneseq
        %v8809 = vshrl.u32 %v8808, 7
        %v8810 = vsub.s32 4, %v8809
        %v8811 = vrot.slane %v1925, %v8810
        %8813 = vbcast.lane.b32.xlu0 %v8811, 256
        %v8814 = vpop.permute.xlu0 %8813
        %s8816 = sor.u32 256, 8
        %8817 = vbcast.lane.b32.xlu0 %v8811, %s8816
        %v8818 = vpop.permute.xlu0 %8817
        %v8819 = vlaneseq
        %v8820 = vshrl.u32 %v8819, 7
        %v8821 = vsub.s32 5, %v8820
        %v8822 = vrot.slane %v1925, %v8821
        %8824 = vbcast.lane.b32.xlu0 %v8822, 256
        %v8825 = vpop.permute.xlu0 %8824
        %s8827 = sor.u32 256, 8
        %8828 = vbcast.lane.b32.xlu0 %v8822, %s8827
        %v8829 = vpop.permute.xlu0 %8828
        %v8830 = vlaneseq
        %v8831 = vshrl.u32 %v8830, 7
        %v8832 = vsub.s32 6, %v8831
        %v8833 = vrot.slane %v1925, %v8832
        %8835 = vbcast.lane.b32.xlu0 %v8833, 256
        %v8836 = vpop.permute.xlu0 %8835
        %s8838 = sor.u32 256, 8
        %8839 = vbcast.lane.b32.xlu0 %v8833, %s8838
        %v8840 = vpop.permute.xlu0 %8839
        %v8841 = vlaneseq
        %v8842 = vshrl.u32 %v8841, 7
        %v8843 = vsub.s32 7, %v8842
        %v8844 = vrot.slane %v1925, %v8843
        %8846 = vbcast.lane.b32.xlu0 %v8844, 256
        %v8847 = vpop.permute.xlu0 %8846
        %s8849 = sor.u32 256, 8
        %8850 = vbcast.lane.b32.xlu0 %v8844, %s8849
        %v8851 = vpop.permute.xlu0 %8850
        %v8852 = vlaneseq
        %v8853 = vshrl.u32 %v8852, 7
        %v8854 = vsub.s32 0, %v8853
        %v8855 = vrot.slane %v1930, %v8854
        %8857 = vbcast.lane.b32.xlu0 %v8855, 256
        %v8858 = vpop.permute.xlu0 %8857
        %s8860 = sor.u32 256, 8
        %8861 = vbcast.lane.b32.xlu0 %v8855, %s8860
        %v8862 = vpop.permute.xlu0 %8861
        %v8863 = vlaneseq
        %v8864 = vshrl.u32 %v8863, 7
        %v8865 = vsub.s32 1, %v8864
        %v8866 = vrot.slane %v1930, %v8865
        %8868 = vbcast.lane.b32.xlu0 %v8866, 256
        %v8869 = vpop.permute.xlu0 %8868
        %s8871 = sor.u32 256, 8
        %8872 = vbcast.lane.b32.xlu0 %v8866, %s8871
        %v8873 = vpop.permute.xlu0 %8872
        %v8874 = vlaneseq
        %v8875 = vshrl.u32 %v8874, 7
        %v8876 = vsub.s32 2, %v8875
        %v8877 = vrot.slane %v1930, %v8876
        %8879 = vbcast.lane.b32.xlu0 %v8877, 256
        %v8880 = vpop.permute.xlu0 %8879
        %s8882 = sor.u32 256, 8
        %8883 = vbcast.lane.b32.xlu0 %v8877, %s8882
        %v8884 = vpop.permute.xlu0 %8883
        %v8885 = vlaneseq
        %v8886 = vshrl.u32 %v8885, 7
        %v8887 = vsub.s32 3, %v8886
        %v8888 = vrot.slane %v1930, %v8887
        %8890 = vbcast.lane.b32.xlu0 %v8888, 256
        %v8891 = vpop.permute.xlu0 %8890
        %s8893 = sor.u32 256, 8
        %8894 = vbcast.lane.b32.xlu0 %v8888, %s8893
        %v8895 = vpop.permute.xlu0 %8894
        %v8896 = vlaneseq
        %v8897 = vshrl.u32 %v8896, 7
        %v8898 = vsub.s32 4, %v8897
        %v8899 = vrot.slane %v1930, %v8898
        %8901 = vbcast.lane.b32.xlu0 %v8899, 256
        %v8902 = vpop.permute.xlu0 %8901
        %s8904 = sor.u32 256, 8
        %8905 = vbcast.lane.b32.xlu0 %v8899, %s8904
        %v8906 = vpop.permute.xlu0 %8905
        %v8907 = vlaneseq
        %v8908 = vshrl.u32 %v8907, 7
        %v8909 = vsub.s32 5, %v8908
        %v8910 = vrot.slane %v1930, %v8909
        %8912 = vbcast.lane.b32.xlu0 %v8910, 256
        %v8913 = vpop.permute.xlu0 %8912
        %s8915 = sor.u32 256, 8
        %8916 = vbcast.lane.b32.xlu0 %v8910, %s8915
        %v8917 = vpop.permute.xlu0 %8916
        %v8918 = vlaneseq
        %v8919 = vshrl.u32 %v8918, 7
        %v8920 = vsub.s32 6, %v8919
        %v8921 = vrot.slane %v1930, %v8920
        %8923 = vbcast.lane.b32.xlu0 %v8921, 256
        %v8924 = vpop.permute.xlu0 %8923
        %s8926 = sor.u32 256, 8
        %8927 = vbcast.lane.b32.xlu0 %v8921, %s8926
        %v8928 = vpop.permute.xlu0 %8927
        %v8929 = vlaneseq
        %v8930 = vshrl.u32 %v8929, 7
        %v8931 = vsub.s32 7, %v8930
        %v8932 = vrot.slane %v1930, %v8931
        %8934 = vbcast.lane.b32.xlu0 %v8932, 256
        %v8935 = vpop.permute.xlu0 %8934
        %s8937 = sor.u32 256, 8
        %8938 = vbcast.lane.b32.xlu0 %v8932, %s8937
        %v8939 = vpop.permute.xlu0 %8938
        %v8940 = vlaneseq
        %v8941 = vshrl.u32 %v8940, 7
        %v8942 = vsub.s32 0, %v8941
        %v8943 = vrot.slane %v1935, %v8942
        %8945 = vbcast.lane.b32.xlu0 %v8943, 256
        %v8946 = vpop.permute.xlu0 %8945
        %s8948 = sor.u32 256, 8
        %8949 = vbcast.lane.b32.xlu0 %v8943, %s8948
        %v8950 = vpop.permute.xlu0 %8949
        %v8951 = vlaneseq
        %v8952 = vshrl.u32 %v8951, 7
        %v8953 = vsub.s32 1, %v8952
        %v8954 = vrot.slane %v1935, %v8953
        %8956 = vbcast.lane.b32.xlu0 %v8954, 256
        %v8957 = vpop.permute.xlu0 %8956
        %s8959 = sor.u32 256, 8
        %8960 = vbcast.lane.b32.xlu0 %v8954, %s8959
        %v8961 = vpop.permute.xlu0 %8960
        %v8962 = vlaneseq
        %v8963 = vshrl.u32 %v8962, 7
        %v8964 = vsub.s32 2, %v8963
        %v8965 = vrot.slane %v1935, %v8964
        %8967 = vbcast.lane.b32.xlu0 %v8965, 256
        %v8968 = vpop.permute.xlu0 %8967
        %s8970 = sor.u32 256, 8
        %8971 = vbcast.lane.b32.xlu0 %v8965, %s8970
        %v8972 = vpop.permute.xlu0 %8971
        %v8973 = vlaneseq
        %v8974 = vshrl.u32 %v8973, 7
        %v8975 = vsub.s32 3, %v8974
        %v8976 = vrot.slane %v1935, %v8975
        %8978 = vbcast.lane.b32.xlu0 %v8976, 256
        %v8979 = vpop.permute.xlu0 %8978
        %s8981 = sor.u32 256, 8
        %8982 = vbcast.lane.b32.xlu0 %v8976, %s8981
        %v8983 = vpop.permute.xlu0 %8982
        %v8984 = vlaneseq
        %v8985 = vshrl.u32 %v8984, 7
        %v8986 = vsub.s32 4, %v8985
        %v8987 = vrot.slane %v1935, %v8986
        %8989 = vbcast.lane.b32.xlu0 %v8987, 256
        %v8990 = vpop.permute.xlu0 %8989
        %s8992 = sor.u32 256, 8
        %8993 = vbcast.lane.b32.xlu0 %v8987, %s8992
        %v8994 = vpop.permute.xlu0 %8993
        %v8995 = vlaneseq
        %v8996 = vshrl.u32 %v8995, 7
        %v8997 = vsub.s32 5, %v8996
        %v8998 = vrot.slane %v1935, %v8997
        %9000 = vbcast.lane.b32.xlu0 %v8998, 256
        %v9001 = vpop.permute.xlu0 %9000
        %s9003 = sor.u32 256, 8
        %9004 = vbcast.lane.b32.xlu0 %v8998, %s9003
        %v9005 = vpop.permute.xlu0 %9004
        %v9006 = vlaneseq
        %v9007 = vshrl.u32 %v9006, 7
        %v9008 = vsub.s32 6, %v9007
        %v9009 = vrot.slane %v1935, %v9008
        %9011 = vbcast.lane.b32.xlu0 %v9009, 256
        %v9012 = vpop.permute.xlu0 %9011
        %s9014 = sor.u32 256, 8
        %9015 = vbcast.lane.b32.xlu0 %v9009, %s9014
        %v9016 = vpop.permute.xlu0 %9015
        %v9017 = vlaneseq
        %v9018 = vshrl.u32 %v9017, 7
        %v9019 = vsub.s32 7, %v9018
        %v9020 = vrot.slane %v1935, %v9019
        %9022 = vbcast.lane.b32.xlu0 %v9020, 256
        %v9023 = vpop.permute.xlu0 %9022
        %s9025 = sor.u32 256, 8
        %9026 = vbcast.lane.b32.xlu0 %v9020, %s9025
        %v9027 = vpop.permute.xlu0 %9026
        %v9028 = vlaneseq
        %v9029 = vshrl.u32 %v9028, 7
        %v9030 = vsub.s32 0, %v9029
        %v9031 = vrot.slane %v1940, %v9030
        %9033 = vbcast.lane.b32.xlu0 %v9031, 256
        %v9034 = vpop.permute.xlu0 %9033
        %s9036 = sor.u32 256, 8
        %9037 = vbcast.lane.b32.xlu0 %v9031, %s9036
        %v9038 = vpop.permute.xlu0 %9037
        %v9039 = vlaneseq
        %v9040 = vshrl.u32 %v9039, 7
        %v9041 = vsub.s32 1, %v9040
        %v9042 = vrot.slane %v1940, %v9041
        %9044 = vbcast.lane.b32.xlu0 %v9042, 256
        %v9045 = vpop.permute.xlu0 %9044
        %s9047 = sor.u32 256, 8
        %9048 = vbcast.lane.b32.xlu0 %v9042, %s9047
        %v9049 = vpop.permute.xlu0 %9048
        %v9050 = vlaneseq
        %v9051 = vshrl.u32 %v9050, 7
        %v9052 = vsub.s32 2, %v9051
        %v9053 = vrot.slane %v1940, %v9052
        %9055 = vbcast.lane.b32.xlu0 %v9053, 256
        %v9056 = vpop.permute.xlu0 %9055
        %s9058 = sor.u32 256, 8
        %9059 = vbcast.lane.b32.xlu0 %v9053, %s9058
        %v9060 = vpop.permute.xlu0 %9059
        %v9061 = vlaneseq
        %v9062 = vshrl.u32 %v9061, 7
        %v9063 = vsub.s32 3, %v9062
        %v9064 = vrot.slane %v1940, %v9063
        %9066 = vbcast.lane.b32.xlu0 %v9064, 256
        %v9067 = vpop.permute.xlu0 %9066
        %s9069 = sor.u32 256, 8
        %9070 = vbcast.lane.b32.xlu0 %v9064, %s9069
        %v9071 = vpop.permute.xlu0 %9070
        %v9072 = vlaneseq
        %v9073 = vshrl.u32 %v9072, 7
        %v9074 = vsub.s32 4, %v9073
        %v9075 = vrot.slane %v1940, %v9074
        %9077 = vbcast.lane.b32.xlu0 %v9075, 256
        %v9078 = vpop.permute.xlu0 %9077
        %s9080 = sor.u32 256, 8
        %9081 = vbcast.lane.b32.xlu0 %v9075, %s9080
        %v9082 = vpop.permute.xlu0 %9081
        %v9083 = vlaneseq
        %v9084 = vshrl.u32 %v9083, 7
        %v9085 = vsub.s32 5, %v9084
        %v9086 = vrot.slane %v1940, %v9085
        %9088 = vbcast.lane.b32.xlu0 %v9086, 256
        %v9089 = vpop.permute.xlu0 %9088
        %s9091 = sor.u32 256, 8
        %9092 = vbcast.lane.b32.xlu0 %v9086, %s9091
        %v9093 = vpop.permute.xlu0 %9092
        %v9094 = vlaneseq
        %v9095 = vshrl.u32 %v9094, 7
        %v9096 = vsub.s32 6, %v9095
        %v9097 = vrot.slane %v1940, %v9096
        %9099 = vbcast.lane.b32.xlu0 %v9097, 256
        %v9100 = vpop.permute.xlu0 %9099
        %s9102 = sor.u32 256, 8
        %9103 = vbcast.lane.b32.xlu0 %v9097, %s9102
        %v9104 = vpop.permute.xlu0 %9103
        %v9105 = vlaneseq
        %v9106 = vshrl.u32 %v9105, 7
        %v9107 = vsub.s32 7, %v9106
        %v9108 = vrot.slane %v1940, %v9107
        %9110 = vbcast.lane.b32.xlu0 %v9108, 256
        %v9111 = vpop.permute.xlu0 %9110
        %s9113 = sor.u32 256, 8
        %9114 = vbcast.lane.b32.xlu0 %v9108, %s9113
        %v9115 = vpop.permute.xlu0 %9114
        %v9116 = vlaneseq
        %v9117 = vshrl.u32 %v9116, 7
        %v9118 = vsub.s32 0, %v9117
        %v9119 = vrot.slane %v1945, %v9118
        %9121 = vbcast.lane.b32.xlu0 %v9119, 256
        %v9122 = vpop.permute.xlu0 %9121
        %s9124 = sor.u32 256, 8
        %9125 = vbcast.lane.b32.xlu0 %v9119, %s9124
        %v9126 = vpop.permute.xlu0 %9125
        %v9127 = vlaneseq
        %v9128 = vshrl.u32 %v9127, 7
        %v9129 = vsub.s32 1, %v9128
        %v9130 = vrot.slane %v1945, %v9129
        %9132 = vbcast.lane.b32.xlu0 %v9130, 256
        %v9133 = vpop.permute.xlu0 %9132
        %s9135 = sor.u32 256, 8
        %9136 = vbcast.lane.b32.xlu0 %v9130, %s9135
        %v9137 = vpop.permute.xlu0 %9136
        %v9138 = vlaneseq
        %v9139 = vshrl.u32 %v9138, 7
        %v9140 = vsub.s32 2, %v9139
        %v9141 = vrot.slane %v1945, %v9140
        %9143 = vbcast.lane.b32.xlu0 %v9141, 256
        %v9144 = vpop.permute.xlu0 %9143
        %s9146 = sor.u32 256, 8
        %9147 = vbcast.lane.b32.xlu0 %v9141, %s9146
        %v9148 = vpop.permute.xlu0 %9147
        %v9149 = vlaneseq
        %v9150 = vshrl.u32 %v9149, 7
        %v9151 = vsub.s32 3, %v9150
        %v9152 = vrot.slane %v1945, %v9151
        %9154 = vbcast.lane.b32.xlu0 %v9152, 256
        %v9155 = vpop.permute.xlu0 %9154
        %s9157 = sor.u32 256, 8
        %9158 = vbcast.lane.b32.xlu0 %v9152, %s9157
        %v9159 = vpop.permute.xlu0 %9158
        %v9160 = vlaneseq
        %v9161 = vshrl.u32 %v9160, 7
        %v9162 = vsub.s32 4, %v9161
        %v9163 = vrot.slane %v1945, %v9162
        %9165 = vbcast.lane.b32.xlu0 %v9163, 256
        %v9166 = vpop.permute.xlu0 %9165
        %s9168 = sor.u32 256, 8
        %9169 = vbcast.lane.b32.xlu0 %v9163, %s9168
        %v9170 = vpop.permute.xlu0 %9169
        %v9171 = vlaneseq
        %v9172 = vshrl.u32 %v9171, 7
        %v9173 = vsub.s32 5, %v9172
        %v9174 = vrot.slane %v1945, %v9173
        %9176 = vbcast.lane.b32.xlu0 %v9174, 256
        %v9177 = vpop.permute.xlu0 %9176
        %s9179 = sor.u32 256, 8
        %9180 = vbcast.lane.b32.xlu0 %v9174, %s9179
        %v9181 = vpop.permute.xlu0 %9180
        %v9182 = vlaneseq
        %v9183 = vshrl.u32 %v9182, 7
        %v9184 = vsub.s32 6, %v9183
        %v9185 = vrot.slane %v1945, %v9184
        %9187 = vbcast.lane.b32.xlu0 %v9185, 256
        %v9188 = vpop.permute.xlu0 %9187
        %s9190 = sor.u32 256, 8
        %9191 = vbcast.lane.b32.xlu0 %v9185, %s9190
        %v9192 = vpop.permute.xlu0 %9191
        %v9193 = vlaneseq
        %v9194 = vshrl.u32 %v9193, 7
        %v9195 = vsub.s32 7, %v9194
        %v9196 = vrot.slane %v1945, %v9195
        %9198 = vbcast.lane.b32.xlu0 %v9196, 256
        %v9199 = vpop.permute.xlu0 %9198
        %s9201 = sor.u32 256, 8
        %9202 = vbcast.lane.b32.xlu0 %v9196, %s9201
        %v9203 = vpop.permute.xlu0 %9202
        %9204 = vst.msk [vmem:[#allocation4] sm:$0xff] %vm868, %v7802
        %9205 = vst.msk [vmem:[#allocation4 + $0x8] sm:$0xff] %vm868, %v7806
        %9206 = vst.msk [vmem:[#allocation4 + $0x10] sm:$0xff] %vm868, %v7813
        %9207 = vst.msk [vmem:[#allocation4 + $0x18] sm:$0xff] %vm868, %v7817
        %9208 = vst.msk [vmem:[#allocation4 + $0x20] sm:$0xff] %vm868, %v7824
        %9209 = vst.msk [vmem:[#allocation4 + $0x28] sm:$0xff] %vm868, %v7828
        %9210 = vst.msk [vmem:[#allocation4 + $0x30] sm:$0xff] %vm868, %v7835
        %9211 = vst.msk [vmem:[#allocation4 + $0x38] sm:$0xff] %vm868, %v7839
        %9212 = vst.msk [vmem:[#allocation4 + $0x40] sm:$0xff] %vm868, %v7846
        %9213 = vst.msk [vmem:[#allocation4 + $0x48] sm:$0xff] %vm868, %v7850
        %9214 = vst.msk [vmem:[#allocation4 + $0x50] sm:$0xff] %vm868, %v7857
        %9215 = vst.msk [vmem:[#allocation4 + $0x58] sm:$0xff] %vm868, %v7861
        %9216 = vst.msk [vmem:[#allocation4 + $0x60] sm:$0xff] %vm868, %v7868
        %9217 = vst.msk [vmem:[#allocation4 + $0x68] sm:$0xff] %vm868, %v7872
        %9218 = vst.msk [vmem:[#allocation4 + $0x70] sm:$0xff] %vm868, %v7879
        %9219 = vst.msk [vmem:[#allocation4 + $0x78] sm:$0xff] %vm868, %v7883
        %9220 = vst.msk [vmem:[#allocation4 + $0x80] sm:$0xff] %vm868, %v7890
        %9221 = vst.msk [vmem:[#allocation4 + $0x88] sm:$0xff] %vm868, %v7894
        %9222 = vst.msk [vmem:[#allocation4 + $0x90] sm:$0xff] %vm868, %v7901
        %9223 = vst.msk [vmem:[#allocation4 + $0x98] sm:$0xff] %vm868, %v7905
        %9224 = vst.msk [vmem:[#allocation4 + $0xa0] sm:$0xff] %vm868, %v7912
        %9225 = vst.msk [vmem:[#allocation4 + $0xa8] sm:$0xff] %vm868, %v7916
        %9226 = vst.msk [vmem:[#allocation4 + $0xb0] sm:$0xff] %vm868, %v7923
        %9227 = vst.msk [vmem:[#allocation4 + $0xb8] sm:$0xff] %vm868, %v7927
        %9228 = vst.msk [vmem:[#allocation4 + $0xc0] sm:$0xff] %vm868, %v7934
        %9229 = vst.msk [vmem:[#allocation4 + $0xc8] sm:$0xff] %vm868, %v7938
        %9230 = vst.msk [vmem:[#allocation4 + $0xd0] sm:$0xff] %vm868, %v7945
        %9231 = vst.msk [vmem:[#allocation4 + $0xd8] sm:$0xff] %vm868, %v7949
        %9232 = vst.msk [vmem:[#allocation4 + $0xe0] sm:$0xff] %vm868, %v7956
        %9233 = vst.msk [vmem:[#allocation4 + $0xe8] sm:$0xff] %vm868, %v7960
        %9234 = vst.msk [vmem:[#allocation4 + $0xf0] sm:$0xff] %vm868, %v7967
        %9235 = vst.msk [vmem:[#allocation4 + $0xf8] sm:$0xff] %vm868, %v7971
        %9236 = vst.msk [vmem:[#allocation4 + $0x100] sm:$0xff] %vm868, %v7978
        %9237 = vst.msk [vmem:[#allocation4 + $0x108] sm:$0xff] %vm868, %v7982
        %9238 = vst.msk [vmem:[#allocation4 + $0x110] sm:$0xff] %vm868, %v7989
        %9239 = vst.msk [vmem:[#allocation4 + $0x118] sm:$0xff] %vm868, %v7993
        %9240 = vst.msk [vmem:[#allocation4 + $0x120] sm:$0xff] %vm868, %v8000
        %9241 = vst.msk [vmem:[#allocation4 + $0x128] sm:$0xff] %vm868, %v8004
        %9242 = vst.msk [vmem:[#allocation4 + $0x130] sm:$0xff] %vm868, %v8011
        %9243 = vst.msk [vmem:[#allocation4 + $0x138] sm:$0xff] %vm868, %v8015
        %9244 = vst.msk [vmem:[#allocation4 + $0x140] sm:$0xff] %vm868, %v8022
        %9245 = vst.msk [vmem:[#allocation4 + $0x148] sm:$0xff] %vm868, %v8026
        %9246 = vst.msk [vmem:[#allocation4 + $0x150] sm:$0xff] %vm868, %v8033
        %9247 = vst.msk [vmem:[#allocation4 + $0x158] sm:$0xff] %vm868, %v8037
        %9248 = vst.msk [vmem:[#allocation4 + $0x160] sm:$0xff] %vm868, %v8044
        %9249 = vst.msk [vmem:[#allocation4 + $0x168] sm:$0xff] %vm868, %v8048
        %9250 = vst.msk [vmem:[#allocation4 + $0x170] sm:$0xff] %vm868, %v8055
        %9251 = vst.msk [vmem:[#allocation4 + $0x178] sm:$0xff] %vm868, %v8059
        %9252 = vst.msk [vmem:[#allocation4 + $0x180] sm:$0xff] %vm868, %v8066
        %9253 = vst.msk [vmem:[#allocation4 + $0x188] sm:$0xff] %vm868, %v8070
        %9254 = vst.msk [vmem:[#allocation4 + $0x190] sm:$0xff] %vm868, %v8077
        %9255 = vst.msk [vmem:[#allocation4 + $0x198] sm:$0xff] %vm868, %v8081
        %9256 = vst.msk [vmem:[#allocation4 + $0x1a0] sm:$0xff] %vm868, %v8088
        %9257 = vst.msk [vmem:[#allocation4 + $0x1a8] sm:$0xff] %vm868, %v8092
        %9258 = vst.msk [vmem:[#allocation4 + $0x1b0] sm:$0xff] %vm868, %v8099
        %9259 = vst.msk [vmem:[#allocation4 + $0x1b8] sm:$0xff] %vm868, %v8103
        %9260 = vst.msk [vmem:[#allocation4 + $0x1c0] sm:$0xff] %vm868, %v8110
        %9261 = vst.msk [vmem:[#allocation4 + $0x1c8] sm:$0xff] %vm868, %v8114
        %9262 = vst.msk [vmem:[#allocation4 + $0x1d0] sm:$0xff] %vm868, %v8121
        %9263 = vst.msk [vmem:[#allocation4 + $0x1d8] sm:$0xff] %vm868, %v8125
        %9264 = vst.msk [vmem:[#allocation4 + $0x1e0] sm:$0xff] %vm868, %v8132
        %9265 = vst.msk [vmem:[#allocation4 + $0x1e8] sm:$0xff] %vm868, %v8136
        %9266 = vst.msk [vmem:[#allocation4 + $0x1f0] sm:$0xff] %vm868, %v8143
        %9267 = vst.msk [vmem:[#allocation4 + $0x1f8] sm:$0xff] %vm868, %v8147
        %9268 = vst.msk [vmem:[#allocation4 + $0x200] sm:$0xff] %vm868, %v8154
        %9269 = vst.msk [vmem:[#allocation4 + $0x208] sm:$0xff] %vm868, %v8158
        %9270 = vst.msk [vmem:[#allocation4 + $0x210] sm:$0xff] %vm868, %v8165
        %9271 = vst.msk [vmem:[#allocation4 + $0x218] sm:$0xff] %vm868, %v8169
        %9272 = vst.msk [vmem:[#allocation4 + $0x220] sm:$0xff] %vm868, %v8176
        %9273 = vst.msk [vmem:[#allocation4 + $0x228] sm:$0xff] %vm868, %v8180
        %9274 = vst.msk [vmem:[#allocation4 + $0x230] sm:$0xff] %vm868, %v8187
        %9275 = vst.msk [vmem:[#allocation4 + $0x238] sm:$0xff] %vm868, %v8191
        %9276 = vst.msk [vmem:[#allocation4 + $0x240] sm:$0xff] %vm868, %v8198
        %9277 = vst.msk [vmem:[#allocation4 + $0x248] sm:$0xff] %vm868, %v8202
        %9278 = vst.msk [vmem:[#allocation4 + $0x250] sm:$0xff] %vm868, %v8209
        %9279 = vst.msk [vmem:[#allocation4 + $0x258] sm:$0xff] %vm868, %v8213
        %9280 = vst.msk [vmem:[#allocation4 + $0x260] sm:$0xff] %vm868, %v8220
        %9281 = vst.msk [vmem:[#allocation4 + $0x268] sm:$0xff] %vm868, %v8224
        %9282 = vst.msk [vmem:[#allocation4 + $0x270] sm:$0xff] %vm868, %v8231
        %9283 = vst.msk [vmem:[#allocation4 + $0x278] sm:$0xff] %vm868, %v8235
        %9284 = vst.msk [vmem:[#allocation4 + $0x280] sm:$0xff] %vm868, %v8242
        %9285 = vst.msk [vmem:[#allocation4 + $0x288] sm:$0xff] %vm868, %v8246
        %9286 = vst.msk [vmem:[#allocation4 + $0x290] sm:$0xff] %vm868, %v8253
        %9287 = vst.msk [vmem:[#allocation4 + $0x298] sm:$0xff] %vm868, %v8257
        %9288 = vst.msk [vmem:[#allocation4 + $0x2a0] sm:$0xff] %vm868, %v8264
        %9289 = vst.msk [vmem:[#allocation4 + $0x2a8] sm:$0xff] %vm868, %v8268
        %9290 = vst.msk [vmem:[#allocation4 + $0x2b0] sm:$0xff] %vm868, %v8275
        %9291 = vst.msk [vmem:[#allocation4 + $0x2b8] sm:$0xff] %vm868, %v8279
        %9292 = vst.msk [vmem:[#allocation4 + $0x2c0] sm:$0xff] %vm868, %v8286
        %9293 = vst.msk [vmem:[#allocation4 + $0x2c8] sm:$0xff] %vm868, %v8290
        %9294 = vst.msk [vmem:[#allocation4 + $0x2d0] sm:$0xff] %vm868, %v8297
        %9295 = vst.msk [vmem:[#allocation4 + $0x2d8] sm:$0xff] %vm868, %v8301
        %9296 = vst.msk [vmem:[#allocation4 + $0x2e0] sm:$0xff] %vm868, %v8308
        %9297 = vst.msk [vmem:[#allocation4 + $0x2e8] sm:$0xff] %vm868, %v8312
        %9298 = vst.msk [vmem:[#allocation4 + $0x2f0] sm:$0xff] %vm868, %v8319
        %9299 = vst.msk [vmem:[#allocation4 + $0x2f8] sm:$0xff] %vm868, %v8323
        %9300 = vst.msk [vmem:[#allocation4 + $0x300] sm:$0xff] %vm868, %v8330
        %9301 = vst.msk [vmem:[#allocation4 + $0x308] sm:$0xff] %vm868, %v8334
        %9302 = vst.msk [vmem:[#allocation4 + $0x310] sm:$0xff] %vm868, %v8341
        %9303 = vst.msk [vmem:[#allocation4 + $0x318] sm:$0xff] %vm868, %v8345
        %9304 = vst.msk [vmem:[#allocation4 + $0x320] sm:$0xff] %vm868, %v8352
        %9305 = vst.msk [vmem:[#allocation4 + $0x328] sm:$0xff] %vm868, %v8356
        %9306 = vst.msk [vmem:[#allocation4 + $0x330] sm:$0xff] %vm868, %v8363
        %9307 = vst.msk [vmem:[#allocation4 + $0x338] sm:$0xff] %vm868, %v8367
        %9308 = vst.msk [vmem:[#allocation4 + $0x340] sm:$0xff] %vm868, %v8374
        %9309 = vst.msk [vmem:[#allocation4 + $0x348] sm:$0xff] %vm868, %v8378
        %9310 = vst.msk [vmem:[#allocation4 + $0x350] sm:$0xff] %vm868, %v8385
        %9311 = vst.msk [vmem:[#allocation4 + $0x358] sm:$0xff] %vm868, %v8389
        %9312 = vst.msk [vmem:[#allocation4 + $0x360] sm:$0xff] %vm868, %v8396
        %9313 = vst.msk [vmem:[#allocation4 + $0x368] sm:$0xff] %vm868, %v8400
        %9314 = vst.msk [vmem:[#allocation4 + $0x370] sm:$0xff] %vm868, %v8407
        %9315 = vst.msk [vmem:[#allocation4 + $0x378] sm:$0xff] %vm868, %v8411
        %9316 = vst.msk [vmem:[#allocation4 + $0x380] sm:$0xff] %vm868, %v8418
        %9317 = vst.msk [vmem:[#allocation4 + $0x388] sm:$0xff] %vm868, %v8422
        %9318 = vst.msk [vmem:[#allocation4 + $0x390] sm:$0xff] %vm868, %v8429
        %9319 = vst.msk [vmem:[#allocation4 + $0x398] sm:$0xff] %vm868, %v8433
        %9320 = vst.msk [vmem:[#allocation4 + $0x3a0] sm:$0xff] %vm868, %v8440
        %9321 = vst.msk [vmem:[#allocation4 + $0x3a8] sm:$0xff] %vm868, %v8444
        %9322 = vst.msk [vmem:[#allocation4 + $0x3b0] sm:$0xff] %vm868, %v8451
        %9323 = vst.msk [vmem:[#allocation4 + $0x3b8] sm:$0xff] %vm868, %v8455
        %9324 = vst.msk [vmem:[#allocation4 + $0x3c0] sm:$0xff] %vm868, %v8462
        %9325 = vst.msk [vmem:[#allocation4 + $0x3c8] sm:$0xff] %vm868, %v8466
        %9326 = vst.msk [vmem:[#allocation4 + $0x3d0] sm:$0xff] %vm868, %v8473
        %9327 = vst.msk [vmem:[#allocation4 + $0x3d8] sm:$0xff] %vm868, %v8477
        %9328 = vst.msk [vmem:[#allocation4 + $0x3e0] sm:$0xff] %vm868, %v8484
        %9329 = vst.msk [vmem:[#allocation4 + $0x3e8] sm:$0xff] %vm868, %v8488
        %9330 = vst.msk [vmem:[#allocation4 + $0x3f0] sm:$0xff] %vm868, %v8495
        %9331 = vst.msk [vmem:[#allocation4 + $0x3f8] sm:$0xff] %vm868, %v8499
        %9332 = vst.msk [vmem:[#allocation4 + $0x400] sm:$0xff] %vm868, %v8506
        %9333 = vst.msk [vmem:[#allocation4 + $0x408] sm:$0xff] %vm868, %v8510
        %9334 = vst.msk [vmem:[#allocation4 + $0x410] sm:$0xff] %vm868, %v8517
        %9335 = vst.msk [vmem:[#allocation4 + $0x418] sm:$0xff] %vm868, %v8521
        %9336 = vst.msk [vmem:[#allocation4 + $0x420] sm:$0xff] %vm868, %v8528
        %9337 = vst.msk [vmem:[#allocation4 + $0x428] sm:$0xff] %vm868, %v8532
        %9338 = vst.msk [vmem:[#allocation4 + $0x430] sm:$0xff] %vm868, %v8539
        %9339 = vst.msk [vmem:[#allocation4 + $0x438] sm:$0xff] %vm868, %v8543
        %9340 = vst.msk [vmem:[#allocation4 + $0x440] sm:$0xff] %vm868, %v8550
        %9341 = vst.msk [vmem:[#allocation4 + $0x448] sm:$0xff] %vm868, %v8554
        %9342 = vst.msk [vmem:[#allocation4 + $0x450] sm:$0xff] %vm868, %v8561
        %9343 = vst.msk [vmem:[#allocation4 + $0x458] sm:$0xff] %vm868, %v8565
        %9344 = vst.msk [vmem:[#allocation4 + $0x460] sm:$0xff] %vm868, %v8572
        %9345 = vst.msk [vmem:[#allocation4 + $0x468] sm:$0xff] %vm868, %v8576
        %9346 = vst.msk [vmem:[#allocation4 + $0x470] sm:$0xff] %vm868, %v8583
        %9347 = vst.msk [vmem:[#allocation4 + $0x478] sm:$0xff] %vm868, %v8587
        %9348 = vst.msk [vmem:[#allocation4 + $0x480] sm:$0xff] %vm868, %v8594
        %9349 = vst.msk [vmem:[#allocation4 + $0x488] sm:$0xff] %vm868, %v8598
        %9350 = vst.msk [vmem:[#allocation4 + $0x490] sm:$0xff] %vm868, %v8605
        %9351 = vst.msk [vmem:[#allocation4 + $0x498] sm:$0xff] %vm868, %v8609
        %9352 = vst.msk [vmem:[#allocation4 + $0x4a0] sm:$0xff] %vm868, %v8616
        %9353 = vst.msk [vmem:[#allocation4 + $0x4a8] sm:$0xff] %vm868, %v8620
        %9354 = vst.msk [vmem:[#allocation4 + $0x4b0] sm:$0xff] %vm868, %v8627
        %9355 = vst.msk [vmem:[#allocation4 + $0x4b8] sm:$0xff] %vm868, %v8631
        %9356 = vst.msk [vmem:[#allocation4 + $0x4c0] sm:$0xff] %vm868, %v8638
        %9357 = vst.msk [vmem:[#allocation4 + $0x4c8] sm:$0xff] %vm868, %v8642
        %9358 = vst.msk [vmem:[#allocation4 + $0x4d0] sm:$0xff] %vm868, %v8649
        %9359 = vst.msk [vmem:[#allocation4 + $0x4d8] sm:$0xff] %vm868, %v8653
        %9360 = vst.msk [vmem:[#allocation4 + $0x4e0] sm:$0xff] %vm868, %v8660
        %9361 = vst.msk [vmem:[#allocation4 + $0x4e8] sm:$0xff] %vm868, %v8664
        %9362 = vst.msk [vmem:[#allocation4 + $0x4f0] sm:$0xff] %vm868, %v8671
        %9363 = vst.msk [vmem:[#allocation4 + $0x4f8] sm:$0xff] %vm868, %v8675
        %9364 = vst.msk [vmem:[#allocation4 + $0x500] sm:$0xff] %vm868, %v8682
        %9365 = vst.msk [vmem:[#allocation4 + $0x508] sm:$0xff] %vm868, %v8686
        %9366 = vst.msk [vmem:[#allocation4 + $0x510] sm:$0xff] %vm868, %v8693
        %9367 = vst.msk [vmem:[#allocation4 + $0x518] sm:$0xff] %vm868, %v8697
        %9368 = vst.msk [vmem:[#allocation4 + $0x520] sm:$0xff] %vm868, %v8704
        %9369 = vst.msk [vmem:[#allocation4 + $0x528] sm:$0xff] %vm868, %v8708
        %9370 = vst.msk [vmem:[#allocation4 + $0x530] sm:$0xff] %vm868, %v8715
        %9371 = vst.msk [vmem:[#allocation4 + $0x538] sm:$0xff] %vm868, %v8719
        %9372 = vst.msk [vmem:[#allocation4 + $0x540] sm:$0xff] %vm868, %v8726
        %9373 = vst.msk [vmem:[#allocation4 + $0x548] sm:$0xff] %vm868, %v8730
        %9374 = vst.msk [vmem:[#allocation4 + $0x550] sm:$0xff] %vm868, %v8737
        %9375 = vst.msk [vmem:[#allocation4 + $0x558] sm:$0xff] %vm868, %v8741
        %9376 = vst.msk [vmem:[#allocation4 + $0x560] sm:$0xff] %vm868, %v8748
        %9377 = vst.msk [vmem:[#allocation4 + $0x568] sm:$0xff] %vm868, %v8752
        %9378 = vst.msk [vmem:[#allocation4 + $0x570] sm:$0xff] %vm868, %v8759
        %9379 = vst.msk [vmem:[#allocation4 + $0x578] sm:$0xff] %vm868, %v8763
        %9380 = vst.msk [vmem:[#allocation4 + $0x580] sm:$0xff] %vm868, %v8770
        %9381 = vst.msk [vmem:[#allocation4 + $0x588] sm:$0xff] %vm868, %v8774
        %9382 = vst.msk [vmem:[#allocation4 + $0x590] sm:$0xff] %vm868, %v8781
        %9383 = vst.msk [vmem:[#allocation4 + $0x598] sm:$0xff] %vm868, %v8785
        %9384 = vst.msk [vmem:[#allocation4 + $0x5a0] sm:$0xff] %vm868, %v8792
        %9385 = vst.msk [vmem:[#allocation4 + $0x5a8] sm:$0xff] %vm868, %v8796
        %9386 = vst.msk [vmem:[#allocation4 + $0x5b0] sm:$0xff] %vm868, %v8803
        %9387 = vst.msk [vmem:[#allocation4 + $0x5b8] sm:$0xff] %vm868, %v8807
        %9388 = vst.msk [vmem:[#allocation4 + $0x5c0] sm:$0xff] %vm868, %v8814
        %9389 = vst.msk [vmem:[#allocation4 + $0x5c8] sm:$0xff] %vm868, %v8818
        %9390 = vst.msk [vmem:[#allocation4 + $0x5d0] sm:$0xff] %vm868, %v8825
        %9391 = vst.msk [vmem:[#allocation4 + $0x5d8] sm:$0xff] %vm868, %v8829
        %9392 = vst.msk [vmem:[#allocation4 + $0x5e0] sm:$0xff] %vm868, %v8836
        %9393 = vst.msk [vmem:[#allocation4 + $0x5e8] sm:$0xff] %vm868, %v8840
        %9394 = vst.msk [vmem:[#allocation4 + $0x5f0] sm:$0xff] %vm868, %v8847
        %9395 = vst.msk [vmem:[#allocation4 + $0x5f8] sm:$0xff] %vm868, %v8851
        %9396 = vst.msk [vmem:[#allocation4 + $0x600] sm:$0xff] %vm868, %v8858
        %9397 = vst.msk [vmem:[#allocation4 + $0x608] sm:$0xff] %vm868, %v8862
        %9398 = vst.msk [vmem:[#allocation4 + $0x610] sm:$0xff] %vm868, %v8869
        %9399 = vst.msk [vmem:[#allocation4 + $0x618] sm:$0xff] %vm868, %v8873
        %9400 = vst.msk [vmem:[#allocation4 + $0x620] sm:$0xff] %vm868, %v8880
        %9401 = vst.msk [vmem:[#allocation4 + $0x628] sm:$0xff] %vm868, %v8884
        %9402 = vst.msk [vmem:[#allocation4 + $0x630] sm:$0xff] %vm868, %v8891
        %9403 = vst.msk [vmem:[#allocation4 + $0x638] sm:$0xff] %vm868, %v8895
        %9404 = vst.msk [vmem:[#allocation4 + $0x640] sm:$0xff] %vm868, %v8902
        %9405 = vst.msk [vmem:[#allocation4 + $0x648] sm:$0xff] %vm868, %v8906
        %9406 = vst.msk [vmem:[#allocation4 + $0x650] sm:$0xff] %vm868, %v8913
        %9407 = vst.msk [vmem:[#allocation4 + $0x658] sm:$0xff] %vm868, %v8917
        %9408 = vst.msk [vmem:[#allocation4 + $0x660] sm:$0xff] %vm868, %v8924
        %9409 = vst.msk [vmem:[#allocation4 + $0x668] sm:$0xff] %vm868, %v8928
        %9410 = vst.msk [vmem:[#allocation4 + $0x670] sm:$0xff] %vm868, %v8935
        %9411 = vst.msk [vmem:[#allocation4 + $0x678] sm:$0xff] %vm868, %v8939
        %9412 = vst.msk [vmem:[#allocation4 + $0x680] sm:$0xff] %vm868, %v8946
        %9413 = vst.msk [vmem:[#allocation4 + $0x688] sm:$0xff] %vm868, %v8950
        %9414 = vst.msk [vmem:[#allocation4 + $0x690] sm:$0xff] %vm868, %v8957
        %9415 = vst.msk [vmem:[#allocation4 + $0x698] sm:$0xff] %vm868, %v8961
        %9416 = vst.msk [vmem:[#allocation4 + $0x6a0] sm:$0xff] %vm868, %v8968
        %9417 = vst.msk [vmem:[#allocation4 + $0x6a8] sm:$0xff] %vm868, %v8972
        %9418 = vst.msk [vmem:[#allocation4 + $0x6b0] sm:$0xff] %vm868, %v8979
        %9419 = vst.msk [vmem:[#allocation4 + $0x6b8] sm:$0xff] %vm868, %v8983
        %9420 = vst.msk [vmem:[#allocation4 + $0x6c0] sm:$0xff] %vm868, %v8990
        %9421 = vst.msk [vmem:[#allocation4 + $0x6c8] sm:$0xff] %vm868, %v8994
        %9422 = vst.msk [vmem:[#allocation4 + $0x6d0] sm:$0xff] %vm868, %v9001
        %9423 = vst.msk [vmem:[#allocation4 + $0x6d8] sm:$0xff] %vm868, %v9005
        %9424 = vst.msk [vmem:[#allocation4 + $0x6e0] sm:$0xff] %vm868, %v9012
        %9425 = vst.msk [vmem:[#allocation4 + $0x6e8] sm:$0xff] %vm868, %v9016
        %9426 = vst.msk [vmem:[#allocation4 + $0x6f0] sm:$0xff] %vm868, %v9023
        %9427 = vst.msk [vmem:[#allocation4 + $0x6f8] sm:$0xff] %vm868, %v9027
        %9428 = vst.msk [vmem:[#allocation4 + $0x700] sm:$0xff] %vm868, %v9034
        %9429 = vst.msk [vmem:[#allocation4 + $0x708] sm:$0xff] %vm868, %v9038
        %9430 = vst.msk [vmem:[#allocation4 + $0x710] sm:$0xff] %vm868, %v9045
        %9431 = vst.msk [vmem:[#allocation4 + $0x718] sm:$0xff] %vm868, %v9049
        %9432 = vst.msk [vmem:[#allocation4 + $0x720] sm:$0xff] %vm868, %v9056
        %9433 = vst.msk [vmem:[#allocation4 + $0x728] sm:$0xff] %vm868, %v9060
        %9434 = vst.msk [vmem:[#allocation4 + $0x730] sm:$0xff] %vm868, %v9067
        %9435 = vst.msk [vmem:[#allocation4 + $0x738] sm:$0xff] %vm868, %v9071
        %9436 = vst.msk [vmem:[#allocation4 + $0x740] sm:$0xff] %vm868, %v9078
        %9437 = vst.msk [vmem:[#allocation4 + $0x748] sm:$0xff] %vm868, %v9082
        %9438 = vst.msk [vmem:[#allocation4 + $0x750] sm:$0xff] %vm868, %v9089
        %9439 = vst.msk [vmem:[#allocation4 + $0x758] sm:$0xff] %vm868, %v9093
        %9440 = vst.msk [vmem:[#allocation4 + $0x760] sm:$0xff] %vm868, %v9100
        %9441 = vst.msk [vmem:[#allocation4 + $0x768] sm:$0xff] %vm868, %v9104
        %9442 = vst.msk [vmem:[#allocation4 + $0x770] sm:$0xff] %vm868, %v9111
        %9443 = vst.msk [vmem:[#allocation4 + $0x778] sm:$0xff] %vm868, %v9115
        %9444 = vst.msk [vmem:[#allocation4 + $0x780] sm:$0xff] %vm868, %v9122
        %9445 = vst.msk [vmem:[#allocation4 + $0x788] sm:$0xff] %vm868, %v9126
        %9446 = vst.msk [vmem:[#allocation4 + $0x790] sm:$0xff] %vm868, %v9133
        %9447 = vst.msk [vmem:[#allocation4 + $0x798] sm:$0xff] %vm868, %v9137
        %9448 = vst.msk [vmem:[#allocation4 + $0x7a0] sm:$0xff] %vm868, %v9144
        %9449 = vst.msk [vmem:[#allocation4 + $0x7a8] sm:$0xff] %vm868, %v9148
        %9450 = vst.msk [vmem:[#allocation4 + $0x7b0] sm:$0xff] %vm868, %v9155
        %9451 = vst.msk [vmem:[#allocation4 + $0x7b8] sm:$0xff] %vm868, %v9159
        %9452 = vst.msk [vmem:[#allocation4 + $0x7c0] sm:$0xff] %vm868, %v9166
        %9453 = vst.msk [vmem:[#allocation4 + $0x7c8] sm:$0xff] %vm868, %v9170
        %9454 = vst.msk [vmem:[#allocation4 + $0x7d0] sm:$0xff] %vm868, %v9177
        %9455 = vst.msk [vmem:[#allocation4 + $0x7d8] sm:$0xff] %vm868, %v9181
        %9456 = vst.msk [vmem:[#allocation4 + $0x7e0] sm:$0xff] %vm868, %v9188
        %9457 = vst.msk [vmem:[#allocation4 + $0x7e8] sm:$0xff] %vm868, %v9192
        %9458 = vst.msk [vmem:[#allocation4 + $0x7f0] sm:$0xff] %vm868, %v9199
        %9459 = vst.msk [vmem:[#allocation4 + $0x7f8] sm:$0xff] %vm868, %v9203
        %v9460 = vld [vmem:[#allocation6] sm:$0xff]
        %v9461 = vld [vmem:[#allocation6 + $0x8] sm:$0xff]
        loop: start=0, step=1, limit=16
        $region81: #{tpu_custom_call.1} parent=75 // loop_pre_header
          _
        $region82: #{tpu_custom_call.1} parent=75 // loop_header
          %s9463 = sphi 0, %s9467
          %p9464 = scmp.ge.s32.totalorder %s9463, 16
          %v9468 = vphi %v9460, %v9677
          %v9469 = vphi %v9461, %v9678
        $region83: #{tpu_custom_call.1} parent=75 // loop_header_branch
          %9466 = sbr.rel (%p9464) target = $region87
        $region84: #{tpu_custom_call.1} parent=75 // loop_body
          %s9470 = smul.u32 %s9463, 8
          %s9471 = smul.u32 %s9470, 16
          %s9472 = scalar_lea.vmem [#allocation2], %s9471
          %v9473 = vld [vmem:[%s9472] sm:$0xff]
          %v9474 = vld [vmem:[%s9472 + $0x8] sm:$0xff]
          %v9475 = vmul.f32 %v9473, %v9468
          %v9476 = vmul.f32 %v9474, %v9469
          %s9477 = scalar_lea.vmem [#allocation3], %s9471
          %v9478 = vld [vmem:[%s9477] sm:$0xff]
          %v9479 = vld [vmem:[%s9477 + $0x8] sm:$0xff]
          %v9480 = vadd.f32 %v9475, %v9478
          %v9481 = vadd.f32 %v9476, %v9479
          %s9482 = scalar_lea.vmem [#allocation4], %s9471
          %v9483 = vld [vmem:[%s9482] sm:$0xff]
          %v9484 = vld [vmem:[%s9482 + $0x8] sm:$0xff]
          %v9485 = vmul.f32 %v9480, %v9483
          %v9486 = vmul.f32 %v9481, %v9484
          %v9487 = vsel %vm868, %v9485, 0.0
          %v9488 = vsel %vm868, %v9486, 0.0
          %v9489 = vadd.f32 %v9487, %v9488
          %v9490 = vrot.slane %v9489, 4
          %v9491 = vadd.f32 %v9489, %v9490
          %v9492 = vrot.slane %v9491, 2
          %v9493 = vadd.f32 %v9491, %v9492
          %v9494 = vrot.slane %v9493, 1
          %v9495 = vadd.f32 %v9493, %v9494
          %s9496 = scalar_lea.vmem [#allocation5], %s9470
          %vm9497 = vcmask 57344
          %9498 = vst.msk [vmem:[%s9496] sm:$0x1] %vm9497, %v9495
          %s9499 = sadd.s32 %s9470, 1
          %s9500 = smul.u32 %s9499, 16
          %s9501 = scalar_lea.vmem [#allocation2], %s9500
          %v9502 = vld [vmem:[%s9501] sm:$0xff]
          %v9503 = vld [vmem:[%s9501 + $0x8] sm:$0xff]
          %v9504 = vmul.f32 %v9502, %v9480
          %v9505 = vmul.f32 %v9503, %v9481
          %s9506 = scalar_lea.vmem [#allocation3], %s9500
          %v9507 = vld [vmem:[%s9506] sm:$0xff]
          %v9508 = vld [vmem:[%s9506 + $0x8] sm:$0xff]
          %v9509 = vadd.f32 %v9504, %v9507
          %v9510 = vadd.f32 %v9505, %v9508
          %s9511 = scalar_lea.vmem [#allocation4], %s9500
          %v9512 = vld [vmem:[%s9511] sm:$0xff]
          %v9513 = vld [vmem:[%s9511 + $0x8] sm:$0xff]
          %v9514 = vmul.f32 %v9509, %v9512
          %v9515 = vmul.f32 %v9510, %v9513
          %v9516 = vsel %vm868, %v9514, 0.0
          %v9517 = vsel %vm868, %v9515, 0.0
          %v9518 = vadd.f32 %v9516, %v9517
          %v9519 = vrot.slane %v9518, 4
          %v9520 = vadd.f32 %v9518, %v9519
          %v9521 = vrot.slane %v9520, 2
          %v9522 = vadd.f32 %v9520, %v9521
          %v9523 = vrot.slane %v9522, 1
          %v9524 = vadd.f32 %v9522, %v9523
          %s9525 = scalar_lea.vmem [#allocation5], %s9499
          %9526 = vst.msk [vmem:[%s9525] sm:$0x1] %vm9497, %v9524
          %s9527 = sadd.s32 %s9470, 2
          %s9528 = smul.u32 %s9527, 16
          %s9529 = scalar_lea.vmem [#allocation2], %s9528
          %v9530 = vld [vmem:[%s9529] sm:$0xff]
          %v9531 = vld [vmem:[%s9529 + $0x8] sm:$0xff]
          %v9532 = vmul.f32 %v9530, %v9509
          %v9533 = vmul.f32 %v9531, %v9510
          %s9534 = scalar_lea.vmem [#allocation3], %s9528
          %v9535 = vld [vmem:[%s9534] sm:$0xff]
          %v9536 = vld [vmem:[%s9534 + $0x8] sm:$0xff]
          %v9537 = vadd.f32 %v9532, %v9535
          %v9538 = vadd.f32 %v9533, %v9536
          %s9539 = scalar_lea.vmem [#allocation4], %s9528
          %v9540 = vld [vmem:[%s9539] sm:$0xff]
          %v9541 = vld [vmem:[%s9539 + $0x8] sm:$0xff]
          %v9542 = vmul.f32 %v9537, %v9540
          %v9543 = vmul.f32 %v9538, %v9541
          %v9544 = vsel %vm868, %v9542, 0.0
          %v9545 = vsel %vm868, %v9543, 0.0
          %v9546 = vadd.f32 %v9544, %v9545
          %v9547 = vrot.slane %v9546, 4
          %v9548 = vadd.f32 %v9546, %v9547
          %v9549 = vrot.slane %v9548, 2
          %v9550 = vadd.f32 %v9548, %v9549
          %v9551 = vrot.slane %v9550, 1
          %v9552 = vadd.f32 %v9550, %v9551
          %s9553 = scalar_lea.vmem [#allocation5], %s9527
          %9554 = vst.msk [vmem:[%s9553] sm:$0x1] %vm9497, %v9552
          %s9555 = sadd.s32 %s9470, 3
          %s9556 = smul.u32 %s9555, 16
          %s9557 = scalar_lea.vmem [#allocation2], %s9556
          %v9558 = vld [vmem:[%s9557] sm:$0xff]
          %v9559 = vld [vmem:[%s9557 + $0x8] sm:$0xff]
          %v9560 = vmul.f32 %v9558, %v9537
          %v9561 = vmul.f32 %v9559, %v9538
          %s9562 = scalar_lea.vmem [#allocation3], %s9556
          %v9563 = vld [vmem:[%s9562] sm:$0xff]
          %v9564 = vld [vmem:[%s9562 + $0x8] sm:$0xff]
          %v9565 = vadd.f32 %v9560, %v9563
          %v9566 = vadd.f32 %v9561, %v9564
          %s9567 = scalar_lea.vmem [#allocation4], %s9556
          %v9568 = vld [vmem:[%s9567] sm:$0xff]
          %v9569 = vld [vmem:[%s9567 + $0x8] sm:$0xff]
          %v9570 = vmul.f32 %v9565, %v9568
          %v9571 = vmul.f32 %v9566, %v9569
          %v9572 = vsel %vm868, %v9570, 0.0
          %v9573 = vsel %vm868, %v9571, 0.0
          %v9574 = vadd.f32 %v9572, %v9573
          %v9575 = vrot.slane %v9574, 4
          %v9576 = vadd.f32 %v9574, %v9575
          %v9577 = vrot.slane %v9576, 2
          %v9578 = vadd.f32 %v9576, %v9577
          %v9579 = vrot.slane %v9578, 1
          %v9580 = vadd.f32 %v9578, %v9579
          %s9581 = scalar_lea.vmem [#allocation5], %s9555
          %9582 = vst.msk [vmem:[%s9581] sm:$0x1] %vm9497, %v9580
          %s9583 = sadd.s32 %s9470, 4
          %s9584 = smul.u32 %s9583, 16
          %s9585 = scalar_lea.vmem [#allocation2], %s9584
          %v9586 = vld [vmem:[%s9585] sm:$0xff]
          %v9587 = vld [vmem:[%s9585 + $0x8] sm:$0xff]
          %v9588 = vmul.f32 %v9586, %v9565
          %v9589 = vmul.f32 %v9587, %v9566
          %s9590 = scalar_lea.vmem [#allocation3], %s9584
          %v9591 = vld [vmem:[%s9590] sm:$0xff]
          %v9592 = vld [vmem:[%s9590 + $0x8] sm:$0xff]
          %v9593 = vadd.f32 %v9588, %v9591
          %v9594 = vadd.f32 %v9589, %v9592
          %s9595 = scalar_lea.vmem [#allocation4], %s9584
          %v9596 = vld [vmem:[%s9595] sm:$0xff]
          %v9597 = vld [vmem:[%s9595 + $0x8] sm:$0xff]
          %v9598 = vmul.f32 %v9593, %v9596
          %v9599 = vmul.f32 %v9594, %v9597
          %v9600 = vsel %vm868, %v9598, 0.0
          %v9601 = vsel %vm868, %v9599, 0.0
          %v9602 = vadd.f32 %v9600, %v9601
          %v9603 = vrot.slane %v9602, 4
          %v9604 = vadd.f32 %v9602, %v9603
          %v9605 = vrot.slane %v9604, 2
          %v9606 = vadd.f32 %v9604, %v9605
          %v9607 = vrot.slane %v9606, 1
          %v9608 = vadd.f32 %v9606, %v9607
          %s9609 = scalar_lea.vmem [#allocation5], %s9583
          %9610 = vst.msk [vmem:[%s9609] sm:$0x1] %vm9497, %v9608
          %s9611 = sadd.s32 %s9470, 5
          %s9612 = smul.u32 %s9611, 16
          %s9613 = scalar_lea.vmem [#allocation2], %s9612
          %v9614 = vld [vmem:[%s9613] sm:$0xff]
          %v9615 = vld [vmem:[%s9613 + $0x8] sm:$0xff]
          %v9616 = vmul.f32 %v9614, %v9593
          %v9617 = vmul.f32 %v9615, %v9594
          %s9618 = scalar_lea.vmem [#allocation3], %s9612
          %v9619 = vld [vmem:[%s9618] sm:$0xff]
          %v9620 = vld [vmem:[%s9618 + $0x8] sm:$0xff]
          %v9621 = vadd.f32 %v9616, %v9619
          %v9622 = vadd.f32 %v9617, %v9620
          %s9623 = scalar_lea.vmem [#allocation4], %s9612
          %v9624 = vld [vmem:[%s9623] sm:$0xff]
          %v9625 = vld [vmem:[%s9623 + $0x8] sm:$0xff]
          %v9626 = vmul.f32 %v9621, %v9624
          %v9627 = vmul.f32 %v9622, %v9625
          %v9628 = vsel %vm868, %v9626, 0.0
          %v9629 = vsel %vm868, %v9627, 0.0
          %v9630 = vadd.f32 %v9628, %v9629
          %v9631 = vrot.slane %v9630, 4
          %v9632 = vadd.f32 %v9630, %v9631
          %v9633 = vrot.slane %v9632, 2
          %v9634 = vadd.f32 %v9632, %v9633
          %v9635 = vrot.slane %v9634, 1
          %v9636 = vadd.f32 %v9634, %v9635
          %s9637 = scalar_lea.vmem [#allocation5], %s9611
          %9638 = vst.msk [vmem:[%s9637] sm:$0x1] %vm9497, %v9636
          %s9639 = sadd.s32 %s9470, 6
          %s9640 = smul.u32 %s9639, 16
          %s9641 = scalar_lea.vmem [#allocation2], %s9640
          %v9642 = vld [vmem:[%s9641] sm:$0xff]
          %v9643 = vld [vmem:[%s9641 + $0x8] sm:$0xff]
          %v9644 = vmul.f32 %v9642, %v9621
          %v9645 = vmul.f32 %v9643, %v9622
          %s9646 = scalar_lea.vmem [#allocation3], %s9640
          %v9647 = vld [vmem:[%s9646] sm:$0xff]
          %v9648 = vld [vmem:[%s9646 + $0x8] sm:$0xff]
          %v9649 = vadd.f32 %v9644, %v9647
          %v9650 = vadd.f32 %v9645, %v9648
          %s9651 = scalar_lea.vmem [#allocation4], %s9640
          %v9652 = vld [vmem:[%s9651] sm:$0xff]
          %v9653 = vld [vmem:[%s9651 + $0x8] sm:$0xff]
          %v9654 = vmul.f32 %v9649, %v9652
          %v9655 = vmul.f32 %v9650, %v9653
          %v9656 = vsel %vm868, %v9654, 0.0
          %v9657 = vsel %vm868, %v9655, 0.0
          %v9658 = vadd.f32 %v9656, %v9657
          %v9659 = vrot.slane %v9658, 4
          %v9660 = vadd.f32 %v9658, %v9659
          %v9661 = vrot.slane %v9660, 2
          %v9662 = vadd.f32 %v9660, %v9661
          %v9663 = vrot.slane %v9662, 1
          %v9664 = vadd.f32 %v9662, %v9663
          %s9665 = scalar_lea.vmem [#allocation5], %s9639
          %9666 = vst.msk [vmem:[%s9665] sm:$0x1] %vm9497, %v9664
          %s9667 = sadd.s32 %s9470, 7
          %s9668 = smul.u32 %s9667, 16
          %s9669 = scalar_lea.vmem [#allocation2], %s9668
          %v9670 = vld [vmem:[%s9669] sm:$0xff]
          %v9671 = vld [vmem:[%s9669 + $0x8] sm:$0xff]
          %v9672 = vmul.f32 %v9670, %v9649
          %v9673 = vmul.f32 %v9671, %v9650
          %s9674 = scalar_lea.vmem [#allocation3], %s9668
          %v9675 = vld [vmem:[%s9674] sm:$0xff]
          %v9676 = vld [vmem:[%s9674 + $0x8] sm:$0xff]
          %v9677 = vadd.f32 %v9672, %v9675
          %v9678 = vadd.f32 %v9673, %v9676
          %s9679 = scalar_lea.vmem [#allocation4], %s9668
          %v9680 = vld [vmem:[%s9679] sm:$0xff]
          %v9681 = vld [vmem:[%s9679 + $0x8] sm:$0xff]
          %v9682 = vmul.f32 %v9677, %v9680
          %v9683 = vmul.f32 %v9678, %v9681
          %v9684 = vsel %vm868, %v9682, 0.0
          %v9685 = vsel %vm868, %v9683, 0.0
          %v9686 = vadd.f32 %v9684, %v9685
          %v9687 = vrot.slane %v9686, 4
          %v9688 = vadd.f32 %v9686, %v9687
          %v9689 = vrot.slane %v9688, 2
          %v9690 = vadd.f32 %v9688, %v9689
          %v9691 = vrot.slane %v9690, 1
          %v9692 = vadd.f32 %v9690, %v9691
          %s9693 = scalar_lea.vmem [#allocation5], %s9667
          %9694 = vst.msk [vmem:[%s9693] sm:$0x1] %vm9497, %v9692
        $region85: #{tpu_custom_call.1} parent=75 // loop_footer
          %s9467 = sadd.s32 1, %s9463
        $region86: #{tpu_custom_call.1} parent=75 // loop_footer_branch
          %9462 = sbr.rel target = $region82
        $region87: #{tpu_custom_call.1} parent=75 // loop_exit
          _
        %9695 = vst.msk [vmem:[#allocation6] sm:$0xff] %vm868, %v9468
        %9696 = vst.msk [vmem:[#allocation6 + $0x8] sm:$0xff] %vm868, %v9469
        %v9697 = vld [vmem:[#allocation5] sm:$0xff]
        %v9698 = vld [vmem:[#allocation5 + $0x8] sm:$0xff]
        %v9699 = vld [vmem:[#allocation5 + $0x10] sm:$0xff]
        %v9700 = vld [vmem:[#allocation5 + $0x18] sm:$0xff]
        %v9701 = vld [vmem:[#allocation5 + $0x20] sm:$0xff]
        %v9702 = vld [vmem:[#allocation5 + $0x28] sm:$0xff]
        %v9703 = vld [vmem:[#allocation5 + $0x30] sm:$0xff]
        %v9704 = vld [vmem:[#allocation5 + $0x38] sm:$0xff]
        %v9705 = vld [vmem:[#allocation5 + $0x40] sm:$0xff]
        %v9706 = vld [vmem:[#allocation5 + $0x48] sm:$0xff]
        %v9707 = vld [vmem:[#allocation5 + $0x50] sm:$0xff]
        %v9708 = vld [vmem:[#allocation5 + $0x58] sm:$0xff]
        %v9709 = vld [vmem:[#allocation5 + $0x60] sm:$0xff]
        %v9710 = vld [vmem:[#allocation5 + $0x68] sm:$0xff]
        %v9711 = vld [vmem:[#allocation5 + $0x70] sm:$0xff]
        %v9712 = vld [vmem:[#allocation5 + $0x78] sm:$0xff]
        %v9713 = vld [vmem:[%s10] sm:$0x1]
        %v9715 = vlaneseq
        %v9716 = vshrl.u32 %v9715, 7
        %v9717 = vsub.s32 0, %v9716
        %v9718 = vrot.slane %v9713, %v9717
        %v9720 = vmul.f32 %v1199, %v9718
        %v9721 = vmul.f32 %v1200, %v9718
        %v9722 = vmul.f32 %v1201, %v9718
        %v9723 = vmul.f32 %v1202, %v9718
        %v9724 = vmul.f32 %v1203, %v9718
        %v9725 = vmul.f32 %v1204, %v9718
        %v9726 = vmul.f32 %v1205, %v9718
        %v9727 = vmul.f32 %v1206, %v9718
        %v9728 = vmul.f32 %v1207, %v9718
        %v9729 = vmul.f32 %v1208, %v9718
        %v9730 = vmul.f32 %v1209, %v9718
        %v9731 = vmul.f32 %v1210, %v9718
        %v9732 = vmul.f32 %v1211, %v9718
        %v9733 = vmul.f32 %v1212, %v9718
        %v9734 = vmul.f32 %v1213, %v9718
        %v9735 = vmul.f32 %v1214, %v9718
        %v9736 = vadd.f32 %v9697, %v9720
        %v9737 = vadd.f32 %v9698, %v9721
        %v9738 = vadd.f32 %v9699, %v9722
        %v9739 = vadd.f32 %v9700, %v9723
        %v9740 = vadd.f32 %v9701, %v9724
        %v9741 = vadd.f32 %v9702, %v9725
        %v9742 = vadd.f32 %v9703, %v9726
        %v9743 = vadd.f32 %v9704, %v9727
        %v9744 = vadd.f32 %v9705, %v9728
        %v9745 = vadd.f32 %v9706, %v9729
        %v9746 = vadd.f32 %v9707, %v9730
        %v9747 = vadd.f32 %v9708, %v9731
        %v9748 = vadd.f32 %v9709, %v9732
        %v9749 = vadd.f32 %v9710, %v9733
        %v9750 = vadd.f32 %v9711, %v9734
        %v9751 = vadd.f32 %v9712, %v9735
        %v9752 = vsub.f32 0.0, %v790
        %v9753 = vsub.f32 0.0, %v795
        %v9754 = vsub.f32 0.0, %v800
        %v9755 = vsub.f32 0.0, %v805
        %v9756 = vsub.f32 0.0, %v810
        %v9757 = vsub.f32 0.0, %v815
        %v9758 = vsub.f32 0.0, %v820
        %v9759 = vsub.f32 0.0, %v825
        %v9760 = vsub.f32 0.0, %v830
        %v9761 = vsub.f32 0.0, %v835
        %v9762 = vsub.f32 0.0, %v840
        %v9763 = vsub.f32 0.0, %v845
        %v9764 = vsub.f32 0.0, %v850
        %v9765 = vsub.f32 0.0, %v855
        %v9766 = vsub.f32 0.0, %v860
        %v9767 = vsub.f32 0.0, %v865
        %v9768 = vmul.f32 %v9752, 1.442695
        %v9769 = vpow.pop %v9768
        %v9770 = vmul.f32 %v9753, 1.442695
        %v9771 = vpow.pop %v9770
        %v9772 = vmul.f32 %v9754, 1.442695
        %v9773 = vpow.pop %v9772
        %v9774 = vmul.f32 %v9755, 1.442695
        %v9775 = vpow.pop %v9774
        %v9776 = vmul.f32 %v9756, 1.442695
        %v9777 = vpow.pop %v9776
        %v9778 = vmul.f32 %v9757, 1.442695
        %v9779 = vpow.pop %v9778
        %v9780 = vmul.f32 %v9758, 1.442695
        %v9781 = vpow.pop %v9780
        %v9782 = vmul.f32 %v9759, 1.442695
        %v9783 = vpow.pop %v9782
        %v9784 = vmul.f32 %v9760, 1.442695
        %v9785 = vpow.pop %v9784
        %v9786 = vmul.f32 %v9761, 1.442695
        %v9787 = vpow.pop %v9786
        %v9788 = vmul.f32 %v9762, 1.442695
        %v9789 = vpow.pop %v9788
        %v9790 = vmul.f32 %v9763, 1.442695
        %v9791 = vpow.pop %v9790
        %v9792 = vmul.f32 %v9764, 1.442695
        %v9793 = vpow.pop %v9792
        %v9794 = vmul.f32 %v9765, 1.442695
        %v9795 = vpow.pop %v9794
        %v9796 = vmul.f32 %v9766, 1.442695
        %v9797 = vpow.pop %v9796
        %v9798 = vmul.f32 %v9767, 1.442695
        %v9799 = vpow.pop %v9798
        %v9800 = vadd.f32 %v9769, 1.0
        %v9801 = vadd.f32 %v9771, 1.0
        %v9802 = vadd.f32 %v9773, 1.0
        %v9803 = vadd.f32 %v9775, 1.0
        %v9804 = vadd.f32 %v9777, 1.0
        %v9805 = vadd.f32 %v9779, 1.0
        %v9806 = vadd.f32 %v9781, 1.0
        %v9807 = vadd.f32 %v9783, 1.0
        %v9808 = vadd.f32 %v9785, 1.0
        %v9809 = vadd.f32 %v9787, 1.0
        %v9810 = vadd.f32 %v9789, 1.0
        %v9811 = vadd.f32 %v9791, 1.0
        %v9812 = vadd.f32 %v9793, 1.0
        %v9813 = vadd.f32 %v9795, 1.0
        %v9814 = vadd.f32 %v9797, 1.0
        %v9815 = vadd.f32 %v9799, 1.0
        %v9816 = vrcp.pop %v9800
        %v9817 = vmul.f32 1.0, %v9816
        %v9818 = vrcp.pop %v9801
        %v9819 = vmul.f32 1.0, %v9818
        %v9820 = vrcp.pop %v9802
        %v9821 = vmul.f32 1.0, %v9820
        %v9822 = vrcp.pop %v9803
        %v9823 = vmul.f32 1.0, %v9822
        %v9824 = vrcp.pop %v9804
        %v9825 = vmul.f32 1.0, %v9824
        %v9826 = vrcp.pop %v9805
        %v9827 = vmul.f32 1.0, %v9826
        %v9828 = vrcp.pop %v9806
        %v9829 = vmul.f32 1.0, %v9828
        %v9830 = vrcp.pop %v9807
        %v9831 = vmul.f32 1.0, %v9830
        %v9832 = vrcp.pop %v9808
        %v9833 = vmul.f32 1.0, %v9832
        %v9834 = vrcp.pop %v9809
        %v9835 = vmul.f32 1.0, %v9834
        %v9836 = vrcp.pop %v9810
        %v9837 = vmul.f32 1.0, %v9836
        %v9838 = vrcp.pop %v9811
        %v9839 = vmul.f32 1.0, %v9838
        %v9840 = vrcp.pop %v9812
        %v9841 = vmul.f32 1.0, %v9840
        %v9842 = vrcp.pop %v9813
        %v9843 = vmul.f32 1.0, %v9842
        %v9844 = vrcp.pop %v9814
        %v9845 = vmul.f32 1.0, %v9844
        %v9846 = vrcp.pop %v9815
        %v9847 = vmul.f32 1.0, %v9846
        %v9848 = vmul.f32 %v790, %v9817
        %v9849 = vmul.f32 %v795, %v9819
        %v9850 = vmul.f32 %v800, %v9821
        %v9851 = vmul.f32 %v805, %v9823
        %v9852 = vmul.f32 %v810, %v9825
        %v9853 = vmul.f32 %v815, %v9827
        %v9854 = vmul.f32 %v820, %v9829
        %v9855 = vmul.f32 %v825, %v9831
        %v9856 = vmul.f32 %v830, %v9833
        %v9857 = vmul.f32 %v835, %v9835
        %v9858 = vmul.f32 %v840, %v9837
        %v9859 = vmul.f32 %v845, %v9839
        %v9860 = vmul.f32 %v850, %v9841
        %v9861 = vmul.f32 %v855, %v9843
        %v9862 = vmul.f32 %v860, %v9845
        %v9863 = vmul.f32 %v865, %v9847
        %v9864 = vmul.f32 %v9736, %v9848
        %v9865 = vmul.f32 %v9737, %v9849
        %v9866 = vmul.f32 %v9738, %v9850
        %v9867 = vmul.f32 %v9739, %v9851
        %v9868 = vmul.f32 %v9740, %v9852
        %v9869 = vmul.f32 %v9741, %v9853
        %v9870 = vmul.f32 %v9742, %v9854
        %v9871 = vmul.f32 %v9743, %v9855
        %v9872 = vmul.f32 %v9744, %v9856
        %v9873 = vmul.f32 %v9745, %v9857
        %v9874 = vmul.f32 %v9746, %v9858
        %v9875 = vmul.f32 %v9747, %v9859
        %v9876 = vmul.f32 %v9748, %v9860
        %v9877 = vmul.f32 %v9749, %v9861
        %v9878 = vmul.f32 %v9750, %v9862
        %v9879 = vmul.f32 %v9751, %v9863
        %v9880 = vld [vmem:[%s11] sm:$0xff]
        %v9882 = vsel %vm868, %v9880, 0
        %v9885 = vsel %vm868, %v9864, 0
        %v9888 = vsel %vm868, %v9865, 0
        %v9891 = vsel %vm868, %v9866, 0
        %v9894 = vsel %vm868, %v9867, 0
        %v9897 = vsel %vm868, %v9868, 0
        %v9900 = vsel %vm868, %v9869, 0
        %v9903 = vsel %vm868, %v9870, 0
        %v9906 = vsel %vm868, %v9871, 0
        %v9909 = vsel %vm868, %v9872, 0
        %v9912 = vsel %vm868, %v9873, 0
        %v9915 = vsel %vm868, %v9874, 0
        %v9918 = vsel %vm868, %v9875, 0
        %v9921 = vsel %vm868, %v9876, 0
        %v9924 = vsel %vm868, %v9877, 0
        %v9927 = vsel %vm868, %v9878, 0
        %v9930 = vsel %vm868, %v9879, 0
        %9932 = vmatprep.subr.mxu0 0.0
        %9933 = vmatpush1.xpose.msra.mxu0 %v9930
        %9934 = vmatprep.subr.mxu0 0.0
        %9935 = vmatpush1.xpose.msra.mxu0 %v9927
        %9936 = vmatprep.subr.mxu0 0.0
        %9937 = vmatpush1.xpose.msra.mxu0 %v9924
        %9938 = vmatprep.subr.mxu0 0.0
        %9939 = vmatpush1.xpose.msra.mxu0 %v9921
        %9940 = vmatprep.subr.mxu0 0.0
        %9941 = vmatpush1.xpose.msra.mxu0 %v9918
        %9942 = vmatprep.subr.mxu0 0.0
        %9943 = vmatpush1.xpose.msra.mxu0 %v9915
        %9944 = vmatprep.subr.mxu0 0.0
        %9945 = vmatpush1.xpose.msra.mxu0 %v9912
        %9946 = vmatprep.subr.mxu0 0.0
        %9947 = vmatpush1.xpose.msra.mxu0 %v9909
        %9948 = vmatprep.subr.mxu0 0.0
        %9949 = vmatpush1.xpose.msra.mxu0 %v9906
        %9950 = vmatprep.subr.mxu0 0.0
        %9951 = vmatpush1.xpose.msra.mxu0 %v9903
        %9952 = vmatprep.subr.mxu0 0.0
        %9953 = vmatpush1.xpose.msra.mxu0 %v9900
        %9954 = vmatprep.subr.mxu0 0.0
        %9955 = vmatpush1.xpose.msra.mxu0 %v9897
        %9956 = vmatprep.subr.mxu0 0.0
        %9957 = vmatpush1.xpose.msra.mxu0 %v9894
        %9958 = vmatprep.subr.mxu0 0.0
        %9959 = vmatpush1.xpose.msra.mxu0 %v9891
        %9960 = vmatprep.subr.mxu0 0.0
        %9961 = vmatpush1.xpose.msra.mxu0 %v9888
        %9962 = vmatprep.subr.mxu0 0.0
        %9963 = vmatpush1.xpose.msra.mxu0 %v9885
        %9964 = vmatprep.subr.mxu0 0.0
        %9965 = vmatpush2.xpose.msra.mxu0 0.0
        %9966 = vmatprep.subr.mxu0 0.0
        %9967 = vmatpush2.xpose.msra.mxu0 0.0
        %9968 = vmatprep.subr.mxu0 0.0
        %9969 = vmatpush2.xpose.msra.mxu0 0.0
        %9970 = vmatprep.subr.mxu0 0.0
        %9971 = vmatpush2.xpose.msra.mxu0 0.0
        %9972 = vmatprep.subr.mxu0 0.0
        %9973 = vmatpush2.xpose.msra.mxu0 0.0
        %9974 = vmatprep.subr.mxu0 0.0
        %9975 = vmatpush2.xpose.msra.mxu0 0.0
        %9976 = vmatprep.subr.mxu0 0.0
        %9977 = vmatpush2.xpose.msra.mxu0 0.0
        %9978 = vmatprep.subr.mxu0 0.0
        %9979 = vmatpush2.xpose.msra.mxu0 0.0
        %9980 = vmatprep.subr.mxu0 0.0
        %9981 = vmatpush2.xpose.msra.mxu0 0.0
        %9982 = vmatprep.subr.mxu0 0.0
        %9983 = vmatpush2.xpose.msra.mxu0 0.0
        %9984 = vmatprep.subr.mxu0 0.0
        %9985 = vmatpush2.xpose.msra.mxu0 0.0
        %9986 = vmatprep.subr.mxu0 0.0
        %9987 = vmatpush2.xpose.msra.mxu0 0.0
        %9988 = vmatprep.subr.mxu0 0.0
        %9989 = vmatpush2.xpose.msra.mxu0 0.0
        %9990 = vmatprep.subr.mxu0 0.0
        %9991 = vmatpush2.xpose.msra.mxu0 0.0
        %9992 = vmatprep.subr.mxu0 0.0
        %9993 = vmatpush2.xpose.msra.mxu0 0.0
        %9994 = vmatprep.subr.mxu0 0.0
        %9995 = vmatpush2.xpose.msra.mxu0 0.0
        %9996 = vmatprep.mubr.f32.mxu0 0.0
        %9997 = vmatmul.mubr.f32.gmra.mxu0 %v9882
        %v9998 = vpop.f32.mrf.mxu0
        %v9999 = vadd.f32 0.0, %v9998
        %v10000 = vpop.f32.mrf.mxu0
        %10001 = vdwg.mxu0
        %v10002 = vrot.slane %v9999, 4
        %v10003 = vadd.f32 %v9999, %v10002
        %v10004 = vrot.slane %v10003, 2
        %v10005 = vadd.f32 %v10003, %v10004
        %v10006 = vrot.slane %v10005, 1
        %v10007 = vadd.f32 %v10005, %v10006
        %v10008 = vrcp.pop 8.0
        %v10009 = vmul.f32 %v10007, %v10008
        %v10010 = vsub.f32 %v9999, %v10009
        %v10011 = vmul.f32 %v10010, %v10010
        %v10012 = vrot.slane %v10011, 4
        %v10013 = vadd.f32 %v10011, %v10012
        %v10014 = vrot.slane %v10013, 2
        %v10015 = vadd.f32 %v10013, %v10014
        %v10016 = vrot.slane %v10015, 1
        %v10017 = vadd.f32 %v10015, %v10016
        %v10018 = vmul.f32 %v10017, %v10008
        %v10019 = vadd.f32 %v10018, 1e-05
        %v10020 = vrsqrt.pop %v10019
        %v10021 = vmul.f32 %v10010, %v10020
        %v10022 = vld [vmem:[%s12] sm:$0xff]
        %10024 = vset.pattern.permute.xlu0 0
        %10025 = vperm.xlu0 %10024, %v10022
        %v10026 = vpop.permute.xlu0 %10025
        %v10028 = vmul.f32 %v10021, %v10026
        %v10029 = vld [vmem:[%s13] sm:$0xff]
        %10031 = vset.pattern.permute.xlu0 0
        %10032 = vperm.xlu0 %10031, %v10029
        %v10033 = vpop.permute.xlu0 %10032
        %v10035 = vadd.f32 %v10028, %v10033
        %v10036 = vmax.f32 %v10035, 0.0
        %10037 = vst [vmem:[%s485] sm:$0xff] %v10036
        %s10038 = sand.u32 %s351, 1
        %s10039 = scalar_lea.sflag [#allocation9], %s10038
        %s10040 = sand.u32 %s351, 1
        %s10041 = smul.addr %s10040, 8
        %s10042 = scalar_lea.vmem [#allocation8], %s10041
        // Predicated region
        $region88: #{tpu_custom_call.1} parent=75 // pred_check
          %p10043 = pneg %p361
        $region89: #{tpu_custom_call.1} parent=75 // pred_check_branch
          %10045 = sbr.rel (%p10043) target = $region91
        $region90: #{tpu_custom_call.1} parent=75 // pred_region
          %s10047 = ssub.s32 128, 128
          %10048 = vsyncadd %s10039, %s10047
          %s10049 = smul.addr %s32, 2
          %s10050 = sadd.s32 %s33, %s10049
          %s10051 = smul.addr %s10050, 128
          %s10052 = scalar_lea.hbm %s14, %s10051
          %s10054 = sshll.u32 %s10042, 4
          %s10055 = int_to_ptr.vmem [resolvable:$true] %s10054
          %10057 = dma.vmem_to_hbm [thread:$0]  %s10055, 128, %s10052, %s10039
        $region91: #{tpu_custom_call.1} parent=75 // pred_fallthru
          _
      $region76: #{tpu_custom_call.1} parent=5 // pred_fallthru
        _
      %p10058 = scmp.le.s32.totalorder 2, %s23
      // Predicated region
      $region92: #{tpu_custom_call.1} parent=5 // pred_check
        %p10059 = pneg %p10058
      $region93: #{tpu_custom_call.1} parent=5 // pred_check_branch
        %10061 = sbr.rel (%p10059) target = $region95
      $region94: #{tpu_custom_call.1} parent=5 // pred_region
        %s10062 = ssub.s32 %s23, 2
        // Predicated region
        $region96: #{tpu_custom_call.1} parent=94 // pred_check
          %p10063 = pneg %p367
        $region97: #{tpu_custom_call.1} parent=94 // pred_check_branch
          %10065 = sbr.rel (%p10063) target = $region99
        $region98: #{tpu_custom_call.1} parent=94 // pred_region
          %s10066 = sand.u32 %s352, 1
          %s10067 = scalar_lea.sflag [#allocation9], %s10066
          %s10068 = sand.u32 %s352, 1
          %s10069 = smul.addr %s10068, 8
          %s10070 = scalar_lea.vmem [#allocation8], %s10069
          %10071 = dma.done %s10067, 128
        $region99: #{tpu_custom_call.1} parent=94 // pred_fallthru
          _
      $region95: #{tpu_custom_call.1} parent=5 // pred_fallthru
        _
    $region6: #{tpu_custom_call.1} parent=1 // loop_footer
      %s27 = sadd.s32 1, %s23
    $region7: #{tpu_custom_call.1} parent=1 // loop_footer_branch
      %22 = sbr.rel target = $region3
    $region8: #{tpu_custom_call.1} parent=1 // loop_exit
      _
    %10072 = vsyncpa [#allocation9], 1
    %s10073 = scalar_lea.sflag [#allocation9], 1
    %10074 = vsyncpa %s10073, 1

</llo_original>
